<compile_context>
chip_gen: v7x
topology: tpu7x:2x2x1
jax: 0.10.0
libtpu: 0.0.40
codegen_flags: <defaults>
</compile_context>

<pallas_src>
import functools

import numpy as np
import jax
import jax.numpy as jnp
from jax import lax
from jax.experimental import pallas as pl
from jax.experimental.pallas import tpu as pltpu

THETA = 0.7
BN_EPS = 1e-5
C_IN = 128      # block input/output channels
C_MID = 153     # real mid channels (128 * 1.2)
C_MIDP = 256    # mid channels padded 153 -> 256 (zero-padded, exact)
RC = 4          # output rows processed per conv chunk
PAD = 8         # aligned left column pad of the staging buffers (col PAD-1 is the zero halo)


def _block3_kernel(x_ref, w1_ref, w2_ref, w3_ref, sh1_ref, sh2_ref, sh3_ref,
                   o_ref, ax_ref, ah_ref, am_ref, yp_ref, rm_ref, *, H, W):
    """One batch element per grid step. x_ref: (H,W,128) -> o_ref: (H/2,W/2,128)."""
    Ho, Wo = H // 2, W // 2
    Wp = W + 2 * PAD  # padded staging-buffer width

    # ---- zero halos (re-established every grid step -> batch axis can be "parallel") ----
    def zero_halo(s_ref, cb):
        s_ref[0:1] = jnp.zeros((1, Wp, cb), jnp.float32)                        # top halo row
        s_ref[H + 1:H + 2] = jnp.zeros((1, Wp, cb), jnp.float32)                # bottom halo row
        s_ref[:, PAD - 1:PAD, :] = jnp.zeros((H + 2, 1, cb), jnp.float32)       # left halo col
        s_ref[:, PAD + W:PAD + W + 1, :] = jnp.zeros((H + 2, 1, cb), jnp.float32)  # right halo col

    zero_halo(ax_ref, C_IN)
    zero_halo(ah_ref, C_IN)
    zero_halo(am_ref, C_MIDP)
    rm_ref[:, 0:PAD, :] = jnp.zeros((Ho, PAD, C_IN), jnp.float32)               # pool left halo

    # ---- stage x into the padded buffer (dense, lane/sublane-aligned stores) ----
    def stage_body(ci, carry):
        r0 = ci * RC
        ax_ref[pl.ds(r0 + 1, RC), pl.ds(PAD, W), :] = x_ref[pl.ds(r0, RC)]
        return carry

    lax.fori_loop(0, H // RC, stage_body, 0)

    # ---- generic 3x3 conv pass: 9 bf16 MXU dots per RC-row chunk, acc in vregs ----
    def conv_pass(src_ref, w_ref, cb, emit):
        def body(ci, carry):
            r0 = ci * RC
            acc = None
            for ky in range(3):
                for kx in range(3):
                    # tap (ky, kx): input pixel (r+ky-1, c+kx-1) lives at
                    # buffer [r+ky, c+kx-1+PAD]; halos supply the zero padding.
                    v = src_ref[pl.ds(r0 + ky, RC), pl.ds(PAD - 1 + kx, W), :]
                    lhs = v.astype(jnp.bfloat16).reshape(RC * W, cb)
                    d = jnp.dot(lhs, w_ref[ky, kx],
                                preferred_element_type=jnp.float32)
                    acc = d if acc is None else acc + d
            emit(r0, acc)
            return carry

        lax.fori_loop(0, H // RC, body, 0)

    def emit1(r0, acc):  # conv1 -> bn1 shift -> relu -> stage for conv2
        h = jnp.maximum(acc + sh1_ref[...], 0.0)
        ah_ref[pl.ds(r0 + 1, RC), pl.ds(PAD, W), :] = h.reshape(RC, W, C_IN)

    def emit2(r0, acc):  # conv2 -> bn2 shift -> relu -> stage for conv3
        h = jnp.maximum(acc + sh2_ref[...], 0.0)
        am_ref[pl.ds(r0 + 1, RC), pl.ds(PAD, W), :] = h.reshape(RC, W, C_MIDP)

    def emit3(r0, acc):  # conv3 -> bn3 shift -> +identity -> relu -> pool input
        y = (acc + sh3_ref[...]).reshape(RC, W, C_IN) + x_ref[pl.ds(r0, RC)]
        yp_ref[pl.ds(r0, RC)] = jnp.maximum(y, 0.0)

    conv_pass(ax_ref, w1_ref, C_IN, emit1)
    conv_pass(ah_ref, w2_ref, C_IN, emit2)
    conv_pass(am_ref, w3_ref, C_MIDP, emit3)

    # ---- MaxPool2d(kernel=3, stride=2, padding=1) ----
    # Row reduce first: purely leading-dim reads (layout-free).  Output row i
    # covers y rows {2i-1, 2i, 2i+1}; the top pad row is handled by clamping
    # (duplicating row 0 in a max is exact).
    def pool_row(i, carry):
        rp = yp_ref[pl.ds(jnp.maximum(2 * i - 1, 0), 1)]
        ra = yp_ref[pl.ds(2 * i, 1)]
        rb = yp_ref[pl.ds(2 * i + 1, 1)]
        rm_ref[pl.ds(i, 1), pl.ds(PAD, W), :] = jnp.maximum(jnp.maximum(rp, ra), rb)
        return carry

    lax.fori_loop(0, Ho, pool_row, 0)

    # Column reduce: stride-2 reads.  Col PAD-1 is a zero halo; since y >= 0
    # (final ReLU) this is equivalent to PyTorch's -inf padding.
    c0 = rm_ref[:, pl.ds(PAD - 1, Wo, stride=2), :]
    c1 = rm_ref[:, pl.ds(PAD, Wo, stride=2), :]
    c2 = rm_ref[:, pl.ds(PAD + 1, Wo, stride=2), :]
    o_ref[...] = jnp.maximum(jnp.maximum(c0, c1), c2)   # single dense lane-dense store


def block3_forward(x, w1, w2, w3, bn1, bn2, bn3, *, theta=THETA):
    B, H, W, C = x.shape
    assert C == C_IN and H % 2 == 0 and W % 2 == 0
    assert H % RC == 0 and W % 8 == 0
    C2 = w2.shape[-1]                      # 153
    Ho, Wo = H // 2, W // 2

    def fold(w, bn):
        scale, shift = bn[0, 0], bn[1, 0]
        # exact: theta * 1x1(sum-of-taps) == theta * extra center-tap contribution
        w = w.at[1, 1].add(-theta * w.sum(axis=(0, 1)))
        # exact: BN scale folded into per-output-channel conv weights
        return w * scale[None, None, None, :], shift

    w1f, sh1 = fold(w1, bn1)
    w2f, sh2 = fold(w2, bn2)
    w3f, sh3 = fold(w3, bn3)
    # zero-pad mid channels 153 -> 256 (exact rewrite)
    w2f = jnp.pad(w2f, ((0, 0), (0, 0), (0, 0), (0, C_MIDP - C2)))
    sh2 = jnp.pad(sh2, (0, C_MIDP - C2))
    w3f = jnp.pad(w3f, ((0, 0), (0, 0), (0, C_MIDP - C2), (0, 0)))
    # bf16 MXU operands (accumulation stays f32 in-kernel)
    w1b = w1f.astype(jnp.bfloat16)
    w2b = w2f.astype(jnp.bfloat16)
    w3b = w3f.astype(jnp.bfloat16)
    sh1 = sh1.reshape(1, C_IN)
    sh2 = sh2.reshape(1, C_MIDP)
    sh3 = sh3.reshape(1, C_IN)

    flops = 2 * 9 * H * W * (C_IN * C_IN + C_IN * C2 + C2 * C_IN) * B
    bytes_accessed = (x.size * 4 + B * Ho * Wo * C_IN * 4
                      + (w1b.size + w2b.size + w3b.size) * 2
                      + (sh1.size + sh2.size + sh3.size) * 4)

    kernel = functools.partial(_block3_kernel, H=H, W=W)
    return pl.pallas_call(
        kernel,
        out_shape=jax.ShapeDtypeStruct((B, Ho, Wo, C_IN), jnp.float32),
        grid_spec=pltpu.PrefetchScalarGridSpec(
            num_scalar_prefetch=0,
            grid=(B,),
            in_specs=[
                pl.BlockSpec((None, H, W, C_IN), lambda b: (b, 0, 0, 0)),
                pl.BlockSpec((3, 3, C_IN, C_IN), lambda b: (0, 0, 0, 0)),
                pl.BlockSpec((3, 3, C_IN, C_MIDP), lambda b: (0, 0, 0, 0)),
                pl.BlockSpec((3, 3, C_MIDP, C_IN), lambda b: (0, 0, 0, 0)),
                pl.BlockSpec((1, C_IN), lambda b: (0, 0)),
                pl.BlockSpec((1, C_MIDP), lambda b: (0, 0)),
                pl.BlockSpec((1, C_IN), lambda b: (0, 0)),
            ],
            out_specs=pl.BlockSpec((None, Ho, Wo, C_IN), lambda b: (b, 0, 0, 0)),
            scratch_shapes=[
                pltpu.VMEM((H + 2, W + 2 * PAD, C_IN), jnp.float32),    # x staging (padded)
                pltpu.VMEM((H + 2, W + 2 * PAD, C_IN), jnp.float32),    # h1 staging (padded)
                pltpu.VMEM((H + 2, W + 2 * PAD, C_MIDP), jnp.float32),  # h2 staging (padded)
                pltpu.VMEM((H, W, C_IN), jnp.float32),                  # y (pool input)
                pltpu.VMEM((Ho, PAD + W, C_IN), jnp.float32),           # row-reduced pool
            ],
        ),
        compiler_params=pltpu.CompilerParams(
            dimension_semantics=("parallel",),
            vmem_limit_bytes=32 * 1024 * 1024),
        cost_estimate=pl.CostEstimate(
            flops=flops, transcendentals=0, bytes_accessed=bytes_accessed),
    )(x, w1b, w2b, w3b, sh1, sh2, sh3)


# ---------------- parameter init (deterministic, synthetic) ----------------

def init_params(key):
    C1, C2 = 128, int(128 * 1.2)   # 128, 153

    def conv_w(k, cin, cout):
        return jax.random.normal(k, (3, 3, cin, cout), jnp.float32) / np.sqrt(9.0 * cin)

    def bn_fold(kg, kb, km, kv, c):
        gamma = 1.0 + 0.1 * jax.random.normal(kg, (c,), jnp.float32)
        beta = 0.1 * jax.random.normal(kb, (c,), jnp.float32)
        mean = 0.1 * jax.random.normal(km, (c,), jnp.float32)
        var = jnp.abs(jax.random.normal(kv, (c,), jnp.float32)) + 0.5
        scale = gamma / jnp.sqrt(var + BN_EPS)
        shift = beta - mean * scale
        return jnp.stack([scale, shift]).reshape(2, 1, c)

    ks = jax.random.split(key, 15)
    w1 = conv_w(ks[0], C1, C1)
    w2 = conv_w(ks[1], C1, C2)
    w3 = conv_w(ks[2], C2, C1)
    bn1 = bn_fold(ks[3], ks[4], ks[5], ks[6], C1)
    bn2 = bn_fold(ks[7], ks[8], ks[9], ks[10], C2)
    bn3 = bn_fold(ks[11], ks[12], ks[13], ks[14], C1)
    return w1, w2, w3, bn1, bn2, bn3


# ---------------- pure-JAX reference for verification ----------------

def _conv_cd_ref(x, w, theta):
    dn = ("NHWC", "HWIO", "NHWC")
    out = jax.lax.conv_general_dilated(x, w, (1, 1), ((1, 1), (1, 1)),
                                       dimension_numbers=dn)
    kd = w.sum(axis=(0, 1))[None, None]
    out_diff = jax.lax.conv_general_dilated(x, kd, (1, 1), ((0, 0), (0, 0)),
                                            dimension_numbers=dn)
    return out - theta * out_diff


def block3_ref(x, w1, w2, w3, bn1, bn2, bn3, theta=THETA):
    def bn(y, p):
        return y * p[0] + p[1]
    h = jax.nn.relu(bn(_conv_cd_ref(x, w1, theta), bn1))
    h = jax.nn.relu(bn(_conv_cd_ref(h, w2, theta), bn2))
    h = bn(_conv_cd_ref(h, w3, theta), bn3)
    y = jax.nn.relu(h + x)
    return jax.lax.reduce_window(
        y, -jnp.inf, jax.lax.max,
        window_dimensions=(1, 3, 3, 1), window_strides=(1, 2, 2, 1),
        padding=((0, 0), (1, 1), (1, 1), (0, 0)))


if __name__ == "__main__":
    key = jax.random.PRNGKey(0)
    kx, kp = jax.random.split(key)
    B, H, W = 2, 16, 16
    x = jax.random.normal(kx, (B, H, W, 128), jnp.float32)   # NHWC (== NCHW [2,128,16,16])

    params = init_params(kp)
    out = jax.block_until_ready(block3_forward(x, *params))

    ref = jax.block_until_ready(block3_ref(x, *params))
    assert out.shape == (B, H // 2, W // 2, 128), out.shape
    # tolerance absorbs bf16 MXU operands vs. the f32 XLA reference
    assert np.allclose(np.asarray(out), np.asarray(ref), atol=5e-2, rtol=5e-2), \
        float(np.max(np.abs(np.asarray(out) - np.asarray(ref))))

    print("KERNEL_OK")
</pallas_src>

<mosaic_0001>
module attributes {stable_mosaic.version = 11 : i64} {
  func.func @_block3_kernel(%arg0: i32, %arg1: memref<1x16x16x128xf32, #tpu.memory_space<vmem>>, %arg2: memref<3x3x128x128xbf16, #tpu.memory_space<vmem>>, %arg3: memref<3x3x128x256xbf16, #tpu.memory_space<vmem>>, %arg4: memref<3x3x256x128xbf16, #tpu.memory_space<vmem>>, %arg5: memref<1x128xf32, #tpu.memory_space<vmem>>, %arg6: memref<1x256xf32, #tpu.memory_space<vmem>>, %arg7: memref<1x128xf32, #tpu.memory_space<vmem>>, %arg8: memref<1x8x8x128xf32, #tpu.memory_space<vmem>>, %arg9: memref<18x32x128xf32, #tpu.memory_space<vmem>>, %arg10: memref<18x32x128xf32, #tpu.memory_space<vmem>>, %arg11: memref<18x32x256xf32, #tpu.memory_space<vmem>>, %arg12: memref<16x16x128xf32, #tpu.memory_space<vmem>>, %arg13: memref<8x24x128xf32, #tpu.memory_space<vmem>>) attributes {dimension_semantics = [#tpu.dimension_semantics<parallel>], iteration_bounds = array<i64: 2>, scalar_prefetch = 0 : i64, scratch_operands = 5 : i64, tpu.core_type = #tpu.core_type<tc>, window_params = [{transform_indices = @transform_0, window_bounds = array<i64: 1, 16, 16, 128>}, {pipeline_mode = #tpu.pipeline_mode<synchronous>, transform_indices = @transform_1, window_bounds = array<i64: 3, 3, 128, 128>}, {pipeline_mode = #tpu.pipeline_mode<synchronous>, transform_indices = @transform_2, window_bounds = array<i64: 3, 3, 128, 256>}, {pipeline_mode = #tpu.pipeline_mode<synchronous>, transform_indices = @transform_3, window_bounds = array<i64: 3, 3, 256, 128>}, {pipeline_mode = #tpu.pipeline_mode<synchronous>, transform_indices = @transform_4, window_bounds = array<i64: 1, 128>}, {pipeline_mode = #tpu.pipeline_mode<synchronous>, transform_indices = @transform_5, window_bounds = array<i64: 1, 256>}, {pipeline_mode = #tpu.pipeline_mode<synchronous>, transform_indices = @transform_6, window_bounds = array<i64: 1, 128>}, {transform_indices = @transform_7, window_bounds = array<i64: 1, 8, 8, 128>}]} {
    %cst = arith.constant 0.000000e+00 : f32
    %0 = vector.broadcast %cst : f32 to vector<1x32x128xf32>
    %c0 = arith.constant 0 : index
    %c0_0 = arith.constant 0 : index
    %c0_1 = arith.constant 0 : index
    %1 = vector.load %arg9[%c0, %c0_0, %c0_1] : memref<18x32x128xf32, #tpu.memory_space<vmem>>, vector<1x32x128xf32>
    tpu.vector_store %arg9[%c0, %c0_0, %c0_1], %0 {strides = array<i32>} : memref<18x32x128xf32, #tpu.memory_space<vmem>>, vector<1x32x128xf32>,
    %cst_2 = arith.constant 0.000000e+00 : f32
    %2 = vector.broadcast %cst_2 : f32 to vector<1x32x128xf32>
    %c17 = arith.constant 17 : index
    %c0_3 = arith.constant 0 : index
    %c0_4 = arith.constant 0 : index
    %3 = vector.load %arg9[%c17, %c0_3, %c0_4] : memref<18x32x128xf32, #tpu.memory_space<vmem>>, vector<1x32x128xf32>
    tpu.vector_store %arg9[%c17, %c0_3, %c0_4], %2 {strides = array<i32>} : memref<18x32x128xf32, #tpu.memory_space<vmem>>, vector<1x32x128xf32>,
    %cst_5 = arith.constant 0.000000e+00 : f32
    %4 = vector.broadcast %cst_5 : f32 to vector<18x1x128xf32>
    %c0_6 = arith.constant 0 : index
    %c7 = arith.constant 7 : index
    %c0_7 = arith.constant 0 : index
    %5 = vector.load %arg9[%c0_6, %c7, %c0_7] : memref<18x32x128xf32, #tpu.memory_space<vmem>>, vector<18x1x128xf32>
    tpu.vector_store %arg9[%c0_6, %c7, %c0_7], %4 {strides = array<i32>} : memref<18x32x128xf32, #tpu.memory_space<vmem>>, vector<18x1x128xf32>,
    %cst_8 = arith.constant 0.000000e+00 : f32
    %6 = vector.broadcast %cst_8 : f32 to vector<18x1x128xf32>
    %c0_9 = arith.constant 0 : index
    %c24 = arith.constant 24 : index
    %c0_10 = arith.constant 0 : index
    %7 = vector.load %arg9[%c0_9, %c24, %c0_10] : memref<18x32x128xf32, #tpu.memory_space<vmem>>, vector<18x1x128xf32>
    tpu.vector_store %arg9[%c0_9, %c24, %c0_10], %6 {strides = array<i32>} : memref<18x32x128xf32, #tpu.memory_space<vmem>>, vector<18x1x128xf32>,
    %cst_11 = arith.constant 0.000000e+00 : f32
    %8 = vector.broadcast %cst_11 : f32 to vector<1x32x128xf32>
    %c0_12 = arith.constant 0 : index
    %c0_13 = arith.constant 0 : index
    %c0_14 = arith.constant 0 : index
    %9 = vector.load %arg10[%c0_12, %c0_13, %c0_14] : memref<18x32x128xf32, #tpu.memory_space<vmem>>, vector<1x32x128xf32>
    tpu.vector_store %arg10[%c0_12, %c0_13, %c0_14], %8 {strides = array<i32>} : memref<18x32x128xf32, #tpu.memory_space<vmem>>, vector<1x32x128xf32>,
    %cst_15 = arith.constant 0.000000e+00 : f32
    %10 = vector.broadcast %cst_15 : f32 to vector<1x32x128xf32>
    %c17_16 = arith.constant 17 : index
    %c0_17 = arith.constant 0 : index
    %c0_18 = arith.constant 0 : index
    %11 = vector.load %arg10[%c17_16, %c0_17, %c0_18] : memref<18x32x128xf32, #tpu.memory_space<vmem>>, vector<1x32x128xf32>
    tpu.vector_store %arg10[%c17_16, %c0_17, %c0_18], %10 {strides = array<i32>} : memref<18x32x128xf32, #tpu.memory_space<vmem>>, vector<1x32x128xf32>,
    %cst_19 = arith.constant 0.000000e+00 : f32
    %12 = vector.broadcast %cst_19 : f32 to vector<18x1x128xf32>
    %c0_20 = arith.constant 0 : index
    %c7_21 = arith.constant 7 : index
    %c0_22 = arith.constant 0 : index
    %13 = vector.load %arg10[%c0_20, %c7_21, %c0_22] : memref<18x32x128xf32, #tpu.memory_space<vmem>>, vector<18x1x128xf32>
    tpu.vector_store %arg10[%c0_20, %c7_21, %c0_22], %12 {strides = array<i32>} : memref<18x32x128xf32, #tpu.memory_space<vmem>>, vector<18x1x128xf32>,
    %cst_23 = arith.constant 0.000000e+00 : f32
    %14 = vector.broadcast %cst_23 : f32 to vector<18x1x128xf32>
    %c0_24 = arith.constant 0 : index
    %c24_25 = arith.constant 24 : index
    %c0_26 = arith.constant 0 : index
    %15 = vector.load %arg10[%c0_24, %c24_25, %c0_26] : memref<18x32x128xf32, #tpu.memory_space<vmem>>, vector<18x1x128xf32>
    tpu.vector_store %arg10[%c0_24, %c24_25, %c0_26], %14 {strides = array<i32>} : memref<18x32x128xf32, #tpu.memory_space<vmem>>, vector<18x1x128xf32>,
    %cst_27 = arith.constant 0.000000e+00 : f32
    %16 = vector.broadcast %cst_27 : f32 to vector<1x32x256xf32>
    %c0_28 = arith.constant 0 : index
    %c0_29 = arith.constant 0 : index
    %c0_30 = arith.constant 0 : index
    %17 = vector.load %arg11[%c0_28, %c0_29, %c0_30] : memref<18x32x256xf32, #tpu.memory_space<vmem>>, vector<1x32x256xf32>
    tpu.vector_store %arg11[%c0_28, %c0_29, %c0_30], %16 {strides = array<i32>} : memref<18x32x256xf32, #tpu.memory_space<vmem>>, vector<1x32x256xf32>,
    %cst_31 = arith.constant 0.000000e+00 : f32
    %18 = vector.broadcast %cst_31 : f32 to vector<1x32x256xf32>
    %c17_32 = arith.constant 17 : index
    %c0_33 = arith.constant 0 : index
    %c0_34 = arith.constant 0 : index
    %19 = vector.load %arg11[%c17_32, %c0_33, %c0_34] : memref<18x32x256xf32, #tpu.memory_space<vmem>>, vector<1x32x256xf32>
    tpu.vector_store %arg11[%c17_32, %c0_33, %c0_34], %18 {strides = array<i32>} : memref<18x32x256xf32, #tpu.memory_space<vmem>>, vector<1x32x256xf32>,
    %cst_35 = arith.constant 0.000000e+00 : f32
    %20 = vector.broadcast %cst_35 : f32 to vector<18x1x256xf32>
    %c0_36 = arith.constant 0 : index
    %c7_37 = arith.constant 7 : index
    %c0_38 = arith.constant 0 : index
    %21 = vector.load %arg11[%c0_36, %c7_37, %c0_38] : memref<18x32x256xf32, #tpu.memory_space<vmem>>, vector<18x1x256xf32>
    tpu.vector_store %arg11[%c0_36, %c7_37, %c0_38], %20 {strides = array<i32>} : memref<18x32x256xf32, #tpu.memory_space<vmem>>, vector<18x1x256xf32>,
    %cst_39 = arith.constant 0.000000e+00 : f32
    %22 = vector.broadcast %cst_39 : f32 to vector<18x1x256xf32>
    %c0_40 = arith.constant 0 : index
    %c24_41 = arith.constant 24 : index
    %c0_42 = arith.constant 0 : index
    %23 = vector.load %arg11[%c0_40, %c24_41, %c0_42] : memref<18x32x256xf32, #tpu.memory_space<vmem>>, vector<18x1x256xf32>
    tpu.vector_store %arg11[%c0_40, %c24_41, %c0_42], %22 {strides = array<i32>} : memref<18x32x256xf32, #tpu.memory_space<vmem>>, vector<18x1x256xf32>,
    %cst_43 = arith.constant 0.000000e+00 : f32
    %24 = vector.broadcast %cst_43 : f32 to vector<8x8x128xf32>
    %c0_44 = arith.constant 0 : index
    %c0_45 = arith.constant 0 : index
    %c0_46 = arith.constant 0 : index
    %25 = vector.load %arg13[%c0_44, %c0_45, %c0_46] : memref<8x24x128xf32, #tpu.memory_space<vmem>>, vector<8x8x128xf32>
    tpu.vector_store %arg13[%c0_44, %c0_45, %c0_46], %24 {strides = array<i32>} : memref<8x24x128xf32, #tpu.memory_space<vmem>>, vector<8x8x128xf32>,
    %c0_i32 = arith.constant 0 : i32
    %c4_i32 = arith.constant 4 : i32
    %26 = arith.addi %c0_i32, %c4_i32 : i32
    %c1_i32 = arith.constant 1 : i32
    scf.for %arg14 = %c0_i32 to %26 step %c1_i32  : i32 {
      %c4_i32_74 = arith.constant 4 : i32
      %39 = arith.muli %arg14, %c4_i32_74 : i32
      %c0_75 = arith.constant 0 : index
      %40 = arith.index_cast %39 : i32 to index
      %c0_76 = arith.constant 0 : index
      %c0_77 = arith.constant 0 : index
      %41 = vector.load %arg1[%c0_75, %40, %c0_76, %c0_77] : memref<1x16x16x128xf32, #tpu.memory_space<vmem>>, vector<1x4x16x128xf32>
      %42 = vector.shape_cast %41 : vector<1x4x16x128xf32> to vector<4x16x128xf32>
      %c1_i32_78 = arith.constant 1 : i32
      %43 = arith.addi %39, %c1_i32_78 : i32
      %44 = arith.index_cast %43 : i32 to index
      %c8_79 = arith.constant 8 : index
      %c0_80 = arith.constant 0 : index
      %45 = vector.load %arg9[%44, %c8_79, %c0_80] : memref<18x32x128xf32, #tpu.memory_space<vmem>>, vector<4x16x128xf32>
      tpu.vector_store %arg9[%44, %c8_79, %c0_80], %42 {strides = array<i32>} : memref<18x32x128xf32, #tpu.memory_space<vmem>>, vector<4x16x128xf32>,
    }
    %c4_i32_47 = arith.constant 4 : i32
    %c0_i32_48 = arith.constant 0 : i32
    %c4_i32_49 = arith.constant 4 : i32
    %27 = arith.addi %c0_i32_48, %c4_i32_49 : i32
    %c1_i32_50 = arith.constant 1 : i32
    scf.for %arg14 = %c0_i32_48 to %27 step %c1_i32_50  : i32 {
      %c4_i32_74 = arith.constant 4 : i32
      %39 = arith.muli %arg14, %c4_i32_74 : i32
      %c0_i32_75 = arith.constant 0 : i32
      %40 = arith.addi %39, %c0_i32_75 : i32
      %41 = arith.index_cast %40 : i32 to index
      %c7_76 = arith.constant 7 : index
      %c0_77 = arith.constant 0 : index
      %42 = vector.load %arg9[%41, %c7_76, %c0_77] : memref<18x32x128xf32, #tpu.memory_space<vmem>>, vector<4x16x128xf32>
      %43 = arith.truncf %42 : vector<4x16x128xf32> to vector<4x16x128xbf16>
      %44 = vector.shape_cast %43 : vector<4x16x128xbf16> to vector<64x128xbf16>
      %c0_78 = arith.constant 0 : index
      %c0_79 = arith.constant 0 : index
      %c0_80 = arith.constant 0 : index
      %c0_81 = arith.constant 0 : index
      %45 = vector.load %arg2[%c0_78, %c0_79, %c0_80, %c0_81] : memref<3x3x128x128xbf16, #tpu.memory_space<vmem>>, vector<1x1x128x128xbf16>
      %46 = vector.shape_cast %45 : vector<1x1x128x128xbf16> to vector<128x128xbf16>
      %cst_82 = arith.constant dense<0.000000e+00> : vector<64x128xf32>
      %47 = tpu.matmul %44, %46, %cst_82 {dimension_numbers = #tpu.dot_dimension_numbers<[1], [0], [0], [1], [0, 0, 1, 1], [], []>} : vector<64x128xbf16>, vector<128x128xbf16>, vector<64x128xf32> -> vector<64x128xf32>
      %c0_i32_83 = arith.constant 0 : i32
      %48 = arith.addi %39, %c0_i32_83 : i32
      %49 = arith.index_cast %48 : i32 to index
      %c8_84 = arith.constant 8 : index
      %c0_85 = arith.constant 0 : index
      %50 = vector.load %arg9[%49, %c8_84, %c0_85] : memref<18x32x128xf32, #tpu.memory_space<vmem>>, vector<4x16x128xf32>
      %51 = arith.truncf %50 : vector<4x16x128xf32> to vector<4x16x128xbf16>
      %52 = vector.shape_cast %51 : vector<4x16x128xbf16> to vector<64x128xbf16>
      %c0_86 = arith.constant 0 : index
      %c1 = arith.constant 1 : index
      %c0_87 = arith.constant 0 : index
      %c0_88 = arith.constant 0 : index
      %53 = vector.load %arg2[%c0_86, %c1, %c0_87, %c0_88] : memref<3x3x128x128xbf16, #tpu.memory_space<vmem>>, vector<1x1x128x128xbf16>
      %54 = vector.shape_cast %53 : vector<1x1x128x128xbf16> to vector<128x128xbf16>
      %cst_89 = arith.constant dense<0.000000e+00> : vector<64x128xf32>
      %55 = tpu.matmul %52, %54, %cst_89 {dimension_numbers = #tpu.dot_dimension_numbers<[1], [0], [0], [1], [0, 0, 1, 1], [], []>} : vector<64x128xbf16>, vector<128x128xbf16>, vector<64x128xf32> -> vector<64x128xf32>
      %56 = arith.addf %47, %55 : vector<64x128xf32>
      %c0_i32_90 = arith.constant 0 : i32
      %57 = arith.addi %39, %c0_i32_90 : i32
      %58 = arith.index_cast %57 : i32 to index
      %c9_91 = arith.constant 9 : index
      %c0_92 = arith.constant 0 : index
      %59 = vector.load %arg9[%58, %c9_91, %c0_92] : memref<18x32x128xf32, #tpu.memory_space<vmem>>, vector<4x16x128xf32>
      %60 = arith.truncf %59 : vector<4x16x128xf32> to vector<4x16x128xbf16>
      %61 = vector.shape_cast %60 : vector<4x16x128xbf16> to vector<64x128xbf16>
      %c0_93 = arith.constant 0 : index
      %c2 = arith.constant 2 : index
      %c0_94 = arith.constant 0 : index
      %c0_95 = arith.constant 0 : index
      %62 = vector.load %arg2[%c0_93, %c2, %c0_94, %c0_95] : memref<3x3x128x128xbf16, #tpu.memory_space<vmem>>, vector<1x1x128x128xbf16>
      %63 = vector.shape_cast %62 : vector<1x1x128x128xbf16> to vector<128x128xbf16>
      %cst_96 = arith.constant dense<0.000000e+00> : vector<64x128xf32>
      %64 = tpu.matmul %61, %63, %cst_96 {dimension_numbers = #tpu.dot_dimension_numbers<[1], [0], [0], [1], [0, 0, 1, 1], [], []>} : vector<64x128xbf16>, vector<128x128xbf16>, vector<64x128xf32> -> vector<64x128xf32>
      %65 = arith.addf %56, %64 : vector<64x128xf32>
      %c1_i32_97 = arith.constant 1 : i32
      %66 = arith.addi %39, %c1_i32_97 : i32
      %67 = arith.index_cast %66 : i32 to index
      %c7_98 = arith.constant 7 : index
      %c0_99 = arith.constant 0 : index
      %68 = vector.load %arg9[%67, %c7_98, %c0_99] : memref<18x32x128xf32, #tpu.memory_space<vmem>>, vector<4x16x128xf32>
      %69 = arith.truncf %68 : vector<4x16x128xf32> to vector<4x16x128xbf16>
      %70 = vector.shape_cast %69 : vector<4x16x128xbf16> to vector<64x128xbf16>
      %c1_100 = arith.constant 1 : index
      %c0_101 = arith.constant 0 : index
      %c0_102 = arith.constant 0 : index
      %c0_103 = arith.constant 0 : index
      %71 = vector.load %arg2[%c1_100, %c0_101, %c0_102, %c0_103] : memref<3x3x128x128xbf16, #tpu.memory_space<vmem>>, vector<1x1x128x128xbf16>
      %72 = vector.shape_cast %71 : vector<1x1x128x128xbf16> to vector<128x128xbf16>
      %cst_104 = arith.constant dense<0.000000e+00> : vector<64x128xf32>
      %73 = tpu.matmul %70, %72, %cst_104 {dimension_numbers = #tpu.dot_dimension_numbers<[1], [0], [0], [1], [0, 0, 1, 1], [], []>} : vector<64x128xbf16>, vector<128x128xbf16>, vector<64x128xf32> -> vector<64x128xf32>
      %74 = arith.addf %65, %73 : vector<64x128xf32>
      %c1_i32_105 = arith.constant 1 : i32
      %75 = arith.addi %39, %c1_i32_105 : i32
      %76 = arith.index_cast %75 : i32 to index
      %c8_106 = arith.constant 8 : index
      %c0_107 = arith.constant 0 : index
      %77 = vector.load %arg9[%76, %c8_106, %c0_107] : memref<18x32x128xf32, #tpu.memory_space<vmem>>, vector<4x16x128xf32>
      %78 = arith.truncf %77 : vector<4x16x128xf32> to vector<4x16x128xbf16>
      %79 = vector.shape_cast %78 : vector<4x16x128xbf16> to vector<64x128xbf16>
      %c1_108 = arith.constant 1 : index
      %c1_109 = arith.constant 1 : index
      %c0_110 = arith.constant 0 : index
      %c0_111 = arith.constant 0 : index
      %80 = vector.load %arg2[%c1_108, %c1_109, %c0_110, %c0_111] : memref<3x3x128x128xbf16, #tpu.memory_space<vmem>>, vector<1x1x128x128xbf16>
      %81 = vector.shape_cast %80 : vector<1x1x128x128xbf16> to vector<128x128xbf16>
      %cst_112 = arith.constant dense<0.000000e+00> : vector<64x128xf32>
      %82 = tpu.matmul %79, %81, %cst_112 {dimension_numbers = #tpu.dot_dimension_numbers<[1], [0], [0], [1], [0, 0, 1, 1], [], []>} : vector<64x128xbf16>, vector<128x128xbf16>, vector<64x128xf32> -> vector<64x128xf32>
      %83 = arith.addf %74, %82 : vector<64x128xf32>
      %c1_i32_113 = arith.constant 1 : i32
      %84 = arith.addi %39, %c1_i32_113 : i32
      %85 = arith.index_cast %84 : i32 to index
      %c9_114 = arith.constant 9 : index
      %c0_115 = arith.constant 0 : index
      %86 = vector.load %arg9[%85, %c9_114, %c0_115] : memref<18x32x128xf32, #tpu.memory_space<vmem>>, vector<4x16x128xf32>
      %87 = arith.truncf %86 : vector<4x16x128xf32> to vector<4x16x128xbf16>
      %88 = vector.shape_cast %87 : vector<4x16x128xbf16> to vector<64x128xbf16>
      %c1_116 = arith.constant 1 : index
      %c2_117 = arith.constant 2 : index
      %c0_118 = arith.constant 0 : index
      %c0_119 = arith.constant 0 : index
      %89 = vector.load %arg2[%c1_116, %c2_117, %c0_118, %c0_119] : memref<3x3x128x128xbf16, #tpu.memory_space<vmem>>, vector<1x1x128x128xbf16>
      %90 = vector.shape_cast %89 : vector<1x1x128x128xbf16> to vector<128x128xbf16>
      %cst_120 = arith.constant dense<0.000000e+00> : vector<64x128xf32>
      %91 = tpu.matmul %88, %90, %cst_120 {dimension_numbers = #tpu.dot_dimension_numbers<[1], [0], [0], [1], [0, 0, 1, 1], [], []>} : vector<64x128xbf16>, vector<128x128xbf16>, vector<64x128xf32> -> vector<64x128xf32>
      %92 = arith.addf %83, %91 : vector<64x128xf32>
      %c2_i32 = arith.constant 2 : i32
      %93 = arith.addi %39, %c2_i32 : i32
      %94 = arith.index_cast %93 : i32 to index
      %c7_121 = arith.constant 7 : index
      %c0_122 = arith.constant 0 : index
      %95 = vector.load %arg9[%94, %c7_121, %c0_122] : memref<18x32x128xf32, #tpu.memory_space<vmem>>, vector<4x16x128xf32>
      %96 = arith.truncf %95 : vector<4x16x128xf32> to vector<4x16x128xbf16>
      %97 = vector.shape_cast %96 : vector<4x16x128xbf16> to vector<64x128xbf16>
      %c2_123 = arith.constant 2 : index
      %c0_124 = arith.constant 0 : index
      %c0_125 = arith.constant 0 : index
      %c0_126 = arith.constant 0 : index
      %98 = vector.load %arg2[%c2_123, %c0_124, %c0_125, %c0_126] : memref<3x3x128x128xbf16, #tpu.memory_space<vmem>>, vector<1x1x128x128xbf16>
      %99 = vector.shape_cast %98 : vector<1x1x128x128xbf16> to vector<128x128xbf16>
      %cst_127 = arith.constant dense<0.000000e+00> : vector<64x128xf32>
      %100 = tpu.matmul %97, %99, %cst_127 {dimension_numbers = #tpu.dot_dimension_numbers<[1], [0], [0], [1], [0, 0, 1, 1], [], []>} : vector<64x128xbf16>, vector<128x128xbf16>, vector<64x128xf32> -> vector<64x128xf32>
      %101 = arith.addf %92, %100 : vector<64x128xf32>
      %c2_i32_128 = arith.constant 2 : i32
      %102 = arith.addi %39, %c2_i32_128 : i32
      %103 = arith.index_cast %102 : i32 to index
      %c8_129 = arith.constant 8 : index
      %c0_130 = arith.constant 0 : index
      %104 = vector.load %arg9[%103, %c8_129, %c0_130] : memref<18x32x128xf32, #tpu.memory_space<vmem>>, vector<4x16x128xf32>
      %105 = arith.truncf %104 : vector<4x16x128xf32> to vector<4x16x128xbf16>
      %106 = vector.shape_cast %105 : vector<4x16x128xbf16> to vector<64x128xbf16>
      %c2_131 = arith.constant 2 : index
      %c1_132 = arith.constant 1 : index
      %c0_133 = arith.constant 0 : index
      %c0_134 = arith.constant 0 : index
      %107 = vector.load %arg2[%c2_131, %c1_132, %c0_133, %c0_134] : memref<3x3x128x128xbf16, #tpu.memory_space<vmem>>, vector<1x1x128x128xbf16>
      %108 = vector.shape_cast %107 : vector<1x1x128x128xbf16> to vector<128x128xbf16>
      %cst_135 = arith.constant dense<0.000000e+00> : vector<64x128xf32>
      %109 = tpu.matmul %106, %108, %cst_135 {dimension_numbers = #tpu.dot_dimension_numbers<[1], [0], [0], [1], [0, 0, 1, 1], [], []>} : vector<64x128xbf16>, vector<128x128xbf16>, vector<64x128xf32> -> vector<64x128xf32>
      %110 = arith.addf %101, %109 : vector<64x128xf32>
      %c2_i32_136 = arith.constant 2 : i32
      %111 = arith.addi %39, %c2_i32_136 : i32
      %112 = arith.index_cast %111 : i32 to index
      %c9_137 = arith.constant 9 : index
      %c0_138 = arith.constant 0 : index
      %113 = vector.load %arg9[%112, %c9_137, %c0_138] : memref<18x32x128xf32, #tpu.memory_space<vmem>>, vector<4x16x128xf32>
      %114 = arith.truncf %113 : vector<4x16x128xf32> to vector<4x16x128xbf16>
      %115 = vector.shape_cast %114 : vector<4x16x128xbf16> to vector<64x128xbf16>
      %c2_139 = arith.constant 2 : index
      %c2_140 = arith.constant 2 : index
      %c0_141 = arith.constant 0 : index
      %c0_142 = arith.constant 0 : index
      %116 = vector.load %arg2[%c2_139, %c2_140, %c0_141, %c0_142] : memref<3x3x128x128xbf16, #tpu.memory_space<vmem>>, vector<1x1x128x128xbf16>
      %117 = vector.shape_cast %116 : vector<1x1x128x128xbf16> to vector<128x128xbf16>
      %cst_143 = arith.constant dense<0.000000e+00> : vector<64x128xf32>
      %118 = tpu.matmul %115, %117, %cst_143 {dimension_numbers = #tpu.dot_dimension_numbers<[1], [0], [0], [1], [0, 0, 1, 1], [], []>} : vector<64x128xbf16>, vector<128x128xbf16>, vector<64x128xf32> -> vector<64x128xf32>
      %119 = arith.addf %110, %118 : vector<64x128xf32>
      %c0_144 = arith.constant 0 : index
      %c0_145 = arith.constant 0 : index
      %120 = vector.load %arg5[%c0_144, %c0_145] : memref<1x128xf32, #tpu.memory_space<vmem>>, vector<1x128xf32>
      %121 = vector.broadcast %120 : vector<1x128xf32> to vector<64x128xf32>
      %122 = arith.addf %119, %121 : vector<64x128xf32>
      %cst_146 = arith.constant 0.000000e+00 : f32
      %123 = vector.broadcast %cst_146 : f32 to vector<64x128xf32>
      %124 = arith.maximumf %122, %123 : vector<64x128xf32>
      %125 = vector.shape_cast %124 : vector<64x128xf32> to vector<4x16x128xf32>
      %c1_i32_147 = arith.constant 1 : i32
      %126 = arith.addi %39, %c1_i32_147 : i32
      %127 = arith.index_cast %126 : i32 to index
      %c8_148 = arith.constant 8 : index
      %c0_149 = arith.constant 0 : index
      %128 = vector.load %arg10[%127, %c8_148, %c0_149] : memref<18x32x128xf32, #tpu.memory_space<vmem>>, vector<4x16x128xf32>
      tpu.vector_store %arg10[%127, %c8_148, %c0_149], %125 {strides = array<i32>} : memref<18x32x128xf32, #tpu.memory_space<vmem>>, vector<4x16x128xf32>,
    }
    %c4_i32_51 = arith.constant 4 : i32
    %c0_i32_52 = arith.constant 0 : i32
    %c4_i32_53 = arith.constant 4 : i32
    %28 = arith.addi %c0_i32_52, %c4_i32_53 : i32
    %c1_i32_54 = arith.constant 1 : i32
    scf.for %arg14 = %c0_i32_52 to %28 step %c1_i32_54  : i32 {
      %c4_i32_74 = arith.constant 4 : i32
      %39 = arith.muli %arg14, %c4_i32_74 : i32
      %c0_i32_75 = arith.constant 0 : i32
      %40 = arith.addi %39, %c0_i32_75 : i32
      %41 = arith.index_cast %40 : i32 to index
      %c7_76 = arith.constant 7 : index
      %c0_77 = arith.constant 0 : index
      %42 = vector.load %arg10[%41, %c7_76, %c0_77] : memref<18x32x128xf32, #tpu.memory_space<vmem>>, vector<4x16x128xf32>
      %43 = arith.truncf %42 : vector<4x16x128xf32> to vector<4x16x128xbf16>
      %44 = vector.shape_cast %43 : vector<4x16x128xbf16> to vector<64x128xbf16>
      %c0_78 = arith.constant 0 : index
      %c0_79 = arith.constant 0 : index
      %c0_80 = arith.constant 0 : index
      %c0_81 = arith.constant 0 : index
      %45 = vector.load %arg3[%c0_78, %c0_79, %c0_80, %c0_81] : memref<3x3x128x256xbf16, #tpu.memory_space<vmem>>, vector<1x1x128x256xbf16>
      %46 = vector.shape_cast %45 : vector<1x1x128x256xbf16> to vector<128x256xbf16>
      %cst_82 = arith.constant dense<0.000000e+00> : vector<64x256xf32>
      %47 = tpu.matmul %44, %46, %cst_82 {dimension_numbers = #tpu.dot_dimension_numbers<[1], [0], [0], [1], [0, 0, 1, 1], [], []>} : vector<64x128xbf16>, vector<128x256xbf16>, vector<64x256xf32> -> vector<64x256xf32>
      %c0_i32_83 = arith.constant 0 : i32
      %48 = arith.addi %39, %c0_i32_83 : i32
      %49 = arith.index_cast %48 : i32 to index
      %c8_84 = arith.constant 8 : index
      %c0_85 = arith.constant 0 : index
      %50 = vector.load %arg10[%49, %c8_84, %c0_85] : memref<18x32x128xf32, #tpu.memory_space<vmem>>, vector<4x16x128xf32>
      %51 = arith.truncf %50 : vector<4x16x128xf32> to vector<4x16x128xbf16>
      %52 = vector.shape_cast %51 : vector<4x16x128xbf16> to vector<64x128xbf16>
      %c0_86 = arith.constant 0 : index
      %c1 = arith.constant 1 : index
      %c0_87 = arith.constant 0 : index
      %c0_88 = arith.constant 0 : index
      %53 = vector.load %arg3[%c0_86, %c1, %c0_87, %c0_88] : memref<3x3x128x256xbf16, #tpu.memory_space<vmem>>, vector<1x1x128x256xbf16>
      %54 = vector.shape_cast %53 : vector<1x1x128x256xbf16> to vector<128x256xbf16>
      %cst_89 = arith.constant dense<0.000000e+00> : vector<64x256xf32>
      %55 = tpu.matmul %52, %54, %cst_89 {dimension_numbers = #tpu.dot_dimension_numbers<[1], [0], [0], [1], [0, 0, 1, 1], [], []>} : vector<64x128xbf16>, vector<128x256xbf16>, vector<64x256xf32> -> vector<64x256xf32>
      %56 = arith.addf %47, %55 : vector<64x256xf32>
      %c0_i32_90 = arith.constant 0 : i32
      %57 = arith.addi %39, %c0_i32_90 : i32
      %58 = arith.index_cast %57 : i32 to index
      %c9_91 = arith.constant 9 : index
      %c0_92 = arith.constant 0 : index
      %59 = vector.load %arg10[%58, %c9_91, %c0_92] : memref<18x32x128xf32, #tpu.memory_space<vmem>>, vector<4x16x128xf32>
      %60 = arith.truncf %59 : vector<4x16x128xf32> to vector<4x16x128xbf16>
      %61 = vector.shape_cast %60 : vector<4x16x128xbf16> to vector<64x128xbf16>
      %c0_93 = arith.constant 0 : index
      %c2 = arith.constant 2 : index
      %c0_94 = arith.constant 0 : index
      %c0_95 = arith.constant 0 : index
      %62 = vector.load %arg3[%c0_93, %c2, %c0_94, %c0_95] : memref<3x3x128x256xbf16, #tpu.memory_space<vmem>>, vector<1x1x128x256xbf16>
      %63 = vector.shape_cast %62 : vector<1x1x128x256xbf16> to vector<128x256xbf16>
      %cst_96 = arith.constant dense<0.000000e+00> : vector<64x256xf32>
      %64 = tpu.matmul %61, %63, %cst_96 {dimension_numbers = #tpu.dot_dimension_numbers<[1], [0], [0], [1], [0, 0, 1, 1], [], []>} : vector<64x128xbf16>, vector<128x256xbf16>, vector<64x256xf32> -> vector<64x256xf32>
      %65 = arith.addf %56, %64 : vector<64x256xf32>
      %c1_i32_97 = arith.constant 1 : i32
      %66 = arith.addi %39, %c1_i32_97 : i32
      %67 = arith.index_cast %66 : i32 to index
      %c7_98 = arith.constant 7 : index
      %c0_99 = arith.constant 0 : index
      %68 = vector.load %arg10[%67, %c7_98, %c0_99] : memref<18x32x128xf32, #tpu.memory_space<vmem>>, vector<4x16x128xf32>
      %69 = arith.truncf %68 : vector<4x16x128xf32> to vector<4x16x128xbf16>
      %70 = vector.shape_cast %69 : vector<4x16x128xbf16> to vector<64x128xbf16>
      %c1_100 = arith.constant 1 : index
      %c0_101 = arith.constant 0 : index
      %c0_102 = arith.constant 0 : index
      %c0_103 = arith.constant 0 : index
      %71 = vector.load %arg3[%c1_100, %c0_101, %c0_102, %c0_103] : memref<3x3x128x256xbf16, #tpu.memory_space<vmem>>, vector<1x1x128x256xbf16>
      %72 = vector.shape_cast %71 : vector<1x1x128x256xbf16> to vector<128x256xbf16>
      %cst_104 = arith.constant dense<0.000000e+00> : vector<64x256xf32>
      %73 = tpu.matmul %70, %72, %cst_104 {dimension_numbers = #tpu.dot_dimension_numbers<[1], [0], [0], [1], [0, 0, 1, 1], [], []>} : vector<64x128xbf16>, vector<128x256xbf16>, vector<64x256xf32> -> vector<64x256xf32>
      %74 = arith.addf %65, %73 : vector<64x256xf32>
      %c1_i32_105 = arith.constant 1 : i32
      %75 = arith.addi %39, %c1_i32_105 : i32
      %76 = arith.index_cast %75 : i32 to index
      %c8_106 = arith.constant 8 : index
      %c0_107 = arith.constant 0 : index
      %77 = vector.load %arg10[%76, %c8_106, %c0_107] : memref<18x32x128xf32, #tpu.memory_space<vmem>>, vector<4x16x128xf32>
      %78 = arith.truncf %77 : vector<4x16x128xf32> to vector<4x16x128xbf16>
      %79 = vector.shape_cast %78 : vector<4x16x128xbf16> to vector<64x128xbf16>
      %c1_108 = arith.constant 1 : index
      %c1_109 = arith.constant 1 : index
      %c0_110 = arith.constant 0 : index
      %c0_111 = arith.constant 0 : index
      %80 = vector.load %arg3[%c1_108, %c1_109, %c0_110, %c0_111] : memref<3x3x128x256xbf16, #tpu.memory_space<vmem>>, vector<1x1x128x256xbf16>
      %81 = vector.shape_cast %80 : vector<1x1x128x256xbf16> to vector<128x256xbf16>
      %cst_112 = arith.constant dense<0.000000e+00> : vector<64x256xf32>
      %82 = tpu.matmul %79, %81, %cst_112 {dimension_numbers = #tpu.dot_dimension_numbers<[1], [0], [0], [1], [0, 0, 1, 1], [], []>} : vector<64x128xbf16>, vector<128x256xbf16>, vector<64x256xf32> -> vector<64x256xf32>
      %83 = arith.addf %74, %82 : vector<64x256xf32>
      %c1_i32_113 = arith.constant 1 : i32
      %84 = arith.addi %39, %c1_i32_113 : i32
      %85 = arith.index_cast %84 : i32 to index
      %c9_114 = arith.constant 9 : index
      %c0_115 = arith.constant 0 : index
      %86 = vector.load %arg10[%85, %c9_114, %c0_115] : memref<18x32x128xf32, #tpu.memory_space<vmem>>, vector<4x16x128xf32>
      %87 = arith.truncf %86 : vector<4x16x128xf32> to vector<4x16x128xbf16>
      %88 = vector.shape_cast %87 : vector<4x16x128xbf16> to vector<64x128xbf16>
      %c1_116 = arith.constant 1 : index
      %c2_117 = arith.constant 2 : index
      %c0_118 = arith.constant 0 : index
      %c0_119 = arith.constant 0 : index
      %89 = vector.load %arg3[%c1_116, %c2_117, %c0_118, %c0_119] : memref<3x3x128x256xbf16, #tpu.memory_space<vmem>>, vector<1x1x128x256xbf16>
      %90 = vector.shape_cast %89 : vector<1x1x128x256xbf16> to vector<128x256xbf16>
      %cst_120 = arith.constant dense<0.000000e+00> : vector<64x256xf32>
      %91 = tpu.matmul %88, %90, %cst_120 {dimension_numbers = #tpu.dot_dimension_numbers<[1], [0], [0], [1], [0, 0, 1, 1], [], []>} : vector<64x128xbf16>, vector<128x256xbf16>, vector<64x256xf32> -> vector<64x256xf32>
      %92 = arith.addf %83, %91 : vector<64x256xf32>
      %c2_i32 = arith.constant 2 : i32
      %93 = arith.addi %39, %c2_i32 : i32
      %94 = arith.index_cast %93 : i32 to index
      %c7_121 = arith.constant 7 : index
      %c0_122 = arith.constant 0 : index
      %95 = vector.load %arg10[%94, %c7_121, %c0_122] : memref<18x32x128xf32, #tpu.memory_space<vmem>>, vector<4x16x128xf32>
      %96 = arith.truncf %95 : vector<4x16x128xf32> to vector<4x16x128xbf16>
      %97 = vector.shape_cast %96 : vector<4x16x128xbf16> to vector<64x128xbf16>
      %c2_123 = arith.constant 2 : index
      %c0_124 = arith.constant 0 : index
      %c0_125 = arith.constant 0 : index
      %c0_126 = arith.constant 0 : index
      %98 = vector.load %arg3[%c2_123, %c0_124, %c0_125, %c0_126] : memref<3x3x128x256xbf16, #tpu.memory_space<vmem>>, vector<1x1x128x256xbf16>
      %99 = vector.shape_cast %98 : vector<1x1x128x256xbf16> to vector<128x256xbf16>
      %cst_127 = arith.constant dense<0.000000e+00> : vector<64x256xf32>
      %100 = tpu.matmul %97, %99, %cst_127 {dimension_numbers = #tpu.dot_dimension_numbers<[1], [0], [0], [1], [0, 0, 1, 1], [], []>} : vector<64x128xbf16>, vector<128x256xbf16>, vector<64x256xf32> -> vector<64x256xf32>
      %101 = arith.addf %92, %100 : vector<64x256xf32>
      %c2_i32_128 = arith.constant 2 : i32
      %102 = arith.addi %39, %c2_i32_128 : i32
      %103 = arith.index_cast %102 : i32 to index
      %c8_129 = arith.constant 8 : index
      %c0_130 = arith.constant 0 : index
      %104 = vector.load %arg10[%103, %c8_129, %c0_130] : memref<18x32x128xf32, #tpu.memory_space<vmem>>, vector<4x16x128xf32>
      %105 = arith.truncf %104 : vector<4x16x128xf32> to vector<4x16x128xbf16>
      %106 = vector.shape_cast %105 : vector<4x16x128xbf16> to vector<64x128xbf16>
      %c2_131 = arith.constant 2 : index
      %c1_132 = arith.constant 1 : index
      %c0_133 = arith.constant 0 : index
      %c0_134 = arith.constant 0 : index
      %107 = vector.load %arg3[%c2_131, %c1_132, %c0_133, %c0_134] : memref<3x3x128x256xbf16, #tpu.memory_space<vmem>>, vector<1x1x128x256xbf16>
      %108 = vector.shape_cast %107 : vector<1x1x128x256xbf16> to vector<128x256xbf16>
      %cst_135 = arith.constant dense<0.000000e+00> : vector<64x256xf32>
      %109 = tpu.matmul %106, %108, %cst_135 {dimension_numbers = #tpu.dot_dimension_numbers<[1], [0], [0], [1], [0, 0, 1, 1], [], []>} : vector<64x128xbf16>, vector<128x256xbf16>, vector<64x256xf32> -> vector<64x256xf32>
      %110 = arith.addf %101, %109 : vector<64x256xf32>
      %c2_i32_136 = arith.constant 2 : i32
      %111 = arith.addi %39, %c2_i32_136 : i32
      %112 = arith.index_cast %111 : i32 to index
      %c9_137 = arith.constant 9 : index
      %c0_138 = arith.constant 0 : index
      %113 = vector.load %arg10[%112, %c9_137, %c0_138] : memref<18x32x128xf32, #tpu.memory_space<vmem>>, vector<4x16x128xf32>
      %114 = arith.truncf %113 : vector<4x16x128xf32> to vector<4x16x128xbf16>
      %115 = vector.shape_cast %114 : vector<4x16x128xbf16> to vector<64x128xbf16>
      %c2_139 = arith.constant 2 : index
      %c2_140 = arith.constant 2 : index
      %c0_141 = arith.constant 0 : index
      %c0_142 = arith.constant 0 : index
      %116 = vector.load %arg3[%c2_139, %c2_140, %c0_141, %c0_142] : memref<3x3x128x256xbf16, #tpu.memory_space<vmem>>, vector<1x1x128x256xbf16>
      %117 = vector.shape_cast %116 : vector<1x1x128x256xbf16> to vector<128x256xbf16>
      %cst_143 = arith.constant dense<0.000000e+00> : vector<64x256xf32>
      %118 = tpu.matmul %115, %117, %cst_143 {dimension_numbers = #tpu.dot_dimension_numbers<[1], [0], [0], [1], [0, 0, 1, 1], [], []>} : vector<64x128xbf16>, vector<128x256xbf16>, vector<64x256xf32> -> vector<64x256xf32>
      %119 = arith.addf %110, %118 : vector<64x256xf32>
      %c0_144 = arith.constant 0 : index
      %c0_145 = arith.constant 0 : index
      %120 = vector.load %arg6[%c0_144, %c0_145] : memref<1x256xf32, #tpu.memory_space<vmem>>, vector<1x256xf32>
      %121 = vector.broadcast %120 : vector<1x256xf32> to vector<64x256xf32>
      %122 = arith.addf %119, %121 : vector<64x256xf32>
      %cst_146 = arith.constant 0.000000e+00 : f32
      %123 = vector.broadcast %cst_146 : f32 to vector<64x256xf32>
      %124 = arith.maximumf %122, %123 : vector<64x256xf32>
      %125 = vector.shape_cast %124 : vector<64x256xf32> to vector<4x16x256xf32>
      %c1_i32_147 = arith.constant 1 : i32
      %126 = arith.addi %39, %c1_i32_147 : i32
      %127 = arith.index_cast %126 : i32 to index
      %c8_148 = arith.constant 8 : index
      %c0_149 = arith.constant 0 : index
      %128 = vector.load %arg11[%127, %c8_148, %c0_149] : memref<18x32x256xf32, #tpu.memory_space<vmem>>, vector<4x16x256xf32>
      tpu.vector_store %arg11[%127, %c8_148, %c0_149], %125 {strides = array<i32>} : memref<18x32x256xf32, #tpu.memory_space<vmem>>, vector<4x16x256xf32>,
    }
    %c4_i32_55 = arith.constant 4 : i32
    %c0_i32_56 = arith.constant 0 : i32
    %c4_i32_57 = arith.constant 4 : i32
    %29 = arith.addi %c0_i32_56, %c4_i32_57 : i32
    %c1_i32_58 = arith.constant 1 : i32
    scf.for %arg14 = %c0_i32_56 to %29 step %c1_i32_58  : i32 {
      %c4_i32_74 = arith.constant 4 : i32
      %39 = arith.muli %arg14, %c4_i32_74 : i32
      %c0_i32_75 = arith.constant 0 : i32
      %40 = arith.addi %39, %c0_i32_75 : i32
      %41 = arith.index_cast %40 : i32 to index
      %c7_76 = arith.constant 7 : index
      %c0_77 = arith.constant 0 : index
      %42 = vector.load %arg11[%41, %c7_76, %c0_77] : memref<18x32x256xf32, #tpu.memory_space<vmem>>, vector<4x16x256xf32>
      %43 = arith.truncf %42 : vector<4x16x256xf32> to vector<4x16x256xbf16>
      %44 = vector.shape_cast %43 : vector<4x16x256xbf16> to vector<64x256xbf16>
      %c0_78 = arith.constant 0 : index
      %c0_79 = arith.constant 0 : index
      %c0_80 = arith.constant 0 : index
      %c0_81 = arith.constant 0 : index
      %45 = vector.load %arg4[%c0_78, %c0_79, %c0_80, %c0_81] : memref<3x3x256x128xbf16, #tpu.memory_space<vmem>>, vector<1x1x256x128xbf16>
      %46 = vector.shape_cast %45 : vector<1x1x256x128xbf16> to vector<256x128xbf16>
      %cst_82 = arith.constant dense<0.000000e+00> : vector<64x128xf32>
      %47 = tpu.matmul %44, %46, %cst_82 {dimension_numbers = #tpu.dot_dimension_numbers<[1], [0], [0], [1], [0, 0, 1, 1], [], []>} : vector<64x256xbf16>, vector<256x128xbf16>, vector<64x128xf32> -> vector<64x128xf32>
      %c0_i32_83 = arith.constant 0 : i32
      %48 = arith.addi %39, %c0_i32_83 : i32
      %49 = arith.index_cast %48 : i32 to index
      %c8_84 = arith.constant 8 : index
      %c0_85 = arith.constant 0 : index
      %50 = vector.load %arg11[%49, %c8_84, %c0_85] : memref<18x32x256xf32, #tpu.memory_space<vmem>>, vector<4x16x256xf32>
      %51 = arith.truncf %50 : vector<4x16x256xf32> to vector<4x16x256xbf16>
      %52 = vector.shape_cast %51 : vector<4x16x256xbf16> to vector<64x256xbf16>
      %c0_86 = arith.constant 0 : index
      %c1 = arith.constant 1 : index
      %c0_87 = arith.constant 0 : index
      %c0_88 = arith.constant 0 : index
      %53 = vector.load %arg4[%c0_86, %c1, %c0_87, %c0_88] : memref<3x3x256x128xbf16, #tpu.memory_space<vmem>>, vector<1x1x256x128xbf16>
      %54 = vector.shape_cast %53 : vector<1x1x256x128xbf16> to vector<256x128xbf16>
      %cst_89 = arith.constant dense<0.000000e+00> : vector<64x128xf32>
      %55 = tpu.matmul %52, %54, %cst_89 {dimension_numbers = #tpu.dot_dimension_numbers<[1], [0], [0], [1], [0, 0, 1, 1], [], []>} : vector<64x256xbf16>, vector<256x128xbf16>, vector<64x128xf32> -> vector<64x128xf32>
      %56 = arith.addf %47, %55 : vector<64x128xf32>
      %c0_i32_90 = arith.constant 0 : i32
      %57 = arith.addi %39, %c0_i32_90 : i32
      %58 = arith.index_cast %57 : i32 to index
      %c9_91 = arith.constant 9 : index
      %c0_92 = arith.constant 0 : index
      %59 = vector.load %arg11[%58, %c9_91, %c0_92] : memref<18x32x256xf32, #tpu.memory_space<vmem>>, vector<4x16x256xf32>
      %60 = arith.truncf %59 : vector<4x16x256xf32> to vector<4x16x256xbf16>
      %61 = vector.shape_cast %60 : vector<4x16x256xbf16> to vector<64x256xbf16>
      %c0_93 = arith.constant 0 : index
      %c2 = arith.constant 2 : index
      %c0_94 = arith.constant 0 : index
      %c0_95 = arith.constant 0 : index
      %62 = vector.load %arg4[%c0_93, %c2, %c0_94, %c0_95] : memref<3x3x256x128xbf16, #tpu.memory_space<vmem>>, vector<1x1x256x128xbf16>
      %63 = vector.shape_cast %62 : vector<1x1x256x128xbf16> to vector<256x128xbf16>
      %cst_96 = arith.constant dense<0.000000e+00> : vector<64x128xf32>
      %64 = tpu.matmul %61, %63, %cst_96 {dimension_numbers = #tpu.dot_dimension_numbers<[1], [0], [0], [1], [0, 0, 1, 1], [], []>} : vector<64x256xbf16>, vector<256x128xbf16>, vector<64x128xf32> -> vector<64x128xf32>
      %65 = arith.addf %56, %64 : vector<64x128xf32>
      %c1_i32_97 = arith.constant 1 : i32
      %66 = arith.addi %39, %c1_i32_97 : i32
      %67 = arith.index_cast %66 : i32 to index
      %c7_98 = arith.constant 7 : index
      %c0_99 = arith.constant 0 : index
      %68 = vector.load %arg11[%67, %c7_98, %c0_99] : memref<18x32x256xf32, #tpu.memory_space<vmem>>, vector<4x16x256xf32>
      %69 = arith.truncf %68 : vector<4x16x256xf32> to vector<4x16x256xbf16>
      %70 = vector.shape_cast %69 : vector<4x16x256xbf16> to vector<64x256xbf16>
      %c1_100 = arith.constant 1 : index
      %c0_101 = arith.constant 0 : index
      %c0_102 = arith.constant 0 : index
      %c0_103 = arith.constant 0 : index
      %71 = vector.load %arg4[%c1_100, %c0_101, %c0_102, %c0_103] : memref<3x3x256x128xbf16, #tpu.memory_space<vmem>>, vector<1x1x256x128xbf16>
      %72 = vector.shape_cast %71 : vector<1x1x256x128xbf16> to vector<256x128xbf16>
      %cst_104 = arith.constant dense<0.000000e+00> : vector<64x128xf32>
      %73 = tpu.matmul %70, %72, %cst_104 {dimension_numbers = #tpu.dot_dimension_numbers<[1], [0], [0], [1], [0, 0, 1, 1], [], []>} : vector<64x256xbf16>, vector<256x128xbf16>, vector<64x128xf32> -> vector<64x128xf32>
      %74 = arith.addf %65, %73 : vector<64x128xf32>
      %c1_i32_105 = arith.constant 1 : i32
      %75 = arith.addi %39, %c1_i32_105 : i32
      %76 = arith.index_cast %75 : i32 to index
      %c8_106 = arith.constant 8 : index
      %c0_107 = arith.constant 0 : index
      %77 = vector.load %arg11[%76, %c8_106, %c0_107] : memref<18x32x256xf32, #tpu.memory_space<vmem>>, vector<4x16x256xf32>
      %78 = arith.truncf %77 : vector<4x16x256xf32> to vector<4x16x256xbf16>
      %79 = vector.shape_cast %78 : vector<4x16x256xbf16> to vector<64x256xbf16>
      %c1_108 = arith.constant 1 : index
      %c1_109 = arith.constant 1 : index
      %c0_110 = arith.constant 0 : index
      %c0_111 = arith.constant 0 : index
      %80 = vector.load %arg4[%c1_108, %c1_109, %c0_110, %c0_111] : memref<3x3x256x128xbf16, #tpu.memory_space<vmem>>, vector<1x1x256x128xbf16>
      %81 = vector.shape_cast %80 : vector<1x1x256x128xbf16> to vector<256x128xbf16>
      %cst_112 = arith.constant dense<0.000000e+00> : vector<64x128xf32>
      %82 = tpu.matmul %79, %81, %cst_112 {dimension_numbers = #tpu.dot_dimension_numbers<[1], [0], [0], [1], [0, 0, 1, 1], [], []>} : vector<64x256xbf16>, vector<256x128xbf16>, vector<64x128xf32> -> vector<64x128xf32>
      %83 = arith.addf %74, %82 : vector<64x128xf32>
      %c1_i32_113 = arith.constant 1 : i32
      %84 = arith.addi %39, %c1_i32_113 : i32
      %85 = arith.index_cast %84 : i32 to index
      %c9_114 = arith.constant 9 : index
      %c0_115 = arith.constant 0 : index
      %86 = vector.load %arg11[%85, %c9_114, %c0_115] : memref<18x32x256xf32, #tpu.memory_space<vmem>>, vector<4x16x256xf32>
      %87 = arith.truncf %86 : vector<4x16x256xf32> to vector<4x16x256xbf16>
      %88 = vector.shape_cast %87 : vector<4x16x256xbf16> to vector<64x256xbf16>
      %c1_116 = arith.constant 1 : index
      %c2_117 = arith.constant 2 : index
      %c0_118 = arith.constant 0 : index
      %c0_119 = arith.constant 0 : index
      %89 = vector.load %arg4[%c1_116, %c2_117, %c0_118, %c0_119] : memref<3x3x256x128xbf16, #tpu.memory_space<vmem>>, vector<1x1x256x128xbf16>
      %90 = vector.shape_cast %89 : vector<1x1x256x128xbf16> to vector<256x128xbf16>
      %cst_120 = arith.constant dense<0.000000e+00> : vector<64x128xf32>
      %91 = tpu.matmul %88, %90, %cst_120 {dimension_numbers = #tpu.dot_dimension_numbers<[1], [0], [0], [1], [0, 0, 1, 1], [], []>} : vector<64x256xbf16>, vector<256x128xbf16>, vector<64x128xf32> -> vector<64x128xf32>
      %92 = arith.addf %83, %91 : vector<64x128xf32>
      %c2_i32 = arith.constant 2 : i32
      %93 = arith.addi %39, %c2_i32 : i32
      %94 = arith.index_cast %93 : i32 to index
      %c7_121 = arith.constant 7 : index
      %c0_122 = arith.constant 0 : index
      %95 = vector.load %arg11[%94, %c7_121, %c0_122] : memref<18x32x256xf32, #tpu.memory_space<vmem>>, vector<4x16x256xf32>
      %96 = arith.truncf %95 : vector<4x16x256xf32> to vector<4x16x256xbf16>
      %97 = vector.shape_cast %96 : vector<4x16x256xbf16> to vector<64x256xbf16>
      %c2_123 = arith.constant 2 : index
      %c0_124 = arith.constant 0 : index
      %c0_125 = arith.constant 0 : index
      %c0_126 = arith.constant 0 : index
      %98 = vector.load %arg4[%c2_123, %c0_124, %c0_125, %c0_126] : memref<3x3x256x128xbf16, #tpu.memory_space<vmem>>, vector<1x1x256x128xbf16>
      %99 = vector.shape_cast %98 : vector<1x1x256x128xbf16> to vector<256x128xbf16>
      %cst_127 = arith.constant dense<0.000000e+00> : vector<64x128xf32>
      %100 = tpu.matmul %97, %99, %cst_127 {dimension_numbers = #tpu.dot_dimension_numbers<[1], [0], [0], [1], [0, 0, 1, 1], [], []>} : vector<64x256xbf16>, vector<256x128xbf16>, vector<64x128xf32> -> vector<64x128xf32>
      %101 = arith.addf %92, %100 : vector<64x128xf32>
      %c2_i32_128 = arith.constant 2 : i32
      %102 = arith.addi %39, %c2_i32_128 : i32
      %103 = arith.index_cast %102 : i32 to index
      %c8_129 = arith.constant 8 : index
      %c0_130 = arith.constant 0 : index
      %104 = vector.load %arg11[%103, %c8_129, %c0_130] : memref<18x32x256xf32, #tpu.memory_space<vmem>>, vector<4x16x256xf32>
      %105 = arith.truncf %104 : vector<4x16x256xf32> to vector<4x16x256xbf16>
      %106 = vector.shape_cast %105 : vector<4x16x256xbf16> to vector<64x256xbf16>
      %c2_131 = arith.constant 2 : index
      %c1_132 = arith.constant 1 : index
      %c0_133 = arith.constant 0 : index
      %c0_134 = arith.constant 0 : index
      %107 = vector.load %arg4[%c2_131, %c1_132, %c0_133, %c0_134] : memref<3x3x256x128xbf16, #tpu.memory_space<vmem>>, vector<1x1x256x128xbf16>
      %108 = vector.shape_cast %107 : vector<1x1x256x128xbf16> to vector<256x128xbf16>
      %cst_135 = arith.constant dense<0.000000e+00> : vector<64x128xf32>
      %109 = tpu.matmul %106, %108, %cst_135 {dimension_numbers = #tpu.dot_dimension_numbers<[1], [0], [0], [1], [0, 0, 1, 1], [], []>} : vector<64x256xbf16>, vector<256x128xbf16>, vector<64x128xf32> -> vector<64x128xf32>
      %110 = arith.addf %101, %109 : vector<64x128xf32>
      %c2_i32_136 = arith.constant 2 : i32
      %111 = arith.addi %39, %c2_i32_136 : i32
      %112 = arith.index_cast %111 : i32 to index
      %c9_137 = arith.constant 9 : index
      %c0_138 = arith.constant 0 : index
      %113 = vector.load %arg11[%112, %c9_137, %c0_138] : memref<18x32x256xf32, #tpu.memory_space<vmem>>, vector<4x16x256xf32>
      %114 = arith.truncf %113 : vector<4x16x256xf32> to vector<4x16x256xbf16>
      %115 = vector.shape_cast %114 : vector<4x16x256xbf16> to vector<64x256xbf16>
      %c2_139 = arith.constant 2 : index
      %c2_140 = arith.constant 2 : index
      %c0_141 = arith.constant 0 : index
      %c0_142 = arith.constant 0 : index
      %116 = vector.load %arg4[%c2_139, %c2_140, %c0_141, %c0_142] : memref<3x3x256x128xbf16, #tpu.memory_space<vmem>>, vector<1x1x256x128xbf16>
      %117 = vector.shape_cast %116 : vector<1x1x256x128xbf16> to vector<256x128xbf16>
      %cst_143 = arith.constant dense<0.000000e+00> : vector<64x128xf32>
      %118 = tpu.matmul %115, %117, %cst_143 {dimension_numbers = #tpu.dot_dimension_numbers<[1], [0], [0], [1], [0, 0, 1, 1], [], []>} : vector<64x256xbf16>, vector<256x128xbf16>, vector<64x128xf32> -> vector<64x128xf32>
      %119 = arith.addf %110, %118 : vector<64x128xf32>
      %c0_144 = arith.constant 0 : index
      %c0_145 = arith.constant 0 : index
      %120 = vector.load %arg7[%c0_144, %c0_145] : memref<1x128xf32, #tpu.memory_space<vmem>>, vector<1x128xf32>
      %121 = vector.broadcast %120 : vector<1x128xf32> to vector<64x128xf32>
      %122 = arith.addf %119, %121 : vector<64x128xf32>
      %123 = vector.shape_cast %122 : vector<64x128xf32> to vector<4x16x128xf32>
      %c0_146 = arith.constant 0 : index
      %124 = arith.index_cast %39 : i32 to index
      %c0_147 = arith.constant 0 : index
      %c0_148 = arith.constant 0 : index
      %125 = vector.load %arg1[%c0_146, %124, %c0_147, %c0_148] : memref<1x16x16x128xf32, #tpu.memory_space<vmem>>, vector<1x4x16x128xf32>
      %126 = vector.shape_cast %125 : vector<1x4x16x128xf32> to vector<4x16x128xf32>
      %127 = arith.addf %123, %126 : vector<4x16x128xf32>
      %cst_149 = arith.constant 0.000000e+00 : f32
      %128 = vector.broadcast %cst_149 : f32 to vector<4x16x128xf32>
      %129 = arith.maximumf %127, %128 : vector<4x16x128xf32>
      %130 = arith.index_cast %39 : i32 to index
      %c0_150 = arith.constant 0 : index
      %c0_151 = arith.constant 0 : index
      %131 = vector.load %arg12[%130, %c0_150, %c0_151] : memref<16x16x128xf32, #tpu.memory_space<vmem>>, vector<4x16x128xf32>
      tpu.vector_store %arg12[%130, %c0_150, %c0_151], %129 {strides = array<i32>} : memref<16x16x128xf32, #tpu.memory_space<vmem>>, vector<4x16x128xf32>,
    }
    %c4_i32_59 = arith.constant 4 : i32
    %c0_i32_60 = arith.constant 0 : i32
    %c8_i32 = arith.constant 8 : i32
    %30 = arith.addi %c0_i32_60, %c8_i32 : i32
    %c1_i32_61 = arith.constant 1 : i32
    scf.for %arg14 = %c0_i32_60 to %30 step %c1_i32_61  : i32 {
      %c2_i32 = arith.constant 2 : i32
      %39 = arith.muli %c2_i32, %arg14 : i32
      %c1_i32_74 = arith.constant 1 : i32
      %40 = arith.subi %39, %c1_i32_74 : i32
      %c0_i32_75 = arith.constant 0 : i32
      %41 = arith.maxsi %40, %c0_i32_75 : i32
      %42 = arith.index_cast %41 : i32 to index
      %c0_76 = arith.constant 0 : index
      %c0_77 = arith.constant 0 : index
      %43 = vector.load %arg12[%42, %c0_76, %c0_77] : memref<16x16x128xf32, #tpu.memory_space<vmem>>, vector<1x16x128xf32>
      %c2_i32_78 = arith.constant 2 : i32
      %44 = arith.muli %c2_i32_78, %arg14 : i32
      %45 = arith.index_cast %44 : i32 to index
      %c0_79 = arith.constant 0 : index
      %c0_80 = arith.constant 0 : index
      %46 = vector.load %arg12[%45, %c0_79, %c0_80] : memref<16x16x128xf32, #tpu.memory_space<vmem>>, vector<1x16x128xf32>
      %c2_i32_81 = arith.constant 2 : i32
      %47 = arith.muli %c2_i32_81, %arg14 : i32
      %c1_i32_82 = arith.constant 1 : i32
      %48 = arith.addi %47, %c1_i32_82 : i32
      %49 = arith.index_cast %48 : i32 to index
      %c0_83 = arith.constant 0 : index
      %c0_84 = arith.constant 0 : index
      %50 = vector.load %arg12[%49, %c0_83, %c0_84] : memref<16x16x128xf32, #tpu.memory_space<vmem>>, vector<1x16x128xf32>
      %51 = arith.maximumf %43, %46 : vector<1x16x128xf32>
      %52 = arith.maximumf %51, %50 : vector<1x16x128xf32>
      %53 = arith.index_cast %arg14 : i32 to index
      %c8_85 = arith.constant 8 : index
      %c0_86 = arith.constant 0 : index
      %54 = vector.load %arg13[%53, %c8_85, %c0_86] : memref<8x24x128xf32, #tpu.memory_space<vmem>>, vector<1x16x128xf32>
      tpu.vector_store %arg13[%53, %c8_85, %c0_86], %52 {strides = array<i32>} : memref<8x24x128xf32, #tpu.memory_space<vmem>>, vector<1x16x128xf32>,
    }
    %c8_i32_62 = arith.constant 8 : i32
    %c0_63 = arith.constant 0 : index
    %c7_64 = arith.constant 7 : index
    %c0_65 = arith.constant 0 : index
    %31 = tpu.strided_load %arg13[%c0_63, %c7_64, %c0_65] {strides = array<i32: 1, 2, 1>} : memref<8x24x128xf32, #tpu.memory_space<vmem>>, vector<8x8x128xf32>
    %c0_66 = arith.constant 0 : index
    %c8 = arith.constant 8 : index
    %c0_67 = arith.constant 0 : index
    %32 = tpu.strided_load %arg13[%c0_66, %c8, %c0_67] {strides = array<i32: 1, 2, 1>} : memref<8x24x128xf32, #tpu.memory_space<vmem>>, vector<8x8x128xf32>
    %c0_68 = arith.constant 0 : index
    %c9 = arith.constant 9 : index
    %c0_69 = arith.constant 0 : index
    %33 = tpu.strided_load %arg13[%c0_68, %c9, %c0_69] {strides = array<i32: 1, 2, 1>} : memref<8x24x128xf32, #tpu.memory_space<vmem>>, vector<8x8x128xf32>
    %34 = arith.maximumf %31, %32 : vector<8x8x128xf32>
    %35 = arith.maximumf %34, %33 : vector<8x8x128xf32>
    %c0_70 = arith.constant 0 : index
    %c0_71 = arith.constant 0 : index
    %c0_72 = arith.constant 0 : index
    %c0_73 = arith.constant 0 : index
    %36 = vector.load %arg8[%c0_70, %c0_71, %c0_72, %c0_73] : memref<1x8x8x128xf32, #tpu.memory_space<vmem>>, vector<1x8x8x128xf32>
    %37 = vector.shape_cast %36 : vector<1x8x8x128xf32> to vector<8x8x128xf32>
    %38 = vector.shape_cast %35 : vector<8x8x128xf32> to vector<1x8x8x128xf32>
    tpu.vector_store %arg8[%c0_70, %c0_71, %c0_72, %c0_73], %38 {strides = array<i32>} : memref<1x8x8x128xf32, #tpu.memory_space<vmem>>, vector<1x8x8x128xf32>,
    return
  }
  func.func @transform_0(%arg0: i32) -> (i32, i32, i32, i32) {
    %c0_i32 = arith.constant 0 : i32
    %c0_i32_0 = arith.constant 0 : i32
    %c0_i32_1 = arith.constant 0 : i32
    %c0_i32_2 = arith.constant 0 : i32
    return %arg0, %c0_i32, %c0_i32_0, %c0_i32_1 : i32, i32, i32, i32
  }
  func.func @transform_1(%arg0: i32) -> (i32, i32, i32, i32) {
    %c0_i32 = arith.constant 0 : i32
    %c0_i32_0 = arith.constant 0 : i32
    %c0_i32_1 = arith.constant 0 : i32
    %c0_i32_2 = arith.constant 0 : i32
    %c0_i32_3 = arith.constant 0 : i32
    return %c0_i32, %c0_i32_0, %c0_i32_1, %c0_i32_2 : i32, i32, i32, i32
  }
  func.func @transform_2(%arg0: i32) -> (i32, i32, i32, i32) {
    %c0_i32 = arith.constant 0 : i32
    %c0_i32_0 = arith.constant 0 : i32
    %c0_i32_1 = arith.constant 0 : i32
    %c0_i32_2 = arith.constant 0 : i32
    %c0_i32_3 = arith.constant 0 : i32
    return %c0_i32, %c0_i32_0, %c0_i32_1, %c0_i32_2 : i32, i32, i32, i32
  }
  func.func @transform_3(%arg0: i32) -> (i32, i32, i32, i32) {
    %c0_i32 = arith.constant 0 : i32
    %c0_i32_0 = arith.constant 0 : i32
    %c0_i32_1 = arith.constant 0 : i32
    %c0_i32_2 = arith.constant 0 : i32
    %c0_i32_3 = arith.constant 0 : i32
    return %c0_i32, %c0_i32_0, %c0_i32_1, %c0_i32_2 : i32, i32, i32, i32
  }
  func.func @transform_4(%arg0: i32) -> (i32, i32) {
    %c0_i32 = arith.constant 0 : i32
    %c0_i32_0 = arith.constant 0 : i32
    %c0_i32_1 = arith.constant 0 : i32
    return %c0_i32, %c0_i32_0 : i32, i32
  }
  func.func @transform_5(%arg0: i32) -> (i32, i32) {
    %c0_i32 = arith.constant 0 : i32
    %c0_i32_0 = arith.constant 0 : i32
    %c0_i32_1 = arith.constant 0 : i32
    return %c0_i32, %c0_i32_0 : i32, i32
  }
  func.func @transform_6(%arg0: i32) -> (i32, i32) {
    %c0_i32 = arith.constant 0 : i32
    %c0_i32_0 = arith.constant 0 : i32
    %c0_i32_1 = arith.constant 0 : i32
    return %c0_i32, %c0_i32_0 : i32, i32
  }
  func.func @transform_7(%arg0: i32) -> (i32, i32, i32, i32) {
    %c0_i32 = arith.constant 0 : i32
    %c0_i32_0 = arith.constant 0 : i32
    %c0_i32_1 = arith.constant 0 : i32
    %c0_i32_2 = arith.constant 0 : i32
    return %arg0, %c0_i32, %c0_i32_0, %c0_i32_1 : i32, i32, i32, i32
  }
}

</mosaic_0001>

<llo_original>
// kernel: tpu_custom_call.1
$region0: #{tpu_custom_call.1}
  #allocation0 [shape = 'u32[]', space=smem, size = 0x4, offset = 0x4, fixed_abs, tag = 'smem constant byte address 0x4 - core index']
  #allocation1 [shape = 'u32[144,128]{1,0:T(1,128)}', space=vmem, size = 0x12000, scoped, tag = 'internal scratch']
  #allocation2 [shape = 'f32[18,32,128]{2,1,0:T(8,128)}', space=vmem, size = 0x48000, scoped, tag = 'scratch operand']
  #allocation3 [shape = 'f32[18,32,128]{2,1,0:T(8,128)}', space=vmem, size = 0x48000, scoped, tag = 'scratch operand']
  #allocation4 [shape = 'f32[18,32,256]{2,1,0:T(8,128)}', space=vmem, size = 0x90000, scoped, tag = 'scratch operand']
  #allocation5 [shape = 'f32[16,16,128]{2,1,0:T(8,128)}', space=vmem, size = 0x20000, scoped, tag = 'scratch operand']
  #allocation6 [shape = 'f32[8,24,128]{2,1,0:T(8,128)}', space=vmem, size = 0x18000, scoped, tag = 'scratch operand']
  %s0 = inlined_call_operand.hbm [shape: f32[2,16,16,128], index: 0, kind: input, shape index: {}]
  %s1 = inlined_call_operand.hbm [shape: bf16[3,3,128,128], index: 1, kind: input, shape index: {}]
  %s2 = inlined_call_operand.hbm [shape: bf16[3,3,128,256], index: 2, kind: input, shape index: {}]
  %s3 = inlined_call_operand.hbm [shape: bf16[3,3,256,128], index: 3, kind: input, shape index: {}]
  %s4 = inlined_call_operand.vmem [shape: f32[1,128], index: 4, kind: input, shape index: {}]
  %s5 = inlined_call_operand.vmem [shape: f32[1,256], index: 5, kind: input, shape index: {}]
  %s6 = inlined_call_operand.vmem [shape: f32[1,128], index: 6, kind: input, shape index: {}]
  %s7 = inlined_call_operand.hbm [shape: f32[2,8,8,128], index: 7, kind: output, shape index: {}]
  %s8 = sld [smem:[#allocation0]]
  $region112: #{tpu_custom_call.1} parent=0
    _
  %s10 = ssub.s32 1, %s8
  %s11 = scalar_select 0, %s10, %s8
  $region1: #{tpu_custom_call.1} parent=0
    #allocation7 [shape = 'u8[262144]{0}', space=vmem, size = 0x40000, scoped, tag = 'input window, operand 0']
    #allocation8 [shape = 's32[2]{0}', space=sflag, size = 0x8, scoped, tag = 'scoped memory for tpu_custom_call.1']
    #allocation9 [shape = 's32[2]{0}', space=sflag, size = 0x8, scoped, tag = 'scoped memory for tpu_custom_call.1']
    #allocation10 [shape = 'u8[294912]{0}', space=vmem, size = 0x48000, scoped, tag = 'input window, operand 1, single buffered']
    #allocation11 [shape = 's32[1]{0}', space=sflag, size = 0x4, scoped, tag = 'scoped memory for tpu_custom_call.1']
    #allocation12 [shape = 'u8[589824]{0}', space=vmem, size = 0x90000, scoped, tag = 'input window, operand 2, single buffered']
    #allocation13 [shape = 'u8[589824]{0}', space=vmem, size = 0x90000, scoped, tag = 'input window, operand 3, single buffered']
    #allocation14 [shape = 's32[1]{0}', space=sflag, size = 0x4, scoped, tag = 'scoped memory for tpu_custom_call.1']
    #allocation15 [shape = 'u8[65536]{0}', space=vmem, size = 0x10000, scoped, tag = 'output window, operand 0']
    %12 = vsyncpa [#allocation8], 0
    %s13 = scalar_lea.sflag [#allocation8], 1
    %14 = vsyncpa %s13, 0
    %15 = vsyncpa [#allocation11], 0
    %16 = vsyncpa [#allocation14], 0
    %17 = vsyncpa [#allocation9], 0
    %s18 = scalar_lea.sflag [#allocation9], 1
    %19 = vsyncpa %s18, 0
    loop: start=0, step=1, limit=4
    $region2: #{tpu_custom_call.1} parent=1 // loop_pre_header
      _
    $region3: #{tpu_custom_call.1} parent=1 // loop_header
      %s21 = sphi 0, %s25
      %p22 = scmp.ge.s32.totalorder %s21, 4
      %s31 = sphi 0, %s33
      %s34 = sphi 0, %s31
      %s35 = sphi 0, %s34
      %s51 = sphi 0, %s35
      %s55 = sphi 0, %s55
      %s57 = sphi 0, %s55
      %s58 = sphi 0, %s57
      %s72 = sphi 0, %s58
      %s76 = sphi 0, %s76
      %s78 = sphi 0, %s76
      %s79 = sphi 0, %s78
      %s93 = sphi 0, %s79
      %s97 = sphi 0, %s97
      %s99 = sphi 0, %s97
      %s100 = sphi 0, %s99
      %s114 = sphi 0, %s100
      %s118 = sphi 0, %s118
      %s120 = sphi 0, %s118
      %s121 = sphi 0, %s120
      %s135 = sphi 0, %s121
      %s139 = sphi 0, %s139
      %s141 = sphi 0, %s139
      %s142 = sphi 0, %s141
      %s156 = sphi 0, %s142
      %s160 = sphi 0, %s160
      %s162 = sphi 0, %s160
      %s163 = sphi 0, %s162
      %s177 = sphi 0, %s163
      %s183 = sphi 0, %s185
      %s186 = sphi 0, %s183
      %s187 = sphi 0, %s186
      %s203 = sphi 0, %s187
    $region4: #{tpu_custom_call.1} parent=1 // loop_header_branch
      %24 = sbr.rel (%p22) target = $region8
    $region5: #{tpu_custom_call.1} parent=1 // loop_body
      %s26 = ssub.s32 %s21, 1
      %s27 = ssub.s32 %s21, 2
      %s28 = sadd.s32 %s21, 1
      %s29 = ssub.s32 %s21, %s28
      %p30 = scmp.eq.s32.totalorder %s29, 0
      %s32 = sadd.s32 %s31, 1
      %s33 = scalar_select %p30, %s31, %s32
      %p36 = pneg %p30
      %p37 = scmp.eq.s32.totalorder %s21, 1
      %p38 = por %p36, %p37
      %p39 = scmp.ne.s32.totalorder %s31, %s34
      %p40 = scmp.eq.s32.totalorder %s21, 0
      %p41 = por %p39, %p40
      %p42 = scmp.ne.s32.totalorder %s31, %s34
      %p43 = scmp.eq.s32.totalorder %s26, 1
      %p44 = por %p42, %p43
      %p45 = scmp.ne.s32.totalorder %s34, %s35
      %p46 = scmp.eq.s32.totalorder %s26, 0
      %p47 = por %p45, %p46
      %p48 = scmp.ne.s32.totalorder %s34, %s35
      %p49 = scmp.eq.s32.totalorder %s27, 1
      %p50 = por %p48, %p49
      %p52 = scmp.ne.s32.totalorder %s35, %s51
      %p53 = scmp.eq.s32.totalorder %s27, 0
      %p54 = por %p52, %p53
      %s56 = sadd.s32 %s55, 1
      %p59 = scmp.eq.s32.totalorder %s21, 1
      %p60 = scmp.ne.s32.totalorder %s55, %s57
      %p61 = scmp.eq.s32.totalorder %s21, 0
      %p62 = por %p60, %p61
      %p63 = scmp.ne.s32.totalorder %s55, %s57
      %p64 = scmp.eq.s32.totalorder %s26, 1
      %p65 = por %p63, %p64
      %p66 = scmp.ne.s32.totalorder %s57, %s58
      %p67 = scmp.eq.s32.totalorder %s26, 0
      %p68 = por %p66, %p67
      %p69 = scmp.ne.s32.totalorder %s57, %s58
      %p70 = scmp.eq.s32.totalorder %s27, 1
      %p71 = por %p69, %p70
      %p73 = scmp.ne.s32.totalorder %s58, %s72
      %p74 = scmp.eq.s32.totalorder %s27, 0
      %p75 = por %p73, %p74
      %s77 = sadd.s32 %s76, 1
      %p80 = scmp.eq.s32.totalorder %s21, 1
      %p81 = scmp.ne.s32.totalorder %s76, %s78
      %p82 = scmp.eq.s32.totalorder %s21, 0
      %p83 = por %p81, %p82
      %p84 = scmp.ne.s32.totalorder %s76, %s78
      %p85 = scmp.eq.s32.totalorder %s26, 1
      %p86 = por %p84, %p85
      %p87 = scmp.ne.s32.totalorder %s78, %s79
      %p88 = scmp.eq.s32.totalorder %s26, 0
      %p89 = por %p87, %p88
      %p90 = scmp.ne.s32.totalorder %s78, %s79
      %p91 = scmp.eq.s32.totalorder %s27, 1
      %p92 = por %p90, %p91
      %p94 = scmp.ne.s32.totalorder %s79, %s93
      %p95 = scmp.eq.s32.totalorder %s27, 0
      %p96 = por %p94, %p95
      %s98 = sadd.s32 %s97, 1
      %p101 = scmp.eq.s32.totalorder %s21, 1
      %p102 = scmp.ne.s32.totalorder %s97, %s99
      %p103 = scmp.eq.s32.totalorder %s21, 0
      %p104 = por %p102, %p103
      %p105 = scmp.ne.s32.totalorder %s97, %s99
      %p106 = scmp.eq.s32.totalorder %s26, 1
      %p107 = por %p105, %p106
      %p108 = scmp.ne.s32.totalorder %s99, %s100
      %p109 = scmp.eq.s32.totalorder %s26, 0
      %p110 = por %p108, %p109
      %p111 = scmp.ne.s32.totalorder %s99, %s100
      %p112 = scmp.eq.s32.totalorder %s27, 1
      %p113 = por %p111, %p112
      %p115 = scmp.ne.s32.totalorder %s100, %s114
      %p116 = scmp.eq.s32.totalorder %s27, 0
      %p117 = por %p115, %p116
      %s119 = sadd.s32 %s118, 1
      %p122 = scmp.eq.s32.totalorder %s21, 1
      %p123 = scmp.ne.s32.totalorder %s118, %s120
      %p124 = scmp.eq.s32.totalorder %s21, 0
      %p125 = por %p123, %p124
      %p126 = scmp.ne.s32.totalorder %s118, %s120
      %p127 = scmp.eq.s32.totalorder %s26, 1
      %p128 = por %p126, %p127
      %p129 = scmp.ne.s32.totalorder %s120, %s121
      %p130 = scmp.eq.s32.totalorder %s26, 0
      %p131 = por %p129, %p130
      %p132 = scmp.ne.s32.totalorder %s120, %s121
      %p133 = scmp.eq.s32.totalorder %s27, 1
      %p134 = por %p132, %p133
      %p136 = scmp.ne.s32.totalorder %s121, %s135
      %p137 = scmp.eq.s32.totalorder %s27, 0
      %p138 = por %p136, %p137
      %s140 = sadd.s32 %s139, 1
      %p143 = scmp.eq.s32.totalorder %s21, 1
      %p144 = scmp.ne.s32.totalorder %s139, %s141
      %p145 = scmp.eq.s32.totalorder %s21, 0
      %p146 = por %p144, %p145
      %p147 = scmp.ne.s32.totalorder %s139, %s141
      %p148 = scmp.eq.s32.totalorder %s26, 1
      %p149 = por %p147, %p148
      %p150 = scmp.ne.s32.totalorder %s141, %s142
      %p151 = scmp.eq.s32.totalorder %s26, 0
      %p152 = por %p150, %p151
      %p153 = scmp.ne.s32.totalorder %s141, %s142
      %p154 = scmp.eq.s32.totalorder %s27, 1
      %p155 = por %p153, %p154
      %p157 = scmp.ne.s32.totalorder %s142, %s156
      %p158 = scmp.eq.s32.totalorder %s27, 0
      %p159 = por %p157, %p158
      %s161 = sadd.s32 %s160, 1
      %p164 = scmp.eq.s32.totalorder %s21, 1
      %p165 = scmp.ne.s32.totalorder %s160, %s162
      %p166 = scmp.eq.s32.totalorder %s21, 0
      %p167 = por %p165, %p166
      %p168 = scmp.ne.s32.totalorder %s160, %s162
      %p169 = scmp.eq.s32.totalorder %s26, 1
      %p170 = por %p168, %p169
      %p171 = scmp.ne.s32.totalorder %s162, %s163
      %p172 = scmp.eq.s32.totalorder %s26, 0
      %p173 = por %p171, %p172
      %p174 = scmp.ne.s32.totalorder %s162, %s163
      %p175 = scmp.eq.s32.totalorder %s27, 1
      %p176 = por %p174, %p175
      %p178 = scmp.ne.s32.totalorder %s163, %s177
      %p179 = scmp.eq.s32.totalorder %s27, 0
      %p180 = por %p178, %p179
      %s181 = ssub.s32 %s21, %s28
      %p182 = scmp.eq.s32.totalorder %s181, 0
      %s184 = sadd.s32 %s183, 1
      %s185 = scalar_select %p182, %s183, %s184
      %p188 = pneg %p182
      %p189 = scmp.eq.s32.totalorder %s21, 1
      %p190 = por %p188, %p189
      %p191 = scmp.ne.s32.totalorder %s183, %s186
      %p192 = scmp.eq.s32.totalorder %s21, 0
      %p193 = por %p191, %p192
      %p194 = scmp.ne.s32.totalorder %s183, %s186
      %p195 = scmp.eq.s32.totalorder %s26, 1
      %p196 = por %p194, %p195
      %p197 = scmp.ne.s32.totalorder %s186, %s187
      %p198 = scmp.eq.s32.totalorder %s26, 0
      %p199 = por %p197, %p198
      %p200 = scmp.ne.s32.totalorder %s186, %s187
      %p201 = scmp.eq.s32.totalorder %s27, 1
      %p202 = por %p200, %p201
      %p204 = scmp.ne.s32.totalorder %s187, %s203
      %p205 = scmp.eq.s32.totalorder %s27, 0
      %p206 = por %p204, %p205
      %p207 = scmp.le.s32.totalorder 1, %s21
      %p208 = scmp.lt.s32.totalorder %s21, 3
      %p209 = pnand %p207, %p208
      %p210 = pneg %p209
      // Predicated region
      $region9: #{tpu_custom_call.1} parent=5 // pred_check
        _
      $region10: #{tpu_custom_call.1} parent=5 // pred_check_branch
        %212 = sbr.rel (%p209) target = $region12
      $region11: #{tpu_custom_call.1} parent=5 // pred_region
        %s213 = ssub.s32 %s21, 1
        // Predicated region
        $region13: #{tpu_custom_call.1} parent=11 // pred_check
          %p214 = pneg %p68
        $region14: #{tpu_custom_call.1} parent=11 // pred_check_branch
          %216 = sbr.rel (%p214) target = $region16
        $region15: #{tpu_custom_call.1} parent=11 // pred_region
          %s218 = ssub.s32 9216, 9216
          %219 = vsyncadd [#allocation11], %s218
          %s220 = sshll.u32 [#allocation10], 4
          %s221 = int_to_ptr.vmem [resolvable:$true] %s220
          %226 = dma.hbm_to_vmem [thread:$0]  %s1, 9216, %s221, [#allocation11], 64, 64, 4
        $region16: #{tpu_custom_call.1} parent=11 // pred_fallthru
          _
        // Predicated region
        $region17: #{tpu_custom_call.1} parent=11 // pred_check
          %p227 = pneg %p89
        $region18: #{tpu_custom_call.1} parent=11 // pred_check_branch
          %229 = sbr.rel (%p227) target = $region20
        $region19: #{tpu_custom_call.1} parent=11 // pred_region
          %s231 = ssub.s32 18432, 18432
          %232 = vsyncadd [#allocation11], %s231
          %s233 = sshll.u32 [#allocation12], 4
          %s234 = int_to_ptr.vmem [resolvable:$true] %s233
          %239 = dma.hbm_to_vmem [thread:$0]  %s2, 18432, %s234, [#allocation11], 128, 128, 8
        $region20: #{tpu_custom_call.1} parent=11 // pred_fallthru
          _
        // Predicated region
        $region21: #{tpu_custom_call.1} parent=11 // pred_check
          %p240 = pneg %p110
        $region22: #{tpu_custom_call.1} parent=11 // pred_check_branch
          %242 = sbr.rel (%p240) target = $region24
        $region23: #{tpu_custom_call.1} parent=11 // pred_region
          %s244 = ssub.s32 18432, 18432
          %245 = vsyncadd [#allocation14], %s244
          %s246 = sshll.u32 [#allocation13], 4
          %s247 = int_to_ptr.vmem [resolvable:$true] %s246
          %252 = dma.hbm_to_vmem [thread:$0]  %s3, 18432, %s247, [#allocation14], 64, 64, 4
        $region24: #{tpu_custom_call.1} parent=11 // pred_fallthru
          _
        // Predicated region
        $region25: #{tpu_custom_call.1} parent=11 // pred_check
          %p253 = pneg %p131
        $region26: #{tpu_custom_call.1} parent=11 // pred_check_branch
          %255 = sbr.rel (%p253) target = $region28
        $region27: #{tpu_custom_call.1} parent=11 // pred_region
          _
        $region28: #{tpu_custom_call.1} parent=11 // pred_fallthru
          _
        // Predicated region
        $region29: #{tpu_custom_call.1} parent=11 // pred_check
          %p256 = pneg %p152
        $region30: #{tpu_custom_call.1} parent=11 // pred_check_branch
          %258 = sbr.rel (%p256) target = $region32
        $region31: #{tpu_custom_call.1} parent=11 // pred_region
          _
        $region32: #{tpu_custom_call.1} parent=11 // pred_fallthru
          _
        // Predicated region
        $region33: #{tpu_custom_call.1} parent=11 // pred_check
          %p259 = pneg %p173
        $region34: #{tpu_custom_call.1} parent=11 // pred_check_branch
          %261 = sbr.rel (%p259) target = $region36
        $region35: #{tpu_custom_call.1} parent=11 // pred_region
          _
        $region36: #{tpu_custom_call.1} parent=11 // pred_fallthru
          _
      $region12: #{tpu_custom_call.1} parent=5 // pred_fallthru
        _
      %p262 = scmp.lt.s32.totalorder %s21, 2
      // Predicated region
      $region37: #{tpu_custom_call.1} parent=5 // pred_check
        %p263 = pneg %p262
      $region38: #{tpu_custom_call.1} parent=5 // pred_check_branch
        %265 = sbr.rel (%p263) target = $region40
      $region39: #{tpu_custom_call.1} parent=5 // pred_region
        // Predicated region
        $region41: #{tpu_custom_call.1} parent=39 // pred_check
          %p266 = pneg %p41
        $region42: #{tpu_custom_call.1} parent=39 // pred_check_branch
          %268 = sbr.rel (%p266) target = $region44
        $region43: #{tpu_custom_call.1} parent=39 // pred_region
          %s269 = sand.u32 %s31, 1
          %s270 = scalar_lea.sflag [#allocation8], %s269
          %s271 = sand.u32 %s31, 1
          %s272 = smul.addr %s271, 256
          %s273 = scalar_lea.vmem [#allocation7], %s272
          %s275 = ssub.s32 4096, 4096
          %276 = vsyncadd %s270, %s275
          %s277 = smul.addr %s21, 32
          %s278 = smul.addr %s277, 128
          %s279 = scalar_lea.hbm %s0, %s278
          %s280 = sshll.u32 %s273, 4
          %s281 = int_to_ptr.vmem [resolvable:$true] %s280
          %286 = dma.hbm_to_vmem [thread:$0]  %s279, 4096, %s281, %s270, 128, 128, 8
        $region44: #{tpu_custom_call.1} parent=39 // pred_fallthru
          _
      $region40: #{tpu_custom_call.1} parent=5 // pred_fallthru
        _
      %p287 = scmp.le.s32.totalorder 1, %s21
      %p288 = scmp.lt.s32.totalorder %s21, 3
      %p289 = pnand %p287, %p288
      %p290 = pneg %p289
      // Predicated region
      $region45: #{tpu_custom_call.1} parent=5 // pred_check
        _
      $region46: #{tpu_custom_call.1} parent=5 // pred_check_branch
        %292 = sbr.rel (%p289) target = $region48
      $region47: #{tpu_custom_call.1} parent=5 // pred_region
        %s293 = ssub.s32 %s21, 1
        %s294 = sand.u32 %s34, 1
        %s295 = scalar_lea.sflag [#allocation8], %s294
        %s296 = sand.u32 %s34, 1
        %s297 = smul.addr %s296, 256
        %s298 = scalar_lea.vmem [#allocation7], %s297
        // Predicated region
        $region49: #{tpu_custom_call.1} parent=47 // pred_check
          %p299 = pneg %p47
        $region50: #{tpu_custom_call.1} parent=47 // pred_check_branch
          %301 = sbr.rel (%p299) target = $region52
        $region51: #{tpu_custom_call.1} parent=47 // pred_region
          %302 = dma.done %s295, 4096
        $region52: #{tpu_custom_call.1} parent=47 // pred_fallthru
          _
        // Predicated region
        $region53: #{tpu_custom_call.1} parent=47 // pred_check
          %p303 = pneg %p68
        $region54: #{tpu_custom_call.1} parent=47 // pred_check_branch
          %305 = sbr.rel (%p303) target = $region56
        $region55: #{tpu_custom_call.1} parent=47 // pred_region
          %306 = dma.done [#allocation11], 9216
        $region56: #{tpu_custom_call.1} parent=47 // pred_fallthru
          _
        // Predicated region
        $region57: #{tpu_custom_call.1} parent=47 // pred_check
          %p307 = pneg %p89
        $region58: #{tpu_custom_call.1} parent=47 // pred_check_branch
          %309 = sbr.rel (%p307) target = $region60
        $region59: #{tpu_custom_call.1} parent=47 // pred_region
          %310 = dma.done [#allocation11], 18432
        $region60: #{tpu_custom_call.1} parent=47 // pred_fallthru
          _
        // Predicated region
        $region61: #{tpu_custom_call.1} parent=47 // pred_check
          %p311 = pneg %p110
        $region62: #{tpu_custom_call.1} parent=47 // pred_check_branch
          %313 = sbr.rel (%p311) target = $region64
        $region63: #{tpu_custom_call.1} parent=47 // pred_region
          %314 = dma.done [#allocation14], 18432
        $region64: #{tpu_custom_call.1} parent=47 // pred_fallthru
          _
        %s315 = sand.u32 %s34, 1
        %s316 = scalar_lea.sflag [#allocation8], %s315
        %s317 = sand.u32 %s34, 1
        %s318 = smul.addr %s317, 256
        %s319 = scalar_lea.vmem [#allocation7], %s318
        %p320 = pneg %p47
        %p321 = pneg %p44
        %p322 = pneg %p68
        %p323 = pneg %p65
        %p324 = pneg %p89
        %p325 = pneg %p86
        %p326 = pneg %p110
        %p327 = pneg %p107
        %p328 = pneg %p131
        %p329 = pneg %p128
        %p330 = pneg %p152
        %p331 = pneg %p149
        %p332 = pneg %p173
        %p333 = pneg %p170
        %p334 = pneg %p199
        %p335 = pneg %p196
        %s336 = sand.u32 %s186, 1
        %s337 = scalar_lea.sflag [#allocation9], %s336
        %s338 = sand.u32 %s186, 1
        %s339 = smul.addr %s338, 64
        %s340 = scalar_lea.vmem [#allocation15], %s339
        %342 = vst [vmem:[#allocation2] sm:$0xff] 0.0
        %343 = vst [vmem:[#allocation2 + $0x8] sm:$0xff] 0.0
        %344 = vst [vmem:[#allocation2 + $0x10] sm:$0xff] 0.0
        %345 = vst [vmem:[#allocation2 + $0x18] sm:$0xff] 0.0
        %s346 = scalar_lea.vmem [#allocation2], 544
        %347 = vst [vmem:[%s346] sm:$0xff] 0.0
        %348 = vst [vmem:[%s346 + $0x8] sm:$0xff] 0.0
        %349 = vst [vmem:[%s346 + $0x10] sm:$0xff] 0.0
        %350 = vst [vmem:[%s346 + $0x18] sm:$0xff] 0.0
        %351 = vst [vmem:[#allocation2 + $0x7] sm:$0x1] 0.0
        %352 = vst [vmem:[#allocation2 + $0x27] sm:$0x1] 0.0
        %353 = vst [vmem:[#allocation2 + $0x47] sm:$0x1] 0.0
        %354 = vst [vmem:[#allocation2 + $0x67] sm:$0x1] 0.0
        %355 = vst [vmem:[#allocation2 + $0x87] sm:$0x1] 0.0
        %356 = vst [vmem:[#allocation2 + $0xa7] sm:$0x1] 0.0
        %357 = vst [vmem:[#allocation2 + $0xc7] sm:$0x1] 0.0
        %358 = vst [vmem:[#allocation2 + $0xe7] sm:$0x1] 0.0
        %359 = vst [vmem:[#allocation2 + $0x107] sm:$0x1] 0.0
        %360 = vst [vmem:[#allocation2 + $0x127] sm:$0x1] 0.0
        %361 = vst [vmem:[#allocation2 + $0x147] sm:$0x1] 0.0
        %362 = vst [vmem:[#allocation2 + $0x167] sm:$0x1] 0.0
        %363 = vst [vmem:[#allocation2 + $0x187] sm:$0x1] 0.0
        %364 = vst [vmem:[#allocation2 + $0x1a7] sm:$0x1] 0.0
        %365 = vst [vmem:[#allocation2 + $0x1c7] sm:$0x1] 0.0
        %366 = vst [vmem:[#allocation2 + $0x1e7] sm:$0x1] 0.0
        %367 = vst [vmem:[#allocation2 + $0x207] sm:$0x1] 0.0
        %368 = vst [vmem:[#allocation2 + $0x227] sm:$0x1] 0.0
        %369 = vst [vmem:[#allocation2 + $0x18] sm:$0x1] 0.0
        %370 = vst [vmem:[#allocation2 + $0x38] sm:$0x1] 0.0
        %371 = vst [vmem:[#allocation2 + $0x58] sm:$0x1] 0.0
        %372 = vst [vmem:[#allocation2 + $0x78] sm:$0x1] 0.0
        %373 = vst [vmem:[#allocation2 + $0x98] sm:$0x1] 0.0
        %374 = vst [vmem:[#allocation2 + $0xb8] sm:$0x1] 0.0
        %375 = vst [vmem:[#allocation2 + $0xd8] sm:$0x1] 0.0
        %376 = vst [vmem:[#allocation2 + $0xf8] sm:$0x1] 0.0
        %377 = vst [vmem:[#allocation2 + $0x118] sm:$0x1] 0.0
        %378 = vst [vmem:[#allocation2 + $0x138] sm:$0x1] 0.0
        %379 = vst [vmem:[#allocation2 + $0x158] sm:$0x1] 0.0
        %380 = vst [vmem:[#allocation2 + $0x178] sm:$0x1] 0.0
        %381 = vst [vmem:[#allocation2 + $0x198] sm:$0x1] 0.0
        %382 = vst [vmem:[#allocation2 + $0x1b8] sm:$0x1] 0.0
        %383 = vst [vmem:[#allocation2 + $0x1d8] sm:$0x1] 0.0
        %384 = vst [vmem:[#allocation2 + $0x1f8] sm:$0x1] 0.0
        %385 = vst [vmem:[#allocation2 + $0x218] sm:$0x1] 0.0
        %386 = vst [vmem:[#allocation2 + $0x238] sm:$0x1] 0.0
        %387 = vst [vmem:[#allocation3] sm:$0xff] 0.0
        %388 = vst [vmem:[#allocation3 + $0x8] sm:$0xff] 0.0
        %389 = vst [vmem:[#allocation3 + $0x10] sm:$0xff] 0.0
        %390 = vst [vmem:[#allocation3 + $0x18] sm:$0xff] 0.0
        %s391 = scalar_lea.vmem [#allocation3], 544
        %392 = vst [vmem:[%s391] sm:$0xff] 0.0
        %393 = vst [vmem:[%s391 + $0x8] sm:$0xff] 0.0
        %394 = vst [vmem:[%s391 + $0x10] sm:$0xff] 0.0
        %395 = vst [vmem:[%s391 + $0x18] sm:$0xff] 0.0
        %396 = vst [vmem:[#allocation3 + $0x7] sm:$0x1] 0.0
        %397 = vst [vmem:[#allocation3 + $0x27] sm:$0x1] 0.0
        %398 = vst [vmem:[#allocation3 + $0x47] sm:$0x1] 0.0
        %399 = vst [vmem:[#allocation3 + $0x67] sm:$0x1] 0.0
        %400 = vst [vmem:[#allocation3 + $0x87] sm:$0x1] 0.0
        %401 = vst [vmem:[#allocation3 + $0xa7] sm:$0x1] 0.0
        %402 = vst [vmem:[#allocation3 + $0xc7] sm:$0x1] 0.0
        %403 = vst [vmem:[#allocation3 + $0xe7] sm:$0x1] 0.0
        %404 = vst [vmem:[#allocation3 + $0x107] sm:$0x1] 0.0
        %405 = vst [vmem:[#allocation3 + $0x127] sm:$0x1] 0.0
        %406 = vst [vmem:[#allocation3 + $0x147] sm:$0x1] 0.0
        %407 = vst [vmem:[#allocation3 + $0x167] sm:$0x1] 0.0
        %408 = vst [vmem:[#allocation3 + $0x187] sm:$0x1] 0.0
        %409 = vst [vmem:[#allocation3 + $0x1a7] sm:$0x1] 0.0
        %410 = vst [vmem:[#allocation3 + $0x1c7] sm:$0x1] 0.0
        %411 = vst [vmem:[#allocation3 + $0x1e7] sm:$0x1] 0.0
        %412 = vst [vmem:[#allocation3 + $0x207] sm:$0x1] 0.0
        %413 = vst [vmem:[#allocation3 + $0x227] sm:$0x1] 0.0
        %414 = vst [vmem:[#allocation3 + $0x18] sm:$0x1] 0.0
        %415 = vst [vmem:[#allocation3 + $0x38] sm:$0x1] 0.0
        %416 = vst [vmem:[#allocation3 + $0x58] sm:$0x1] 0.0
        %417 = vst [vmem:[#allocation3 + $0x78] sm:$0x1] 0.0
        %418 = vst [vmem:[#allocation3 + $0x98] sm:$0x1] 0.0
        %419 = vst [vmem:[#allocation3 + $0xb8] sm:$0x1] 0.0
        %420 = vst [vmem:[#allocation3 + $0xd8] sm:$0x1] 0.0
        %421 = vst [vmem:[#allocation3 + $0xf8] sm:$0x1] 0.0
        %422 = vst [vmem:[#allocation3 + $0x118] sm:$0x1] 0.0
        %423 = vst [vmem:[#allocation3 + $0x138] sm:$0x1] 0.0
        %424 = vst [vmem:[#allocation3 + $0x158] sm:$0x1] 0.0
        %425 = vst [vmem:[#allocation3 + $0x178] sm:$0x1] 0.0
        %426 = vst [vmem:[#allocation3 + $0x198] sm:$0x1] 0.0
        %427 = vst [vmem:[#allocation3 + $0x1b8] sm:$0x1] 0.0
        %428 = vst [vmem:[#allocation3 + $0x1d8] sm:$0x1] 0.0
        %429 = vst [vmem:[#allocation3 + $0x1f8] sm:$0x1] 0.0
        %430 = vst [vmem:[#allocation3 + $0x218] sm:$0x1] 0.0
        %431 = vst [vmem:[#allocation3 + $0x238] sm:$0x1] 0.0
        %432 = vst [vmem:[#allocation4] sm:$0xff] 0.0
        %433 = vst [vmem:[#allocation4 + $0x8] sm:$0xff] 0.0
        %434 = vst [vmem:[#allocation4 + $0x10] sm:$0xff] 0.0
        %435 = vst [vmem:[#allocation4 + $0x18] sm:$0xff] 0.0
        %436 = vst [vmem:[#allocation4 + $0x20] sm:$0xff] 0.0
        %437 = vst [vmem:[#allocation4 + $0x28] sm:$0xff] 0.0
        %438 = vst [vmem:[#allocation4 + $0x30] sm:$0xff] 0.0
        %439 = vst [vmem:[#allocation4 + $0x38] sm:$0xff] 0.0
        %s440 = scalar_lea.vmem [#allocation4], 1088
        %441 = vst [vmem:[%s440] sm:$0xff] 0.0
        %442 = vst [vmem:[%s440 + $0x8] sm:$0xff] 0.0
        %443 = vst [vmem:[%s440 + $0x10] sm:$0xff] 0.0
        %444 = vst [vmem:[%s440 + $0x18] sm:$0xff] 0.0
        %445 = vst [vmem:[%s440 + $0x20] sm:$0xff] 0.0
        %446 = vst [vmem:[%s440 + $0x28] sm:$0xff] 0.0
        %447 = vst [vmem:[%s440 + $0x30] sm:$0xff] 0.0
        %448 = vst [vmem:[%s440 + $0x38] sm:$0xff] 0.0
        %v449 = vlaneseq
        %vm450 = vcmp.ge.s32.totalorder %v449, 0
        %vm451 = vcmp.lt.s32.totalorder %v449, 256
        %vm452 = vmand %vm450, %vm451
        %s453 = scalar_lea.vmem [#allocation4], 7
        %454 = vst.msk [vmem:[%s453] ss:$8 sm:$0x3] %vm452, 0.0
        %455 = vst.msk [vmem:[%s453] ss:$8 sm:$0x0] %vm452, 0.0
        %s456 = scalar_lea.vmem [#allocation4], 71
        %457 = vst.msk [vmem:[%s456] ss:$8 sm:$0x3] %vm452, 0.0
        %458 = vst.msk [vmem:[%s456] ss:$8 sm:$0x0] %vm452, 0.0
        %s459 = scalar_lea.vmem [#allocation4], 135
        %460 = vst.msk [vmem:[%s459] ss:$8 sm:$0x3] %vm452, 0.0
        %461 = vst.msk [vmem:[%s459] ss:$8 sm:$0x0] %vm452, 0.0
        %s462 = scalar_lea.vmem [#allocation4], 199
        %463 = vst.msk [vmem:[%s462] ss:$8 sm:$0x3] %vm452, 0.0
        %464 = vst.msk [vmem:[%s462] ss:$8 sm:$0x0] %vm452, 0.0
        %s465 = scalar_lea.vmem [#allocation4], 263
        %466 = vst.msk [vmem:[%s465] ss:$8 sm:$0x3] %vm452, 0.0
        %467 = vst.msk [vmem:[%s465] ss:$8 sm:$0x0] %vm452, 0.0
        %s468 = scalar_lea.vmem [#allocation4], 327
        %469 = vst.msk [vmem:[%s468] ss:$8 sm:$0x3] %vm452, 0.0
        %470 = vst.msk [vmem:[%s468] ss:$8 sm:$0x0] %vm452, 0.0
        %s471 = scalar_lea.vmem [#allocation4], 391
        %472 = vst.msk [vmem:[%s471] ss:$8 sm:$0x3] %vm452, 0.0
        %473 = vst.msk [vmem:[%s471] ss:$8 sm:$0x0] %vm452, 0.0
        %s474 = scalar_lea.vmem [#allocation4], 455
        %475 = vst.msk [vmem:[%s474] ss:$8 sm:$0x3] %vm452, 0.0
        %476 = vst.msk [vmem:[%s474] ss:$8 sm:$0x0] %vm452, 0.0
        %s477 = scalar_lea.vmem [#allocation4], 519
        %478 = vst.msk [vmem:[%s477] ss:$8 sm:$0x3] %vm452, 0.0
        %479 = vst.msk [vmem:[%s477] ss:$8 sm:$0x0] %vm452, 0.0
        %s480 = scalar_lea.vmem [#allocation4], 583
        %481 = vst.msk [vmem:[%s480] ss:$8 sm:$0x3] %vm452, 0.0
        %482 = vst.msk [vmem:[%s480] ss:$8 sm:$0x0] %vm452, 0.0
        %s483 = scalar_lea.vmem [#allocation4], 647
        %484 = vst.msk [vmem:[%s483] ss:$8 sm:$0x3] %vm452, 0.0
        %485 = vst.msk [vmem:[%s483] ss:$8 sm:$0x0] %vm452, 0.0
        %s486 = scalar_lea.vmem [#allocation4], 711
        %487 = vst.msk [vmem:[%s486] ss:$8 sm:$0x3] %vm452, 0.0
        %488 = vst.msk [vmem:[%s486] ss:$8 sm:$0x0] %vm452, 0.0
        %s489 = scalar_lea.vmem [#allocation4], 775
        %490 = vst.msk [vmem:[%s489] ss:$8 sm:$0x3] %vm452, 0.0
        %491 = vst.msk [vmem:[%s489] ss:$8 sm:$0x0] %vm452, 0.0
        %s492 = scalar_lea.vmem [#allocation4], 839
        %493 = vst.msk [vmem:[%s492] ss:$8 sm:$0x3] %vm452, 0.0
        %494 = vst.msk [vmem:[%s492] ss:$8 sm:$0x0] %vm452, 0.0
        %s495 = scalar_lea.vmem [#allocation4], 903
        %496 = vst.msk [vmem:[%s495] ss:$8 sm:$0x3] %vm452, 0.0
        %497 = vst.msk [vmem:[%s495] ss:$8 sm:$0x0] %vm452, 0.0
        %s498 = scalar_lea.vmem [#allocation4], 967
        %499 = vst.msk [vmem:[%s498] ss:$8 sm:$0x3] %vm452, 0.0
        %500 = vst.msk [vmem:[%s498] ss:$8 sm:$0x0] %vm452, 0.0
        %s501 = scalar_lea.vmem [#allocation4], 1031
        %502 = vst.msk [vmem:[%s501] ss:$8 sm:$0x3] %vm452, 0.0
        %503 = vst.msk [vmem:[%s501] ss:$8 sm:$0x0] %vm452, 0.0
        %s504 = scalar_lea.vmem [#allocation4], 1095
        %505 = vst.msk [vmem:[%s504] ss:$8 sm:$0x3] %vm452, 0.0
        %506 = vst.msk [vmem:[%s504] ss:$8 sm:$0x0] %vm452, 0.0
        %s507 = scalar_lea.vmem [#allocation4], 48
        %508 = vst.msk [vmem:[%s507] ss:$8 sm:$0x3] %vm452, 0.0
        %509 = vst.msk [vmem:[%s507] ss:$8 sm:$0x0] %vm452, 0.0
        %s510 = scalar_lea.vmem [#allocation4], 112
        %511 = vst.msk [vmem:[%s510] ss:$8 sm:$0x3] %vm452, 0.0
        %512 = vst.msk [vmem:[%s510] ss:$8 sm:$0x0] %vm452, 0.0
        %s513 = scalar_lea.vmem [#allocation4], 176
        %514 = vst.msk [vmem:[%s513] ss:$8 sm:$0x3] %vm452, 0.0
        %515 = vst.msk [vmem:[%s513] ss:$8 sm:$0x0] %vm452, 0.0
        %s516 = scalar_lea.vmem [#allocation4], 240
        %517 = vst.msk [vmem:[%s516] ss:$8 sm:$0x3] %vm452, 0.0
        %518 = vst.msk [vmem:[%s516] ss:$8 sm:$0x0] %vm452, 0.0
        %s519 = scalar_lea.vmem [#allocation4], 304
        %520 = vst.msk [vmem:[%s519] ss:$8 sm:$0x3] %vm452, 0.0
        %521 = vst.msk [vmem:[%s519] ss:$8 sm:$0x0] %vm452, 0.0
        %s522 = scalar_lea.vmem [#allocation4], 368
        %523 = vst.msk [vmem:[%s522] ss:$8 sm:$0x3] %vm452, 0.0
        %524 = vst.msk [vmem:[%s522] ss:$8 sm:$0x0] %vm452, 0.0
        %s525 = scalar_lea.vmem [#allocation4], 432
        %526 = vst.msk [vmem:[%s525] ss:$8 sm:$0x3] %vm452, 0.0
        %527 = vst.msk [vmem:[%s525] ss:$8 sm:$0x0] %vm452, 0.0
        %s528 = scalar_lea.vmem [#allocation4], 496
        %529 = vst.msk [vmem:[%s528] ss:$8 sm:$0x3] %vm452, 0.0
        %530 = vst.msk [vmem:[%s528] ss:$8 sm:$0x0] %vm452, 0.0
        %s531 = scalar_lea.vmem [#allocation4], 560
        %532 = vst.msk [vmem:[%s531] ss:$8 sm:$0x3] %vm452, 0.0
        %533 = vst.msk [vmem:[%s531] ss:$8 sm:$0x0] %vm452, 0.0
        %s534 = scalar_lea.vmem [#allocation4], 624
        %535 = vst.msk [vmem:[%s534] ss:$8 sm:$0x3] %vm452, 0.0
        %536 = vst.msk [vmem:[%s534] ss:$8 sm:$0x0] %vm452, 0.0
        %s537 = scalar_lea.vmem [#allocation4], 688
        %538 = vst.msk [vmem:[%s537] ss:$8 sm:$0x3] %vm452, 0.0
        %539 = vst.msk [vmem:[%s537] ss:$8 sm:$0x0] %vm452, 0.0
        %s540 = scalar_lea.vmem [#allocation4], 752
        %541 = vst.msk [vmem:[%s540] ss:$8 sm:$0x3] %vm452, 0.0
        %542 = vst.msk [vmem:[%s540] ss:$8 sm:$0x0] %vm452, 0.0
        %s543 = scalar_lea.vmem [#allocation4], 816
        %544 = vst.msk [vmem:[%s543] ss:$8 sm:$0x3] %vm452, 0.0
        %545 = vst.msk [vmem:[%s543] ss:$8 sm:$0x0] %vm452, 0.0
        %s546 = scalar_lea.vmem [#allocation4], 880
        %547 = vst.msk [vmem:[%s546] ss:$8 sm:$0x3] %vm452, 0.0
        %548 = vst.msk [vmem:[%s546] ss:$8 sm:$0x0] %vm452, 0.0
        %s549 = scalar_lea.vmem [#allocation4], 944
        %550 = vst.msk [vmem:[%s549] ss:$8 sm:$0x3] %vm452, 0.0
        %551 = vst.msk [vmem:[%s549] ss:$8 sm:$0x0] %vm452, 0.0
        %s552 = scalar_lea.vmem [#allocation4], 1008
        %553 = vst.msk [vmem:[%s552] ss:$8 sm:$0x3] %vm452, 0.0
        %554 = vst.msk [vmem:[%s552] ss:$8 sm:$0x0] %vm452, 0.0
        %s555 = scalar_lea.vmem [#allocation4], 1072
        %556 = vst.msk [vmem:[%s555] ss:$8 sm:$0x3] %vm452, 0.0
        %557 = vst.msk [vmem:[%s555] ss:$8 sm:$0x0] %vm452, 0.0
        %s558 = scalar_lea.vmem [#allocation4], 1136
        %559 = vst.msk [vmem:[%s558] ss:$8 sm:$0x3] %vm452, 0.0
        %560 = vst.msk [vmem:[%s558] ss:$8 sm:$0x0] %vm452, 0.0
        %561 = vst [vmem:[#allocation6] sm:$0xff] 0.0
        %562 = vst [vmem:[#allocation6 + $0x18] sm:$0xff] 0.0
        %563 = vst [vmem:[#allocation6 + $0x30] sm:$0xff] 0.0
        %564 = vst [vmem:[#allocation6 + $0x48] sm:$0xff] 0.0
        %565 = vst [vmem:[#allocation6 + $0x60] sm:$0xff] 0.0
        %566 = vst [vmem:[#allocation6 + $0x78] sm:$0xff] 0.0
        %567 = vst [vmem:[#allocation6 + $0x90] sm:$0xff] 0.0
        %568 = vst [vmem:[#allocation6 + $0xa8] sm:$0xff] 0.0
        loop: start=0, step=1, limit=4
        $region65: #{tpu_custom_call.1} parent=47 // loop_pre_header
          _
        $region66: #{tpu_custom_call.1} parent=47 // loop_header
          %s570 = sphi 0, %s574
          %p571 = scmp.ge.s32.totalorder %s570, 4
        $region67: #{tpu_custom_call.1} parent=47 // loop_header_branch
          %573 = sbr.rel (%p571) target = $region71
        $region68: #{tpu_custom_call.1} parent=47 // loop_body
          %s575 = smul.u32 %s570, 4
          %s576 = smul.u32 %s575, 16
          %s577 = scalar_lea.vmem %s298, %s576 [#allocation7]
          %v578 = vld [vmem:[%s577] sm:$0xff]
          %v579 = vld [vmem:[%s577 + $0x8] sm:$0xff]
          %v580 = vld [vmem:[%s577 + $0x10] sm:$0xff]
          %v581 = vld [vmem:[%s577 + $0x18] sm:$0xff]
          %v582 = vld [vmem:[%s577 + $0x20] sm:$0xff]
          %v583 = vld [vmem:[%s577 + $0x28] sm:$0xff]
          %v584 = vld [vmem:[%s577 + $0x30] sm:$0xff]
          %v585 = vld [vmem:[%s577 + $0x38] sm:$0xff]
          %s586 = sadd.s32 %s575, 1
          %s587 = smul.u32 %s586, 32
          %s588 = scalar_lea.vmem [#allocation2], %s587
          %589 = vst [vmem:[%s588 + $0x8] sm:$0xff] %v578
          %590 = vst [vmem:[%s588 + $0x10] sm:$0xff] %v579
          %591 = vst [vmem:[%s588 + $0x28] sm:$0xff] %v580
          %592 = vst [vmem:[%s588 + $0x30] sm:$0xff] %v581
          %593 = vst [vmem:[%s588 + $0x48] sm:$0xff] %v582
          %594 = vst [vmem:[%s588 + $0x50] sm:$0xff] %v583
          %595 = vst [vmem:[%s588 + $0x68] sm:$0xff] %v584
          %596 = vst [vmem:[%s588 + $0x70] sm:$0xff] %v585
        $region69: #{tpu_custom_call.1} parent=47 // loop_footer
          %s574 = sadd.s32 1, %s570
        $region70: #{tpu_custom_call.1} parent=47 // loop_footer_branch
          %569 = sbr.rel target = $region66
        $region71: #{tpu_custom_call.1} parent=47 // loop_exit
          _
        loop: start=0, step=1, limit=4
        $region72: #{tpu_custom_call.1} parent=47 // loop_pre_header
          _
        $region73: #{tpu_custom_call.1} parent=47 // loop_header
          %s598 = sphi 0, %s602
          %p599 = scmp.ge.s32.totalorder %s598, 4
        $region74: #{tpu_custom_call.1} parent=47 // loop_header_branch
          %601 = sbr.rel (%p599) target = $region78
        $region75: #{tpu_custom_call.1} parent=47 // loop_body
          %s603 = smul.u32 %s598, 4
          %s604 = smul.u32 %s603, 32
          %s605 = scalar_lea.vmem [#allocation2], %s604
          %v606 = vld [vmem:[%s605 + $0x7] sm:$0xff]
          %v607 = vld [vmem:[%s605 + $0xf] sm:$0xff]
          %v608 = vld [vmem:[%s605 + $0x27] sm:$0xff]
          %v609 = vld [vmem:[%s605 + $0x2f] sm:$0xff]
          %v610 = vld [vmem:[%s605 + $0x47] sm:$0xff]
          %v611 = vld [vmem:[%s605 + $0x4f] sm:$0xff]
          %v612 = vld [vmem:[%s605 + $0x67] sm:$0xff]
          %v613 = vld [vmem:[%s605 + $0x6f] sm:$0xff]
          %v614 = vpack.c.bf16 %v607, %v606
          %v615 = vpack.c.bf16 %v609, %v608
          %v616 = vpack.c.bf16 %v611, %v610
          %v617 = vpack.c.bf16 %v613, %v612
          %v618 = vld [vmem:[#allocation10] sm:$0xf]
          %v619 = vld [vmem:[#allocation10 + $0x4] sm:$0xf]
          %v620 = vld [vmem:[#allocation10 + $0x8] sm:$0xf]
          %v621 = vld [vmem:[#allocation10 + $0xc] sm:$0xf]
          %v622 = vld [vmem:[#allocation10 + $0x10] sm:$0xf]
          %v623 = vld [vmem:[#allocation10 + $0x14] sm:$0xf]
          %v624 = vld [vmem:[#allocation10 + $0x18] sm:$0xf]
          %v625 = vld [vmem:[#allocation10 + $0x1c] sm:$0xf]
          %v626 = vld [vmem:[#allocation10 + $0x20] sm:$0xf]
          %v627 = vld [vmem:[#allocation10 + $0x24] sm:$0xf]
          %v628 = vld [vmem:[#allocation10 + $0x28] sm:$0xf]
          %v629 = vld [vmem:[#allocation10 + $0x2c] sm:$0xf]
          %v630 = vld [vmem:[#allocation10 + $0x30] sm:$0xf]
          %v631 = vld [vmem:[#allocation10 + $0x34] sm:$0xf]
          %v632 = vld [vmem:[#allocation10 + $0x38] sm:$0xf]
          %v633 = vld [vmem:[#allocation10 + $0x3c] sm:$0xf]
          %v634 = vld [vmem:[%s605 + $0x8] sm:$0xff]
          %v635 = vld [vmem:[%s605 + $0x10] sm:$0xff]
          %v636 = vld [vmem:[%s605 + $0x28] sm:$0xff]
          %v637 = vld [vmem:[%s605 + $0x30] sm:$0xff]
          %v638 = vld [vmem:[%s605 + $0x48] sm:$0xff]
          %v639 = vld [vmem:[%s605 + $0x50] sm:$0xff]
          %v640 = vld [vmem:[%s605 + $0x68] sm:$0xff]
          %v641 = vld [vmem:[%s605 + $0x70] sm:$0xff]
          %v642 = vpack.c.bf16 %v635, %v634
          %v643 = vpack.c.bf16 %v637, %v636
          %v644 = vpack.c.bf16 %v639, %v638
          %v645 = vpack.c.bf16 %v641, %v640
          %s646 = scalar_lea.vmem [#allocation10], 64
          %v647 = vld [vmem:[%s646] sm:$0xf]
          %v648 = vld [vmem:[%s646 + $0x4] sm:$0xf]
          %v649 = vld [vmem:[%s646 + $0x8] sm:$0xf]
          %v650 = vld [vmem:[%s646 + $0xc] sm:$0xf]
          %v651 = vld [vmem:[%s646 + $0x10] sm:$0xf]
          %v652 = vld [vmem:[%s646 + $0x14] sm:$0xf]
          %v653 = vld [vmem:[%s646 + $0x18] sm:$0xf]
          %v654 = vld [vmem:[%s646 + $0x1c] sm:$0xf]
          %v655 = vld [vmem:[%s646 + $0x20] sm:$0xf]
          %v656 = vld [vmem:[%s646 + $0x24] sm:$0xf]
          %v657 = vld [vmem:[%s646 + $0x28] sm:$0xf]
          %v658 = vld [vmem:[%s646 + $0x2c] sm:$0xf]
          %v659 = vld [vmem:[%s646 + $0x30] sm:$0xf]
          %v660 = vld [vmem:[%s646 + $0x34] sm:$0xf]
          %v661 = vld [vmem:[%s646 + $0x38] sm:$0xf]
          %v662 = vld [vmem:[%s646 + $0x3c] sm:$0xf]
          %v679 = vunpack.c.l.b16 %v647
          %v680 = vunpack.c.l.b16 %v648
          %v681 = vunpack.c.l.b16 %v649
          %v682 = vunpack.c.l.b16 %v650
          %v683 = vunpack.c.l.b16 %v651
          %v684 = vunpack.c.l.b16 %v652
          %v685 = vunpack.c.l.b16 %v653
          %v686 = vunpack.c.l.b16 %v654
          %v687 = vunpack.c.l.b16 %v655
          %v688 = vunpack.c.l.b16 %v656
          %v689 = vunpack.c.l.b16 %v657
          %v690 = vunpack.c.l.b16 %v658
          %v691 = vunpack.c.l.b16 %v659
          %v692 = vunpack.c.l.b16 %v660
          %v693 = vunpack.c.l.b16 %v661
          %v694 = vunpack.c.l.b16 %v662
          %v695 = vpack.c.b16 %v680, %v679
          %v696 = vpack.c.b16 %v682, %v681
          %v697 = vpack.c.b16 %v684, %v683
          %v698 = vpack.c.b16 %v686, %v685
          %v699 = vpack.c.b16 %v688, %v687
          %v700 = vpack.c.b16 %v690, %v689
          %v701 = vpack.c.b16 %v692, %v691
          %v702 = vpack.c.b16 %v694, %v693
          %711 = vmatprep.subr.bf16.mxu0 0
          %712 = vmatpush1.bf16.msra.mxu0 %v695
          %713 = vmatprep.subr.bf16.mxu0 0
          %714 = vmatpush1.bf16.msra.mxu0 %v696
          %715 = vmatprep.subr.bf16.mxu0 0
          %716 = vmatpush1.bf16.msra.mxu0 %v697
          %717 = vmatprep.subr.bf16.mxu0 0
          %718 = vmatpush1.bf16.msra.mxu0 %v698
          %719 = vmatprep.subr.bf16.mxu0 0
          %720 = vmatpush1.bf16.msra.mxu0 %v699
          %721 = vmatprep.subr.bf16.mxu0 0
          %722 = vmatpush1.bf16.msra.mxu0 %v700
          %723 = vmatprep.subr.bf16.mxu0 0
          %724 = vmatpush1.bf16.msra.mxu0 %v701
          %725 = vmatprep.subr.bf16.mxu0 0
          %726 = vmatpush1.bf16.msra.mxu0 %v702
          %727 = vmatprep.subr.bf16.mxu0 0
          %728 = vmatpush1.bf16.msra.mxu0 0
          %729 = vmatprep.subr.bf16.mxu0 0
          %730 = vmatpush1.bf16.msra.mxu0 0
          %731 = vmatprep.subr.bf16.mxu0 0
          %732 = vmatpush1.bf16.msra.mxu0 0
          %733 = vmatprep.subr.bf16.mxu0 0
          %734 = vmatpush1.bf16.msra.mxu0 0
          %735 = vmatprep.subr.bf16.mxu0 0
          %736 = vmatpush1.bf16.msra.mxu0 0
          %737 = vmatprep.subr.bf16.mxu0 0
          %738 = vmatpush1.bf16.msra.mxu0 0
          %739 = vmatprep.subr.bf16.mxu0 0
          %740 = vmatpush1.bf16.msra.mxu0 0
          %741 = vmatprep.subr.bf16.mxu0 0
          %742 = vmatpush1.bf16.msra.mxu0 0
          %743 = vmatprep.mubr.bf16.mxu0 0
          %744 = vmatmul.mubr.bf16.gmra.mrb[0].mxu0 %v642
          %v745 = vpop.f32.mrb[0].mxu0
          %v746 = vadd.f32 0.0, %v745
          %v747 = vpop.f32.mrb[0].mxu0
          %v748 = vpop.f32.mrb[0].mxu0
          %v749 = vadd.f32 0.0, %v748
          %v750 = vpop.f32.mrb[0].mxu0
          %751 = vmatprep.mubr.bf16.mxu0 0
          %752 = vmatmul.mubr.bf16.gmra.mrb[0].mxu0 %v643
          %v753 = vpop.f32.mrb[0].mxu0
          %v754 = vadd.f32 0.0, %v753
          %v755 = vpop.f32.mrb[0].mxu0
          %v756 = vpop.f32.mrb[0].mxu0
          %v757 = vadd.f32 0.0, %v756
          %v758 = vpop.f32.mrb[0].mxu0
          %759 = vmatprep.mubr.bf16.mxu0 0
          %760 = vmatmul.mubr.bf16.gmra.mrb[0].mxu0 %v644
          %v761 = vpop.f32.mrb[0].mxu0
          %v762 = vadd.f32 0.0, %v761
          %v763 = vpop.f32.mrb[0].mxu0
          %v764 = vpop.f32.mrb[0].mxu0
          %v765 = vadd.f32 0.0, %v764
          %v766 = vpop.f32.mrb[0].mxu0
          %767 = vmatprep.mubr.bf16.mxu0 0
          %768 = vmatmul.mubr.bf16.gmra.mrb[0].mxu0 %v645
          %v769 = vpop.f32.mrb[0].mxu0
          %v770 = vadd.f32 0.0, %v769
          %v771 = vpop.f32.mrb[0].mxu0
          %v772 = vpop.f32.mrb[0].mxu0
          %v773 = vadd.f32 0.0, %v772
          %v774 = vpop.f32.mrb[0].mxu0
          %775 = vdwg.mxu0
          %v792 = vunpack.c.l.b16 %v618
          %v793 = vunpack.c.l.b16 %v619
          %v794 = vunpack.c.l.b16 %v620
          %v795 = vunpack.c.l.b16 %v621
          %v796 = vunpack.c.l.b16 %v622
          %v797 = vunpack.c.l.b16 %v623
          %v798 = vunpack.c.l.b16 %v624
          %v799 = vunpack.c.l.b16 %v625
          %v800 = vunpack.c.l.b16 %v626
          %v801 = vunpack.c.l.b16 %v627
          %v802 = vunpack.c.l.b16 %v628
          %v803 = vunpack.c.l.b16 %v629
          %v804 = vunpack.c.l.b16 %v630
          %v805 = vunpack.c.l.b16 %v631
          %v806 = vunpack.c.l.b16 %v632
          %v807 = vunpack.c.l.b16 %v633
          %v808 = vpack.c.b16 %v793, %v792
          %v809 = vpack.c.b16 %v795, %v794
          %v810 = vpack.c.b16 %v797, %v796
          %v811 = vpack.c.b16 %v799, %v798
          %v812 = vpack.c.b16 %v801, %v800
          %v813 = vpack.c.b16 %v803, %v802
          %v814 = vpack.c.b16 %v805, %v804
          %v815 = vpack.c.b16 %v807, %v806
          %824 = vmatprep.subr.bf16.mxu0 0
          %825 = vmatpush1.bf16.msra.mxu0 %v808
          %826 = vmatprep.subr.bf16.mxu0 0
          %827 = vmatpush1.bf16.msra.mxu0 %v809
          %828 = vmatprep.subr.bf16.mxu0 0
          %829 = vmatpush1.bf16.msra.mxu0 %v810
          %830 = vmatprep.subr.bf16.mxu0 0
          %831 = vmatpush1.bf16.msra.mxu0 %v811
          %832 = vmatprep.subr.bf16.mxu0 0
          %833 = vmatpush1.bf16.msra.mxu0 %v812
          %834 = vmatprep.subr.bf16.mxu0 0
          %835 = vmatpush1.bf16.msra.mxu0 %v813
          %836 = vmatprep.subr.bf16.mxu0 0
          %837 = vmatpush1.bf16.msra.mxu0 %v814
          %838 = vmatprep.subr.bf16.mxu0 0
          %839 = vmatpush1.bf16.msra.mxu0 %v815
          %840 = vmatprep.subr.bf16.mxu0 0
          %841 = vmatpush1.bf16.msra.mxu0 0
          %842 = vmatprep.subr.bf16.mxu0 0
          %843 = vmatpush1.bf16.msra.mxu0 0
          %844 = vmatprep.subr.bf16.mxu0 0
          %845 = vmatpush1.bf16.msra.mxu0 0
          %846 = vmatprep.subr.bf16.mxu0 0
          %847 = vmatpush1.bf16.msra.mxu0 0
          %848 = vmatprep.subr.bf16.mxu0 0
          %849 = vmatpush1.bf16.msra.mxu0 0
          %850 = vmatprep.subr.bf16.mxu0 0
          %851 = vmatpush1.bf16.msra.mxu0 0
          %852 = vmatprep.subr.bf16.mxu0 0
          %853 = vmatpush1.bf16.msra.mxu0 0
          %854 = vmatprep.subr.bf16.mxu0 0
          %855 = vmatpush1.bf16.msra.mxu0 0
          %856 = vmatprep.mubr.bf16.mxu0 0
          %857 = vmatmul.mubr.bf16.gmra.mrb[0].mxu0 %v614
          %v858 = vpop.f32.mrb[0].mxu0
          %v859 = vadd.f32 %v746, %v858
          %v860 = vpop.f32.mrb[0].mxu0
          %v861 = vpop.f32.mrb[0].mxu0
          %v862 = vadd.f32 %v749, %v861
          %v863 = vpop.f32.mrb[0].mxu0
          %864 = vmatprep.mubr.bf16.mxu0 0
          %865 = vmatmul.mubr.bf16.gmra.mrb[0].mxu0 %v615
          %v866 = vpop.f32.mrb[0].mxu0
          %v867 = vadd.f32 %v754, %v866
          %v868 = vpop.f32.mrb[0].mxu0
          %v869 = vpop.f32.mrb[0].mxu0
          %v870 = vadd.f32 %v757, %v869
          %v871 = vpop.f32.mrb[0].mxu0
          %872 = vmatprep.mubr.bf16.mxu0 0
          %873 = vmatmul.mubr.bf16.gmra.mrb[0].mxu0 %v616
          %v874 = vpop.f32.mrb[0].mxu0
          %v875 = vadd.f32 %v762, %v874
          %v876 = vpop.f32.mrb[0].mxu0
          %v877 = vpop.f32.mrb[0].mxu0
          %v878 = vadd.f32 %v765, %v877
          %v879 = vpop.f32.mrb[0].mxu0
          %880 = vmatprep.mubr.bf16.mxu0 0
          %881 = vmatmul.mubr.bf16.gmra.mrb[0].mxu0 %v617
          %v882 = vpop.f32.mrb[0].mxu0
          %v883 = vadd.f32 %v770, %v882
          %v884 = vpop.f32.mrb[0].mxu0
          %v885 = vpop.f32.mrb[0].mxu0
          %v886 = vadd.f32 %v773, %v885
          %v887 = vpop.f32.mrb[0].mxu0
          %888 = vdwg.mxu0
          %v889 = vld [vmem:[%s605 + $0x9] sm:$0xff]
          %v890 = vld [vmem:[%s605 + $0x11] sm:$0xff]
          %v891 = vld [vmem:[%s605 + $0x29] sm:$0xff]
          %v892 = vld [vmem:[%s605 + $0x31] sm:$0xff]
          %v893 = vld [vmem:[%s605 + $0x49] sm:$0xff]
          %v894 = vld [vmem:[%s605 + $0x51] sm:$0xff]
          %v895 = vld [vmem:[%s605 + $0x69] sm:$0xff]
          %v896 = vld [vmem:[%s605 + $0x71] sm:$0xff]
          %v897 = vpack.c.bf16 %v890, %v889
          %v898 = vpack.c.bf16 %v892, %v891
          %v899 = vpack.c.bf16 %v894, %v893
          %v900 = vpack.c.bf16 %v896, %v895
          %s901 = scalar_lea.vmem [#allocation10], 128
          %v902 = vld [vmem:[%s901] sm:$0xf]
          %v903 = vld [vmem:[%s901 + $0x4] sm:$0xf]
          %v904 = vld [vmem:[%s901 + $0x8] sm:$0xf]
          %v905 = vld [vmem:[%s901 + $0xc] sm:$0xf]
          %v906 = vld [vmem:[%s901 + $0x10] sm:$0xf]
          %v907 = vld [vmem:[%s901 + $0x14] sm:$0xf]
          %v908 = vld [vmem:[%s901 + $0x18] sm:$0xf]
          %v909 = vld [vmem:[%s901 + $0x1c] sm:$0xf]
          %v910 = vld [vmem:[%s901 + $0x20] sm:$0xf]
          %v911 = vld [vmem:[%s901 + $0x24] sm:$0xf]
          %v912 = vld [vmem:[%s901 + $0x28] sm:$0xf]
          %v913 = vld [vmem:[%s901 + $0x2c] sm:$0xf]
          %v914 = vld [vmem:[%s901 + $0x30] sm:$0xf]
          %v915 = vld [vmem:[%s901 + $0x34] sm:$0xf]
          %v916 = vld [vmem:[%s901 + $0x38] sm:$0xf]
          %v917 = vld [vmem:[%s901 + $0x3c] sm:$0xf]
          %v934 = vunpack.c.l.b16 %v902
          %v935 = vunpack.c.l.b16 %v903
          %v936 = vunpack.c.l.b16 %v904
          %v937 = vunpack.c.l.b16 %v905
          %v938 = vunpack.c.l.b16 %v906
          %v939 = vunpack.c.l.b16 %v907
          %v940 = vunpack.c.l.b16 %v908
          %v941 = vunpack.c.l.b16 %v909
          %v942 = vunpack.c.l.b16 %v910
          %v943 = vunpack.c.l.b16 %v911
          %v944 = vunpack.c.l.b16 %v912
          %v945 = vunpack.c.l.b16 %v913
          %v946 = vunpack.c.l.b16 %v914
          %v947 = vunpack.c.l.b16 %v915
          %v948 = vunpack.c.l.b16 %v916
          %v949 = vunpack.c.l.b16 %v917
          %v950 = vpack.c.b16 %v935, %v934
          %v951 = vpack.c.b16 %v937, %v936
          %v952 = vpack.c.b16 %v939, %v938
          %v953 = vpack.c.b16 %v941, %v940
          %v954 = vpack.c.b16 %v943, %v942
          %v955 = vpack.c.b16 %v945, %v944
          %v956 = vpack.c.b16 %v947, %v946
          %v957 = vpack.c.b16 %v949, %v948
          %966 = vmatprep.subr.bf16.mxu0 0
          %967 = vmatpush1.bf16.msra.mxu0 %v950
          %968 = vmatprep.subr.bf16.mxu0 0
          %969 = vmatpush1.bf16.msra.mxu0 %v951
          %970 = vmatprep.subr.bf16.mxu0 0
          %971 = vmatpush1.bf16.msra.mxu0 %v952
          %972 = vmatprep.subr.bf16.mxu0 0
          %973 = vmatpush1.bf16.msra.mxu0 %v953
          %974 = vmatprep.subr.bf16.mxu0 0
          %975 = vmatpush1.bf16.msra.mxu0 %v954
          %976 = vmatprep.subr.bf16.mxu0 0
          %977 = vmatpush1.bf16.msra.mxu0 %v955
          %978 = vmatprep.subr.bf16.mxu0 0
          %979 = vmatpush1.bf16.msra.mxu0 %v956
          %980 = vmatprep.subr.bf16.mxu0 0
          %981 = vmatpush1.bf16.msra.mxu0 %v957
          %982 = vmatprep.subr.bf16.mxu0 0
          %983 = vmatpush1.bf16.msra.mxu0 0
          %984 = vmatprep.subr.bf16.mxu0 0
          %985 = vmatpush1.bf16.msra.mxu0 0
          %986 = vmatprep.subr.bf16.mxu0 0
          %987 = vmatpush1.bf16.msra.mxu0 0
          %988 = vmatprep.subr.bf16.mxu0 0
          %989 = vmatpush1.bf16.msra.mxu0 0
          %990 = vmatprep.subr.bf16.mxu0 0
          %991 = vmatpush1.bf16.msra.mxu0 0
          %992 = vmatprep.subr.bf16.mxu0 0
          %993 = vmatpush1.bf16.msra.mxu0 0
          %994 = vmatprep.subr.bf16.mxu0 0
          %995 = vmatpush1.bf16.msra.mxu0 0
          %996 = vmatprep.subr.bf16.mxu0 0
          %997 = vmatpush1.bf16.msra.mxu0 0
          %998 = vmatprep.mubr.bf16.mxu0 0
          %999 = vmatmul.mubr.bf16.gmra.mrb[0].mxu0 %v897
          %v1000 = vpop.f32.mrb[0].mxu0
          %v1001 = vadd.f32 0.0, %v1000
          %v1002 = vpop.f32.mrb[0].mxu0
          %v1003 = vpop.f32.mrb[0].mxu0
          %v1004 = vadd.f32 0.0, %v1003
          %v1005 = vpop.f32.mrb[0].mxu0
          %1006 = vmatprep.mubr.bf16.mxu0 0
          %1007 = vmatmul.mubr.bf16.gmra.mrb[0].mxu0 %v898
          %v1008 = vpop.f32.mrb[0].mxu0
          %v1009 = vadd.f32 0.0, %v1008
          %v1010 = vpop.f32.mrb[0].mxu0
          %v1011 = vpop.f32.mrb[0].mxu0
          %v1012 = vadd.f32 0.0, %v1011
          %v1013 = vpop.f32.mrb[0].mxu0
          %1014 = vmatprep.mubr.bf16.mxu0 0
          %1015 = vmatmul.mubr.bf16.gmra.mrb[0].mxu0 %v899
          %v1016 = vpop.f32.mrb[0].mxu0
          %v1017 = vadd.f32 0.0, %v1016
          %v1018 = vpop.f32.mrb[0].mxu0
          %v1019 = vpop.f32.mrb[0].mxu0
          %v1020 = vadd.f32 0.0, %v1019
          %v1021 = vpop.f32.mrb[0].mxu0
          %1022 = vmatprep.mubr.bf16.mxu0 0
          %1023 = vmatmul.mubr.bf16.gmra.mrb[0].mxu0 %v900
          %v1024 = vpop.f32.mrb[0].mxu0
          %v1025 = vadd.f32 0.0, %v1024
          %v1026 = vpop.f32.mrb[0].mxu0
          %v1027 = vpop.f32.mrb[0].mxu0
          %v1028 = vadd.f32 0.0, %v1027
          %v1029 = vpop.f32.mrb[0].mxu0
          %1030 = vdwg.mxu0
          %v1031 = vadd.f32 %v859, %v1001
          %v1032 = vadd.f32 %v862, %v1004
          %v1033 = vadd.f32 %v867, %v1009
          %v1034 = vadd.f32 %v870, %v1012
          %v1035 = vadd.f32 %v875, %v1017
          %v1036 = vadd.f32 %v878, %v1020
          %v1037 = vadd.f32 %v883, %v1025
          %v1038 = vadd.f32 %v886, %v1028
          %s1039 = sadd.s32 %s603, 1
          %s1040 = smul.u32 %s1039, 32
          %s1041 = scalar_lea.vmem [#allocation2], %s1040
          %v1042 = vld [vmem:[%s1041 + $0x7] sm:$0xff]
          %v1043 = vld [vmem:[%s1041 + $0xf] sm:$0xff]
          %v1044 = vld [vmem:[%s1041 + $0x27] sm:$0xff]
          %v1045 = vld [vmem:[%s1041 + $0x2f] sm:$0xff]
          %v1046 = vld [vmem:[%s1041 + $0x47] sm:$0xff]
          %v1047 = vld [vmem:[%s1041 + $0x4f] sm:$0xff]
          %v1048 = vld [vmem:[%s1041 + $0x67] sm:$0xff]
          %v1049 = vld [vmem:[%s1041 + $0x6f] sm:$0xff]
          %v1050 = vpack.c.bf16 %v1043, %v1042
          %v1051 = vpack.c.bf16 %v1045, %v1044
          %v1052 = vpack.c.bf16 %v1047, %v1046
          %v1053 = vpack.c.bf16 %v1049, %v1048
          %s1054 = scalar_lea.vmem [#allocation10], 192
          %v1055 = vld [vmem:[%s1054] sm:$0xf]
          %v1056 = vld [vmem:[%s1054 + $0x4] sm:$0xf]
          %v1057 = vld [vmem:[%s1054 + $0x8] sm:$0xf]
          %v1058 = vld [vmem:[%s1054 + $0xc] sm:$0xf]
          %v1059 = vld [vmem:[%s1054 + $0x10] sm:$0xf]
          %v1060 = vld [vmem:[%s1054 + $0x14] sm:$0xf]
          %v1061 = vld [vmem:[%s1054 + $0x18] sm:$0xf]
          %v1062 = vld [vmem:[%s1054 + $0x1c] sm:$0xf]
          %v1063 = vld [vmem:[%s1054 + $0x20] sm:$0xf]
          %v1064 = vld [vmem:[%s1054 + $0x24] sm:$0xf]
          %v1065 = vld [vmem:[%s1054 + $0x28] sm:$0xf]
          %v1066 = vld [vmem:[%s1054 + $0x2c] sm:$0xf]
          %v1067 = vld [vmem:[%s1054 + $0x30] sm:$0xf]
          %v1068 = vld [vmem:[%s1054 + $0x34] sm:$0xf]
          %v1069 = vld [vmem:[%s1054 + $0x38] sm:$0xf]
          %v1070 = vld [vmem:[%s1054 + $0x3c] sm:$0xf]
          %v1087 = vunpack.c.l.b16 %v1055
          %v1088 = vunpack.c.l.b16 %v1056
          %v1089 = vunpack.c.l.b16 %v1057
          %v1090 = vunpack.c.l.b16 %v1058
          %v1091 = vunpack.c.l.b16 %v1059
          %v1092 = vunpack.c.l.b16 %v1060
          %v1093 = vunpack.c.l.b16 %v1061
          %v1094 = vunpack.c.l.b16 %v1062
          %v1095 = vunpack.c.l.b16 %v1063
          %v1096 = vunpack.c.l.b16 %v1064
          %v1097 = vunpack.c.l.b16 %v1065
          %v1098 = vunpack.c.l.b16 %v1066
          %v1099 = vunpack.c.l.b16 %v1067
          %v1100 = vunpack.c.l.b16 %v1068
          %v1101 = vunpack.c.l.b16 %v1069
          %v1102 = vunpack.c.l.b16 %v1070
          %v1103 = vpack.c.b16 %v1088, %v1087
          %v1104 = vpack.c.b16 %v1090, %v1089
          %v1105 = vpack.c.b16 %v1092, %v1091
          %v1106 = vpack.c.b16 %v1094, %v1093
          %v1107 = vpack.c.b16 %v1096, %v1095
          %v1108 = vpack.c.b16 %v1098, %v1097
          %v1109 = vpack.c.b16 %v1100, %v1099
          %v1110 = vpack.c.b16 %v1102, %v1101
          %1119 = vmatprep.subr.bf16.mxu0 0
          %1120 = vmatpush1.bf16.msra.mxu0 %v1103
          %1121 = vmatprep.subr.bf16.mxu0 0
          %1122 = vmatpush1.bf16.msra.mxu0 %v1104
          %1123 = vmatprep.subr.bf16.mxu0 0
          %1124 = vmatpush1.bf16.msra.mxu0 %v1105
          %1125 = vmatprep.subr.bf16.mxu0 0
          %1126 = vmatpush1.bf16.msra.mxu0 %v1106
          %1127 = vmatprep.subr.bf16.mxu0 0
          %1128 = vmatpush1.bf16.msra.mxu0 %v1107
          %1129 = vmatprep.subr.bf16.mxu0 0
          %1130 = vmatpush1.bf16.msra.mxu0 %v1108
          %1131 = vmatprep.subr.bf16.mxu0 0
          %1132 = vmatpush1.bf16.msra.mxu0 %v1109
          %1133 = vmatprep.subr.bf16.mxu0 0
          %1134 = vmatpush1.bf16.msra.mxu0 %v1110
          %1135 = vmatprep.subr.bf16.mxu0 0
          %1136 = vmatpush1.bf16.msra.mxu0 0
          %1137 = vmatprep.subr.bf16.mxu0 0
          %1138 = vmatpush1.bf16.msra.mxu0 0
          %1139 = vmatprep.subr.bf16.mxu0 0
          %1140 = vmatpush1.bf16.msra.mxu0 0
          %1141 = vmatprep.subr.bf16.mxu0 0
          %1142 = vmatpush1.bf16.msra.mxu0 0
          %1143 = vmatprep.subr.bf16.mxu0 0
          %1144 = vmatpush1.bf16.msra.mxu0 0
          %1145 = vmatprep.subr.bf16.mxu0 0
          %1146 = vmatpush1.bf16.msra.mxu0 0
          %1147 = vmatprep.subr.bf16.mxu0 0
          %1148 = vmatpush1.bf16.msra.mxu0 0
          %1149 = vmatprep.subr.bf16.mxu0 0
          %1150 = vmatpush1.bf16.msra.mxu0 0
          %1151 = vmatprep.mubr.bf16.mxu0 0
          %1152 = vmatmul.mubr.bf16.gmra.mrb[0].mxu0 %v1050
          %v1153 = vpop.f32.mrb[0].mxu0
          %v1154 = vadd.f32 0.0, %v1153
          %v1155 = vpop.f32.mrb[0].mxu0
          %v1156 = vpop.f32.mrb[0].mxu0
          %v1157 = vadd.f32 0.0, %v1156
          %v1158 = vpop.f32.mrb[0].mxu0
          %1159 = vmatprep.mubr.bf16.mxu0 0
          %1160 = vmatmul.mubr.bf16.gmra.mrb[0].mxu0 %v1051
          %v1161 = vpop.f32.mrb[0].mxu0
          %v1162 = vadd.f32 0.0, %v1161
          %v1163 = vpop.f32.mrb[0].mxu0
          %v1164 = vpop.f32.mrb[0].mxu0
          %v1165 = vadd.f32 0.0, %v1164
          %v1166 = vpop.f32.mrb[0].mxu0
          %1167 = vmatprep.mubr.bf16.mxu0 0
          %1168 = vmatmul.mubr.bf16.gmra.mrb[0].mxu0 %v1052
          %v1169 = vpop.f32.mrb[0].mxu0
          %v1170 = vadd.f32 0.0, %v1169
          %v1171 = vpop.f32.mrb[0].mxu0
          %v1172 = vpop.f32.mrb[0].mxu0
          %v1173 = vadd.f32 0.0, %v1172
          %v1174 = vpop.f32.mrb[0].mxu0
          %1175 = vmatprep.mubr.bf16.mxu0 0
          %1176 = vmatmul.mubr.bf16.gmra.mrb[0].mxu0 %v1053
          %v1177 = vpop.f32.mrb[0].mxu0
          %v1178 = vadd.f32 0.0, %v1177
          %v1179 = vpop.f32.mrb[0].mxu0
          %v1180 = vpop.f32.mrb[0].mxu0
          %v1181 = vadd.f32 0.0, %v1180
          %v1182 = vpop.f32.mrb[0].mxu0
          %1183 = vdwg.mxu0
          %v1184 = vadd.f32 %v1031, %v1154
          %v1185 = vadd.f32 %v1032, %v1157
          %v1186 = vadd.f32 %v1033, %v1162
          %v1187 = vadd.f32 %v1034, %v1165
          %v1188 = vadd.f32 %v1035, %v1170
          %v1189 = vadd.f32 %v1036, %v1173
          %v1190 = vadd.f32 %v1037, %v1178
          %v1191 = vadd.f32 %v1038, %v1181
          %v1192 = vld [vmem:[%s1041 + $0x8] sm:$0xff]
          %v1193 = vld [vmem:[%s1041 + $0x10] sm:$0xff]
          %v1194 = vld [vmem:[%s1041 + $0x28] sm:$0xff]
          %v1195 = vld [vmem:[%s1041 + $0x30] sm:$0xff]
          %v1196 = vld [vmem:[%s1041 + $0x48] sm:$0xff]
          %v1197 = vld [vmem:[%s1041 + $0x50] sm:$0xff]
          %v1198 = vld [vmem:[%s1041 + $0x68] sm:$0xff]
          %v1199 = vld [vmem:[%s1041 + $0x70] sm:$0xff]
          %v1200 = vpack.c.bf16 %v1193, %v1192
          %v1201 = vpack.c.bf16 %v1195, %v1194
          %v1202 = vpack.c.bf16 %v1197, %v1196
          %v1203 = vpack.c.bf16 %v1199, %v1198
          %s1204 = scalar_lea.vmem [#allocation10], 256
          %v1205 = vld [vmem:[%s1204] sm:$0xf]
          %v1206 = vld [vmem:[%s1204 + $0x4] sm:$0xf]
          %v1207 = vld [vmem:[%s1204 + $0x8] sm:$0xf]
          %v1208 = vld [vmem:[%s1204 + $0xc] sm:$0xf]
          %v1209 = vld [vmem:[%s1204 + $0x10] sm:$0xf]
          %v1210 = vld [vmem:[%s1204 + $0x14] sm:$0xf]
          %v1211 = vld [vmem:[%s1204 + $0x18] sm:$0xf]
          %v1212 = vld [vmem:[%s1204 + $0x1c] sm:$0xf]
          %v1213 = vld [vmem:[%s1204 + $0x20] sm:$0xf]
          %v1214 = vld [vmem:[%s1204 + $0x24] sm:$0xf]
          %v1215 = vld [vmem:[%s1204 + $0x28] sm:$0xf]
          %v1216 = vld [vmem:[%s1204 + $0x2c] sm:$0xf]
          %v1217 = vld [vmem:[%s1204 + $0x30] sm:$0xf]
          %v1218 = vld [vmem:[%s1204 + $0x34] sm:$0xf]
          %v1219 = vld [vmem:[%s1204 + $0x38] sm:$0xf]
          %v1220 = vld [vmem:[%s1204 + $0x3c] sm:$0xf]
          %v1237 = vunpack.c.l.b16 %v1205
          %v1238 = vunpack.c.l.b16 %v1206
          %v1239 = vunpack.c.l.b16 %v1207
          %v1240 = vunpack.c.l.b16 %v1208
          %v1241 = vunpack.c.l.b16 %v1209
          %v1242 = vunpack.c.l.b16 %v1210
          %v1243 = vunpack.c.l.b16 %v1211
          %v1244 = vunpack.c.l.b16 %v1212
          %v1245 = vunpack.c.l.b16 %v1213
          %v1246 = vunpack.c.l.b16 %v1214
          %v1247 = vunpack.c.l.b16 %v1215
          %v1248 = vunpack.c.l.b16 %v1216
          %v1249 = vunpack.c.l.b16 %v1217
          %v1250 = vunpack.c.l.b16 %v1218
          %v1251 = vunpack.c.l.b16 %v1219
          %v1252 = vunpack.c.l.b16 %v1220
          %v1253 = vpack.c.b16 %v1238, %v1237
          %v1254 = vpack.c.b16 %v1240, %v1239
          %v1255 = vpack.c.b16 %v1242, %v1241
          %v1256 = vpack.c.b16 %v1244, %v1243
          %v1257 = vpack.c.b16 %v1246, %v1245
          %v1258 = vpack.c.b16 %v1248, %v1247
          %v1259 = vpack.c.b16 %v1250, %v1249
          %v1260 = vpack.c.b16 %v1252, %v1251
          %1269 = vmatprep.subr.bf16.mxu0 0
          %1270 = vmatpush1.bf16.msra.mxu0 %v1253
          %1271 = vmatprep.subr.bf16.mxu0 0
          %1272 = vmatpush1.bf16.msra.mxu0 %v1254
          %1273 = vmatprep.subr.bf16.mxu0 0
          %1274 = vmatpush1.bf16.msra.mxu0 %v1255
          %1275 = vmatprep.subr.bf16.mxu0 0
          %1276 = vmatpush1.bf16.msra.mxu0 %v1256
          %1277 = vmatprep.subr.bf16.mxu0 0
          %1278 = vmatpush1.bf16.msra.mxu0 %v1257
          %1279 = vmatprep.subr.bf16.mxu0 0
          %1280 = vmatpush1.bf16.msra.mxu0 %v1258
          %1281 = vmatprep.subr.bf16.mxu0 0
          %1282 = vmatpush1.bf16.msra.mxu0 %v1259
          %1283 = vmatprep.subr.bf16.mxu0 0
          %1284 = vmatpush1.bf16.msra.mxu0 %v1260
          %1285 = vmatprep.subr.bf16.mxu0 0
          %1286 = vmatpush1.bf16.msra.mxu0 0
          %1287 = vmatprep.subr.bf16.mxu0 0
          %1288 = vmatpush1.bf16.msra.mxu0 0
          %1289 = vmatprep.subr.bf16.mxu0 0
          %1290 = vmatpush1.bf16.msra.mxu0 0
          %1291 = vmatprep.subr.bf16.mxu0 0
          %1292 = vmatpush1.bf16.msra.mxu0 0
          %1293 = vmatprep.subr.bf16.mxu0 0
          %1294 = vmatpush1.bf16.msra.mxu0 0
          %1295 = vmatprep.subr.bf16.mxu0 0
          %1296 = vmatpush1.bf16.msra.mxu0 0
          %1297 = vmatprep.subr.bf16.mxu0 0
          %1298 = vmatpush1.bf16.msra.mxu0 0
          %1299 = vmatprep.subr.bf16.mxu0 0
          %1300 = vmatpush1.bf16.msra.mxu0 0
          %1301 = vmatprep.mubr.bf16.mxu0 0
          %1302 = vmatmul.mubr.bf16.gmra.mrb[0].mxu0 %v1200
          %v1303 = vpop.f32.mrb[0].mxu0
          %v1304 = vadd.f32 0.0, %v1303
          %v1305 = vpop.f32.mrb[0].mxu0
          %v1306 = vpop.f32.mrb[0].mxu0
          %v1307 = vadd.f32 0.0, %v1306
          %v1308 = vpop.f32.mrb[0].mxu0
          %1309 = vmatprep.mubr.bf16.mxu0 0
          %1310 = vmatmul.mubr.bf16.gmra.mrb[0].mxu0 %v1201
          %v1311 = vpop.f32.mrb[0].mxu0
          %v1312 = vadd.f32 0.0, %v1311
          %v1313 = vpop.f32.mrb[0].mxu0
          %v1314 = vpop.f32.mrb[0].mxu0
          %v1315 = vadd.f32 0.0, %v1314
          %v1316 = vpop.f32.mrb[0].mxu0
          %1317 = vmatprep.mubr.bf16.mxu0 0
          %1318 = vmatmul.mubr.bf16.gmra.mrb[0].mxu0 %v1202
          %v1319 = vpop.f32.mrb[0].mxu0
          %v1320 = vadd.f32 0.0, %v1319
          %v1321 = vpop.f32.mrb[0].mxu0
          %v1322 = vpop.f32.mrb[0].mxu0
          %v1323 = vadd.f32 0.0, %v1322
          %v1324 = vpop.f32.mrb[0].mxu0
          %1325 = vmatprep.mubr.bf16.mxu0 0
          %1326 = vmatmul.mubr.bf16.gmra.mrb[0].mxu0 %v1203
          %v1327 = vpop.f32.mrb[0].mxu0
          %v1328 = vadd.f32 0.0, %v1327
          %v1329 = vpop.f32.mrb[0].mxu0
          %v1330 = vpop.f32.mrb[0].mxu0
          %v1331 = vadd.f32 0.0, %v1330
          %v1332 = vpop.f32.mrb[0].mxu0
          %1333 = vdwg.mxu0
          %v1334 = vadd.f32 %v1184, %v1304
          %v1335 = vadd.f32 %v1185, %v1307
          %v1336 = vadd.f32 %v1186, %v1312
          %v1337 = vadd.f32 %v1187, %v1315
          %v1338 = vadd.f32 %v1188, %v1320
          %v1339 = vadd.f32 %v1189, %v1323
          %v1340 = vadd.f32 %v1190, %v1328
          %v1341 = vadd.f32 %v1191, %v1331
          %v1342 = vld [vmem:[%s1041 + $0x9] sm:$0xff]
          %v1343 = vld [vmem:[%s1041 + $0x11] sm:$0xff]
          %v1344 = vld [vmem:[%s1041 + $0x29] sm:$0xff]
          %v1345 = vld [vmem:[%s1041 + $0x31] sm:$0xff]
          %v1346 = vld [vmem:[%s1041 + $0x49] sm:$0xff]
          %v1347 = vld [vmem:[%s1041 + $0x51] sm:$0xff]
          %v1348 = vld [vmem:[%s1041 + $0x69] sm:$0xff]
          %v1349 = vld [vmem:[%s1041 + $0x71] sm:$0xff]
          %v1350 = vpack.c.bf16 %v1343, %v1342
          %v1351 = vpack.c.bf16 %v1345, %v1344
          %v1352 = vpack.c.bf16 %v1347, %v1346
          %v1353 = vpack.c.bf16 %v1349, %v1348
          %s1354 = scalar_lea.vmem [#allocation10], 320
          %v1355 = vld [vmem:[%s1354] sm:$0xf]
          %v1356 = vld [vmem:[%s1354 + $0x4] sm:$0xf]
          %v1357 = vld [vmem:[%s1354 + $0x8] sm:$0xf]
          %v1358 = vld [vmem:[%s1354 + $0xc] sm:$0xf]
          %v1359 = vld [vmem:[%s1354 + $0x10] sm:$0xf]
          %v1360 = vld [vmem:[%s1354 + $0x14] sm:$0xf]
          %v1361 = vld [vmem:[%s1354 + $0x18] sm:$0xf]
          %v1362 = vld [vmem:[%s1354 + $0x1c] sm:$0xf]
          %v1363 = vld [vmem:[%s1354 + $0x20] sm:$0xf]
          %v1364 = vld [vmem:[%s1354 + $0x24] sm:$0xf]
          %v1365 = vld [vmem:[%s1354 + $0x28] sm:$0xf]
          %v1366 = vld [vmem:[%s1354 + $0x2c] sm:$0xf]
          %v1367 = vld [vmem:[%s1354 + $0x30] sm:$0xf]
          %v1368 = vld [vmem:[%s1354 + $0x34] sm:$0xf]
          %v1369 = vld [vmem:[%s1354 + $0x38] sm:$0xf]
          %v1370 = vld [vmem:[%s1354 + $0x3c] sm:$0xf]
          %v1387 = vunpack.c.l.b16 %v1355
          %v1388 = vunpack.c.l.b16 %v1356
          %v1389 = vunpack.c.l.b16 %v1357
          %v1390 = vunpack.c.l.b16 %v1358
          %v1391 = vunpack.c.l.b16 %v1359
          %v1392 = vunpack.c.l.b16 %v1360
          %v1393 = vunpack.c.l.b16 %v1361
          %v1394 = vunpack.c.l.b16 %v1362
          %v1395 = vunpack.c.l.b16 %v1363
          %v1396 = vunpack.c.l.b16 %v1364
          %v1397 = vunpack.c.l.b16 %v1365
          %v1398 = vunpack.c.l.b16 %v1366
          %v1399 = vunpack.c.l.b16 %v1367
          %v1400 = vunpack.c.l.b16 %v1368
          %v1401 = vunpack.c.l.b16 %v1369
          %v1402 = vunpack.c.l.b16 %v1370
          %v1403 = vpack.c.b16 %v1388, %v1387
          %v1404 = vpack.c.b16 %v1390, %v1389
          %v1405 = vpack.c.b16 %v1392, %v1391
          %v1406 = vpack.c.b16 %v1394, %v1393
          %v1407 = vpack.c.b16 %v1396, %v1395
          %v1408 = vpack.c.b16 %v1398, %v1397
          %v1409 = vpack.c.b16 %v1400, %v1399
          %v1410 = vpack.c.b16 %v1402, %v1401
          %1419 = vmatprep.subr.bf16.mxu0 0
          %1420 = vmatpush1.bf16.msra.mxu0 %v1403
          %1421 = vmatprep.subr.bf16.mxu0 0
          %1422 = vmatpush1.bf16.msra.mxu0 %v1404
          %1423 = vmatprep.subr.bf16.mxu0 0
          %1424 = vmatpush1.bf16.msra.mxu0 %v1405
          %1425 = vmatprep.subr.bf16.mxu0 0
          %1426 = vmatpush1.bf16.msra.mxu0 %v1406
          %1427 = vmatprep.subr.bf16.mxu0 0
          %1428 = vmatpush1.bf16.msra.mxu0 %v1407
          %1429 = vmatprep.subr.bf16.mxu0 0
          %1430 = vmatpush1.bf16.msra.mxu0 %v1408
          %1431 = vmatprep.subr.bf16.mxu0 0
          %1432 = vmatpush1.bf16.msra.mxu0 %v1409
          %1433 = vmatprep.subr.bf16.mxu0 0
          %1434 = vmatpush1.bf16.msra.mxu0 %v1410
          %1435 = vmatprep.subr.bf16.mxu0 0
          %1436 = vmatpush1.bf16.msra.mxu0 0
          %1437 = vmatprep.subr.bf16.mxu0 0
          %1438 = vmatpush1.bf16.msra.mxu0 0
          %1439 = vmatprep.subr.bf16.mxu0 0
          %1440 = vmatpush1.bf16.msra.mxu0 0
          %1441 = vmatprep.subr.bf16.mxu0 0
          %1442 = vmatpush1.bf16.msra.mxu0 0
          %1443 = vmatprep.subr.bf16.mxu0 0
          %1444 = vmatpush1.bf16.msra.mxu0 0
          %1445 = vmatprep.subr.bf16.mxu0 0
          %1446 = vmatpush1.bf16.msra.mxu0 0
          %1447 = vmatprep.subr.bf16.mxu0 0
          %1448 = vmatpush1.bf16.msra.mxu0 0
          %1449 = vmatprep.subr.bf16.mxu0 0
          %1450 = vmatpush1.bf16.msra.mxu0 0
          %1451 = vmatprep.mubr.bf16.mxu0 0
          %1452 = vmatmul.mubr.bf16.gmra.mrb[0].mxu0 %v1350
          %v1453 = vpop.f32.mrb[0].mxu0
          %v1454 = vadd.f32 0.0, %v1453
          %v1455 = vpop.f32.mrb[0].mxu0
          %v1456 = vpop.f32.mrb[0].mxu0
          %v1457 = vadd.f32 0.0, %v1456
          %v1458 = vpop.f32.mrb[0].mxu0
          %1459 = vmatprep.mubr.bf16.mxu0 0
          %1460 = vmatmul.mubr.bf16.gmra.mrb[0].mxu0 %v1351
          %v1461 = vpop.f32.mrb[0].mxu0
          %v1462 = vadd.f32 0.0, %v1461
          %v1463 = vpop.f32.mrb[0].mxu0
          %v1464 = vpop.f32.mrb[0].mxu0
          %v1465 = vadd.f32 0.0, %v1464
          %v1466 = vpop.f32.mrb[0].mxu0
          %1467 = vmatprep.mubr.bf16.mxu0 0
          %1468 = vmatmul.mubr.bf16.gmra.mrb[0].mxu0 %v1352
          %v1469 = vpop.f32.mrb[0].mxu0
          %v1470 = vadd.f32 0.0, %v1469
          %v1471 = vpop.f32.mrb[0].mxu0
          %v1472 = vpop.f32.mrb[0].mxu0
          %v1473 = vadd.f32 0.0, %v1472
          %v1474 = vpop.f32.mrb[0].mxu0
          %1475 = vmatprep.mubr.bf16.mxu0 0
          %1476 = vmatmul.mubr.bf16.gmra.mrb[0].mxu0 %v1353
          %v1477 = vpop.f32.mrb[0].mxu0
          %v1478 = vadd.f32 0.0, %v1477
          %v1479 = vpop.f32.mrb[0].mxu0
          %v1480 = vpop.f32.mrb[0].mxu0
          %v1481 = vadd.f32 0.0, %v1480
          %v1482 = vpop.f32.mrb[0].mxu0
          %1483 = vdwg.mxu0
          %v1484 = vadd.f32 %v1334, %v1454
          %v1485 = vadd.f32 %v1335, %v1457
          %v1486 = vadd.f32 %v1336, %v1462
          %v1487 = vadd.f32 %v1337, %v1465
          %v1488 = vadd.f32 %v1338, %v1470
          %v1489 = vadd.f32 %v1339, %v1473
          %v1490 = vadd.f32 %v1340, %v1478
          %v1491 = vadd.f32 %v1341, %v1481
          %s1492 = sadd.s32 %s603, 2
          %s1493 = smul.u32 %s1492, 32
          %s1494 = scalar_lea.vmem [#allocation2], %s1493
          %v1495 = vld [vmem:[%s1494 + $0x7] sm:$0xff]
          %v1496 = vld [vmem:[%s1494 + $0xf] sm:$0xff]
          %v1497 = vld [vmem:[%s1494 + $0x27] sm:$0xff]
          %v1498 = vld [vmem:[%s1494 + $0x2f] sm:$0xff]
          %v1499 = vld [vmem:[%s1494 + $0x47] sm:$0xff]
          %v1500 = vld [vmem:[%s1494 + $0x4f] sm:$0xff]
          %v1501 = vld [vmem:[%s1494 + $0x67] sm:$0xff]
          %v1502 = vld [vmem:[%s1494 + $0x6f] sm:$0xff]
          %v1503 = vpack.c.bf16 %v1496, %v1495
          %v1504 = vpack.c.bf16 %v1498, %v1497
          %v1505 = vpack.c.bf16 %v1500, %v1499
          %v1506 = vpack.c.bf16 %v1502, %v1501
          %s1507 = scalar_lea.vmem [#allocation10], 384
          %v1508 = vld [vmem:[%s1507] sm:$0xf]
          %v1509 = vld [vmem:[%s1507 + $0x4] sm:$0xf]
          %v1510 = vld [vmem:[%s1507 + $0x8] sm:$0xf]
          %v1511 = vld [vmem:[%s1507 + $0xc] sm:$0xf]
          %v1512 = vld [vmem:[%s1507 + $0x10] sm:$0xf]
          %v1513 = vld [vmem:[%s1507 + $0x14] sm:$0xf]
          %v1514 = vld [vmem:[%s1507 + $0x18] sm:$0xf]
          %v1515 = vld [vmem:[%s1507 + $0x1c] sm:$0xf]
          %v1516 = vld [vmem:[%s1507 + $0x20] sm:$0xf]
          %v1517 = vld [vmem:[%s1507 + $0x24] sm:$0xf]
          %v1518 = vld [vmem:[%s1507 + $0x28] sm:$0xf]
          %v1519 = vld [vmem:[%s1507 + $0x2c] sm:$0xf]
          %v1520 = vld [vmem:[%s1507 + $0x30] sm:$0xf]
          %v1521 = vld [vmem:[%s1507 + $0x34] sm:$0xf]
          %v1522 = vld [vmem:[%s1507 + $0x38] sm:$0xf]
          %v1523 = vld [vmem:[%s1507 + $0x3c] sm:$0xf]
          %v1540 = vunpack.c.l.b16 %v1508
          %v1541 = vunpack.c.l.b16 %v1509
          %v1542 = vunpack.c.l.b16 %v1510
          %v1543 = vunpack.c.l.b16 %v1511
          %v1544 = vunpack.c.l.b16 %v1512
          %v1545 = vunpack.c.l.b16 %v1513
          %v1546 = vunpack.c.l.b16 %v1514
          %v1547 = vunpack.c.l.b16 %v1515
          %v1548 = vunpack.c.l.b16 %v1516
          %v1549 = vunpack.c.l.b16 %v1517
          %v1550 = vunpack.c.l.b16 %v1518
          %v1551 = vunpack.c.l.b16 %v1519
          %v1552 = vunpack.c.l.b16 %v1520
          %v1553 = vunpack.c.l.b16 %v1521
          %v1554 = vunpack.c.l.b16 %v1522
          %v1555 = vunpack.c.l.b16 %v1523
          %v1556 = vpack.c.b16 %v1541, %v1540
          %v1557 = vpack.c.b16 %v1543, %v1542
          %v1558 = vpack.c.b16 %v1545, %v1544
          %v1559 = vpack.c.b16 %v1547, %v1546
          %v1560 = vpack.c.b16 %v1549, %v1548
          %v1561 = vpack.c.b16 %v1551, %v1550
          %v1562 = vpack.c.b16 %v1553, %v1552
          %v1563 = vpack.c.b16 %v1555, %v1554
          %1572 = vmatprep.subr.bf16.mxu0 0
          %1573 = vmatpush1.bf16.msra.mxu0 %v1556
          %1574 = vmatprep.subr.bf16.mxu0 0
          %1575 = vmatpush1.bf16.msra.mxu0 %v1557
          %1576 = vmatprep.subr.bf16.mxu0 0
          %1577 = vmatpush1.bf16.msra.mxu0 %v1558
          %1578 = vmatprep.subr.bf16.mxu0 0
          %1579 = vmatpush1.bf16.msra.mxu0 %v1559
          %1580 = vmatprep.subr.bf16.mxu0 0
          %1581 = vmatpush1.bf16.msra.mxu0 %v1560
          %1582 = vmatprep.subr.bf16.mxu0 0
          %1583 = vmatpush1.bf16.msra.mxu0 %v1561
          %1584 = vmatprep.subr.bf16.mxu0 0
          %1585 = vmatpush1.bf16.msra.mxu0 %v1562
          %1586 = vmatprep.subr.bf16.mxu0 0
          %1587 = vmatpush1.bf16.msra.mxu0 %v1563
          %1588 = vmatprep.subr.bf16.mxu0 0
          %1589 = vmatpush1.bf16.msra.mxu0 0
          %1590 = vmatprep.subr.bf16.mxu0 0
          %1591 = vmatpush1.bf16.msra.mxu0 0
          %1592 = vmatprep.subr.bf16.mxu0 0
          %1593 = vmatpush1.bf16.msra.mxu0 0
          %1594 = vmatprep.subr.bf16.mxu0 0
          %1595 = vmatpush1.bf16.msra.mxu0 0
          %1596 = vmatprep.subr.bf16.mxu0 0
          %1597 = vmatpush1.bf16.msra.mxu0 0
          %1598 = vmatprep.subr.bf16.mxu0 0
          %1599 = vmatpush1.bf16.msra.mxu0 0
          %1600 = vmatprep.subr.bf16.mxu0 0
          %1601 = vmatpush1.bf16.msra.mxu0 0
          %1602 = vmatprep.subr.bf16.mxu0 0
          %1603 = vmatpush1.bf16.msra.mxu0 0
          %1604 = vmatprep.mubr.bf16.mxu0 0
          %1605 = vmatmul.mubr.bf16.gmra.mrb[0].mxu0 %v1503
          %v1606 = vpop.f32.mrb[0].mxu0
          %v1607 = vadd.f32 0.0, %v1606
          %v1608 = vpop.f32.mrb[0].mxu0
          %v1609 = vpop.f32.mrb[0].mxu0
          %v1610 = vadd.f32 0.0, %v1609
          %v1611 = vpop.f32.mrb[0].mxu0
          %1612 = vmatprep.mubr.bf16.mxu0 0
          %1613 = vmatmul.mubr.bf16.gmra.mrb[0].mxu0 %v1504
          %v1614 = vpop.f32.mrb[0].mxu0
          %v1615 = vadd.f32 0.0, %v1614
          %v1616 = vpop.f32.mrb[0].mxu0
          %v1617 = vpop.f32.mrb[0].mxu0
          %v1618 = vadd.f32 0.0, %v1617
          %v1619 = vpop.f32.mrb[0].mxu0
          %1620 = vmatprep.mubr.bf16.mxu0 0
          %1621 = vmatmul.mubr.bf16.gmra.mrb[0].mxu0 %v1505
          %v1622 = vpop.f32.mrb[0].mxu0
          %v1623 = vadd.f32 0.0, %v1622
          %v1624 = vpop.f32.mrb[0].mxu0
          %v1625 = vpop.f32.mrb[0].mxu0
          %v1626 = vadd.f32 0.0, %v1625
          %v1627 = vpop.f32.mrb[0].mxu0
          %1628 = vmatprep.mubr.bf16.mxu0 0
          %1629 = vmatmul.mubr.bf16.gmra.mrb[0].mxu0 %v1506
          %v1630 = vpop.f32.mrb[0].mxu0
          %v1631 = vadd.f32 0.0, %v1630
          %v1632 = vpop.f32.mrb[0].mxu0
          %v1633 = vpop.f32.mrb[0].mxu0
          %v1634 = vadd.f32 0.0, %v1633
          %v1635 = vpop.f32.mrb[0].mxu0
          %1636 = vdwg.mxu0
          %v1637 = vadd.f32 %v1484, %v1607
          %v1638 = vadd.f32 %v1485, %v1610
          %v1639 = vadd.f32 %v1486, %v1615
          %v1640 = vadd.f32 %v1487, %v1618
          %v1641 = vadd.f32 %v1488, %v1623
          %v1642 = vadd.f32 %v1489, %v1626
          %v1643 = vadd.f32 %v1490, %v1631
          %v1644 = vadd.f32 %v1491, %v1634
          %v1645 = vld [vmem:[%s1494 + $0x8] sm:$0xff]
          %v1646 = vld [vmem:[%s1494 + $0x10] sm:$0xff]
          %v1647 = vld [vmem:[%s1494 + $0x28] sm:$0xff]
          %v1648 = vld [vmem:[%s1494 + $0x30] sm:$0xff]
          %v1649 = vld [vmem:[%s1494 + $0x48] sm:$0xff]
          %v1650 = vld [vmem:[%s1494 + $0x50] sm:$0xff]
          %v1651 = vld [vmem:[%s1494 + $0x68] sm:$0xff]
          %v1652 = vld [vmem:[%s1494 + $0x70] sm:$0xff]
          %v1653 = vpack.c.bf16 %v1646, %v1645
          %v1654 = vpack.c.bf16 %v1648, %v1647
          %v1655 = vpack.c.bf16 %v1650, %v1649
          %v1656 = vpack.c.bf16 %v1652, %v1651
          %s1657 = scalar_lea.vmem [#allocation10], 448
          %v1658 = vld [vmem:[%s1657] sm:$0xf]
          %v1659 = vld [vmem:[%s1657 + $0x4] sm:$0xf]
          %v1660 = vld [vmem:[%s1657 + $0x8] sm:$0xf]
          %v1661 = vld [vmem:[%s1657 + $0xc] sm:$0xf]
          %v1662 = vld [vmem:[%s1657 + $0x10] sm:$0xf]
          %v1663 = vld [vmem:[%s1657 + $0x14] sm:$0xf]
          %v1664 = vld [vmem:[%s1657 + $0x18] sm:$0xf]
          %v1665 = vld [vmem:[%s1657 + $0x1c] sm:$0xf]
          %v1666 = vld [vmem:[%s1657 + $0x20] sm:$0xf]
          %v1667 = vld [vmem:[%s1657 + $0x24] sm:$0xf]
          %v1668 = vld [vmem:[%s1657 + $0x28] sm:$0xf]
          %v1669 = vld [vmem:[%s1657 + $0x2c] sm:$0xf]
          %v1670 = vld [vmem:[%s1657 + $0x30] sm:$0xf]
          %v1671 = vld [vmem:[%s1657 + $0x34] sm:$0xf]
          %v1672 = vld [vmem:[%s1657 + $0x38] sm:$0xf]
          %v1673 = vld [vmem:[%s1657 + $0x3c] sm:$0xf]
          %v1690 = vunpack.c.l.b16 %v1658
          %v1691 = vunpack.c.l.b16 %v1659
          %v1692 = vunpack.c.l.b16 %v1660
          %v1693 = vunpack.c.l.b16 %v1661
          %v1694 = vunpack.c.l.b16 %v1662
          %v1695 = vunpack.c.l.b16 %v1663
          %v1696 = vunpack.c.l.b16 %v1664
          %v1697 = vunpack.c.l.b16 %v1665
          %v1698 = vunpack.c.l.b16 %v1666
          %v1699 = vunpack.c.l.b16 %v1667
          %v1700 = vunpack.c.l.b16 %v1668
          %v1701 = vunpack.c.l.b16 %v1669
          %v1702 = vunpack.c.l.b16 %v1670
          %v1703 = vunpack.c.l.b16 %v1671
          %v1704 = vunpack.c.l.b16 %v1672
          %v1705 = vunpack.c.l.b16 %v1673
          %v1706 = vpack.c.b16 %v1691, %v1690
          %v1707 = vpack.c.b16 %v1693, %v1692
          %v1708 = vpack.c.b16 %v1695, %v1694
          %v1709 = vpack.c.b16 %v1697, %v1696
          %v1710 = vpack.c.b16 %v1699, %v1698
          %v1711 = vpack.c.b16 %v1701, %v1700
          %v1712 = vpack.c.b16 %v1703, %v1702
          %v1713 = vpack.c.b16 %v1705, %v1704
          %1722 = vmatprep.subr.bf16.mxu0 0
          %1723 = vmatpush1.bf16.msra.mxu0 %v1706
          %1724 = vmatprep.subr.bf16.mxu0 0
          %1725 = vmatpush1.bf16.msra.mxu0 %v1707
          %1726 = vmatprep.subr.bf16.mxu0 0
          %1727 = vmatpush1.bf16.msra.mxu0 %v1708
          %1728 = vmatprep.subr.bf16.mxu0 0
          %1729 = vmatpush1.bf16.msra.mxu0 %v1709
          %1730 = vmatprep.subr.bf16.mxu0 0
          %1731 = vmatpush1.bf16.msra.mxu0 %v1710
          %1732 = vmatprep.subr.bf16.mxu0 0
          %1733 = vmatpush1.bf16.msra.mxu0 %v1711
          %1734 = vmatprep.subr.bf16.mxu0 0
          %1735 = vmatpush1.bf16.msra.mxu0 %v1712
          %1736 = vmatprep.subr.bf16.mxu0 0
          %1737 = vmatpush1.bf16.msra.mxu0 %v1713
          %1738 = vmatprep.subr.bf16.mxu0 0
          %1739 = vmatpush1.bf16.msra.mxu0 0
          %1740 = vmatprep.subr.bf16.mxu0 0
          %1741 = vmatpush1.bf16.msra.mxu0 0
          %1742 = vmatprep.subr.bf16.mxu0 0
          %1743 = vmatpush1.bf16.msra.mxu0 0
          %1744 = vmatprep.subr.bf16.mxu0 0
          %1745 = vmatpush1.bf16.msra.mxu0 0
          %1746 = vmatprep.subr.bf16.mxu0 0
          %1747 = vmatpush1.bf16.msra.mxu0 0
          %1748 = vmatprep.subr.bf16.mxu0 0
          %1749 = vmatpush1.bf16.msra.mxu0 0
          %1750 = vmatprep.subr.bf16.mxu0 0
          %1751 = vmatpush1.bf16.msra.mxu0 0
          %1752 = vmatprep.subr.bf16.mxu0 0
          %1753 = vmatpush1.bf16.msra.mxu0 0
          %1754 = vmatprep.mubr.bf16.mxu0 0
          %1755 = vmatmul.mubr.bf16.gmra.mrb[0].mxu0 %v1653
          %v1756 = vpop.f32.mrb[0].mxu0
          %v1757 = vadd.f32 0.0, %v1756
          %v1758 = vpop.f32.mrb[0].mxu0
          %v1759 = vpop.f32.mrb[0].mxu0
          %v1760 = vadd.f32 0.0, %v1759
          %v1761 = vpop.f32.mrb[0].mxu0
          %1762 = vmatprep.mubr.bf16.mxu0 0
          %1763 = vmatmul.mubr.bf16.gmra.mrb[0].mxu0 %v1654
          %v1764 = vpop.f32.mrb[0].mxu0
          %v1765 = vadd.f32 0.0, %v1764
          %v1766 = vpop.f32.mrb[0].mxu0
          %v1767 = vpop.f32.mrb[0].mxu0
          %v1768 = vadd.f32 0.0, %v1767
          %v1769 = vpop.f32.mrb[0].mxu0
          %1770 = vmatprep.mubr.bf16.mxu0 0
          %1771 = vmatmul.mubr.bf16.gmra.mrb[0].mxu0 %v1655
          %v1772 = vpop.f32.mrb[0].mxu0
          %v1773 = vadd.f32 0.0, %v1772
          %v1774 = vpop.f32.mrb[0].mxu0
          %v1775 = vpop.f32.mrb[0].mxu0
          %v1776 = vadd.f32 0.0, %v1775
          %v1777 = vpop.f32.mrb[0].mxu0
          %1778 = vmatprep.mubr.bf16.mxu0 0
          %1779 = vmatmul.mubr.bf16.gmra.mrb[0].mxu0 %v1656
          %v1780 = vpop.f32.mrb[0].mxu0
          %v1781 = vadd.f32 0.0, %v1780
          %v1782 = vpop.f32.mrb[0].mxu0
          %v1783 = vpop.f32.mrb[0].mxu0
          %v1784 = vadd.f32 0.0, %v1783
          %v1785 = vpop.f32.mrb[0].mxu0
          %1786 = vdwg.mxu0
          %v1787 = vadd.f32 %v1637, %v1757
          %v1788 = vadd.f32 %v1638, %v1760
          %v1789 = vadd.f32 %v1639, %v1765
          %v1790 = vadd.f32 %v1640, %v1768
          %v1791 = vadd.f32 %v1641, %v1773
          %v1792 = vadd.f32 %v1642, %v1776
          %v1793 = vadd.f32 %v1643, %v1781
          %v1794 = vadd.f32 %v1644, %v1784
          %v1795 = vld [vmem:[%s1494 + $0x9] sm:$0xff]
          %v1796 = vld [vmem:[%s1494 + $0x11] sm:$0xff]
          %v1797 = vld [vmem:[%s1494 + $0x29] sm:$0xff]
          %v1798 = vld [vmem:[%s1494 + $0x31] sm:$0xff]
          %v1799 = vld [vmem:[%s1494 + $0x49] sm:$0xff]
          %v1800 = vld [vmem:[%s1494 + $0x51] sm:$0xff]
          %v1801 = vld [vmem:[%s1494 + $0x69] sm:$0xff]
          %v1802 = vld [vmem:[%s1494 + $0x71] sm:$0xff]
          %v1803 = vpack.c.bf16 %v1796, %v1795
          %v1804 = vpack.c.bf16 %v1798, %v1797
          %v1805 = vpack.c.bf16 %v1800, %v1799
          %v1806 = vpack.c.bf16 %v1802, %v1801
          %s1807 = scalar_lea.vmem [#allocation10], 512
          %v1808 = vld [vmem:[%s1807] sm:$0xf]
          %v1809 = vld [vmem:[%s1807 + $0x4] sm:$0xf]
          %v1810 = vld [vmem:[%s1807 + $0x8] sm:$0xf]
          %v1811 = vld [vmem:[%s1807 + $0xc] sm:$0xf]
          %v1812 = vld [vmem:[%s1807 + $0x10] sm:$0xf]
          %v1813 = vld [vmem:[%s1807 + $0x14] sm:$0xf]
          %v1814 = vld [vmem:[%s1807 + $0x18] sm:$0xf]
          %v1815 = vld [vmem:[%s1807 + $0x1c] sm:$0xf]
          %v1816 = vld [vmem:[%s1807 + $0x20] sm:$0xf]
          %v1817 = vld [vmem:[%s1807 + $0x24] sm:$0xf]
          %v1818 = vld [vmem:[%s1807 + $0x28] sm:$0xf]
          %v1819 = vld [vmem:[%s1807 + $0x2c] sm:$0xf]
          %v1820 = vld [vmem:[%s1807 + $0x30] sm:$0xf]
          %v1821 = vld [vmem:[%s1807 + $0x34] sm:$0xf]
          %v1822 = vld [vmem:[%s1807 + $0x38] sm:$0xf]
          %v1823 = vld [vmem:[%s1807 + $0x3c] sm:$0xf]
          %v1840 = vunpack.c.l.b16 %v1808
          %v1841 = vunpack.c.l.b16 %v1809
          %v1842 = vunpack.c.l.b16 %v1810
          %v1843 = vunpack.c.l.b16 %v1811
          %v1844 = vunpack.c.l.b16 %v1812
          %v1845 = vunpack.c.l.b16 %v1813
          %v1846 = vunpack.c.l.b16 %v1814
          %v1847 = vunpack.c.l.b16 %v1815
          %v1848 = vunpack.c.l.b16 %v1816
          %v1849 = vunpack.c.l.b16 %v1817
          %v1850 = vunpack.c.l.b16 %v1818
          %v1851 = vunpack.c.l.b16 %v1819
          %v1852 = vunpack.c.l.b16 %v1820
          %v1853 = vunpack.c.l.b16 %v1821
          %v1854 = vunpack.c.l.b16 %v1822
          %v1855 = vunpack.c.l.b16 %v1823
          %v1856 = vpack.c.b16 %v1841, %v1840
          %v1857 = vpack.c.b16 %v1843, %v1842
          %v1858 = vpack.c.b16 %v1845, %v1844
          %v1859 = vpack.c.b16 %v1847, %v1846
          %v1860 = vpack.c.b16 %v1849, %v1848
          %v1861 = vpack.c.b16 %v1851, %v1850
          %v1862 = vpack.c.b16 %v1853, %v1852
          %v1863 = vpack.c.b16 %v1855, %v1854
          %1872 = vmatprep.subr.bf16.mxu0 0
          %1873 = vmatpush1.bf16.msra.mxu0 %v1856
          %1874 = vmatprep.subr.bf16.mxu0 0
          %1875 = vmatpush1.bf16.msra.mxu0 %v1857
          %1876 = vmatprep.subr.bf16.mxu0 0
          %1877 = vmatpush1.bf16.msra.mxu0 %v1858
          %1878 = vmatprep.subr.bf16.mxu0 0
          %1879 = vmatpush1.bf16.msra.mxu0 %v1859
          %1880 = vmatprep.subr.bf16.mxu0 0
          %1881 = vmatpush1.bf16.msra.mxu0 %v1860
          %1882 = vmatprep.subr.bf16.mxu0 0
          %1883 = vmatpush1.bf16.msra.mxu0 %v1861
          %1884 = vmatprep.subr.bf16.mxu0 0
          %1885 = vmatpush1.bf16.msra.mxu0 %v1862
          %1886 = vmatprep.subr.bf16.mxu0 0
          %1887 = vmatpush1.bf16.msra.mxu0 %v1863
          %1888 = vmatprep.subr.bf16.mxu0 0
          %1889 = vmatpush1.bf16.msra.mxu0 0
          %1890 = vmatprep.subr.bf16.mxu0 0
          %1891 = vmatpush1.bf16.msra.mxu0 0
          %1892 = vmatprep.subr.bf16.mxu0 0
          %1893 = vmatpush1.bf16.msra.mxu0 0
          %1894 = vmatprep.subr.bf16.mxu0 0
          %1895 = vmatpush1.bf16.msra.mxu0 0
          %1896 = vmatprep.subr.bf16.mxu0 0
          %1897 = vmatpush1.bf16.msra.mxu0 0
          %1898 = vmatprep.subr.bf16.mxu0 0
          %1899 = vmatpush1.bf16.msra.mxu0 0
          %1900 = vmatprep.subr.bf16.mxu0 0
          %1901 = vmatpush1.bf16.msra.mxu0 0
          %1902 = vmatprep.subr.bf16.mxu0 0
          %1903 = vmatpush1.bf16.msra.mxu0 0
          %1904 = vmatprep.mubr.bf16.mxu0 0
          %1905 = vmatmul.mubr.bf16.gmra.mrb[0].mxu0 %v1803
          %v1906 = vpop.f32.mrb[0].mxu0
          %v1907 = vadd.f32 0.0, %v1906
          %v1908 = vpop.f32.mrb[0].mxu0
          %v1909 = vpop.f32.mrb[0].mxu0
          %v1910 = vadd.f32 0.0, %v1909
          %v1911 = vpop.f32.mrb[0].mxu0
          %1912 = vmatprep.mubr.bf16.mxu0 0
          %1913 = vmatmul.mubr.bf16.gmra.mrb[0].mxu0 %v1804
          %v1914 = vpop.f32.mrb[0].mxu0
          %v1915 = vadd.f32 0.0, %v1914
          %v1916 = vpop.f32.mrb[0].mxu0
          %v1917 = vpop.f32.mrb[0].mxu0
          %v1918 = vadd.f32 0.0, %v1917
          %v1919 = vpop.f32.mrb[0].mxu0
          %1920 = vmatprep.mubr.bf16.mxu0 0
          %1921 = vmatmul.mubr.bf16.gmra.mrb[0].mxu0 %v1805
          %v1922 = vpop.f32.mrb[0].mxu0
          %v1923 = vadd.f32 0.0, %v1922
          %v1924 = vpop.f32.mrb[0].mxu0
          %v1925 = vpop.f32.mrb[0].mxu0
          %v1926 = vadd.f32 0.0, %v1925
          %v1927 = vpop.f32.mrb[0].mxu0
          %1928 = vmatprep.mubr.bf16.mxu0 0
          %1929 = vmatmul.mubr.bf16.gmra.mrb[0].mxu0 %v1806
          %v1930 = vpop.f32.mrb[0].mxu0
          %v1931 = vadd.f32 0.0, %v1930
          %v1932 = vpop.f32.mrb[0].mxu0
          %v1933 = vpop.f32.mrb[0].mxu0
          %v1934 = vadd.f32 0.0, %v1933
          %v1935 = vpop.f32.mrb[0].mxu0
          %1936 = vdwg.mxu0
          %v1937 = vadd.f32 %v1787, %v1907
          %v1938 = vadd.f32 %v1788, %v1910
          %v1939 = vadd.f32 %v1789, %v1915
          %v1940 = vadd.f32 %v1790, %v1918
          %v1941 = vadd.f32 %v1791, %v1923
          %v1942 = vadd.f32 %v1792, %v1926
          %v1943 = vadd.f32 %v1793, %v1931
          %v1944 = vadd.f32 %v1794, %v1934
          %v1945 = vld [vmem:[%s4] sm:$0x1]
          %v1947 = vlaneseq
          %v1948 = vshrl.u32 %v1947, 7
          %v1949 = vsub.s32 0, %v1948
          %v1950 = vrot.slane %v1945, %v1949
          %v1952 = vadd.f32 %v1937, %v1950
          %v1953 = vadd.f32 %v1938, %v1950
          %v1954 = vadd.f32 %v1939, %v1950
          %v1955 = vadd.f32 %v1940, %v1950
          %v1956 = vadd.f32 %v1941, %v1950
          %v1957 = vadd.f32 %v1942, %v1950
          %v1958 = vadd.f32 %v1943, %v1950
          %v1959 = vadd.f32 %v1944, %v1950
          %v1960 = vmax.f32 %v1952, 0.0
          %v1961 = vmax.f32 %v1953, 0.0
          %v1962 = vmax.f32 %v1954, 0.0
          %v1963 = vmax.f32 %v1955, 0.0
          %v1964 = vmax.f32 %v1956, 0.0
          %v1965 = vmax.f32 %v1957, 0.0
          %v1966 = vmax.f32 %v1958, 0.0
          %v1967 = vmax.f32 %v1959, 0.0
          %s1968 = scalar_lea.vmem [#allocation3], %s1040
          %1969 = vst [vmem:[%s1968 + $0x8] sm:$0xff] %v1960
          %1970 = vst [vmem:[%s1968 + $0x10] sm:$0xff] %v1961
          %1971 = vst [vmem:[%s1968 + $0x28] sm:$0xff] %v1962
          %1972 = vst [vmem:[%s1968 + $0x30] sm:$0xff] %v1963
          %1973 = vst [vmem:[%s1968 + $0x48] sm:$0xff] %v1964
          %1974 = vst [vmem:[%s1968 + $0x50] sm:$0xff] %v1965
          %1975 = vst [vmem:[%s1968 + $0x68] sm:$0xff] %v1966
          %1976 = vst [vmem:[%s1968 + $0x70] sm:$0xff] %v1967
        $region76: #{tpu_custom_call.1} parent=47 // loop_footer
          %s602 = sadd.s32 1, %s598
        $region77: #{tpu_custom_call.1} parent=47 // loop_footer_branch
          %597 = sbr.rel target = $region73
        $region78: #{tpu_custom_call.1} parent=47 // loop_exit
          _
        loop: start=0, step=1, limit=4
        $region79: #{tpu_custom_call.1} parent=47 // loop_pre_header
          _
        $region80: #{tpu_custom_call.1} parent=47 // loop_header
          %s1978 = sphi 0, %s1982
          %p1979 = scmp.ge.s32.totalorder %s1978, 4
        $region81: #{tpu_custom_call.1} parent=47 // loop_header_branch
          %1981 = sbr.rel (%p1979) target = $region85
        $region82: #{tpu_custom_call.1} parent=47 // loop_body
          %s1983 = smul.u32 %s1978, 4
          %s1984 = smul.u32 %s1983, 32
          %s1985 = scalar_lea.vmem [#allocation3], %s1984
          %v1986 = vld [vmem:[%s1985 + $0x7] sm:$0xff]
          %v1987 = vld [vmem:[%s1985 + $0xf] sm:$0xff]
          %v1988 = vld [vmem:[%s1985 + $0x27] sm:$0xff]
          %v1989 = vld [vmem:[%s1985 + $0x2f] sm:$0xff]
          %v1990 = vld [vmem:[%s1985 + $0x47] sm:$0xff]
          %v1991 = vld [vmem:[%s1985 + $0x4f] sm:$0xff]
          %v1992 = vld [vmem:[%s1985 + $0x67] sm:$0xff]
          %v1993 = vld [vmem:[%s1985 + $0x6f] sm:$0xff]
          %v1994 = vpack.c.bf16 %v1987, %v1986
          %v1995 = vpack.c.bf16 %v1989, %v1988
          %v1996 = vpack.c.bf16 %v1991, %v1990
          %v1997 = vpack.c.bf16 %v1993, %v1992
          %v1998 = vld [vmem:[#allocation12] sm:$0xff]
          %v1999 = vld [vmem:[#allocation12 + $0x8] sm:$0xff]
          %v2000 = vld [vmem:[#allocation12 + $0x10] sm:$0xff]
          %v2001 = vld [vmem:[#allocation12 + $0x18] sm:$0xff]
          %v2002 = vld [vmem:[#allocation12 + $0x20] sm:$0xff]
          %v2003 = vld [vmem:[#allocation12 + $0x28] sm:$0xff]
          %v2004 = vld [vmem:[#allocation12 + $0x30] sm:$0xff]
          %v2005 = vld [vmem:[#allocation12 + $0x38] sm:$0xff]
          %v2006 = vld [vmem:[#allocation12 + $0x40] sm:$0xff]
          %v2007 = vld [vmem:[#allocation12 + $0x48] sm:$0xff]
          %v2008 = vld [vmem:[#allocation12 + $0x50] sm:$0xff]
          %v2009 = vld [vmem:[#allocation12 + $0x58] sm:$0xff]
          %v2010 = vld [vmem:[#allocation12 + $0x60] sm:$0xff]
          %v2011 = vld [vmem:[#allocation12 + $0x68] sm:$0xff]
          %v2012 = vld [vmem:[#allocation12 + $0x70] sm:$0xff]
          %v2013 = vld [vmem:[#allocation12 + $0x78] sm:$0xff]
          %v2014 = vld [vmem:[%s1985 + $0x8] sm:$0xff]
          %v2015 = vld [vmem:[%s1985 + $0x10] sm:$0xff]
          %v2016 = vld [vmem:[%s1985 + $0x28] sm:$0xff]
          %v2017 = vld [vmem:[%s1985 + $0x30] sm:$0xff]
          %v2018 = vld [vmem:[%s1985 + $0x48] sm:$0xff]
          %v2019 = vld [vmem:[%s1985 + $0x50] sm:$0xff]
          %v2020 = vld [vmem:[%s1985 + $0x68] sm:$0xff]
          %v2021 = vld [vmem:[%s1985 + $0x70] sm:$0xff]
          %v2022 = vpack.c.bf16 %v2015, %v2014
          %v2023 = vpack.c.bf16 %v2017, %v2016
          %v2024 = vpack.c.bf16 %v2019, %v2018
          %v2025 = vpack.c.bf16 %v2021, %v2020
          %s2026 = scalar_lea.vmem [#allocation12], 128
          %v2027 = vld [vmem:[%s2026] sm:$0xff]
          %v2028 = vld [vmem:[%s2026 + $0x8] sm:$0xff]
          %v2029 = vld [vmem:[%s2026 + $0x10] sm:$0xff]
          %v2030 = vld [vmem:[%s2026 + $0x18] sm:$0xff]
          %v2031 = vld [vmem:[%s2026 + $0x20] sm:$0xff]
          %v2032 = vld [vmem:[%s2026 + $0x28] sm:$0xff]
          %v2033 = vld [vmem:[%s2026 + $0x30] sm:$0xff]
          %v2034 = vld [vmem:[%s2026 + $0x38] sm:$0xff]
          %v2035 = vld [vmem:[%s2026 + $0x40] sm:$0xff]
          %v2036 = vld [vmem:[%s2026 + $0x48] sm:$0xff]
          %v2037 = vld [vmem:[%s2026 + $0x50] sm:$0xff]
          %v2038 = vld [vmem:[%s2026 + $0x58] sm:$0xff]
          %v2039 = vld [vmem:[%s2026 + $0x60] sm:$0xff]
          %v2040 = vld [vmem:[%s2026 + $0x68] sm:$0xff]
          %v2041 = vld [vmem:[%s2026 + $0x70] sm:$0xff]
          %v2042 = vld [vmem:[%s2026 + $0x78] sm:$0xff]
          %v2059 = vunpack.c.l.b16 %v2027
          %v2060 = vunpack.c.h.b16 %v2027
          %v2061 = vunpack.c.l.b16 %v2028
          %v2062 = vunpack.c.h.b16 %v2028
          %v2063 = vunpack.c.l.b16 %v2029
          %v2064 = vunpack.c.h.b16 %v2029
          %v2065 = vunpack.c.l.b16 %v2030
          %v2066 = vunpack.c.h.b16 %v2030
          %v2067 = vunpack.c.l.b16 %v2031
          %v2068 = vunpack.c.h.b16 %v2031
          %v2069 = vunpack.c.l.b16 %v2032
          %v2070 = vunpack.c.h.b16 %v2032
          %v2071 = vunpack.c.l.b16 %v2033
          %v2072 = vunpack.c.h.b16 %v2033
          %v2073 = vunpack.c.l.b16 %v2034
          %v2074 = vunpack.c.h.b16 %v2034
          %v2075 = vunpack.c.l.b16 %v2035
          %v2076 = vunpack.c.h.b16 %v2035
          %v2077 = vunpack.c.l.b16 %v2036
          %v2078 = vunpack.c.h.b16 %v2036
          %v2079 = vunpack.c.l.b16 %v2037
          %v2080 = vunpack.c.h.b16 %v2037
          %v2081 = vunpack.c.l.b16 %v2038
          %v2082 = vunpack.c.h.b16 %v2038
          %v2083 = vunpack.c.l.b16 %v2039
          %v2084 = vunpack.c.h.b16 %v2039
          %v2085 = vunpack.c.l.b16 %v2040
          %v2086 = vunpack.c.h.b16 %v2040
          %v2087 = vunpack.c.l.b16 %v2041
          %v2088 = vunpack.c.h.b16 %v2041
          %v2089 = vunpack.c.l.b16 %v2042
          %v2090 = vunpack.c.h.b16 %v2042
          %v2091 = vpack.c.b16 %v2061, %v2059
          %v2092 = vpack.c.b16 %v2062, %v2060
          %v2093 = vpack.c.b16 %v2065, %v2063
          %v2094 = vpack.c.b16 %v2066, %v2064
          %v2095 = vpack.c.b16 %v2069, %v2067
          %v2096 = vpack.c.b16 %v2070, %v2068
          %v2097 = vpack.c.b16 %v2073, %v2071
          %v2098 = vpack.c.b16 %v2074, %v2072
          %v2099 = vpack.c.b16 %v2077, %v2075
          %v2100 = vpack.c.b16 %v2078, %v2076
          %v2101 = vpack.c.b16 %v2081, %v2079
          %v2102 = vpack.c.b16 %v2082, %v2080
          %v2103 = vpack.c.b16 %v2085, %v2083
          %v2104 = vpack.c.b16 %v2086, %v2084
          %v2105 = vpack.c.b16 %v2089, %v2087
          %v2106 = vpack.c.b16 %v2090, %v2088
          %2123 = vmatprep.subr.bf16.mxu0 %v2092
          %2124 = vmatpush1.bf16.msra.mxu0 %v2091
          %2125 = vmatprep.subr.bf16.mxu0 %v2094
          %2126 = vmatpush1.bf16.msra.mxu0 %v2093
          %2127 = vmatprep.subr.bf16.mxu0 %v2096
          %2128 = vmatpush1.bf16.msra.mxu0 %v2095
          %2129 = vmatprep.subr.bf16.mxu0 %v2098
          %2130 = vmatpush1.bf16.msra.mxu0 %v2097
          %2131 = vmatprep.subr.bf16.mxu0 %v2100
          %2132 = vmatpush1.bf16.msra.mxu0 %v2099
          %2133 = vmatprep.subr.bf16.mxu0 %v2102
          %2134 = vmatpush1.bf16.msra.mxu0 %v2101
          %2135 = vmatprep.subr.bf16.mxu0 %v2104
          %2136 = vmatpush1.bf16.msra.mxu0 %v2103
          %2137 = vmatprep.subr.bf16.mxu0 %v2106
          %2138 = vmatpush1.bf16.msra.mxu0 %v2105
          %2139 = vmatprep.subr.bf16.mxu0 0
          %2140 = vmatpush1.bf16.msra.mxu0 0
          %2141 = vmatprep.subr.bf16.mxu0 0
          %2142 = vmatpush1.bf16.msra.mxu0 0
          %2143 = vmatprep.subr.bf16.mxu0 0
          %2144 = vmatpush1.bf16.msra.mxu0 0
          %2145 = vmatprep.subr.bf16.mxu0 0
          %2146 = vmatpush1.bf16.msra.mxu0 0
          %2147 = vmatprep.subr.bf16.mxu0 0
          %2148 = vmatpush1.bf16.msra.mxu0 0
          %2149 = vmatprep.subr.bf16.mxu0 0
          %2150 = vmatpush1.bf16.msra.mxu0 0
          %2151 = vmatprep.subr.bf16.mxu0 0
          %2152 = vmatpush1.bf16.msra.mxu0 0
          %2153 = vmatprep.subr.bf16.mxu0 0
          %2154 = vmatpush1.bf16.msra.mxu0 0
          %2155 = vmatprep.mubr.bf16.mxu0 0
          %2156 = vmatmul.mubr.bf16.gmra.mrb[0].mxu0 %v2022
          %v2157 = vpop.f32.mrb[0].mxu0
          %v2158 = vadd.f32 0.0, %v2157
          %v2159 = vpop.f32.mrb[0].mxu0
          %v2160 = vadd.f32 0.0, %v2159
          %v2161 = vpop.f32.mrb[0].mxu0
          %v2162 = vadd.f32 0.0, %v2161
          %v2163 = vpop.f32.mrb[0].mxu0
          %v2164 = vadd.f32 0.0, %v2163
          %2165 = vmatprep.mubr.bf16.mxu0 0
          %2166 = vmatmul.mubr.bf16.gmra.mrb[0].mxu0 %v2023
          %v2167 = vpop.f32.mrb[0].mxu0
          %v2168 = vadd.f32 0.0, %v2167
          %v2169 = vpop.f32.mrb[0].mxu0
          %v2170 = vadd.f32 0.0, %v2169
          %v2171 = vpop.f32.mrb[0].mxu0
          %v2172 = vadd.f32 0.0, %v2171
          %v2173 = vpop.f32.mrb[0].mxu0
          %v2174 = vadd.f32 0.0, %v2173
          %2175 = vmatprep.mubr.bf16.mxu0 0
          %2176 = vmatmul.mubr.bf16.gmra.mrb[0].mxu0 %v2024
          %v2177 = vpop.f32.mrb[0].mxu0
          %v2178 = vadd.f32 0.0, %v2177
          %v2179 = vpop.f32.mrb[0].mxu0
          %v2180 = vadd.f32 0.0, %v2179
          %v2181 = vpop.f32.mrb[0].mxu0
          %v2182 = vadd.f32 0.0, %v2181
          %v2183 = vpop.f32.mrb[0].mxu0
          %v2184 = vadd.f32 0.0, %v2183
          %2185 = vmatprep.mubr.bf16.mxu0 0
          %2186 = vmatmul.mubr.bf16.gmra.mrb[0].mxu0 %v2025
          %v2187 = vpop.f32.mrb[0].mxu0
          %v2188 = vadd.f32 0.0, %v2187
          %v2189 = vpop.f32.mrb[0].mxu0
          %v2190 = vadd.f32 0.0, %v2189
          %v2191 = vpop.f32.mrb[0].mxu0
          %v2192 = vadd.f32 0.0, %v2191
          %v2193 = vpop.f32.mrb[0].mxu0
          %v2194 = vadd.f32 0.0, %v2193
          %2195 = vdwg.mxu0
          %v2212 = vunpack.c.l.b16 %v1998
          %v2213 = vunpack.c.h.b16 %v1998
          %v2214 = vunpack.c.l.b16 %v1999
          %v2215 = vunpack.c.h.b16 %v1999
          %v2216 = vunpack.c.l.b16 %v2000
          %v2217 = vunpack.c.h.b16 %v2000
          %v2218 = vunpack.c.l.b16 %v2001
          %v2219 = vunpack.c.h.b16 %v2001
          %v2220 = vunpack.c.l.b16 %v2002
          %v2221 = vunpack.c.h.b16 %v2002
          %v2222 = vunpack.c.l.b16 %v2003
          %v2223 = vunpack.c.h.b16 %v2003
          %v2224 = vunpack.c.l.b16 %v2004
          %v2225 = vunpack.c.h.b16 %v2004
          %v2226 = vunpack.c.l.b16 %v2005
          %v2227 = vunpack.c.h.b16 %v2005
          %v2228 = vunpack.c.l.b16 %v2006
          %v2229 = vunpack.c.h.b16 %v2006
          %v2230 = vunpack.c.l.b16 %v2007
          %v2231 = vunpack.c.h.b16 %v2007
          %v2232 = vunpack.c.l.b16 %v2008
          %v2233 = vunpack.c.h.b16 %v2008
          %v2234 = vunpack.c.l.b16 %v2009
          %v2235 = vunpack.c.h.b16 %v2009
          %v2236 = vunpack.c.l.b16 %v2010
          %v2237 = vunpack.c.h.b16 %v2010
          %v2238 = vunpack.c.l.b16 %v2011
          %v2239 = vunpack.c.h.b16 %v2011
          %v2240 = vunpack.c.l.b16 %v2012
          %v2241 = vunpack.c.h.b16 %v2012
          %v2242 = vunpack.c.l.b16 %v2013
          %v2243 = vunpack.c.h.b16 %v2013
          %v2244 = vpack.c.b16 %v2214, %v2212
          %v2245 = vpack.c.b16 %v2215, %v2213
          %v2246 = vpack.c.b16 %v2218, %v2216
          %v2247 = vpack.c.b16 %v2219, %v2217
          %v2248 = vpack.c.b16 %v2222, %v2220
          %v2249 = vpack.c.b16 %v2223, %v2221
          %v2250 = vpack.c.b16 %v2226, %v2224
          %v2251 = vpack.c.b16 %v2227, %v2225
          %v2252 = vpack.c.b16 %v2230, %v2228
          %v2253 = vpack.c.b16 %v2231, %v2229
          %v2254 = vpack.c.b16 %v2234, %v2232
          %v2255 = vpack.c.b16 %v2235, %v2233
          %v2256 = vpack.c.b16 %v2238, %v2236
          %v2257 = vpack.c.b16 %v2239, %v2237
          %v2258 = vpack.c.b16 %v2242, %v2240
          %v2259 = vpack.c.b16 %v2243, %v2241
          %2276 = vmatprep.subr.bf16.mxu0 %v2245
          %2277 = vmatpush1.bf16.msra.mxu0 %v2244
          %2278 = vmatprep.subr.bf16.mxu0 %v2247
          %2279 = vmatpush1.bf16.msra.mxu0 %v2246
          %2280 = vmatprep.subr.bf16.mxu0 %v2249
          %2281 = vmatpush1.bf16.msra.mxu0 %v2248
          %2282 = vmatprep.subr.bf16.mxu0 %v2251
          %2283 = vmatpush1.bf16.msra.mxu0 %v2250
          %2284 = vmatprep.subr.bf16.mxu0 %v2253
          %2285 = vmatpush1.bf16.msra.mxu0 %v2252
          %2286 = vmatprep.subr.bf16.mxu0 %v2255
          %2287 = vmatpush1.bf16.msra.mxu0 %v2254
          %2288 = vmatprep.subr.bf16.mxu0 %v2257
          %2289 = vmatpush1.bf16.msra.mxu0 %v2256
          %2290 = vmatprep.subr.bf16.mxu0 %v2259
          %2291 = vmatpush1.bf16.msra.mxu0 %v2258
          %2292 = vmatprep.subr.bf16.mxu0 0
          %2293 = vmatpush1.bf16.msra.mxu0 0
          %2294 = vmatprep.subr.bf16.mxu0 0
          %2295 = vmatpush1.bf16.msra.mxu0 0
          %2296 = vmatprep.subr.bf16.mxu0 0
          %2297 = vmatpush1.bf16.msra.mxu0 0
          %2298 = vmatprep.subr.bf16.mxu0 0
          %2299 = vmatpush1.bf16.msra.mxu0 0
          %2300 = vmatprep.subr.bf16.mxu0 0
          %2301 = vmatpush1.bf16.msra.mxu0 0
          %2302 = vmatprep.subr.bf16.mxu0 0
          %2303 = vmatpush1.bf16.msra.mxu0 0
          %2304 = vmatprep.subr.bf16.mxu0 0
          %2305 = vmatpush1.bf16.msra.mxu0 0
          %2306 = vmatprep.subr.bf16.mxu0 0
          %2307 = vmatpush1.bf16.msra.mxu0 0
          %2308 = vmatprep.mubr.bf16.mxu0 0
          %2309 = vmatmul.mubr.bf16.gmra.mrb[0].mxu0 %v1994
          %v2310 = vpop.f32.mrb[0].mxu0
          %v2311 = vadd.f32 %v2158, %v2310
          %v2312 = vpop.f32.mrb[0].mxu0
          %v2313 = vadd.f32 %v2160, %v2312
          %v2314 = vpop.f32.mrb[0].mxu0
          %v2315 = vadd.f32 %v2162, %v2314
          %v2316 = vpop.f32.mrb[0].mxu0
          %v2317 = vadd.f32 %v2164, %v2316
          %2318 = vmatprep.mubr.bf16.mxu0 0
          %2319 = vmatmul.mubr.bf16.gmra.mrb[0].mxu0 %v1995
          %v2320 = vpop.f32.mrb[0].mxu0
          %v2321 = vadd.f32 %v2168, %v2320
          %v2322 = vpop.f32.mrb[0].mxu0
          %v2323 = vadd.f32 %v2170, %v2322
          %v2324 = vpop.f32.mrb[0].mxu0
          %v2325 = vadd.f32 %v2172, %v2324
          %v2326 = vpop.f32.mrb[0].mxu0
          %v2327 = vadd.f32 %v2174, %v2326
          %2328 = vmatprep.mubr.bf16.mxu0 0
          %2329 = vmatmul.mubr.bf16.gmra.mrb[0].mxu0 %v1996
          %v2330 = vpop.f32.mrb[0].mxu0
          %v2331 = vadd.f32 %v2178, %v2330
          %v2332 = vpop.f32.mrb[0].mxu0
          %v2333 = vadd.f32 %v2180, %v2332
          %v2334 = vpop.f32.mrb[0].mxu0
          %v2335 = vadd.f32 %v2182, %v2334
          %v2336 = vpop.f32.mrb[0].mxu0
          %v2337 = vadd.f32 %v2184, %v2336
          %2338 = vmatprep.mubr.bf16.mxu0 0
          %2339 = vmatmul.mubr.bf16.gmra.mrb[0].mxu0 %v1997
          %v2340 = vpop.f32.mrb[0].mxu0
          %v2341 = vadd.f32 %v2188, %v2340
          %v2342 = vpop.f32.mrb[0].mxu0
          %v2343 = vadd.f32 %v2190, %v2342
          %v2344 = vpop.f32.mrb[0].mxu0
          %v2345 = vadd.f32 %v2192, %v2344
          %v2346 = vpop.f32.mrb[0].mxu0
          %v2347 = vadd.f32 %v2194, %v2346
          %2348 = vdwg.mxu0
          %v2349 = vld [vmem:[%s1985 + $0x9] sm:$0xff]
          %v2350 = vld [vmem:[%s1985 + $0x11] sm:$0xff]
          %v2351 = vld [vmem:[%s1985 + $0x29] sm:$0xff]
          %v2352 = vld [vmem:[%s1985 + $0x31] sm:$0xff]
          %v2353 = vld [vmem:[%s1985 + $0x49] sm:$0xff]
          %v2354 = vld [vmem:[%s1985 + $0x51] sm:$0xff]
          %v2355 = vld [vmem:[%s1985 + $0x69] sm:$0xff]
          %v2356 = vld [vmem:[%s1985 + $0x71] sm:$0xff]
          %v2357 = vpack.c.bf16 %v2350, %v2349
          %v2358 = vpack.c.bf16 %v2352, %v2351
          %v2359 = vpack.c.bf16 %v2354, %v2353
          %v2360 = vpack.c.bf16 %v2356, %v2355
          %s2361 = scalar_lea.vmem [#allocation12], 256
          %v2362 = vld [vmem:[%s2361] sm:$0xff]
          %v2363 = vld [vmem:[%s2361 + $0x8] sm:$0xff]
          %v2364 = vld [vmem:[%s2361 + $0x10] sm:$0xff]
          %v2365 = vld [vmem:[%s2361 + $0x18] sm:$0xff]
          %v2366 = vld [vmem:[%s2361 + $0x20] sm:$0xff]
          %v2367 = vld [vmem:[%s2361 + $0x28] sm:$0xff]
          %v2368 = vld [vmem:[%s2361 + $0x30] sm:$0xff]
          %v2369 = vld [vmem:[%s2361 + $0x38] sm:$0xff]
          %v2370 = vld [vmem:[%s2361 + $0x40] sm:$0xff]
          %v2371 = vld [vmem:[%s2361 + $0x48] sm:$0xff]
          %v2372 = vld [vmem:[%s2361 + $0x50] sm:$0xff]
          %v2373 = vld [vmem:[%s2361 + $0x58] sm:$0xff]
          %v2374 = vld [vmem:[%s2361 + $0x60] sm:$0xff]
          %v2375 = vld [vmem:[%s2361 + $0x68] sm:$0xff]
          %v2376 = vld [vmem:[%s2361 + $0x70] sm:$0xff]
          %v2377 = vld [vmem:[%s2361 + $0x78] sm:$0xff]
          %v2394 = vunpack.c.l.b16 %v2362
          %v2395 = vunpack.c.h.b16 %v2362
          %v2396 = vunpack.c.l.b16 %v2363
          %v2397 = vunpack.c.h.b16 %v2363
          %v2398 = vunpack.c.l.b16 %v2364
          %v2399 = vunpack.c.h.b16 %v2364
          %v2400 = vunpack.c.l.b16 %v2365
          %v2401 = vunpack.c.h.b16 %v2365
          %v2402 = vunpack.c.l.b16 %v2366
          %v2403 = vunpack.c.h.b16 %v2366
          %v2404 = vunpack.c.l.b16 %v2367
          %v2405 = vunpack.c.h.b16 %v2367
          %v2406 = vunpack.c.l.b16 %v2368
          %v2407 = vunpack.c.h.b16 %v2368
          %v2408 = vunpack.c.l.b16 %v2369
          %v2409 = vunpack.c.h.b16 %v2369
          %v2410 = vunpack.c.l.b16 %v2370
          %v2411 = vunpack.c.h.b16 %v2370
          %v2412 = vunpack.c.l.b16 %v2371
          %v2413 = vunpack.c.h.b16 %v2371
          %v2414 = vunpack.c.l.b16 %v2372
          %v2415 = vunpack.c.h.b16 %v2372
          %v2416 = vunpack.c.l.b16 %v2373
          %v2417 = vunpack.c.h.b16 %v2373
          %v2418 = vunpack.c.l.b16 %v2374
          %v2419 = vunpack.c.h.b16 %v2374
          %v2420 = vunpack.c.l.b16 %v2375
          %v2421 = vunpack.c.h.b16 %v2375
          %v2422 = vunpack.c.l.b16 %v2376
          %v2423 = vunpack.c.h.b16 %v2376
          %v2424 = vunpack.c.l.b16 %v2377
          %v2425 = vunpack.c.h.b16 %v2377
          %v2426 = vpack.c.b16 %v2396, %v2394
          %v2427 = vpack.c.b16 %v2397, %v2395
          %v2428 = vpack.c.b16 %v2400, %v2398
          %v2429 = vpack.c.b16 %v2401, %v2399
          %v2430 = vpack.c.b16 %v2404, %v2402
          %v2431 = vpack.c.b16 %v2405, %v2403
          %v2432 = vpack.c.b16 %v2408, %v2406
          %v2433 = vpack.c.b16 %v2409, %v2407
          %v2434 = vpack.c.b16 %v2412, %v2410
          %v2435 = vpack.c.b16 %v2413, %v2411
          %v2436 = vpack.c.b16 %v2416, %v2414
          %v2437 = vpack.c.b16 %v2417, %v2415
          %v2438 = vpack.c.b16 %v2420, %v2418
          %v2439 = vpack.c.b16 %v2421, %v2419
          %v2440 = vpack.c.b16 %v2424, %v2422
          %v2441 = vpack.c.b16 %v2425, %v2423
          %2458 = vmatprep.subr.bf16.mxu0 %v2427
          %2459 = vmatpush1.bf16.msra.mxu0 %v2426
          %2460 = vmatprep.subr.bf16.mxu0 %v2429
          %2461 = vmatpush1.bf16.msra.mxu0 %v2428
          %2462 = vmatprep.subr.bf16.mxu0 %v2431
          %2463 = vmatpush1.bf16.msra.mxu0 %v2430
          %2464 = vmatprep.subr.bf16.mxu0 %v2433
          %2465 = vmatpush1.bf16.msra.mxu0 %v2432
          %2466 = vmatprep.subr.bf16.mxu0 %v2435
          %2467 = vmatpush1.bf16.msra.mxu0 %v2434
          %2468 = vmatprep.subr.bf16.mxu0 %v2437
          %2469 = vmatpush1.bf16.msra.mxu0 %v2436
          %2470 = vmatprep.subr.bf16.mxu0 %v2439
          %2471 = vmatpush1.bf16.msra.mxu0 %v2438
          %2472 = vmatprep.subr.bf16.mxu0 %v2441
          %2473 = vmatpush1.bf16.msra.mxu0 %v2440
          %2474 = vmatprep.subr.bf16.mxu0 0
          %2475 = vmatpush1.bf16.msra.mxu0 0
          %2476 = vmatprep.subr.bf16.mxu0 0
          %2477 = vmatpush1.bf16.msra.mxu0 0
          %2478 = vmatprep.subr.bf16.mxu0 0
          %2479 = vmatpush1.bf16.msra.mxu0 0
          %2480 = vmatprep.subr.bf16.mxu0 0
          %2481 = vmatpush1.bf16.msra.mxu0 0
          %2482 = vmatprep.subr.bf16.mxu0 0
          %2483 = vmatpush1.bf16.msra.mxu0 0
          %2484 = vmatprep.subr.bf16.mxu0 0
          %2485 = vmatpush1.bf16.msra.mxu0 0
          %2486 = vmatprep.subr.bf16.mxu0 0
          %2487 = vmatpush1.bf16.msra.mxu0 0
          %2488 = vmatprep.subr.bf16.mxu0 0
          %2489 = vmatpush1.bf16.msra.mxu0 0
          %2490 = vmatprep.mubr.bf16.mxu0 0
          %2491 = vmatmul.mubr.bf16.gmra.mrb[0].mxu0 %v2357
          %v2492 = vpop.f32.mrb[0].mxu0
          %v2493 = vadd.f32 0.0, %v2492
          %v2494 = vpop.f32.mrb[0].mxu0
          %v2495 = vadd.f32 0.0, %v2494
          %v2496 = vpop.f32.mrb[0].mxu0
          %v2497 = vadd.f32 0.0, %v2496
          %v2498 = vpop.f32.mrb[0].mxu0
          %v2499 = vadd.f32 0.0, %v2498
          %2500 = vmatprep.mubr.bf16.mxu0 0
          %2501 = vmatmul.mubr.bf16.gmra.mrb[0].mxu0 %v2358
          %v2502 = vpop.f32.mrb[0].mxu0
          %v2503 = vadd.f32 0.0, %v2502
          %v2504 = vpop.f32.mrb[0].mxu0
          %v2505 = vadd.f32 0.0, %v2504
          %v2506 = vpop.f32.mrb[0].mxu0
          %v2507 = vadd.f32 0.0, %v2506
          %v2508 = vpop.f32.mrb[0].mxu0
          %v2509 = vadd.f32 0.0, %v2508
          %2510 = vmatprep.mubr.bf16.mxu0 0
          %2511 = vmatmul.mubr.bf16.gmra.mrb[0].mxu0 %v2359
          %v2512 = vpop.f32.mrb[0].mxu0
          %v2513 = vadd.f32 0.0, %v2512
          %v2514 = vpop.f32.mrb[0].mxu0
          %v2515 = vadd.f32 0.0, %v2514
          %v2516 = vpop.f32.mrb[0].mxu0
          %v2517 = vadd.f32 0.0, %v2516
          %v2518 = vpop.f32.mrb[0].mxu0
          %v2519 = vadd.f32 0.0, %v2518
          %2520 = vmatprep.mubr.bf16.mxu0 0
          %2521 = vmatmul.mubr.bf16.gmra.mrb[0].mxu0 %v2360
          %v2522 = vpop.f32.mrb[0].mxu0
          %v2523 = vadd.f32 0.0, %v2522
          %v2524 = vpop.f32.mrb[0].mxu0
          %v2525 = vadd.f32 0.0, %v2524
          %v2526 = vpop.f32.mrb[0].mxu0
          %v2527 = vadd.f32 0.0, %v2526
          %v2528 = vpop.f32.mrb[0].mxu0
          %v2529 = vadd.f32 0.0, %v2528
          %2530 = vdwg.mxu0
          %v2531 = vadd.f32 %v2311, %v2493
          %v2532 = vadd.f32 %v2313, %v2495
          %v2533 = vadd.f32 %v2315, %v2497
          %v2534 = vadd.f32 %v2317, %v2499
          %v2535 = vadd.f32 %v2321, %v2503
          %v2536 = vadd.f32 %v2323, %v2505
          %v2537 = vadd.f32 %v2325, %v2507
          %v2538 = vadd.f32 %v2327, %v2509
          %v2539 = vadd.f32 %v2331, %v2513
          %v2540 = vadd.f32 %v2333, %v2515
          %v2541 = vadd.f32 %v2335, %v2517
          %v2542 = vadd.f32 %v2337, %v2519
          %v2543 = vadd.f32 %v2341, %v2523
          %v2544 = vadd.f32 %v2343, %v2525
          %v2545 = vadd.f32 %v2345, %v2527
          %v2546 = vadd.f32 %v2347, %v2529
          %s2547 = sadd.s32 %s1983, 1
          %s2548 = smul.u32 %s2547, 32
          %s2549 = scalar_lea.vmem [#allocation3], %s2548
          %v2550 = vld [vmem:[%s2549 + $0x7] sm:$0xff]
          %v2551 = vld [vmem:[%s2549 + $0xf] sm:$0xff]
          %v2552 = vld [vmem:[%s2549 + $0x27] sm:$0xff]
          %v2553 = vld [vmem:[%s2549 + $0x2f] sm:$0xff]
          %v2554 = vld [vmem:[%s2549 + $0x47] sm:$0xff]
          %v2555 = vld [vmem:[%s2549 + $0x4f] sm:$0xff]
          %v2556 = vld [vmem:[%s2549 + $0x67] sm:$0xff]
          %v2557 = vld [vmem:[%s2549 + $0x6f] sm:$0xff]
          %v2558 = vpack.c.bf16 %v2551, %v2550
          %v2559 = vpack.c.bf16 %v2553, %v2552
          %v2560 = vpack.c.bf16 %v2555, %v2554
          %v2561 = vpack.c.bf16 %v2557, %v2556
          %s2562 = scalar_lea.vmem [#allocation12], 384
          %v2563 = vld [vmem:[%s2562] sm:$0xff]
          %v2564 = vld [vmem:[%s2562 + $0x8] sm:$0xff]
          %v2565 = vld [vmem:[%s2562 + $0x10] sm:$0xff]
          %v2566 = vld [vmem:[%s2562 + $0x18] sm:$0xff]
          %v2567 = vld [vmem:[%s2562 + $0x20] sm:$0xff]
          %v2568 = vld [vmem:[%s2562 + $0x28] sm:$0xff]
          %v2569 = vld [vmem:[%s2562 + $0x30] sm:$0xff]
          %v2570 = vld [vmem:[%s2562 + $0x38] sm:$0xff]
          %v2571 = vld [vmem:[%s2562 + $0x40] sm:$0xff]
          %v2572 = vld [vmem:[%s2562 + $0x48] sm:$0xff]
          %v2573 = vld [vmem:[%s2562 + $0x50] sm:$0xff]
          %v2574 = vld [vmem:[%s2562 + $0x58] sm:$0xff]
          %v2575 = vld [vmem:[%s2562 + $0x60] sm:$0xff]
          %v2576 = vld [vmem:[%s2562 + $0x68] sm:$0xff]
          %v2577 = vld [vmem:[%s2562 + $0x70] sm:$0xff]
          %v2578 = vld [vmem:[%s2562 + $0x78] sm:$0xff]
          %v2595 = vunpack.c.l.b16 %v2563
          %v2596 = vunpack.c.h.b16 %v2563
          %v2597 = vunpack.c.l.b16 %v2564
          %v2598 = vunpack.c.h.b16 %v2564
          %v2599 = vunpack.c.l.b16 %v2565
          %v2600 = vunpack.c.h.b16 %v2565
          %v2601 = vunpack.c.l.b16 %v2566
          %v2602 = vunpack.c.h.b16 %v2566
          %v2603 = vunpack.c.l.b16 %v2567
          %v2604 = vunpack.c.h.b16 %v2567
          %v2605 = vunpack.c.l.b16 %v2568
          %v2606 = vunpack.c.h.b16 %v2568
          %v2607 = vunpack.c.l.b16 %v2569
          %v2608 = vunpack.c.h.b16 %v2569
          %v2609 = vunpack.c.l.b16 %v2570
          %v2610 = vunpack.c.h.b16 %v2570
          %v2611 = vunpack.c.l.b16 %v2571
          %v2612 = vunpack.c.h.b16 %v2571
          %v2613 = vunpack.c.l.b16 %v2572
          %v2614 = vunpack.c.h.b16 %v2572
          %v2615 = vunpack.c.l.b16 %v2573
          %v2616 = vunpack.c.h.b16 %v2573
          %v2617 = vunpack.c.l.b16 %v2574
          %v2618 = vunpack.c.h.b16 %v2574
          %v2619 = vunpack.c.l.b16 %v2575
          %v2620 = vunpack.c.h.b16 %v2575
          %v2621 = vunpack.c.l.b16 %v2576
          %v2622 = vunpack.c.h.b16 %v2576
          %v2623 = vunpack.c.l.b16 %v2577
          %v2624 = vunpack.c.h.b16 %v2577
          %v2625 = vunpack.c.l.b16 %v2578
          %v2626 = vunpack.c.h.b16 %v2578
          %v2627 = vpack.c.b16 %v2597, %v2595
          %v2628 = vpack.c.b16 %v2598, %v2596
          %v2629 = vpack.c.b16 %v2601, %v2599
          %v2630 = vpack.c.b16 %v2602, %v2600
          %v2631 = vpack.c.b16 %v2605, %v2603
          %v2632 = vpack.c.b16 %v2606, %v2604
          %v2633 = vpack.c.b16 %v2609, %v2607
          %v2634 = vpack.c.b16 %v2610, %v2608
          %v2635 = vpack.c.b16 %v2613, %v2611
          %v2636 = vpack.c.b16 %v2614, %v2612
          %v2637 = vpack.c.b16 %v2617, %v2615
          %v2638 = vpack.c.b16 %v2618, %v2616
          %v2639 = vpack.c.b16 %v2621, %v2619
          %v2640 = vpack.c.b16 %v2622, %v2620
          %v2641 = vpack.c.b16 %v2625, %v2623
          %v2642 = vpack.c.b16 %v2626, %v2624
          %2659 = vmatprep.subr.bf16.mxu0 %v2628
          %2660 = vmatpush1.bf16.msra.mxu0 %v2627
          %2661 = vmatprep.subr.bf16.mxu0 %v2630
          %2662 = vmatpush1.bf16.msra.mxu0 %v2629
          %2663 = vmatprep.subr.bf16.mxu0 %v2632
          %2664 = vmatpush1.bf16.msra.mxu0 %v2631
          %2665 = vmatprep.subr.bf16.mxu0 %v2634
          %2666 = vmatpush1.bf16.msra.mxu0 %v2633
          %2667 = vmatprep.subr.bf16.mxu0 %v2636
          %2668 = vmatpush1.bf16.msra.mxu0 %v2635
          %2669 = vmatprep.subr.bf16.mxu0 %v2638
          %2670 = vmatpush1.bf16.msra.mxu0 %v2637
          %2671 = vmatprep.subr.bf16.mxu0 %v2640
          %2672 = vmatpush1.bf16.msra.mxu0 %v2639
          %2673 = vmatprep.subr.bf16.mxu0 %v2642
          %2674 = vmatpush1.bf16.msra.mxu0 %v2641
          %2675 = vmatprep.subr.bf16.mxu0 0
          %2676 = vmatpush1.bf16.msra.mxu0 0
          %2677 = vmatprep.subr.bf16.mxu0 0
          %2678 = vmatpush1.bf16.msra.mxu0 0
          %2679 = vmatprep.subr.bf16.mxu0 0
          %2680 = vmatpush1.bf16.msra.mxu0 0
          %2681 = vmatprep.subr.bf16.mxu0 0
          %2682 = vmatpush1.bf16.msra.mxu0 0
          %2683 = vmatprep.subr.bf16.mxu0 0
          %2684 = vmatpush1.bf16.msra.mxu0 0
          %2685 = vmatprep.subr.bf16.mxu0 0
          %2686 = vmatpush1.bf16.msra.mxu0 0
          %2687 = vmatprep.subr.bf16.mxu0 0
          %2688 = vmatpush1.bf16.msra.mxu0 0
          %2689 = vmatprep.subr.bf16.mxu0 0
          %2690 = vmatpush1.bf16.msra.mxu0 0
          %2691 = vmatprep.mubr.bf16.mxu0 0
          %2692 = vmatmul.mubr.bf16.gmra.mrb[0].mxu0 %v2558
          %v2693 = vpop.f32.mrb[0].mxu0
          %v2694 = vadd.f32 0.0, %v2693
          %v2695 = vpop.f32.mrb[0].mxu0
          %v2696 = vadd.f32 0.0, %v2695
          %v2697 = vpop.f32.mrb[0].mxu0
          %v2698 = vadd.f32 0.0, %v2697
          %v2699 = vpop.f32.mrb[0].mxu0
          %v2700 = vadd.f32 0.0, %v2699
          %2701 = vmatprep.mubr.bf16.mxu0 0
          %2702 = vmatmul.mubr.bf16.gmra.mrb[0].mxu0 %v2559
          %v2703 = vpop.f32.mrb[0].mxu0
          %v2704 = vadd.f32 0.0, %v2703
          %v2705 = vpop.f32.mrb[0].mxu0
          %v2706 = vadd.f32 0.0, %v2705
          %v2707 = vpop.f32.mrb[0].mxu0
          %v2708 = vadd.f32 0.0, %v2707
          %v2709 = vpop.f32.mrb[0].mxu0
          %v2710 = vadd.f32 0.0, %v2709
          %2711 = vmatprep.mubr.bf16.mxu0 0
          %2712 = vmatmul.mubr.bf16.gmra.mrb[0].mxu0 %v2560
          %v2713 = vpop.f32.mrb[0].mxu0
          %v2714 = vadd.f32 0.0, %v2713
          %v2715 = vpop.f32.mrb[0].mxu0
          %v2716 = vadd.f32 0.0, %v2715
          %v2717 = vpop.f32.mrb[0].mxu0
          %v2718 = vadd.f32 0.0, %v2717
          %v2719 = vpop.f32.mrb[0].mxu0
          %v2720 = vadd.f32 0.0, %v2719
          %2721 = vmatprep.mubr.bf16.mxu0 0
          %2722 = vmatmul.mubr.bf16.gmra.mrb[0].mxu0 %v2561
          %v2723 = vpop.f32.mrb[0].mxu0
          %v2724 = vadd.f32 0.0, %v2723
          %v2725 = vpop.f32.mrb[0].mxu0
          %v2726 = vadd.f32 0.0, %v2725
          %v2727 = vpop.f32.mrb[0].mxu0
          %v2728 = vadd.f32 0.0, %v2727
          %v2729 = vpop.f32.mrb[0].mxu0
          %v2730 = vadd.f32 0.0, %v2729
          %2731 = vdwg.mxu0
          %v2732 = vadd.f32 %v2531, %v2694
          %v2733 = vadd.f32 %v2532, %v2696
          %v2734 = vadd.f32 %v2533, %v2698
          %v2735 = vadd.f32 %v2534, %v2700
          %v2736 = vadd.f32 %v2535, %v2704
          %v2737 = vadd.f32 %v2536, %v2706
          %v2738 = vadd.f32 %v2537, %v2708
          %v2739 = vadd.f32 %v2538, %v2710
          %v2740 = vadd.f32 %v2539, %v2714
          %v2741 = vadd.f32 %v2540, %v2716
          %v2742 = vadd.f32 %v2541, %v2718
          %v2743 = vadd.f32 %v2542, %v2720
          %v2744 = vadd.f32 %v2543, %v2724
          %v2745 = vadd.f32 %v2544, %v2726
          %v2746 = vadd.f32 %v2545, %v2728
          %v2747 = vadd.f32 %v2546, %v2730
          %v2748 = vld [vmem:[%s2549 + $0x8] sm:$0xff]
          %v2749 = vld [vmem:[%s2549 + $0x10] sm:$0xff]
          %v2750 = vld [vmem:[%s2549 + $0x28] sm:$0xff]
          %v2751 = vld [vmem:[%s2549 + $0x30] sm:$0xff]
          %v2752 = vld [vmem:[%s2549 + $0x48] sm:$0xff]
          %v2753 = vld [vmem:[%s2549 + $0x50] sm:$0xff]
          %v2754 = vld [vmem:[%s2549 + $0x68] sm:$0xff]
          %v2755 = vld [vmem:[%s2549 + $0x70] sm:$0xff]
          %v2756 = vpack.c.bf16 %v2749, %v2748
          %v2757 = vpack.c.bf16 %v2751, %v2750
          %v2758 = vpack.c.bf16 %v2753, %v2752
          %v2759 = vpack.c.bf16 %v2755, %v2754
          %s2760 = scalar_lea.vmem [#allocation12], 512
          %v2761 = vld [vmem:[%s2760] sm:$0xff]
          %v2762 = vld [vmem:[%s2760 + $0x8] sm:$0xff]
          %v2763 = vld [vmem:[%s2760 + $0x10] sm:$0xff]
          %v2764 = vld [vmem:[%s2760 + $0x18] sm:$0xff]
          %v2765 = vld [vmem:[%s2760 + $0x20] sm:$0xff]
          %v2766 = vld [vmem:[%s2760 + $0x28] sm:$0xff]
          %v2767 = vld [vmem:[%s2760 + $0x30] sm:$0xff]
          %v2768 = vld [vmem:[%s2760 + $0x38] sm:$0xff]
          %v2769 = vld [vmem:[%s2760 + $0x40] sm:$0xff]
          %v2770 = vld [vmem:[%s2760 + $0x48] sm:$0xff]
          %v2771 = vld [vmem:[%s2760 + $0x50] sm:$0xff]
          %v2772 = vld [vmem:[%s2760 + $0x58] sm:$0xff]
          %v2773 = vld [vmem:[%s2760 + $0x60] sm:$0xff]
          %v2774 = vld [vmem:[%s2760 + $0x68] sm:$0xff]
          %v2775 = vld [vmem:[%s2760 + $0x70] sm:$0xff]
          %v2776 = vld [vmem:[%s2760 + $0x78] sm:$0xff]
          %v2793 = vunpack.c.l.b16 %v2761
          %v2794 = vunpack.c.h.b16 %v2761
          %v2795 = vunpack.c.l.b16 %v2762
          %v2796 = vunpack.c.h.b16 %v2762
          %v2797 = vunpack.c.l.b16 %v2763
          %v2798 = vunpack.c.h.b16 %v2763
          %v2799 = vunpack.c.l.b16 %v2764
          %v2800 = vunpack.c.h.b16 %v2764
          %v2801 = vunpack.c.l.b16 %v2765
          %v2802 = vunpack.c.h.b16 %v2765
          %v2803 = vunpack.c.l.b16 %v2766
          %v2804 = vunpack.c.h.b16 %v2766
          %v2805 = vunpack.c.l.b16 %v2767
          %v2806 = vunpack.c.h.b16 %v2767
          %v2807 = vunpack.c.l.b16 %v2768
          %v2808 = vunpack.c.h.b16 %v2768
          %v2809 = vunpack.c.l.b16 %v2769
          %v2810 = vunpack.c.h.b16 %v2769
          %v2811 = vunpack.c.l.b16 %v2770
          %v2812 = vunpack.c.h.b16 %v2770
          %v2813 = vunpack.c.l.b16 %v2771
          %v2814 = vunpack.c.h.b16 %v2771
          %v2815 = vunpack.c.l.b16 %v2772
          %v2816 = vunpack.c.h.b16 %v2772
          %v2817 = vunpack.c.l.b16 %v2773
          %v2818 = vunpack.c.h.b16 %v2773
          %v2819 = vunpack.c.l.b16 %v2774
          %v2820 = vunpack.c.h.b16 %v2774
          %v2821 = vunpack.c.l.b16 %v2775
          %v2822 = vunpack.c.h.b16 %v2775
          %v2823 = vunpack.c.l.b16 %v2776
          %v2824 = vunpack.c.h.b16 %v2776
          %v2825 = vpack.c.b16 %v2795, %v2793
          %v2826 = vpack.c.b16 %v2796, %v2794
          %v2827 = vpack.c.b16 %v2799, %v2797
          %v2828 = vpack.c.b16 %v2800, %v2798
          %v2829 = vpack.c.b16 %v2803, %v2801
          %v2830 = vpack.c.b16 %v2804, %v2802
          %v2831 = vpack.c.b16 %v2807, %v2805
          %v2832 = vpack.c.b16 %v2808, %v2806
          %v2833 = vpack.c.b16 %v2811, %v2809
          %v2834 = vpack.c.b16 %v2812, %v2810
          %v2835 = vpack.c.b16 %v2815, %v2813
          %v2836 = vpack.c.b16 %v2816, %v2814
          %v2837 = vpack.c.b16 %v2819, %v2817
          %v2838 = vpack.c.b16 %v2820, %v2818
          %v2839 = vpack.c.b16 %v2823, %v2821
          %v2840 = vpack.c.b16 %v2824, %v2822
          %2857 = vmatprep.subr.bf16.mxu0 %v2826
          %2858 = vmatpush1.bf16.msra.mxu0 %v2825
          %2859 = vmatprep.subr.bf16.mxu0 %v2828
          %2860 = vmatpush1.bf16.msra.mxu0 %v2827
          %2861 = vmatprep.subr.bf16.mxu0 %v2830
          %2862 = vmatpush1.bf16.msra.mxu0 %v2829
          %2863 = vmatprep.subr.bf16.mxu0 %v2832
          %2864 = vmatpush1.bf16.msra.mxu0 %v2831
          %2865 = vmatprep.subr.bf16.mxu0 %v2834
          %2866 = vmatpush1.bf16.msra.mxu0 %v2833
          %2867 = vmatprep.subr.bf16.mxu0 %v2836
          %2868 = vmatpush1.bf16.msra.mxu0 %v2835
          %2869 = vmatprep.subr.bf16.mxu0 %v2838
          %2870 = vmatpush1.bf16.msra.mxu0 %v2837
          %2871 = vmatprep.subr.bf16.mxu0 %v2840
          %2872 = vmatpush1.bf16.msra.mxu0 %v2839
          %2873 = vmatprep.subr.bf16.mxu0 0
          %2874 = vmatpush1.bf16.msra.mxu0 0
          %2875 = vmatprep.subr.bf16.mxu0 0
          %2876 = vmatpush1.bf16.msra.mxu0 0
          %2877 = vmatprep.subr.bf16.mxu0 0
          %2878 = vmatpush1.bf16.msra.mxu0 0
          %2879 = vmatprep.subr.bf16.mxu0 0
          %2880 = vmatpush1.bf16.msra.mxu0 0
          %2881 = vmatprep.subr.bf16.mxu0 0
          %2882 = vmatpush1.bf16.msra.mxu0 0
          %2883 = vmatprep.subr.bf16.mxu0 0
          %2884 = vmatpush1.bf16.msra.mxu0 0
          %2885 = vmatprep.subr.bf16.mxu0 0
          %2886 = vmatpush1.bf16.msra.mxu0 0
          %2887 = vmatprep.subr.bf16.mxu0 0
          %2888 = vmatpush1.bf16.msra.mxu0 0
          %2889 = vmatprep.mubr.bf16.mxu0 0
          %2890 = vmatmul.mubr.bf16.gmra.mrb[0].mxu0 %v2756
          %v2891 = vpop.f32.mrb[0].mxu0
          %v2892 = vadd.f32 0.0, %v2891
          %v2893 = vpop.f32.mrb[0].mxu0
          %v2894 = vadd.f32 0.0, %v2893
          %v2895 = vpop.f32.mrb[0].mxu0
          %v2896 = vadd.f32 0.0, %v2895
          %v2897 = vpop.f32.mrb[0].mxu0
          %v2898 = vadd.f32 0.0, %v2897
          %2899 = vmatprep.mubr.bf16.mxu0 0
          %2900 = vmatmul.mubr.bf16.gmra.mrb[0].mxu0 %v2757
          %v2901 = vpop.f32.mrb[0].mxu0
          %v2902 = vadd.f32 0.0, %v2901
          %v2903 = vpop.f32.mrb[0].mxu0
          %v2904 = vadd.f32 0.0, %v2903
          %v2905 = vpop.f32.mrb[0].mxu0
          %v2906 = vadd.f32 0.0, %v2905
          %v2907 = vpop.f32.mrb[0].mxu0
          %v2908 = vadd.f32 0.0, %v2907
          %2909 = vmatprep.mubr.bf16.mxu0 0
          %2910 = vmatmul.mubr.bf16.gmra.mrb[0].mxu0 %v2758
          %v2911 = vpop.f32.mrb[0].mxu0
          %v2912 = vadd.f32 0.0, %v2911
          %v2913 = vpop.f32.mrb[0].mxu0
          %v2914 = vadd.f32 0.0, %v2913
          %v2915 = vpop.f32.mrb[0].mxu0
          %v2916 = vadd.f32 0.0, %v2915
          %v2917 = vpop.f32.mrb[0].mxu0
          %v2918 = vadd.f32 0.0, %v2917
          %2919 = vmatprep.mubr.bf16.mxu0 0
          %2920 = vmatmul.mubr.bf16.gmra.mrb[0].mxu0 %v2759
          %v2921 = vpop.f32.mrb[0].mxu0
          %v2922 = vadd.f32 0.0, %v2921
          %v2923 = vpop.f32.mrb[0].mxu0
          %v2924 = vadd.f32 0.0, %v2923
          %v2925 = vpop.f32.mrb[0].mxu0
          %v2926 = vadd.f32 0.0, %v2925
          %v2927 = vpop.f32.mrb[0].mxu0
          %v2928 = vadd.f32 0.0, %v2927
          %2929 = vdwg.mxu0
          %v2930 = vadd.f32 %v2732, %v2892
          %v2931 = vadd.f32 %v2733, %v2894
          %v2932 = vadd.f32 %v2734, %v2896
          %v2933 = vadd.f32 %v2735, %v2898
          %v2934 = vadd.f32 %v2736, %v2902
          %v2935 = vadd.f32 %v2737, %v2904
          %v2936 = vadd.f32 %v2738, %v2906
          %v2937 = vadd.f32 %v2739, %v2908
          %v2938 = vadd.f32 %v2740, %v2912
          %v2939 = vadd.f32 %v2741, %v2914
          %v2940 = vadd.f32 %v2742, %v2916
          %v2941 = vadd.f32 %v2743, %v2918
          %v2942 = vadd.f32 %v2744, %v2922
          %v2943 = vadd.f32 %v2745, %v2924
          %v2944 = vadd.f32 %v2746, %v2926
          %v2945 = vadd.f32 %v2747, %v2928
          %v2946 = vld [vmem:[%s2549 + $0x9] sm:$0xff]
          %v2947 = vld [vmem:[%s2549 + $0x11] sm:$0xff]
          %v2948 = vld [vmem:[%s2549 + $0x29] sm:$0xff]
          %v2949 = vld [vmem:[%s2549 + $0x31] sm:$0xff]
          %v2950 = vld [vmem:[%s2549 + $0x49] sm:$0xff]
          %v2951 = vld [vmem:[%s2549 + $0x51] sm:$0xff]
          %v2952 = vld [vmem:[%s2549 + $0x69] sm:$0xff]
          %v2953 = vld [vmem:[%s2549 + $0x71] sm:$0xff]
          %v2954 = vpack.c.bf16 %v2947, %v2946
          %v2955 = vpack.c.bf16 %v2949, %v2948
          %v2956 = vpack.c.bf16 %v2951, %v2950
          %v2957 = vpack.c.bf16 %v2953, %v2952
          %s2958 = scalar_lea.vmem [#allocation12], 640
          %v2959 = vld [vmem:[%s2958] sm:$0xff]
          %v2960 = vld [vmem:[%s2958 + $0x8] sm:$0xff]
          %v2961 = vld [vmem:[%s2958 + $0x10] sm:$0xff]
          %v2962 = vld [vmem:[%s2958 + $0x18] sm:$0xff]
          %v2963 = vld [vmem:[%s2958 + $0x20] sm:$0xff]
          %v2964 = vld [vmem:[%s2958 + $0x28] sm:$0xff]
          %v2965 = vld [vmem:[%s2958 + $0x30] sm:$0xff]
          %v2966 = vld [vmem:[%s2958 + $0x38] sm:$0xff]
          %v2967 = vld [vmem:[%s2958 + $0x40] sm:$0xff]
          %v2968 = vld [vmem:[%s2958 + $0x48] sm:$0xff]
          %v2969 = vld [vmem:[%s2958 + $0x50] sm:$0xff]
          %v2970 = vld [vmem:[%s2958 + $0x58] sm:$0xff]
          %v2971 = vld [vmem:[%s2958 + $0x60] sm:$0xff]
          %v2972 = vld [vmem:[%s2958 + $0x68] sm:$0xff]
          %v2973 = vld [vmem:[%s2958 + $0x70] sm:$0xff]
          %v2974 = vld [vmem:[%s2958 + $0x78] sm:$0xff]
          %v2991 = vunpack.c.l.b16 %v2959
          %v2992 = vunpack.c.h.b16 %v2959
          %v2993 = vunpack.c.l.b16 %v2960
          %v2994 = vunpack.c.h.b16 %v2960
          %v2995 = vunpack.c.l.b16 %v2961
          %v2996 = vunpack.c.h.b16 %v2961
          %v2997 = vunpack.c.l.b16 %v2962
          %v2998 = vunpack.c.h.b16 %v2962
          %v2999 = vunpack.c.l.b16 %v2963
          %v3000 = vunpack.c.h.b16 %v2963
          %v3001 = vunpack.c.l.b16 %v2964
          %v3002 = vunpack.c.h.b16 %v2964
          %v3003 = vunpack.c.l.b16 %v2965
          %v3004 = vunpack.c.h.b16 %v2965
          %v3005 = vunpack.c.l.b16 %v2966
          %v3006 = vunpack.c.h.b16 %v2966
          %v3007 = vunpack.c.l.b16 %v2967
          %v3008 = vunpack.c.h.b16 %v2967
          %v3009 = vunpack.c.l.b16 %v2968
          %v3010 = vunpack.c.h.b16 %v2968
          %v3011 = vunpack.c.l.b16 %v2969
          %v3012 = vunpack.c.h.b16 %v2969
          %v3013 = vunpack.c.l.b16 %v2970
          %v3014 = vunpack.c.h.b16 %v2970
          %v3015 = vunpack.c.l.b16 %v2971
          %v3016 = vunpack.c.h.b16 %v2971
          %v3017 = vunpack.c.l.b16 %v2972
          %v3018 = vunpack.c.h.b16 %v2972
          %v3019 = vunpack.c.l.b16 %v2973
          %v3020 = vunpack.c.h.b16 %v2973
          %v3021 = vunpack.c.l.b16 %v2974
          %v3022 = vunpack.c.h.b16 %v2974
          %v3023 = vpack.c.b16 %v2993, %v2991
          %v3024 = vpack.c.b16 %v2994, %v2992
          %v3025 = vpack.c.b16 %v2997, %v2995
          %v3026 = vpack.c.b16 %v2998, %v2996
          %v3027 = vpack.c.b16 %v3001, %v2999
          %v3028 = vpack.c.b16 %v3002, %v3000
          %v3029 = vpack.c.b16 %v3005, %v3003
          %v3030 = vpack.c.b16 %v3006, %v3004
          %v3031 = vpack.c.b16 %v3009, %v3007
          %v3032 = vpack.c.b16 %v3010, %v3008
          %v3033 = vpack.c.b16 %v3013, %v3011
          %v3034 = vpack.c.b16 %v3014, %v3012
          %v3035 = vpack.c.b16 %v3017, %v3015
          %v3036 = vpack.c.b16 %v3018, %v3016
          %v3037 = vpack.c.b16 %v3021, %v3019
          %v3038 = vpack.c.b16 %v3022, %v3020
          %3055 = vmatprep.subr.bf16.mxu0 %v3024
          %3056 = vmatpush1.bf16.msra.mxu0 %v3023
          %3057 = vmatprep.subr.bf16.mxu0 %v3026
          %3058 = vmatpush1.bf16.msra.mxu0 %v3025
          %3059 = vmatprep.subr.bf16.mxu0 %v3028
          %3060 = vmatpush1.bf16.msra.mxu0 %v3027
          %3061 = vmatprep.subr.bf16.mxu0 %v3030
          %3062 = vmatpush1.bf16.msra.mxu0 %v3029
          %3063 = vmatprep.subr.bf16.mxu0 %v3032
          %3064 = vmatpush1.bf16.msra.mxu0 %v3031
          %3065 = vmatprep.subr.bf16.mxu0 %v3034
          %3066 = vmatpush1.bf16.msra.mxu0 %v3033
          %3067 = vmatprep.subr.bf16.mxu0 %v3036
          %3068 = vmatpush1.bf16.msra.mxu0 %v3035
          %3069 = vmatprep.subr.bf16.mxu0 %v3038
          %3070 = vmatpush1.bf16.msra.mxu0 %v3037
          %3071 = vmatprep.subr.bf16.mxu0 0
          %3072 = vmatpush1.bf16.msra.mxu0 0
          %3073 = vmatprep.subr.bf16.mxu0 0
          %3074 = vmatpush1.bf16.msra.mxu0 0
          %3075 = vmatprep.subr.bf16.mxu0 0
          %3076 = vmatpush1.bf16.msra.mxu0 0
          %3077 = vmatprep.subr.bf16.mxu0 0
          %3078 = vmatpush1.bf16.msra.mxu0 0
          %3079 = vmatprep.subr.bf16.mxu0 0
          %3080 = vmatpush1.bf16.msra.mxu0 0
          %3081 = vmatprep.subr.bf16.mxu0 0
          %3082 = vmatpush1.bf16.msra.mxu0 0
          %3083 = vmatprep.subr.bf16.mxu0 0
          %3084 = vmatpush1.bf16.msra.mxu0 0
          %3085 = vmatprep.subr.bf16.mxu0 0
          %3086 = vmatpush1.bf16.msra.mxu0 0
          %3087 = vmatprep.mubr.bf16.mxu0 0
          %3088 = vmatmul.mubr.bf16.gmra.mrb[0].mxu0 %v2954
          %v3089 = vpop.f32.mrb[0].mxu0
          %v3090 = vadd.f32 0.0, %v3089
          %v3091 = vpop.f32.mrb[0].mxu0
          %v3092 = vadd.f32 0.0, %v3091
          %v3093 = vpop.f32.mrb[0].mxu0
          %v3094 = vadd.f32 0.0, %v3093
          %v3095 = vpop.f32.mrb[0].mxu0
          %v3096 = vadd.f32 0.0, %v3095
          %3097 = vmatprep.mubr.bf16.mxu0 0
          %3098 = vmatmul.mubr.bf16.gmra.mrb[0].mxu0 %v2955
          %v3099 = vpop.f32.mrb[0].mxu0
          %v3100 = vadd.f32 0.0, %v3099
          %v3101 = vpop.f32.mrb[0].mxu0
          %v3102 = vadd.f32 0.0, %v3101
          %v3103 = vpop.f32.mrb[0].mxu0
          %v3104 = vadd.f32 0.0, %v3103
          %v3105 = vpop.f32.mrb[0].mxu0
          %v3106 = vadd.f32 0.0, %v3105
          %3107 = vmatprep.mubr.bf16.mxu0 0
          %3108 = vmatmul.mubr.bf16.gmra.mrb[0].mxu0 %v2956
          %v3109 = vpop.f32.mrb[0].mxu0
          %v3110 = vadd.f32 0.0, %v3109
          %v3111 = vpop.f32.mrb[0].mxu0
          %v3112 = vadd.f32 0.0, %v3111
          %v3113 = vpop.f32.mrb[0].mxu0
          %v3114 = vadd.f32 0.0, %v3113
          %v3115 = vpop.f32.mrb[0].mxu0
          %v3116 = vadd.f32 0.0, %v3115
          %3117 = vmatprep.mubr.bf16.mxu0 0
          %3118 = vmatmul.mubr.bf16.gmra.mrb[0].mxu0 %v2957
          %v3119 = vpop.f32.mrb[0].mxu0
          %v3120 = vadd.f32 0.0, %v3119
          %v3121 = vpop.f32.mrb[0].mxu0
          %v3122 = vadd.f32 0.0, %v3121
          %v3123 = vpop.f32.mrb[0].mxu0
          %v3124 = vadd.f32 0.0, %v3123
          %v3125 = vpop.f32.mrb[0].mxu0
          %v3126 = vadd.f32 0.0, %v3125
          %3127 = vdwg.mxu0
          %v3128 = vadd.f32 %v2930, %v3090
          %v3129 = vadd.f32 %v2931, %v3092
          %v3130 = vadd.f32 %v2932, %v3094
          %v3131 = vadd.f32 %v2933, %v3096
          %v3132 = vadd.f32 %v2934, %v3100
          %v3133 = vadd.f32 %v2935, %v3102
          %v3134 = vadd.f32 %v2936, %v3104
          %v3135 = vadd.f32 %v2937, %v3106
          %v3136 = vadd.f32 %v2938, %v3110
          %v3137 = vadd.f32 %v2939, %v3112
          %v3138 = vadd.f32 %v2940, %v3114
          %v3139 = vadd.f32 %v2941, %v3116
          %v3140 = vadd.f32 %v2942, %v3120
          %v3141 = vadd.f32 %v2943, %v3122
          %v3142 = vadd.f32 %v2944, %v3124
          %v3143 = vadd.f32 %v2945, %v3126
          %s3144 = sadd.s32 %s1983, 2
          %s3145 = smul.u32 %s3144, 32
          %s3146 = scalar_lea.vmem [#allocation3], %s3145
          %v3147 = vld [vmem:[%s3146 + $0x7] sm:$0xff]
          %v3148 = vld [vmem:[%s3146 + $0xf] sm:$0xff]
          %v3149 = vld [vmem:[%s3146 + $0x27] sm:$0xff]
          %v3150 = vld [vmem:[%s3146 + $0x2f] sm:$0xff]
          %v3151 = vld [vmem:[%s3146 + $0x47] sm:$0xff]
          %v3152 = vld [vmem:[%s3146 + $0x4f] sm:$0xff]
          %v3153 = vld [vmem:[%s3146 + $0x67] sm:$0xff]
          %v3154 = vld [vmem:[%s3146 + $0x6f] sm:$0xff]
          %v3155 = vpack.c.bf16 %v3148, %v3147
          %v3156 = vpack.c.bf16 %v3150, %v3149
          %v3157 = vpack.c.bf16 %v3152, %v3151
          %v3158 = vpack.c.bf16 %v3154, %v3153
          %s3159 = scalar_lea.vmem [#allocation12], 768
          %v3160 = vld [vmem:[%s3159] sm:$0xff]
          %v3161 = vld [vmem:[%s3159 + $0x8] sm:$0xff]
          %v3162 = vld [vmem:[%s3159 + $0x10] sm:$0xff]
          %v3163 = vld [vmem:[%s3159 + $0x18] sm:$0xff]
          %v3164 = vld [vmem:[%s3159 + $0x20] sm:$0xff]
          %v3165 = vld [vmem:[%s3159 + $0x28] sm:$0xff]
          %v3166 = vld [vmem:[%s3159 + $0x30] sm:$0xff]
          %v3167 = vld [vmem:[%s3159 + $0x38] sm:$0xff]
          %v3168 = vld [vmem:[%s3159 + $0x40] sm:$0xff]
          %v3169 = vld [vmem:[%s3159 + $0x48] sm:$0xff]
          %v3170 = vld [vmem:[%s3159 + $0x50] sm:$0xff]
          %v3171 = vld [vmem:[%s3159 + $0x58] sm:$0xff]
          %v3172 = vld [vmem:[%s3159 + $0x60] sm:$0xff]
          %v3173 = vld [vmem:[%s3159 + $0x68] sm:$0xff]
          %v3174 = vld [vmem:[%s3159 + $0x70] sm:$0xff]
          %v3175 = vld [vmem:[%s3159 + $0x78] sm:$0xff]
          %v3192 = vunpack.c.l.b16 %v3160
          %v3193 = vunpack.c.h.b16 %v3160
          %v3194 = vunpack.c.l.b16 %v3161
          %v3195 = vunpack.c.h.b16 %v3161
          %v3196 = vunpack.c.l.b16 %v3162
          %v3197 = vunpack.c.h.b16 %v3162
          %v3198 = vunpack.c.l.b16 %v3163
          %v3199 = vunpack.c.h.b16 %v3163
          %v3200 = vunpack.c.l.b16 %v3164
          %v3201 = vunpack.c.h.b16 %v3164
          %v3202 = vunpack.c.l.b16 %v3165
          %v3203 = vunpack.c.h.b16 %v3165
          %v3204 = vunpack.c.l.b16 %v3166
          %v3205 = vunpack.c.h.b16 %v3166
          %v3206 = vunpack.c.l.b16 %v3167
          %v3207 = vunpack.c.h.b16 %v3167
          %v3208 = vunpack.c.l.b16 %v3168
          %v3209 = vunpack.c.h.b16 %v3168
          %v3210 = vunpack.c.l.b16 %v3169
          %v3211 = vunpack.c.h.b16 %v3169
          %v3212 = vunpack.c.l.b16 %v3170
          %v3213 = vunpack.c.h.b16 %v3170
          %v3214 = vunpack.c.l.b16 %v3171
          %v3215 = vunpack.c.h.b16 %v3171
          %v3216 = vunpack.c.l.b16 %v3172
          %v3217 = vunpack.c.h.b16 %v3172
          %v3218 = vunpack.c.l.b16 %v3173
          %v3219 = vunpack.c.h.b16 %v3173
          %v3220 = vunpack.c.l.b16 %v3174
          %v3221 = vunpack.c.h.b16 %v3174
          %v3222 = vunpack.c.l.b16 %v3175
          %v3223 = vunpack.c.h.b16 %v3175
          %v3224 = vpack.c.b16 %v3194, %v3192
          %v3225 = vpack.c.b16 %v3195, %v3193
          %v3226 = vpack.c.b16 %v3198, %v3196
          %v3227 = vpack.c.b16 %v3199, %v3197
          %v3228 = vpack.c.b16 %v3202, %v3200
          %v3229 = vpack.c.b16 %v3203, %v3201
          %v3230 = vpack.c.b16 %v3206, %v3204
          %v3231 = vpack.c.b16 %v3207, %v3205
          %v3232 = vpack.c.b16 %v3210, %v3208
          %v3233 = vpack.c.b16 %v3211, %v3209
          %v3234 = vpack.c.b16 %v3214, %v3212
          %v3235 = vpack.c.b16 %v3215, %v3213
          %v3236 = vpack.c.b16 %v3218, %v3216
          %v3237 = vpack.c.b16 %v3219, %v3217
          %v3238 = vpack.c.b16 %v3222, %v3220
          %v3239 = vpack.c.b16 %v3223, %v3221
          %3256 = vmatprep.subr.bf16.mxu0 %v3225
          %3257 = vmatpush1.bf16.msra.mxu0 %v3224
          %3258 = vmatprep.subr.bf16.mxu0 %v3227
          %3259 = vmatpush1.bf16.msra.mxu0 %v3226
          %3260 = vmatprep.subr.bf16.mxu0 %v3229
          %3261 = vmatpush1.bf16.msra.mxu0 %v3228
          %3262 = vmatprep.subr.bf16.mxu0 %v3231
          %3263 = vmatpush1.bf16.msra.mxu0 %v3230
          %3264 = vmatprep.subr.bf16.mxu0 %v3233
          %3265 = vmatpush1.bf16.msra.mxu0 %v3232
          %3266 = vmatprep.subr.bf16.mxu0 %v3235
          %3267 = vmatpush1.bf16.msra.mxu0 %v3234
          %3268 = vmatprep.subr.bf16.mxu0 %v3237
          %3269 = vmatpush1.bf16.msra.mxu0 %v3236
          %3270 = vmatprep.subr.bf16.mxu0 %v3239
          %3271 = vmatpush1.bf16.msra.mxu0 %v3238
          %3272 = vmatprep.subr.bf16.mxu0 0
          %3273 = vmatpush1.bf16.msra.mxu0 0
          %3274 = vmatprep.subr.bf16.mxu0 0
          %3275 = vmatpush1.bf16.msra.mxu0 0
          %3276 = vmatprep.subr.bf16.mxu0 0
          %3277 = vmatpush1.bf16.msra.mxu0 0
          %3278 = vmatprep.subr.bf16.mxu0 0
          %3279 = vmatpush1.bf16.msra.mxu0 0
          %3280 = vmatprep.subr.bf16.mxu0 0
          %3281 = vmatpush1.bf16.msra.mxu0 0
          %3282 = vmatprep.subr.bf16.mxu0 0
          %3283 = vmatpush1.bf16.msra.mxu0 0
          %3284 = vmatprep.subr.bf16.mxu0 0
          %3285 = vmatpush1.bf16.msra.mxu0 0
          %3286 = vmatprep.subr.bf16.mxu0 0
          %3287 = vmatpush1.bf16.msra.mxu0 0
          %3288 = vmatprep.mubr.bf16.mxu0 0
          %3289 = vmatmul.mubr.bf16.gmra.mrb[0].mxu0 %v3155
          %v3290 = vpop.f32.mrb[0].mxu0
          %v3291 = vadd.f32 0.0, %v3290
          %v3292 = vpop.f32.mrb[0].mxu0
          %v3293 = vadd.f32 0.0, %v3292
          %v3294 = vpop.f32.mrb[0].mxu0
          %v3295 = vadd.f32 0.0, %v3294
          %v3296 = vpop.f32.mrb[0].mxu0
          %v3297 = vadd.f32 0.0, %v3296
          %3298 = vmatprep.mubr.bf16.mxu0 0
          %3299 = vmatmul.mubr.bf16.gmra.mrb[0].mxu0 %v3156
          %v3300 = vpop.f32.mrb[0].mxu0
          %v3301 = vadd.f32 0.0, %v3300
          %v3302 = vpop.f32.mrb[0].mxu0
          %v3303 = vadd.f32 0.0, %v3302
          %v3304 = vpop.f32.mrb[0].mxu0
          %v3305 = vadd.f32 0.0, %v3304
          %v3306 = vpop.f32.mrb[0].mxu0
          %v3307 = vadd.f32 0.0, %v3306
          %3308 = vmatprep.mubr.bf16.mxu0 0
          %3309 = vmatmul.mubr.bf16.gmra.mrb[0].mxu0 %v3157
          %v3310 = vpop.f32.mrb[0].mxu0
          %v3311 = vadd.f32 0.0, %v3310
          %v3312 = vpop.f32.mrb[0].mxu0
          %v3313 = vadd.f32 0.0, %v3312
          %v3314 = vpop.f32.mrb[0].mxu0
          %v3315 = vadd.f32 0.0, %v3314
          %v3316 = vpop.f32.mrb[0].mxu0
          %v3317 = vadd.f32 0.0, %v3316
          %3318 = vmatprep.mubr.bf16.mxu0 0
          %3319 = vmatmul.mubr.bf16.gmra.mrb[0].mxu0 %v3158
          %v3320 = vpop.f32.mrb[0].mxu0
          %v3321 = vadd.f32 0.0, %v3320
          %v3322 = vpop.f32.mrb[0].mxu0
          %v3323 = vadd.f32 0.0, %v3322
          %v3324 = vpop.f32.mrb[0].mxu0
          %v3325 = vadd.f32 0.0, %v3324
          %v3326 = vpop.f32.mrb[0].mxu0
          %v3327 = vadd.f32 0.0, %v3326
          %3328 = vdwg.mxu0
          %v3329 = vadd.f32 %v3128, %v3291
          %v3330 = vadd.f32 %v3129, %v3293
          %v3331 = vadd.f32 %v3130, %v3295
          %v3332 = vadd.f32 %v3131, %v3297
          %v3333 = vadd.f32 %v3132, %v3301
          %v3334 = vadd.f32 %v3133, %v3303
          %v3335 = vadd.f32 %v3134, %v3305
          %v3336 = vadd.f32 %v3135, %v3307
          %v3337 = vadd.f32 %v3136, %v3311
          %v3338 = vadd.f32 %v3137, %v3313
          %v3339 = vadd.f32 %v3138, %v3315
          %v3340 = vadd.f32 %v3139, %v3317
          %v3341 = vadd.f32 %v3140, %v3321
          %v3342 = vadd.f32 %v3141, %v3323
          %v3343 = vadd.f32 %v3142, %v3325
          %v3344 = vadd.f32 %v3143, %v3327
          %v3345 = vld [vmem:[%s3146 + $0x8] sm:$0xff]
          %v3346 = vld [vmem:[%s3146 + $0x10] sm:$0xff]
          %v3347 = vld [vmem:[%s3146 + $0x28] sm:$0xff]
          %v3348 = vld [vmem:[%s3146 + $0x30] sm:$0xff]
          %v3349 = vld [vmem:[%s3146 + $0x48] sm:$0xff]
          %v3350 = vld [vmem:[%s3146 + $0x50] sm:$0xff]
          %v3351 = vld [vmem:[%s3146 + $0x68] sm:$0xff]
          %v3352 = vld [vmem:[%s3146 + $0x70] sm:$0xff]
          %v3353 = vpack.c.bf16 %v3346, %v3345
          %v3354 = vpack.c.bf16 %v3348, %v3347
          %v3355 = vpack.c.bf16 %v3350, %v3349
          %v3356 = vpack.c.bf16 %v3352, %v3351
          %s3357 = scalar_lea.vmem [#allocation12], 896
          %v3358 = vld [vmem:[%s3357] sm:$0xff]
          %v3359 = vld [vmem:[%s3357 + $0x8] sm:$0xff]
          %v3360 = vld [vmem:[%s3357 + $0x10] sm:$0xff]
          %v3361 = vld [vmem:[%s3357 + $0x18] sm:$0xff]
          %v3362 = vld [vmem:[%s3357 + $0x20] sm:$0xff]
          %v3363 = vld [vmem:[%s3357 + $0x28] sm:$0xff]
          %v3364 = vld [vmem:[%s3357 + $0x30] sm:$0xff]
          %v3365 = vld [vmem:[%s3357 + $0x38] sm:$0xff]
          %v3366 = vld [vmem:[%s3357 + $0x40] sm:$0xff]
          %v3367 = vld [vmem:[%s3357 + $0x48] sm:$0xff]
          %v3368 = vld [vmem:[%s3357 + $0x50] sm:$0xff]
          %v3369 = vld [vmem:[%s3357 + $0x58] sm:$0xff]
          %v3370 = vld [vmem:[%s3357 + $0x60] sm:$0xff]
          %v3371 = vld [vmem:[%s3357 + $0x68] sm:$0xff]
          %v3372 = vld [vmem:[%s3357 + $0x70] sm:$0xff]
          %v3373 = vld [vmem:[%s3357 + $0x78] sm:$0xff]
          %v3390 = vunpack.c.l.b16 %v3358
          %v3391 = vunpack.c.h.b16 %v3358
          %v3392 = vunpack.c.l.b16 %v3359
          %v3393 = vunpack.c.h.b16 %v3359
          %v3394 = vunpack.c.l.b16 %v3360
          %v3395 = vunpack.c.h.b16 %v3360
          %v3396 = vunpack.c.l.b16 %v3361
          %v3397 = vunpack.c.h.b16 %v3361
          %v3398 = vunpack.c.l.b16 %v3362
          %v3399 = vunpack.c.h.b16 %v3362
          %v3400 = vunpack.c.l.b16 %v3363
          %v3401 = vunpack.c.h.b16 %v3363
          %v3402 = vunpack.c.l.b16 %v3364
          %v3403 = vunpack.c.h.b16 %v3364
          %v3404 = vunpack.c.l.b16 %v3365
          %v3405 = vunpack.c.h.b16 %v3365
          %v3406 = vunpack.c.l.b16 %v3366
          %v3407 = vunpack.c.h.b16 %v3366
          %v3408 = vunpack.c.l.b16 %v3367
          %v3409 = vunpack.c.h.b16 %v3367
          %v3410 = vunpack.c.l.b16 %v3368
          %v3411 = vunpack.c.h.b16 %v3368
          %v3412 = vunpack.c.l.b16 %v3369
          %v3413 = vunpack.c.h.b16 %v3369
          %v3414 = vunpack.c.l.b16 %v3370
          %v3415 = vunpack.c.h.b16 %v3370
          %v3416 = vunpack.c.l.b16 %v3371
          %v3417 = vunpack.c.h.b16 %v3371
          %v3418 = vunpack.c.l.b16 %v3372
          %v3419 = vunpack.c.h.b16 %v3372
          %v3420 = vunpack.c.l.b16 %v3373
          %v3421 = vunpack.c.h.b16 %v3373
          %v3422 = vpack.c.b16 %v3392, %v3390
          %v3423 = vpack.c.b16 %v3393, %v3391
          %v3424 = vpack.c.b16 %v3396, %v3394
          %v3425 = vpack.c.b16 %v3397, %v3395
          %v3426 = vpack.c.b16 %v3400, %v3398
          %v3427 = vpack.c.b16 %v3401, %v3399
          %v3428 = vpack.c.b16 %v3404, %v3402
          %v3429 = vpack.c.b16 %v3405, %v3403
          %v3430 = vpack.c.b16 %v3408, %v3406
          %v3431 = vpack.c.b16 %v3409, %v3407
          %v3432 = vpack.c.b16 %v3412, %v3410
          %v3433 = vpack.c.b16 %v3413, %v3411
          %v3434 = vpack.c.b16 %v3416, %v3414
          %v3435 = vpack.c.b16 %v3417, %v3415
          %v3436 = vpack.c.b16 %v3420, %v3418
          %v3437 = vpack.c.b16 %v3421, %v3419
          %3454 = vmatprep.subr.bf16.mxu0 %v3423
          %3455 = vmatpush1.bf16.msra.mxu0 %v3422
          %3456 = vmatprep.subr.bf16.mxu0 %v3425
          %3457 = vmatpush1.bf16.msra.mxu0 %v3424
          %3458 = vmatprep.subr.bf16.mxu0 %v3427
          %3459 = vmatpush1.bf16.msra.mxu0 %v3426
          %3460 = vmatprep.subr.bf16.mxu0 %v3429
          %3461 = vmatpush1.bf16.msra.mxu0 %v3428
          %3462 = vmatprep.subr.bf16.mxu0 %v3431
          %3463 = vmatpush1.bf16.msra.mxu0 %v3430
          %3464 = vmatprep.subr.bf16.mxu0 %v3433
          %3465 = vmatpush1.bf16.msra.mxu0 %v3432
          %3466 = vmatprep.subr.bf16.mxu0 %v3435
          %3467 = vmatpush1.bf16.msra.mxu0 %v3434
          %3468 = vmatprep.subr.bf16.mxu0 %v3437
          %3469 = vmatpush1.bf16.msra.mxu0 %v3436
          %3470 = vmatprep.subr.bf16.mxu0 0
          %3471 = vmatpush1.bf16.msra.mxu0 0
          %3472 = vmatprep.subr.bf16.mxu0 0
          %3473 = vmatpush1.bf16.msra.mxu0 0
          %3474 = vmatprep.subr.bf16.mxu0 0
          %3475 = vmatpush1.bf16.msra.mxu0 0
          %3476 = vmatprep.subr.bf16.mxu0 0
          %3477 = vmatpush1.bf16.msra.mxu0 0
          %3478 = vmatprep.subr.bf16.mxu0 0
          %3479 = vmatpush1.bf16.msra.mxu0 0
          %3480 = vmatprep.subr.bf16.mxu0 0
          %3481 = vmatpush1.bf16.msra.mxu0 0
          %3482 = vmatprep.subr.bf16.mxu0 0
          %3483 = vmatpush1.bf16.msra.mxu0 0
          %3484 = vmatprep.subr.bf16.mxu0 0
          %3485 = vmatpush1.bf16.msra.mxu0 0
          %3486 = vmatprep.mubr.bf16.mxu0 0
          %3487 = vmatmul.mubr.bf16.gmra.mrb[0].mxu0 %v3353
          %v3488 = vpop.f32.mrb[0].mxu0
          %v3489 = vadd.f32 0.0, %v3488
          %v3490 = vpop.f32.mrb[0].mxu0
          %v3491 = vadd.f32 0.0, %v3490
          %v3492 = vpop.f32.mrb[0].mxu0
          %v3493 = vadd.f32 0.0, %v3492
          %v3494 = vpop.f32.mrb[0].mxu0
          %v3495 = vadd.f32 0.0, %v3494
          %3496 = vmatprep.mubr.bf16.mxu0 0
          %3497 = vmatmul.mubr.bf16.gmra.mrb[0].mxu0 %v3354
          %v3498 = vpop.f32.mrb[0].mxu0
          %v3499 = vadd.f32 0.0, %v3498
          %v3500 = vpop.f32.mrb[0].mxu0
          %v3501 = vadd.f32 0.0, %v3500
          %v3502 = vpop.f32.mrb[0].mxu0
          %v3503 = vadd.f32 0.0, %v3502
          %v3504 = vpop.f32.mrb[0].mxu0
          %v3505 = vadd.f32 0.0, %v3504
          %3506 = vmatprep.mubr.bf16.mxu0 0
          %3507 = vmatmul.mubr.bf16.gmra.mrb[0].mxu0 %v3355
          %v3508 = vpop.f32.mrb[0].mxu0
          %v3509 = vadd.f32 0.0, %v3508
          %v3510 = vpop.f32.mrb[0].mxu0
          %v3511 = vadd.f32 0.0, %v3510
          %v3512 = vpop.f32.mrb[0].mxu0
          %v3513 = vadd.f32 0.0, %v3512
          %v3514 = vpop.f32.mrb[0].mxu0
          %v3515 = vadd.f32 0.0, %v3514
          %3516 = vmatprep.mubr.bf16.mxu0 0
          %3517 = vmatmul.mubr.bf16.gmra.mrb[0].mxu0 %v3356
          %v3518 = vpop.f32.mrb[0].mxu0
          %v3519 = vadd.f32 0.0, %v3518
          %v3520 = vpop.f32.mrb[0].mxu0
          %v3521 = vadd.f32 0.0, %v3520
          %v3522 = vpop.f32.mrb[0].mxu0
          %v3523 = vadd.f32 0.0, %v3522
          %v3524 = vpop.f32.mrb[0].mxu0
          %v3525 = vadd.f32 0.0, %v3524
          %3526 = vdwg.mxu0
          %v3527 = vadd.f32 %v3329, %v3489
          %v3528 = vadd.f32 %v3330, %v3491
          %v3529 = vadd.f32 %v3331, %v3493
          %v3530 = vadd.f32 %v3332, %v3495
          %v3531 = vadd.f32 %v3333, %v3499
          %v3532 = vadd.f32 %v3334, %v3501
          %v3533 = vadd.f32 %v3335, %v3503
          %v3534 = vadd.f32 %v3336, %v3505
          %v3535 = vadd.f32 %v3337, %v3509
          %v3536 = vadd.f32 %v3338, %v3511
          %v3537 = vadd.f32 %v3339, %v3513
          %v3538 = vadd.f32 %v3340, %v3515
          %v3539 = vadd.f32 %v3341, %v3519
          %v3540 = vadd.f32 %v3342, %v3521
          %v3541 = vadd.f32 %v3343, %v3523
          %v3542 = vadd.f32 %v3344, %v3525
          %v3543 = vld [vmem:[%s3146 + $0x9] sm:$0xff]
          %v3544 = vld [vmem:[%s3146 + $0x11] sm:$0xff]
          %v3545 = vld [vmem:[%s3146 + $0x29] sm:$0xff]
          %v3546 = vld [vmem:[%s3146 + $0x31] sm:$0xff]
          %v3547 = vld [vmem:[%s3146 + $0x49] sm:$0xff]
          %v3548 = vld [vmem:[%s3146 + $0x51] sm:$0xff]
          %v3549 = vld [vmem:[%s3146 + $0x69] sm:$0xff]
          %v3550 = vld [vmem:[%s3146 + $0x71] sm:$0xff]
          %v3551 = vpack.c.bf16 %v3544, %v3543
          %v3552 = vpack.c.bf16 %v3546, %v3545
          %v3553 = vpack.c.bf16 %v3548, %v3547
          %v3554 = vpack.c.bf16 %v3550, %v3549
          %s3555 = scalar_lea.vmem [#allocation12], 1024
          %v3556 = vld [vmem:[%s3555] sm:$0xff]
          %v3557 = vld [vmem:[%s3555 + $0x8] sm:$0xff]
          %v3558 = vld [vmem:[%s3555 + $0x10] sm:$0xff]
          %v3559 = vld [vmem:[%s3555 + $0x18] sm:$0xff]
          %v3560 = vld [vmem:[%s3555 + $0x20] sm:$0xff]
          %v3561 = vld [vmem:[%s3555 + $0x28] sm:$0xff]
          %v3562 = vld [vmem:[%s3555 + $0x30] sm:$0xff]
          %v3563 = vld [vmem:[%s3555 + $0x38] sm:$0xff]
          %v3564 = vld [vmem:[%s3555 + $0x40] sm:$0xff]
          %v3565 = vld [vmem:[%s3555 + $0x48] sm:$0xff]
          %v3566 = vld [vmem:[%s3555 + $0x50] sm:$0xff]
          %v3567 = vld [vmem:[%s3555 + $0x58] sm:$0xff]
          %v3568 = vld [vmem:[%s3555 + $0x60] sm:$0xff]
          %v3569 = vld [vmem:[%s3555 + $0x68] sm:$0xff]
          %v3570 = vld [vmem:[%s3555 + $0x70] sm:$0xff]
          %v3571 = vld [vmem:[%s3555 + $0x78] sm:$0xff]
          %v3588 = vunpack.c.l.b16 %v3556
          %v3589 = vunpack.c.h.b16 %v3556
          %v3590 = vunpack.c.l.b16 %v3557
          %v3591 = vunpack.c.h.b16 %v3557
          %v3592 = vunpack.c.l.b16 %v3558
          %v3593 = vunpack.c.h.b16 %v3558
          %v3594 = vunpack.c.l.b16 %v3559
          %v3595 = vunpack.c.h.b16 %v3559
          %v3596 = vunpack.c.l.b16 %v3560
          %v3597 = vunpack.c.h.b16 %v3560
          %v3598 = vunpack.c.l.b16 %v3561
          %v3599 = vunpack.c.h.b16 %v3561
          %v3600 = vunpack.c.l.b16 %v3562
          %v3601 = vunpack.c.h.b16 %v3562
          %v3602 = vunpack.c.l.b16 %v3563
          %v3603 = vunpack.c.h.b16 %v3563
          %v3604 = vunpack.c.l.b16 %v3564
          %v3605 = vunpack.c.h.b16 %v3564
          %v3606 = vunpack.c.l.b16 %v3565
          %v3607 = vunpack.c.h.b16 %v3565
          %v3608 = vunpack.c.l.b16 %v3566
          %v3609 = vunpack.c.h.b16 %v3566
          %v3610 = vunpack.c.l.b16 %v3567
          %v3611 = vunpack.c.h.b16 %v3567
          %v3612 = vunpack.c.l.b16 %v3568
          %v3613 = vunpack.c.h.b16 %v3568
          %v3614 = vunpack.c.l.b16 %v3569
          %v3615 = vunpack.c.h.b16 %v3569
          %v3616 = vunpack.c.l.b16 %v3570
          %v3617 = vunpack.c.h.b16 %v3570
          %v3618 = vunpack.c.l.b16 %v3571
          %v3619 = vunpack.c.h.b16 %v3571
          %v3620 = vpack.c.b16 %v3590, %v3588
          %v3621 = vpack.c.b16 %v3591, %v3589
          %v3622 = vpack.c.b16 %v3594, %v3592
          %v3623 = vpack.c.b16 %v3595, %v3593
          %v3624 = vpack.c.b16 %v3598, %v3596
          %v3625 = vpack.c.b16 %v3599, %v3597
          %v3626 = vpack.c.b16 %v3602, %v3600
          %v3627 = vpack.c.b16 %v3603, %v3601
          %v3628 = vpack.c.b16 %v3606, %v3604
          %v3629 = vpack.c.b16 %v3607, %v3605
          %v3630 = vpack.c.b16 %v3610, %v3608
          %v3631 = vpack.c.b16 %v3611, %v3609
          %v3632 = vpack.c.b16 %v3614, %v3612
          %v3633 = vpack.c.b16 %v3615, %v3613
          %v3634 = vpack.c.b16 %v3618, %v3616
          %v3635 = vpack.c.b16 %v3619, %v3617
          %3652 = vmatprep.subr.bf16.mxu0 %v3621
          %3653 = vmatpush1.bf16.msra.mxu0 %v3620
          %3654 = vmatprep.subr.bf16.mxu0 %v3623
          %3655 = vmatpush1.bf16.msra.mxu0 %v3622
          %3656 = vmatprep.subr.bf16.mxu0 %v3625
          %3657 = vmatpush1.bf16.msra.mxu0 %v3624
          %3658 = vmatprep.subr.bf16.mxu0 %v3627
          %3659 = vmatpush1.bf16.msra.mxu0 %v3626
          %3660 = vmatprep.subr.bf16.mxu0 %v3629
          %3661 = vmatpush1.bf16.msra.mxu0 %v3628
          %3662 = vmatprep.subr.bf16.mxu0 %v3631
          %3663 = vmatpush1.bf16.msra.mxu0 %v3630
          %3664 = vmatprep.subr.bf16.mxu0 %v3633
          %3665 = vmatpush1.bf16.msra.mxu0 %v3632
          %3666 = vmatprep.subr.bf16.mxu0 %v3635
          %3667 = vmatpush1.bf16.msra.mxu0 %v3634
          %3668 = vmatprep.subr.bf16.mxu0 0
          %3669 = vmatpush1.bf16.msra.mxu0 0
          %3670 = vmatprep.subr.bf16.mxu0 0
          %3671 = vmatpush1.bf16.msra.mxu0 0
          %3672 = vmatprep.subr.bf16.mxu0 0
          %3673 = vmatpush1.bf16.msra.mxu0 0
          %3674 = vmatprep.subr.bf16.mxu0 0
          %3675 = vmatpush1.bf16.msra.mxu0 0
          %3676 = vmatprep.subr.bf16.mxu0 0
          %3677 = vmatpush1.bf16.msra.mxu0 0
          %3678 = vmatprep.subr.bf16.mxu0 0
          %3679 = vmatpush1.bf16.msra.mxu0 0
          %3680 = vmatprep.subr.bf16.mxu0 0
          %3681 = vmatpush1.bf16.msra.mxu0 0
          %3682 = vmatprep.subr.bf16.mxu0 0
          %3683 = vmatpush1.bf16.msra.mxu0 0
          %3684 = vmatprep.mubr.bf16.mxu0 0
          %3685 = vmatmul.mubr.bf16.gmra.mrb[0].mxu0 %v3551
          %v3686 = vpop.f32.mrb[0].mxu0
          %v3687 = vadd.f32 0.0, %v3686
          %v3688 = vpop.f32.mrb[0].mxu0
          %v3689 = vadd.f32 0.0, %v3688
          %v3690 = vpop.f32.mrb[0].mxu0
          %v3691 = vadd.f32 0.0, %v3690
          %v3692 = vpop.f32.mrb[0].mxu0
          %v3693 = vadd.f32 0.0, %v3692
          %3694 = vmatprep.mubr.bf16.mxu0 0
          %3695 = vmatmul.mubr.bf16.gmra.mrb[0].mxu0 %v3552
          %v3696 = vpop.f32.mrb[0].mxu0
          %v3697 = vadd.f32 0.0, %v3696
          %v3698 = vpop.f32.mrb[0].mxu0
          %v3699 = vadd.f32 0.0, %v3698
          %v3700 = vpop.f32.mrb[0].mxu0
          %v3701 = vadd.f32 0.0, %v3700
          %v3702 = vpop.f32.mrb[0].mxu0
          %v3703 = vadd.f32 0.0, %v3702
          %3704 = vmatprep.mubr.bf16.mxu0 0
          %3705 = vmatmul.mubr.bf16.gmra.mrb[0].mxu0 %v3553
          %v3706 = vpop.f32.mrb[0].mxu0
          %v3707 = vadd.f32 0.0, %v3706
          %v3708 = vpop.f32.mrb[0].mxu0
          %v3709 = vadd.f32 0.0, %v3708
          %v3710 = vpop.f32.mrb[0].mxu0
          %v3711 = vadd.f32 0.0, %v3710
          %v3712 = vpop.f32.mrb[0].mxu0
          %v3713 = vadd.f32 0.0, %v3712
          %3714 = vmatprep.mubr.bf16.mxu0 0
          %3715 = vmatmul.mubr.bf16.gmra.mrb[0].mxu0 %v3554
          %v3716 = vpop.f32.mrb[0].mxu0
          %v3717 = vadd.f32 0.0, %v3716
          %v3718 = vpop.f32.mrb[0].mxu0
          %v3719 = vadd.f32 0.0, %v3718
          %v3720 = vpop.f32.mrb[0].mxu0
          %v3721 = vadd.f32 0.0, %v3720
          %v3722 = vpop.f32.mrb[0].mxu0
          %v3723 = vadd.f32 0.0, %v3722
          %3724 = vdwg.mxu0
          %v3725 = vadd.f32 %v3527, %v3687
          %v3726 = vadd.f32 %v3528, %v3689
          %v3727 = vadd.f32 %v3529, %v3691
          %v3728 = vadd.f32 %v3530, %v3693
          %v3729 = vadd.f32 %v3531, %v3697
          %v3730 = vadd.f32 %v3532, %v3699
          %v3731 = vadd.f32 %v3533, %v3701
          %v3732 = vadd.f32 %v3534, %v3703
          %v3733 = vadd.f32 %v3535, %v3707
          %v3734 = vadd.f32 %v3536, %v3709
          %v3735 = vadd.f32 %v3537, %v3711
          %v3736 = vadd.f32 %v3538, %v3713
          %v3737 = vadd.f32 %v3539, %v3717
          %v3738 = vadd.f32 %v3540, %v3719
          %v3739 = vadd.f32 %v3541, %v3721
          %v3740 = vadd.f32 %v3542, %v3723
          %v3741 = vld [vmem:[%s5] sm:$0x3]
          %v3743 = vlaneseq
          %v3744 = vshrl.u32 %v3743, 7
          %v3745 = vsub.s32 0, %v3744
          %v3746 = vrot.slane %v3741, %v3745
          %v3747 = vlaneseq
          %v3748 = vshrl.u32 %v3747, 7
          %v3749 = vsub.s32 1, %v3748
          %v3750 = vrot.slane %v3741, %v3749
          %v3753 = vadd.f32 %v3725, %v3746
          %v3754 = vadd.f32 %v3726, %v3750
          %v3755 = vadd.f32 %v3727, %v3746
          %v3756 = vadd.f32 %v3728, %v3750
          %v3757 = vadd.f32 %v3729, %v3746
          %v3758 = vadd.f32 %v3730, %v3750
          %v3759 = vadd.f32 %v3731, %v3746
          %v3760 = vadd.f32 %v3732, %v3750
          %v3761 = vadd.f32 %v3733, %v3746
          %v3762 = vadd.f32 %v3734, %v3750
          %v3763 = vadd.f32 %v3735, %v3746
          %v3764 = vadd.f32 %v3736, %v3750
          %v3765 = vadd.f32 %v3737, %v3746
          %v3766 = vadd.f32 %v3738, %v3750
          %v3767 = vadd.f32 %v3739, %v3746
          %v3768 = vadd.f32 %v3740, %v3750
          %v3769 = vmax.f32 %v3753, 0.0
          %v3770 = vmax.f32 %v3754, 0.0
          %v3771 = vmax.f32 %v3755, 0.0
          %v3772 = vmax.f32 %v3756, 0.0
          %v3773 = vmax.f32 %v3757, 0.0
          %v3774 = vmax.f32 %v3758, 0.0
          %v3775 = vmax.f32 %v3759, 0.0
          %v3776 = vmax.f32 %v3760, 0.0
          %v3777 = vmax.f32 %v3761, 0.0
          %v3778 = vmax.f32 %v3762, 0.0
          %v3779 = vmax.f32 %v3763, 0.0
          %v3780 = vmax.f32 %v3764, 0.0
          %v3781 = vmax.f32 %v3765, 0.0
          %v3782 = vmax.f32 %v3766, 0.0
          %v3783 = vmax.f32 %v3767, 0.0
          %v3784 = vmax.f32 %v3768, 0.0
          %s3785 = smul.u32 %s2547, 8
          %s3786 = smul.addr %s3785, 8
          %s3787 = scalar_lea.vmem [#allocation4], %s3786
          %3788 = vst [vmem:[%s3787 + $0x10] sm:$0xff] %v3769
          %3789 = vst [vmem:[%s3787 + $0x18] sm:$0xff] %v3770
          %3790 = vst [vmem:[%s3787 + $0x20] sm:$0xff] %v3771
          %3791 = vst [vmem:[%s3787 + $0x28] sm:$0xff] %v3772
          %3792 = vst [vmem:[%s3787 + $0x50] sm:$0xff] %v3773
          %3793 = vst [vmem:[%s3787 + $0x58] sm:$0xff] %v3774
          %3794 = vst [vmem:[%s3787 + $0x60] sm:$0xff] %v3775
          %3795 = vst [vmem:[%s3787 + $0x68] sm:$0xff] %v3776
          %3796 = vst [vmem:[%s3787 + $0x90] sm:$0xff] %v3777
          %3797 = vst [vmem:[%s3787 + $0x98] sm:$0xff] %v3778
          %3798 = vst [vmem:[%s3787 + $0xa0] sm:$0xff] %v3779
          %3799 = vst [vmem:[%s3787 + $0xa8] sm:$0xff] %v3780
          %3800 = vst [vmem:[%s3787 + $0xd0] sm:$0xff] %v3781
          %3801 = vst [vmem:[%s3787 + $0xd8] sm:$0xff] %v3782
          %3802 = vst [vmem:[%s3787 + $0xe0] sm:$0xff] %v3783
          %3803 = vst [vmem:[%s3787 + $0xe8] sm:$0xff] %v3784
        $region83: #{tpu_custom_call.1} parent=47 // loop_footer
          %s1982 = sadd.s32 1, %s1978
        $region84: #{tpu_custom_call.1} parent=47 // loop_footer_branch
          %1977 = sbr.rel target = $region80
        $region85: #{tpu_custom_call.1} parent=47 // loop_exit
          _
        loop: start=0, step=1, limit=4
        $region86: #{tpu_custom_call.1} parent=47 // loop_pre_header
          _
        $region87: #{tpu_custom_call.1} parent=47 // loop_header
          %s3805 = sphi 0, %s3809
          %p3806 = scmp.ge.s32.totalorder %s3805, 4
        $region88: #{tpu_custom_call.1} parent=47 // loop_header_branch
          %3808 = sbr.rel (%p3806) target = $region92
        $region89: #{tpu_custom_call.1} parent=47 // loop_body
          %s3810 = smul.u32 %s3805, 4
          %s3811 = smul.u32 %s3810, 8
          %s3812 = smul.addr %s3811, 8
          %s3813 = scalar_lea.vmem [#allocation4], %s3812
          %v3814 = vld [vmem:[%s3813] sm:$0x80]
          %v3815 = vld [vmem:[%s3813 + $0x8] sm:$0x80]
          %v3816 = vld [vmem:[%s3813 + $0x10] sm:$0xff]
          %v3817 = vld [vmem:[%s3813 + $0x18] sm:$0xff]
          %v3818 = vld [vmem:[%s3813 + $0x20] sm:$0x7f]
          %v3819 = vld [vmem:[%s3813 + $0x28] sm:$0x7f]
          %v3820 = vld [vmem:[%s3813 + $0x40] sm:$0x80]
          %v3821 = vld [vmem:[%s3813 + $0x48] sm:$0x80]
          %v3822 = vld [vmem:[%s3813 + $0x50] sm:$0xff]
          %v3823 = vld [vmem:[%s3813 + $0x58] sm:$0xff]
          %v3824 = vld [vmem:[%s3813 + $0x60] sm:$0x7f]
          %v3825 = vld [vmem:[%s3813 + $0x68] sm:$0x7f]
          %v3826 = vld [vmem:[%s3813 + $0x80] sm:$0x80]
          %v3827 = vld [vmem:[%s3813 + $0x88] sm:$0x80]
          %v3828 = vld [vmem:[%s3813 + $0x90] sm:$0xff]
          %v3829 = vld [vmem:[%s3813 + $0x98] sm:$0xff]
          %v3830 = vld [vmem:[%s3813 + $0xa0] sm:$0x7f]
          %v3831 = vld [vmem:[%s3813 + $0xa8] sm:$0x7f]
          %v3832 = vld [vmem:[%s3813 + $0xc0] sm:$0x80]
          %v3833 = vld [vmem:[%s3813 + $0xc8] sm:$0x80]
          %v3834 = vld [vmem:[%s3813 + $0xd0] sm:$0xff]
          %v3835 = vld [vmem:[%s3813 + $0xd8] sm:$0xff]
          %v3836 = vld [vmem:[%s3813 + $0xe0] sm:$0x7f]
          %v3837 = vld [vmem:[%s3813 + $0xe8] sm:$0x7f]
          %v3838 = vpack.c.bf16 %v3816, %v3814
          %v3839 = vpack.c.bf16 %v3817, %v3815
          %v3840 = vpack.c.bf16 %v3818, %v3818
          %v3841 = vpack.c.bf16 %v3819, %v3819
          %v3842 = vpack.c.bf16 %v3822, %v3820
          %v3843 = vpack.c.bf16 %v3823, %v3821
          %v3844 = vpack.c.bf16 %v3824, %v3824
          %v3845 = vpack.c.bf16 %v3825, %v3825
          %v3846 = vpack.c.bf16 %v3828, %v3826
          %v3847 = vpack.c.bf16 %v3829, %v3827
          %v3848 = vpack.c.bf16 %v3830, %v3830
          %v3849 = vpack.c.bf16 %v3831, %v3831
          %v3850 = vpack.c.bf16 %v3834, %v3832
          %v3851 = vpack.c.bf16 %v3835, %v3833
          %v3852 = vpack.c.bf16 %v3836, %v3836
          %v3853 = vpack.c.bf16 %v3837, %v3837
          %vm3854 = vsmask.f32 4352
          %v3856 = vshrl.u32 %v3838, 16
          %v3858 = vrot.slane %v3856, 3
          %v3859 = vshll.u32 %v3838, 16
          %v3861 = vrot.slane %v3859, 4
          %v3862 = vor.u32 %v3858, %v3861
          %v3864 = vshrl.u32 %v3840, 16
          %v3866 = vrot.slane %v3864, 3
          %v3867 = vshll.u32 %v3840, 16
          %v3869 = vrot.slane %v3867, 4
          %v3870 = vor.u32 %v3866, %v3869
          %v3871 = vsel %vm3854, %v3862, %v3870
          %v3873 = vshrl.u32 %v3839, 16
          %v3875 = vrot.slane %v3873, 3
          %v3876 = vshll.u32 %v3839, 16
          %v3878 = vrot.slane %v3876, 4
          %v3879 = vor.u32 %v3875, %v3878
          %v3881 = vshrl.u32 %v3841, 16
          %v3883 = vrot.slane %v3881, 3
          %v3884 = vshll.u32 %v3841, 16
          %v3886 = vrot.slane %v3884, 4
          %v3887 = vor.u32 %v3883, %v3886
          %v3888 = vsel %vm3854, %v3879, %v3887
          %v3890 = vshrl.u32 %v3842, 16
          %v3892 = vrot.slane %v3890, 3
          %v3893 = vshll.u32 %v3842, 16
          %v3895 = vrot.slane %v3893, 4
          %v3896 = vor.u32 %v3892, %v3895
          %v3898 = vshrl.u32 %v3844, 16
          %v3900 = vrot.slane %v3898, 3
          %v3901 = vshll.u32 %v3844, 16
          %v3903 = vrot.slane %v3901, 4
          %v3904 = vor.u32 %v3900, %v3903
          %v3905 = vsel %vm3854, %v3896, %v3904
          %v3907 = vshrl.u32 %v3843, 16
          %v3909 = vrot.slane %v3907, 3
          %v3910 = vshll.u32 %v3843, 16
          %v3912 = vrot.slane %v3910, 4
          %v3913 = vor.u32 %v3909, %v3912
          %v3915 = vshrl.u32 %v3845, 16
          %v3917 = vrot.slane %v3915, 3
          %v3918 = vshll.u32 %v3845, 16
          %v3920 = vrot.slane %v3918, 4
          %v3921 = vor.u32 %v3917, %v3920
          %v3922 = vsel %vm3854, %v3913, %v3921
          %v3924 = vshrl.u32 %v3846, 16
          %v3926 = vrot.slane %v3924, 3
          %v3927 = vshll.u32 %v3846, 16
          %v3929 = vrot.slane %v3927, 4
          %v3930 = vor.u32 %v3926, %v3929
          %v3932 = vshrl.u32 %v3848, 16
          %v3934 = vrot.slane %v3932, 3
          %v3935 = vshll.u32 %v3848, 16
          %v3937 = vrot.slane %v3935, 4
          %v3938 = vor.u32 %v3934, %v3937
          %v3939 = vsel %vm3854, %v3930, %v3938
          %v3941 = vshrl.u32 %v3847, 16
          %v3943 = vrot.slane %v3941, 3
          %v3944 = vshll.u32 %v3847, 16
          %v3946 = vrot.slane %v3944, 4
          %v3947 = vor.u32 %v3943, %v3946
          %v3949 = vshrl.u32 %v3849, 16
          %v3951 = vrot.slane %v3949, 3
          %v3952 = vshll.u32 %v3849, 16
          %v3954 = vrot.slane %v3952, 4
          %v3955 = vor.u32 %v3951, %v3954
          %v3956 = vsel %vm3854, %v3947, %v3955
          %v3958 = vshrl.u32 %v3850, 16
          %v3960 = vrot.slane %v3958, 3
          %v3961 = vshll.u32 %v3850, 16
          %v3963 = vrot.slane %v3961, 4
          %v3964 = vor.u32 %v3960, %v3963
          %v3966 = vshrl.u32 %v3852, 16
          %v3968 = vrot.slane %v3966, 3
          %v3969 = vshll.u32 %v3852, 16
          %v3971 = vrot.slane %v3969, 4
          %v3972 = vor.u32 %v3968, %v3971
          %v3973 = vsel %vm3854, %v3964, %v3972
          %v3975 = vshrl.u32 %v3851, 16
          %v3977 = vrot.slane %v3975, 3
          %v3978 = vshll.u32 %v3851, 16
          %v3980 = vrot.slane %v3978, 4
          %v3981 = vor.u32 %v3977, %v3980
          %v3983 = vshrl.u32 %v3853, 16
          %v3985 = vrot.slane %v3983, 3
          %v3986 = vshll.u32 %v3853, 16
          %v3988 = vrot.slane %v3986, 4
          %v3989 = vor.u32 %v3985, %v3988
          %v3990 = vsel %vm3854, %v3981, %v3989
          %v3999 = vld [vmem:[#allocation13] sm:$0xf]
          %v4000 = vld [vmem:[#allocation13 + $0x4] sm:$0xf]
          %v4001 = vld [vmem:[#allocation13 + $0x8] sm:$0xf]
          %v4002 = vld [vmem:[#allocation13 + $0xc] sm:$0xf]
          %v4003 = vld [vmem:[#allocation13 + $0x10] sm:$0xf]
          %v4004 = vld [vmem:[#allocation13 + $0x14] sm:$0xf]
          %v4005 = vld [vmem:[#allocation13 + $0x18] sm:$0xf]
          %v4006 = vld [vmem:[#allocation13 + $0x1c] sm:$0xf]
          %v4007 = vld [vmem:[#allocation13 + $0x20] sm:$0xf]
          %v4008 = vld [vmem:[#allocation13 + $0x24] sm:$0xf]
          %v4009 = vld [vmem:[#allocation13 + $0x28] sm:$0xf]
          %v4010 = vld [vmem:[#allocation13 + $0x2c] sm:$0xf]
          %v4011 = vld [vmem:[#allocation13 + $0x30] sm:$0xf]
          %v4012 = vld [vmem:[#allocation13 + $0x34] sm:$0xf]
          %v4013 = vld [vmem:[#allocation13 + $0x38] sm:$0xf]
          %v4014 = vld [vmem:[#allocation13 + $0x3c] sm:$0xf]
          %v4015 = vld [vmem:[#allocation13 + $0x40] sm:$0xf]
          %v4016 = vld [vmem:[#allocation13 + $0x44] sm:$0xf]
          %v4017 = vld [vmem:[#allocation13 + $0x48] sm:$0xf]
          %v4018 = vld [vmem:[#allocation13 + $0x4c] sm:$0xf]
          %v4019 = vld [vmem:[#allocation13 + $0x50] sm:$0xf]
          %v4020 = vld [vmem:[#allocation13 + $0x54] sm:$0xf]
          %v4021 = vld [vmem:[#allocation13 + $0x58] sm:$0xf]
          %v4022 = vld [vmem:[#allocation13 + $0x5c] sm:$0xf]
          %v4023 = vld [vmem:[#allocation13 + $0x60] sm:$0xf]
          %v4024 = vld [vmem:[#allocation13 + $0x64] sm:$0xf]
          %v4025 = vld [vmem:[#allocation13 + $0x68] sm:$0xf]
          %v4026 = vld [vmem:[#allocation13 + $0x6c] sm:$0xf]
          %v4027 = vld [vmem:[#allocation13 + $0x70] sm:$0xf]
          %v4028 = vld [vmem:[#allocation13 + $0x74] sm:$0xf]
          %v4029 = vld [vmem:[#allocation13 + $0x78] sm:$0xf]
          %v4030 = vld [vmem:[#allocation13 + $0x7c] sm:$0xf]
          %v4031 = vld [vmem:[%s3813 + $0x20] sm:$0xff]
          %v4032 = vld [vmem:[%s3813 + $0x28] sm:$0xff]
          %v4033 = vld [vmem:[%s3813 + $0x60] sm:$0xff]
          %v4034 = vld [vmem:[%s3813 + $0x68] sm:$0xff]
          %v4035 = vld [vmem:[%s3813 + $0xa0] sm:$0xff]
          %v4036 = vld [vmem:[%s3813 + $0xa8] sm:$0xff]
          %v4037 = vld [vmem:[%s3813 + $0xe0] sm:$0xff]
          %v4038 = vld [vmem:[%s3813 + $0xe8] sm:$0xff]
          %v4039 = vpack.c.bf16 %v4031, %v3816
          %v4040 = vpack.c.bf16 %v4032, %v3817
          %v4041 = vpack.c.bf16 %v4033, %v3822
          %v4042 = vpack.c.bf16 %v4034, %v3823
          %v4043 = vpack.c.bf16 %v4035, %v3828
          %v4044 = vpack.c.bf16 %v4036, %v3829
          %v4045 = vpack.c.bf16 %v4037, %v3834
          %v4046 = vpack.c.bf16 %v4038, %v3835
          %s4047 = scalar_lea.vmem [#allocation13], 128
          %v4048 = vld [vmem:[%s4047] sm:$0xf]
          %v4049 = vld [vmem:[%s4047 + $0x4] sm:$0xf]
          %v4050 = vld [vmem:[%s4047 + $0x8] sm:$0xf]
          %v4051 = vld [vmem:[%s4047 + $0xc] sm:$0xf]
          %v4052 = vld [vmem:[%s4047 + $0x10] sm:$0xf]
          %v4053 = vld [vmem:[%s4047 + $0x14] sm:$0xf]
          %v4054 = vld [vmem:[%s4047 + $0x18] sm:$0xf]
          %v4055 = vld [vmem:[%s4047 + $0x1c] sm:$0xf]
          %v4056 = vld [vmem:[%s4047 + $0x20] sm:$0xf]
          %v4057 = vld [vmem:[%s4047 + $0x24] sm:$0xf]
          %v4058 = vld [vmem:[%s4047 + $0x28] sm:$0xf]
          %v4059 = vld [vmem:[%s4047 + $0x2c] sm:$0xf]
          %v4060 = vld [vmem:[%s4047 + $0x30] sm:$0xf]
          %v4061 = vld [vmem:[%s4047 + $0x34] sm:$0xf]
          %v4062 = vld [vmem:[%s4047 + $0x38] sm:$0xf]
          %v4063 = vld [vmem:[%s4047 + $0x3c] sm:$0xf]
          %v4064 = vld [vmem:[%s4047 + $0x40] sm:$0xf]
          %v4065 = vld [vmem:[%s4047 + $0x44] sm:$0xf]
          %v4066 = vld [vmem:[%s4047 + $0x48] sm:$0xf]
          %v4067 = vld [vmem:[%s4047 + $0x4c] sm:$0xf]
          %v4068 = vld [vmem:[%s4047 + $0x50] sm:$0xf]
          %v4069 = vld [vmem:[%s4047 + $0x54] sm:$0xf]
          %v4070 = vld [vmem:[%s4047 + $0x58] sm:$0xf]
          %v4071 = vld [vmem:[%s4047 + $0x5c] sm:$0xf]
          %v4072 = vld [vmem:[%s4047 + $0x60] sm:$0xf]
          %v4073 = vld [vmem:[%s4047 + $0x64] sm:$0xf]
          %v4074 = vld [vmem:[%s4047 + $0x68] sm:$0xf]
          %v4075 = vld [vmem:[%s4047 + $0x6c] sm:$0xf]
          %v4076 = vld [vmem:[%s4047 + $0x70] sm:$0xf]
          %v4077 = vld [vmem:[%s4047 + $0x74] sm:$0xf]
          %v4078 = vld [vmem:[%s4047 + $0x78] sm:$0xf]
          %v4079 = vld [vmem:[%s4047 + $0x7c] sm:$0xf]
          %v4112 = vunpack.c.l.b16 %v4048
          %v4113 = vunpack.c.l.b16 %v4049
          %v4114 = vunpack.c.l.b16 %v4050
          %v4115 = vunpack.c.l.b16 %v4051
          %v4116 = vunpack.c.l.b16 %v4052
          %v4117 = vunpack.c.l.b16 %v4053
          %v4118 = vunpack.c.l.b16 %v4054
          %v4119 = vunpack.c.l.b16 %v4055
          %v4120 = vunpack.c.l.b16 %v4056
          %v4121 = vunpack.c.l.b16 %v4057
          %v4122 = vunpack.c.l.b16 %v4058
          %v4123 = vunpack.c.l.b16 %v4059
          %v4124 = vunpack.c.l.b16 %v4060
          %v4125 = vunpack.c.l.b16 %v4061
          %v4126 = vunpack.c.l.b16 %v4062
          %v4127 = vunpack.c.l.b16 %v4063
          %v4128 = vunpack.c.l.b16 %v4064
          %v4129 = vunpack.c.l.b16 %v4065
          %v4130 = vunpack.c.l.b16 %v4066
          %v4131 = vunpack.c.l.b16 %v4067
          %v4132 = vunpack.c.l.b16 %v4068
          %v4133 = vunpack.c.l.b16 %v4069
          %v4134 = vunpack.c.l.b16 %v4070
          %v4135 = vunpack.c.l.b16 %v4071
          %v4136 = vunpack.c.l.b16 %v4072
          %v4137 = vunpack.c.l.b16 %v4073
          %v4138 = vunpack.c.l.b16 %v4074
          %v4139 = vunpack.c.l.b16 %v4075
          %v4140 = vunpack.c.l.b16 %v4076
          %v4141 = vunpack.c.l.b16 %v4077
          %v4142 = vunpack.c.l.b16 %v4078
          %v4143 = vunpack.c.l.b16 %v4079
          %v4144 = vpack.c.b16 %v4113, %v4112
          %v4145 = vpack.c.b16 %v4115, %v4114
          %v4146 = vpack.c.b16 %v4117, %v4116
          %v4147 = vpack.c.b16 %v4119, %v4118
          %v4148 = vpack.c.b16 %v4121, %v4120
          %v4149 = vpack.c.b16 %v4123, %v4122
          %v4150 = vpack.c.b16 %v4125, %v4124
          %v4151 = vpack.c.b16 %v4127, %v4126
          %v4152 = vpack.c.b16 %v4129, %v4128
          %v4153 = vpack.c.b16 %v4131, %v4130
          %v4154 = vpack.c.b16 %v4133, %v4132
          %v4155 = vpack.c.b16 %v4135, %v4134
          %v4156 = vpack.c.b16 %v4137, %v4136
          %v4157 = vpack.c.b16 %v4139, %v4138
          %v4158 = vpack.c.b16 %v4141, %v4140
          %v4159 = vpack.c.b16 %v4143, %v4142
          %4176 = vmatprep.subr.bf16.mxu0 0
          %4177 = vmatpush1.bf16.msra.mxu0 %v4144
          %4178 = vmatprep.subr.bf16.mxu0 0
          %4179 = vmatpush1.bf16.msra.mxu0 %v4145
          %4180 = vmatprep.subr.bf16.mxu0 0
          %4181 = vmatpush1.bf16.msra.mxu0 %v4146
          %4182 = vmatprep.subr.bf16.mxu0 0
          %4183 = vmatpush1.bf16.msra.mxu0 %v4147
          %4184 = vmatprep.subr.bf16.mxu0 0
          %4185 = vmatpush1.bf16.msra.mxu0 %v4148
          %4186 = vmatprep.subr.bf16.mxu0 0
          %4187 = vmatpush1.bf16.msra.mxu0 %v4149
          %4188 = vmatprep.subr.bf16.mxu0 0
          %4189 = vmatpush1.bf16.msra.mxu0 %v4150
          %4190 = vmatprep.subr.bf16.mxu0 0
          %4191 = vmatpush1.bf16.msra.mxu0 %v4151
          %4192 = vmatprep.subr.bf16.mxu0 0
          %4193 = vmatpush1.bf16.msra.mxu0 %v4152
          %4194 = vmatprep.subr.bf16.mxu0 0
          %4195 = vmatpush1.bf16.msra.mxu0 %v4153
          %4196 = vmatprep.subr.bf16.mxu0 0
          %4197 = vmatpush1.bf16.msra.mxu0 %v4154
          %4198 = vmatprep.subr.bf16.mxu0 0
          %4199 = vmatpush1.bf16.msra.mxu0 %v4155
          %4200 = vmatprep.subr.bf16.mxu0 0
          %4201 = vmatpush1.bf16.msra.mxu0 %v4156
          %4202 = vmatprep.subr.bf16.mxu0 0
          %4203 = vmatpush1.bf16.msra.mxu0 %v4157
          %4204 = vmatprep.subr.bf16.mxu0 0
          %4205 = vmatpush1.bf16.msra.mxu0 %v4158
          %4206 = vmatprep.subr.bf16.mxu0 0
          %4207 = vmatpush1.bf16.msra.mxu0 %v4159
          %4208 = vmatprep.mubr.bf16.mxu0 %v4040
          %4209 = vmatmul.mubr.bf16.gmra.mrb[0].mxu0 %v4039
          %v4210 = vpop.f32.mrb[0].mxu0
          %v4211 = vadd.f32 0.0, %v4210
          %v4212 = vpop.f32.mrb[0].mxu0
          %v4213 = vpop.f32.mrb[0].mxu0
          %v4214 = vadd.f32 0.0, %v4213
          %v4215 = vpop.f32.mrb[0].mxu0
          %4216 = vmatprep.mubr.bf16.mxu0 %v4042
          %4217 = vmatmul.mubr.bf16.gmra.mrb[0].mxu0 %v4041
          %v4218 = vpop.f32.mrb[0].mxu0
          %v4219 = vadd.f32 0.0, %v4218
          %v4220 = vpop.f32.mrb[0].mxu0
          %v4221 = vpop.f32.mrb[0].mxu0
          %v4222 = vadd.f32 0.0, %v4221
          %v4223 = vpop.f32.mrb[0].mxu0
          %4224 = vmatprep.mubr.bf16.mxu0 %v4044
          %4225 = vmatmul.mubr.bf16.gmra.mrb[0].mxu0 %v4043
          %v4226 = vpop.f32.mrb[0].mxu0
          %v4227 = vadd.f32 0.0, %v4226
          %v4228 = vpop.f32.mrb[0].mxu0
          %v4229 = vpop.f32.mrb[0].mxu0
          %v4230 = vadd.f32 0.0, %v4229
          %v4231 = vpop.f32.mrb[0].mxu0
          %4232 = vmatprep.mubr.bf16.mxu0 %v4046
          %4233 = vmatmul.mubr.bf16.gmra.mrb[0].mxu0 %v4045
          %v4234 = vpop.f32.mrb[0].mxu0
          %v4235 = vadd.f32 0.0, %v4234
          %v4236 = vpop.f32.mrb[0].mxu0
          %v4237 = vpop.f32.mrb[0].mxu0
          %v4238 = vadd.f32 0.0, %v4237
          %v4239 = vpop.f32.mrb[0].mxu0
          %4240 = vdwg.mxu0
          %v4273 = vunpack.c.l.b16 %v3999
          %v4274 = vunpack.c.l.b16 %v4000
          %v4275 = vunpack.c.l.b16 %v4001
          %v4276 = vunpack.c.l.b16 %v4002
          %v4277 = vunpack.c.l.b16 %v4003
          %v4278 = vunpack.c.l.b16 %v4004
          %v4279 = vunpack.c.l.b16 %v4005
          %v4280 = vunpack.c.l.b16 %v4006
          %v4281 = vunpack.c.l.b16 %v4007
          %v4282 = vunpack.c.l.b16 %v4008
          %v4283 = vunpack.c.l.b16 %v4009
          %v4284 = vunpack.c.l.b16 %v4010
          %v4285 = vunpack.c.l.b16 %v4011
          %v4286 = vunpack.c.l.b16 %v4012
          %v4287 = vunpack.c.l.b16 %v4013
          %v4288 = vunpack.c.l.b16 %v4014
          %v4289 = vunpack.c.l.b16 %v4015
          %v4290 = vunpack.c.l.b16 %v4016
          %v4291 = vunpack.c.l.b16 %v4017
          %v4292 = vunpack.c.l.b16 %v4018
          %v4293 = vunpack.c.l.b16 %v4019
          %v4294 = vunpack.c.l.b16 %v4020
          %v4295 = vunpack.c.l.b16 %v4021
          %v4296 = vunpack.c.l.b16 %v4022
          %v4297 = vunpack.c.l.b16 %v4023
          %v4298 = vunpack.c.l.b16 %v4024
          %v4299 = vunpack.c.l.b16 %v4025
          %v4300 = vunpack.c.l.b16 %v4026
          %v4301 = vunpack.c.l.b16 %v4027
          %v4302 = vunpack.c.l.b16 %v4028
          %v4303 = vunpack.c.l.b16 %v4029
          %v4304 = vunpack.c.l.b16 %v4030
          %v4305 = vpack.c.b16 %v4274, %v4273
          %v4306 = vpack.c.b16 %v4276, %v4275
          %v4307 = vpack.c.b16 %v4278, %v4277
          %v4308 = vpack.c.b16 %v4280, %v4279
          %v4309 = vpack.c.b16 %v4282, %v4281
          %v4310 = vpack.c.b16 %v4284, %v4283
          %v4311 = vpack.c.b16 %v4286, %v4285
          %v4312 = vpack.c.b16 %v4288, %v4287
          %v4313 = vpack.c.b16 %v4290, %v4289
          %v4314 = vpack.c.b16 %v4292, %v4291
          %v4315 = vpack.c.b16 %v4294, %v4293
          %v4316 = vpack.c.b16 %v4296, %v4295
          %v4317 = vpack.c.b16 %v4298, %v4297
          %v4318 = vpack.c.b16 %v4300, %v4299
          %v4319 = vpack.c.b16 %v4302, %v4301
          %v4320 = vpack.c.b16 %v4304, %v4303
          %4337 = vmatprep.subr.bf16.mxu0 0
          %4338 = vmatpush1.bf16.msra.mxu0 %v4305
          %4339 = vmatprep.subr.bf16.mxu0 0
          %4340 = vmatpush1.bf16.msra.mxu0 %v4306
          %4341 = vmatprep.subr.bf16.mxu0 0
          %4342 = vmatpush1.bf16.msra.mxu0 %v4307
          %4343 = vmatprep.subr.bf16.mxu0 0
          %4344 = vmatpush1.bf16.msra.mxu0 %v4308
          %4345 = vmatprep.subr.bf16.mxu0 0
          %4346 = vmatpush1.bf16.msra.mxu0 %v4309
          %4347 = vmatprep.subr.bf16.mxu0 0
          %4348 = vmatpush1.bf16.msra.mxu0 %v4310
          %4349 = vmatprep.subr.bf16.mxu0 0
          %4350 = vmatpush1.bf16.msra.mxu0 %v4311
          %4351 = vmatprep.subr.bf16.mxu0 0
          %4352 = vmatpush1.bf16.msra.mxu0 %v4312
          %4353 = vmatprep.subr.bf16.mxu0 0
          %4354 = vmatpush1.bf16.msra.mxu0 %v4313
          %4355 = vmatprep.subr.bf16.mxu0 0
          %4356 = vmatpush1.bf16.msra.mxu0 %v4314
          %4357 = vmatprep.subr.bf16.mxu0 0
          %4358 = vmatpush1.bf16.msra.mxu0 %v4315
          %4359 = vmatprep.subr.bf16.mxu0 0
          %4360 = vmatpush1.bf16.msra.mxu0 %v4316
          %4361 = vmatprep.subr.bf16.mxu0 0
          %4362 = vmatpush1.bf16.msra.mxu0 %v4317
          %4363 = vmatprep.subr.bf16.mxu0 0
          %4364 = vmatpush1.bf16.msra.mxu0 %v4318
          %4365 = vmatprep.subr.bf16.mxu0 0
          %4366 = vmatpush1.bf16.msra.mxu0 %v4319
          %4367 = vmatprep.subr.bf16.mxu0 0
          %4368 = vmatpush1.bf16.msra.mxu0 %v4320
          %4369 = vmatprep.mubr.bf16.mxu0 %v3888
          %4370 = vmatmul.mubr.bf16.gmra.mrb[0].mxu0 %v3871
          %v4371 = vpop.f32.mrb[0].mxu0
          %v4372 = vadd.f32 %v4211, %v4371
          %v4373 = vpop.f32.mrb[0].mxu0
          %v4374 = vpop.f32.mrb[0].mxu0
          %v4375 = vadd.f32 %v4214, %v4374
          %v4376 = vpop.f32.mrb[0].mxu0
          %4377 = vmatprep.mubr.bf16.mxu0 %v3922
          %4378 = vmatmul.mubr.bf16.gmra.mrb[0].mxu0 %v3905
          %v4379 = vpop.f32.mrb[0].mxu0
          %v4380 = vadd.f32 %v4219, %v4379
          %v4381 = vpop.f32.mrb[0].mxu0
          %v4382 = vpop.f32.mrb[0].mxu0
          %v4383 = vadd.f32 %v4222, %v4382
          %v4384 = vpop.f32.mrb[0].mxu0
          %4385 = vmatprep.mubr.bf16.mxu0 %v3956
          %4386 = vmatmul.mubr.bf16.gmra.mrb[0].mxu0 %v3939
          %v4387 = vpop.f32.mrb[0].mxu0
          %v4388 = vadd.f32 %v4227, %v4387
          %v4389 = vpop.f32.mrb[0].mxu0
          %v4390 = vpop.f32.mrb[0].mxu0
          %v4391 = vadd.f32 %v4230, %v4390
          %v4392 = vpop.f32.mrb[0].mxu0
          %4393 = vmatprep.mubr.bf16.mxu0 %v3990
          %4394 = vmatmul.mubr.bf16.gmra.mrb[0].mxu0 %v3973
          %v4395 = vpop.f32.mrb[0].mxu0
          %v4396 = vadd.f32 %v4235, %v4395
          %v4397 = vpop.f32.mrb[0].mxu0
          %v4398 = vpop.f32.mrb[0].mxu0
          %v4399 = vadd.f32 %v4238, %v4398
          %v4400 = vpop.f32.mrb[0].mxu0
          %4401 = vdwg.mxu0
          %v4402 = vld [vmem:[%s3813 + $0x10] sm:$0xfe]
          %v4403 = vld [vmem:[%s3813 + $0x18] sm:$0xfe]
          %v4404 = vld [vmem:[%s3813 + $0x20] sm:$0xff]
          %v4405 = vld [vmem:[%s3813 + $0x28] sm:$0xff]
          %v4406 = vld [vmem:[%s3813 + $0x30] sm:$0x1]
          %v4407 = vld [vmem:[%s3813 + $0x38] sm:$0x1]
          %v4408 = vld [vmem:[%s3813 + $0x50] sm:$0xfe]
          %v4409 = vld [vmem:[%s3813 + $0x58] sm:$0xfe]
          %v4410 = vld [vmem:[%s3813 + $0x60] sm:$0xff]
          %v4411 = vld [vmem:[%s3813 + $0x68] sm:$0xff]
          %v4412 = vld [vmem:[%s3813 + $0x70] sm:$0x1]
          %v4413 = vld [vmem:[%s3813 + $0x78] sm:$0x1]
          %v4414 = vld [vmem:[%s3813 + $0x90] sm:$0xfe]
          %v4415 = vld [vmem:[%s3813 + $0x98] sm:$0xfe]
          %v4416 = vld [vmem:[%s3813 + $0xa0] sm:$0xff]
          %v4417 = vld [vmem:[%s3813 + $0xa8] sm:$0xff]
          %v4418 = vld [vmem:[%s3813 + $0xb0] sm:$0x1]
          %v4419 = vld [vmem:[%s3813 + $0xb8] sm:$0x1]
          %v4420 = vld [vmem:[%s3813 + $0xd0] sm:$0xfe]
          %v4421 = vld [vmem:[%s3813 + $0xd8] sm:$0xfe]
          %v4422 = vld [vmem:[%s3813 + $0xe0] sm:$0xff]
          %v4423 = vld [vmem:[%s3813 + $0xe8] sm:$0xff]
          %v4424 = vld [vmem:[%s3813 + $0xf0] sm:$0x1]
          %v4425 = vld [vmem:[%s3813 + $0xf8] sm:$0x1]
          %v4426 = vpack.c.bf16 %v4404, %v4402
          %v4427 = vpack.c.bf16 %v4405, %v4403
          %v4428 = vpack.c.bf16 %v4406, %v4406
          %v4429 = vpack.c.bf16 %v4407, %v4407
          %v4430 = vpack.c.bf16 %v4410, %v4408
          %v4431 = vpack.c.bf16 %v4411, %v4409
          %v4432 = vpack.c.bf16 %v4412, %v4412
          %v4433 = vpack.c.bf16 %v4413, %v4413
          %v4434 = vpack.c.bf16 %v4416, %v4414
          %v4435 = vpack.c.bf16 %v4417, %v4415
          %v4436 = vpack.c.bf16 %v4418, %v4418
          %v4437 = vpack.c.bf16 %v4419, %v4419
          %v4438 = vpack.c.bf16 %v4422, %v4420
          %v4439 = vpack.c.bf16 %v4423, %v4421
          %v4440 = vpack.c.bf16 %v4424, %v4424
          %v4441 = vpack.c.bf16 %v4425, %v4425
          %vm4442 = vsmask.f32 7424
          %v4444 = vshrl.u32 %v4426, 16
          %v4446 = vshll.u32 %v4426, 16
          %v4448 = vrot.slane %v4446, 1
          %v4449 = vor.u32 %v4444, %v4448
          %v4451 = vshll.u32 %v4428, 16
          %v4453 = vrot.slane %v4451, 1
          %v4454 = vsel %vm4442, %v4449, %v4453
          %v4456 = vshrl.u32 %v4427, 16
          %v4458 = vshll.u32 %v4427, 16
          %v4460 = vrot.slane %v4458, 1
          %v4461 = vor.u32 %v4456, %v4460
          %v4463 = vshll.u32 %v4429, 16
          %v4465 = vrot.slane %v4463, 1
          %v4466 = vsel %vm4442, %v4461, %v4465
          %v4468 = vshrl.u32 %v4430, 16
          %v4470 = vshll.u32 %v4430, 16
          %v4472 = vrot.slane %v4470, 1
          %v4473 = vor.u32 %v4468, %v4472
          %v4475 = vshll.u32 %v4432, 16
          %v4477 = vrot.slane %v4475, 1
          %v4478 = vsel %vm4442, %v4473, %v4477
          %v4480 = vshrl.u32 %v4431, 16
          %v4482 = vshll.u32 %v4431, 16
          %v4484 = vrot.slane %v4482, 1
          %v4485 = vor.u32 %v4480, %v4484
          %v4487 = vshll.u32 %v4433, 16
          %v4489 = vrot.slane %v4487, 1
          %v4490 = vsel %vm4442, %v4485, %v4489
          %v4492 = vshrl.u32 %v4434, 16
          %v4494 = vshll.u32 %v4434, 16
          %v4496 = vrot.slane %v4494, 1
          %v4497 = vor.u32 %v4492, %v4496
          %v4499 = vshll.u32 %v4436, 16
          %v4501 = vrot.slane %v4499, 1
          %v4502 = vsel %vm4442, %v4497, %v4501
          %v4504 = vshrl.u32 %v4435, 16
          %v4506 = vshll.u32 %v4435, 16
          %v4508 = vrot.slane %v4506, 1
          %v4509 = vor.u32 %v4504, %v4508
          %v4511 = vshll.u32 %v4437, 16
          %v4513 = vrot.slane %v4511, 1
          %v4514 = vsel %vm4442, %v4509, %v4513
          %v4516 = vshrl.u32 %v4438, 16
          %v4518 = vshll.u32 %v4438, 16
          %v4520 = vrot.slane %v4518, 1
          %v4521 = vor.u32 %v4516, %v4520
          %v4523 = vshll.u32 %v4440, 16
          %v4525 = vrot.slane %v4523, 1
          %v4526 = vsel %vm4442, %v4521, %v4525
          %v4528 = vshrl.u32 %v4439, 16
          %v4530 = vshll.u32 %v4439, 16
          %v4532 = vrot.slane %v4530, 1
          %v4533 = vor.u32 %v4528, %v4532
          %v4535 = vshll.u32 %v4441, 16
          %v4537 = vrot.slane %v4535, 1
          %v4538 = vsel %vm4442, %v4533, %v4537
          %s4547 = scalar_lea.vmem [#allocation13], 256
          %v4548 = vld [vmem:[%s4547] sm:$0xf]
          %v4549 = vld [vmem:[%s4547 + $0x4] sm:$0xf]
          %v4550 = vld [vmem:[%s4547 + $0x8] sm:$0xf]
          %v4551 = vld [vmem:[%s4547 + $0xc] sm:$0xf]
          %v4552 = vld [vmem:[%s4547 + $0x10] sm:$0xf]
          %v4553 = vld [vmem:[%s4547 + $0x14] sm:$0xf]
          %v4554 = vld [vmem:[%s4547 + $0x18] sm:$0xf]
          %v4555 = vld [vmem:[%s4547 + $0x1c] sm:$0xf]
          %v4556 = vld [vmem:[%s4547 + $0x20] sm:$0xf]
          %v4557 = vld [vmem:[%s4547 + $0x24] sm:$0xf]
          %v4558 = vld [vmem:[%s4547 + $0x28] sm:$0xf]
          %v4559 = vld [vmem:[%s4547 + $0x2c] sm:$0xf]
          %v4560 = vld [vmem:[%s4547 + $0x30] sm:$0xf]
          %v4561 = vld [vmem:[%s4547 + $0x34] sm:$0xf]
          %v4562 = vld [vmem:[%s4547 + $0x38] sm:$0xf]
          %v4563 = vld [vmem:[%s4547 + $0x3c] sm:$0xf]
          %v4564 = vld [vmem:[%s4547 + $0x40] sm:$0xf]
          %v4565 = vld [vmem:[%s4547 + $0x44] sm:$0xf]
          %v4566 = vld [vmem:[%s4547 + $0x48] sm:$0xf]
          %v4567 = vld [vmem:[%s4547 + $0x4c] sm:$0xf]
          %v4568 = vld [vmem:[%s4547 + $0x50] sm:$0xf]
          %v4569 = vld [vmem:[%s4547 + $0x54] sm:$0xf]
          %v4570 = vld [vmem:[%s4547 + $0x58] sm:$0xf]
          %v4571 = vld [vmem:[%s4547 + $0x5c] sm:$0xf]
          %v4572 = vld [vmem:[%s4547 + $0x60] sm:$0xf]
          %v4573 = vld [vmem:[%s4547 + $0x64] sm:$0xf]
          %v4574 = vld [vmem:[%s4547 + $0x68] sm:$0xf]
          %v4575 = vld [vmem:[%s4547 + $0x6c] sm:$0xf]
          %v4576 = vld [vmem:[%s4547 + $0x70] sm:$0xf]
          %v4577 = vld [vmem:[%s4547 + $0x74] sm:$0xf]
          %v4578 = vld [vmem:[%s4547 + $0x78] sm:$0xf]
          %v4579 = vld [vmem:[%s4547 + $0x7c] sm:$0xf]
          %v4612 = vunpack.c.l.b16 %v4548
          %v4613 = vunpack.c.l.b16 %v4549
          %v4614 = vunpack.c.l.b16 %v4550
          %v4615 = vunpack.c.l.b16 %v4551
          %v4616 = vunpack.c.l.b16 %v4552
          %v4617 = vunpack.c.l.b16 %v4553
          %v4618 = vunpack.c.l.b16 %v4554
          %v4619 = vunpack.c.l.b16 %v4555
          %v4620 = vunpack.c.l.b16 %v4556
          %v4621 = vunpack.c.l.b16 %v4557
          %v4622 = vunpack.c.l.b16 %v4558
          %v4623 = vunpack.c.l.b16 %v4559
          %v4624 = vunpack.c.l.b16 %v4560
          %v4625 = vunpack.c.l.b16 %v4561
          %v4626 = vunpack.c.l.b16 %v4562
          %v4627 = vunpack.c.l.b16 %v4563
          %v4628 = vunpack.c.l.b16 %v4564
          %v4629 = vunpack.c.l.b16 %v4565
          %v4630 = vunpack.c.l.b16 %v4566
          %v4631 = vunpack.c.l.b16 %v4567
          %v4632 = vunpack.c.l.b16 %v4568
          %v4633 = vunpack.c.l.b16 %v4569
          %v4634 = vunpack.c.l.b16 %v4570
          %v4635 = vunpack.c.l.b16 %v4571
          %v4636 = vunpack.c.l.b16 %v4572
          %v4637 = vunpack.c.l.b16 %v4573
          %v4638 = vunpack.c.l.b16 %v4574
          %v4639 = vunpack.c.l.b16 %v4575
          %v4640 = vunpack.c.l.b16 %v4576
          %v4641 = vunpack.c.l.b16 %v4577
          %v4642 = vunpack.c.l.b16 %v4578
          %v4643 = vunpack.c.l.b16 %v4579
          %v4644 = vpack.c.b16 %v4613, %v4612
          %v4645 = vpack.c.b16 %v4615, %v4614
          %v4646 = vpack.c.b16 %v4617, %v4616
          %v4647 = vpack.c.b16 %v4619, %v4618
          %v4648 = vpack.c.b16 %v4621, %v4620
          %v4649 = vpack.c.b16 %v4623, %v4622
          %v4650 = vpack.c.b16 %v4625, %v4624
          %v4651 = vpack.c.b16 %v4627, %v4626
          %v4652 = vpack.c.b16 %v4629, %v4628
          %v4653 = vpack.c.b16 %v4631, %v4630
          %v4654 = vpack.c.b16 %v4633, %v4632
          %v4655 = vpack.c.b16 %v4635, %v4634
          %v4656 = vpack.c.b16 %v4637, %v4636
          %v4657 = vpack.c.b16 %v4639, %v4638
          %v4658 = vpack.c.b16 %v4641, %v4640
          %v4659 = vpack.c.b16 %v4643, %v4642
          %4676 = vmatprep.subr.bf16.mxu0 0
          %4677 = vmatpush1.bf16.msra.mxu0 %v4644
          %4678 = vmatprep.subr.bf16.mxu0 0
          %4679 = vmatpush1.bf16.msra.mxu0 %v4645
          %4680 = vmatprep.subr.bf16.mxu0 0
          %4681 = vmatpush1.bf16.msra.mxu0 %v4646
          %4682 = vmatprep.subr.bf16.mxu0 0
          %4683 = vmatpush1.bf16.msra.mxu0 %v4647
          %4684 = vmatprep.subr.bf16.mxu0 0
          %4685 = vmatpush1.bf16.msra.mxu0 %v4648
          %4686 = vmatprep.subr.bf16.mxu0 0
          %4687 = vmatpush1.bf16.msra.mxu0 %v4649
          %4688 = vmatprep.subr.bf16.mxu0 0
          %4689 = vmatpush1.bf16.msra.mxu0 %v4650
          %4690 = vmatprep.subr.bf16.mxu0 0
          %4691 = vmatpush1.bf16.msra.mxu0 %v4651
          %4692 = vmatprep.subr.bf16.mxu0 0
          %4693 = vmatpush1.bf16.msra.mxu0 %v4652
          %4694 = vmatprep.subr.bf16.mxu0 0
          %4695 = vmatpush1.bf16.msra.mxu0 %v4653
          %4696 = vmatprep.subr.bf16.mxu0 0
          %4697 = vmatpush1.bf16.msra.mxu0 %v4654
          %4698 = vmatprep.subr.bf16.mxu0 0
          %4699 = vmatpush1.bf16.msra.mxu0 %v4655
          %4700 = vmatprep.subr.bf16.mxu0 0
          %4701 = vmatpush1.bf16.msra.mxu0 %v4656
          %4702 = vmatprep.subr.bf16.mxu0 0
          %4703 = vmatpush1.bf16.msra.mxu0 %v4657
          %4704 = vmatprep.subr.bf16.mxu0 0
          %4705 = vmatpush1.bf16.msra.mxu0 %v4658
          %4706 = vmatprep.subr.bf16.mxu0 0
          %4707 = vmatpush1.bf16.msra.mxu0 %v4659
          %4708 = vmatprep.mubr.bf16.mxu0 %v4466
          %4709 = vmatmul.mubr.bf16.gmra.mrb[0].mxu0 %v4454
          %v4710 = vpop.f32.mrb[0].mxu0
          %v4711 = vadd.f32 0.0, %v4710
          %v4712 = vpop.f32.mrb[0].mxu0
          %v4713 = vpop.f32.mrb[0].mxu0
          %v4714 = vadd.f32 0.0, %v4713
          %v4715 = vpop.f32.mrb[0].mxu0
          %4716 = vmatprep.mubr.bf16.mxu0 %v4490
          %4717 = vmatmul.mubr.bf16.gmra.mrb[0].mxu0 %v4478
          %v4718 = vpop.f32.mrb[0].mxu0
          %v4719 = vadd.f32 0.0, %v4718
          %v4720 = vpop.f32.mrb[0].mxu0
          %v4721 = vpop.f32.mrb[0].mxu0
          %v4722 = vadd.f32 0.0, %v4721
          %v4723 = vpop.f32.mrb[0].mxu0
          %4724 = vmatprep.mubr.bf16.mxu0 %v4514
          %4725 = vmatmul.mubr.bf16.gmra.mrb[0].mxu0 %v4502
          %v4726 = vpop.f32.mrb[0].mxu0
          %v4727 = vadd.f32 0.0, %v4726
          %v4728 = vpop.f32.mrb[0].mxu0
          %v4729 = vpop.f32.mrb[0].mxu0
          %v4730 = vadd.f32 0.0, %v4729
          %v4731 = vpop.f32.mrb[0].mxu0
          %4732 = vmatprep.mubr.bf16.mxu0 %v4538
          %4733 = vmatmul.mubr.bf16.gmra.mrb[0].mxu0 %v4526
          %v4734 = vpop.f32.mrb[0].mxu0
          %v4735 = vadd.f32 0.0, %v4734
          %v4736 = vpop.f32.mrb[0].mxu0
          %v4737 = vpop.f32.mrb[0].mxu0
          %v4738 = vadd.f32 0.0, %v4737
          %v4739 = vpop.f32.mrb[0].mxu0
          %4740 = vdwg.mxu0
          %v4741 = vadd.f32 %v4372, %v4711
          %v4742 = vadd.f32 %v4375, %v4714
          %v4743 = vadd.f32 %v4380, %v4719
          %v4744 = vadd.f32 %v4383, %v4722
          %v4745 = vadd.f32 %v4388, %v4727
          %v4746 = vadd.f32 %v4391, %v4730
          %v4747 = vadd.f32 %v4396, %v4735
          %v4748 = vadd.f32 %v4399, %v4738
          %s4749 = sadd.s32 %s3810, 1
          %s4750 = smul.u32 %s4749, 8
          %s4751 = smul.addr %s4750, 8
          %s4752 = scalar_lea.vmem [#allocation4], %s4751
          %v4753 = vld [vmem:[%s4752] sm:$0x80]
          %v4754 = vld [vmem:[%s4752 + $0x8] sm:$0x80]
          %v4755 = vld [vmem:[%s4752 + $0x10] sm:$0xff]
          %v4756 = vld [vmem:[%s4752 + $0x18] sm:$0xff]
          %v4757 = vld [vmem:[%s4752 + $0x20] sm:$0x7f]
          %v4758 = vld [vmem:[%s4752 + $0x28] sm:$0x7f]
          %v4759 = vld [vmem:[%s4752 + $0x40] sm:$0x80]
          %v4760 = vld [vmem:[%s4752 + $0x48] sm:$0x80]
          %v4761 = vld [vmem:[%s4752 + $0x50] sm:$0xff]
          %v4762 = vld [vmem:[%s4752 + $0x58] sm:$0xff]
          %v4763 = vld [vmem:[%s4752 + $0x60] sm:$0x7f]
          %v4764 = vld [vmem:[%s4752 + $0x68] sm:$0x7f]
          %v4765 = vld [vmem:[%s4752 + $0x80] sm:$0x80]
          %v4766 = vld [vmem:[%s4752 + $0x88] sm:$0x80]
          %v4767 = vld [vmem:[%s4752 + $0x90] sm:$0xff]
          %v4768 = vld [vmem:[%s4752 + $0x98] sm:$0xff]
          %v4769 = vld [vmem:[%s4752 + $0xa0] sm:$0x7f]
          %v4770 = vld [vmem:[%s4752 + $0xa8] sm:$0x7f]
          %v4771 = vld [vmem:[%s4752 + $0xc0] sm:$0x80]
          %v4772 = vld [vmem:[%s4752 + $0xc8] sm:$0x80]
          %v4773 = vld [vmem:[%s4752 + $0xd0] sm:$0xff]
          %v4774 = vld [vmem:[%s4752 + $0xd8] sm:$0xff]
          %v4775 = vld [vmem:[%s4752 + $0xe0] sm:$0x7f]
          %v4776 = vld [vmem:[%s4752 + $0xe8] sm:$0x7f]
          %v4777 = vpack.c.bf16 %v4755, %v4753
          %v4778 = vpack.c.bf16 %v4756, %v4754
          %v4779 = vpack.c.bf16 %v4757, %v4757
          %v4780 = vpack.c.bf16 %v4758, %v4758
          %v4781 = vpack.c.bf16 %v4761, %v4759
          %v4782 = vpack.c.bf16 %v4762, %v4760
          %v4783 = vpack.c.bf16 %v4763, %v4763
          %v4784 = vpack.c.bf16 %v4764, %v4764
          %v4785 = vpack.c.bf16 %v4767, %v4765
          %v4786 = vpack.c.bf16 %v4768, %v4766
          %v4787 = vpack.c.bf16 %v4769, %v4769
          %v4788 = vpack.c.bf16 %v4770, %v4770
          %v4789 = vpack.c.bf16 %v4773, %v4771
          %v4790 = vpack.c.bf16 %v4774, %v4772
          %v4791 = vpack.c.bf16 %v4775, %v4775
          %v4792 = vpack.c.bf16 %v4776, %v4776
          %v4794 = vshrl.u32 %v4777, 16
          %v4796 = vrot.slane %v4794, 3
          %v4797 = vshll.u32 %v4777, 16
          %v4799 = vrot.slane %v4797, 4
          %v4800 = vor.u32 %v4796, %v4799
          %v4802 = vshrl.u32 %v4779, 16
          %v4804 = vrot.slane %v4802, 3
          %v4805 = vshll.u32 %v4779, 16
          %v4807 = vrot.slane %v4805, 4
          %v4808 = vor.u32 %v4804, %v4807
          %v4809 = vsel %vm3854, %v4800, %v4808
          %v4811 = vshrl.u32 %v4778, 16
          %v4813 = vrot.slane %v4811, 3
          %v4814 = vshll.u32 %v4778, 16
          %v4816 = vrot.slane %v4814, 4
          %v4817 = vor.u32 %v4813, %v4816
          %v4819 = vshrl.u32 %v4780, 16
          %v4821 = vrot.slane %v4819, 3
          %v4822 = vshll.u32 %v4780, 16
          %v4824 = vrot.slane %v4822, 4
          %v4825 = vor.u32 %v4821, %v4824
          %v4826 = vsel %vm3854, %v4817, %v4825
          %v4828 = vshrl.u32 %v4781, 16
          %v4830 = vrot.slane %v4828, 3
          %v4831 = vshll.u32 %v4781, 16
          %v4833 = vrot.slane %v4831, 4
          %v4834 = vor.u32 %v4830, %v4833
          %v4836 = vshrl.u32 %v4783, 16
          %v4838 = vrot.slane %v4836, 3
          %v4839 = vshll.u32 %v4783, 16
          %v4841 = vrot.slane %v4839, 4
          %v4842 = vor.u32 %v4838, %v4841
          %v4843 = vsel %vm3854, %v4834, %v4842
          %v4845 = vshrl.u32 %v4782, 16
          %v4847 = vrot.slane %v4845, 3
          %v4848 = vshll.u32 %v4782, 16
          %v4850 = vrot.slane %v4848, 4
          %v4851 = vor.u32 %v4847, %v4850
          %v4853 = vshrl.u32 %v4784, 16
          %v4855 = vrot.slane %v4853, 3
          %v4856 = vshll.u32 %v4784, 16
          %v4858 = vrot.slane %v4856, 4
          %v4859 = vor.u32 %v4855, %v4858
          %v4860 = vsel %vm3854, %v4851, %v4859
          %v4862 = vshrl.u32 %v4785, 16
          %v4864 = vrot.slane %v4862, 3
          %v4865 = vshll.u32 %v4785, 16
          %v4867 = vrot.slane %v4865, 4
          %v4868 = vor.u32 %v4864, %v4867
          %v4870 = vshrl.u32 %v4787, 16
          %v4872 = vrot.slane %v4870, 3
          %v4873 = vshll.u32 %v4787, 16
          %v4875 = vrot.slane %v4873, 4
          %v4876 = vor.u32 %v4872, %v4875
          %v4877 = vsel %vm3854, %v4868, %v4876
          %v4879 = vshrl.u32 %v4786, 16
          %v4881 = vrot.slane %v4879, 3
          %v4882 = vshll.u32 %v4786, 16
          %v4884 = vrot.slane %v4882, 4
          %v4885 = vor.u32 %v4881, %v4884
          %v4887 = vshrl.u32 %v4788, 16
          %v4889 = vrot.slane %v4887, 3
          %v4890 = vshll.u32 %v4788, 16
          %v4892 = vrot.slane %v4890, 4
          %v4893 = vor.u32 %v4889, %v4892
          %v4894 = vsel %vm3854, %v4885, %v4893
          %v4896 = vshrl.u32 %v4789, 16
          %v4898 = vrot.slane %v4896, 3
          %v4899 = vshll.u32 %v4789, 16
          %v4901 = vrot.slane %v4899, 4
          %v4902 = vor.u32 %v4898, %v4901
          %v4904 = vshrl.u32 %v4791, 16
          %v4906 = vrot.slane %v4904, 3
          %v4907 = vshll.u32 %v4791, 16
          %v4909 = vrot.slane %v4907, 4
          %v4910 = vor.u32 %v4906, %v4909
          %v4911 = vsel %vm3854, %v4902, %v4910
          %v4913 = vshrl.u32 %v4790, 16
          %v4915 = vrot.slane %v4913, 3
          %v4916 = vshll.u32 %v4790, 16
          %v4918 = vrot.slane %v4916, 4
          %v4919 = vor.u32 %v4915, %v4918
          %v4921 = vshrl.u32 %v4792, 16
          %v4923 = vrot.slane %v4921, 3
          %v4924 = vshll.u32 %v4792, 16
          %v4926 = vrot.slane %v4924, 4
          %v4927 = vor.u32 %v4923, %v4926
          %v4928 = vsel %vm3854, %v4919, %v4927
          %s4937 = scalar_lea.vmem [#allocation13], 384
          %v4938 = vld [vmem:[%s4937] sm:$0xf]
          %v4939 = vld [vmem:[%s4937 + $0x4] sm:$0xf]
          %v4940 = vld [vmem:[%s4937 + $0x8] sm:$0xf]
          %v4941 = vld [vmem:[%s4937 + $0xc] sm:$0xf]
          %v4942 = vld [vmem:[%s4937 + $0x10] sm:$0xf]
          %v4943 = vld [vmem:[%s4937 + $0x14] sm:$0xf]
          %v4944 = vld [vmem:[%s4937 + $0x18] sm:$0xf]
          %v4945 = vld [vmem:[%s4937 + $0x1c] sm:$0xf]
          %v4946 = vld [vmem:[%s4937 + $0x20] sm:$0xf]
          %v4947 = vld [vmem:[%s4937 + $0x24] sm:$0xf]
          %v4948 = vld [vmem:[%s4937 + $0x28] sm:$0xf]
          %v4949 = vld [vmem:[%s4937 + $0x2c] sm:$0xf]
          %v4950 = vld [vmem:[%s4937 + $0x30] sm:$0xf]
          %v4951 = vld [vmem:[%s4937 + $0x34] sm:$0xf]
          %v4952 = vld [vmem:[%s4937 + $0x38] sm:$0xf]
          %v4953 = vld [vmem:[%s4937 + $0x3c] sm:$0xf]
          %v4954 = vld [vmem:[%s4937 + $0x40] sm:$0xf]
          %v4955 = vld [vmem:[%s4937 + $0x44] sm:$0xf]
          %v4956 = vld [vmem:[%s4937 + $0x48] sm:$0xf]
          %v4957 = vld [vmem:[%s4937 + $0x4c] sm:$0xf]
          %v4958 = vld [vmem:[%s4937 + $0x50] sm:$0xf]
          %v4959 = vld [vmem:[%s4937 + $0x54] sm:$0xf]
          %v4960 = vld [vmem:[%s4937 + $0x58] sm:$0xf]
          %v4961 = vld [vmem:[%s4937 + $0x5c] sm:$0xf]
          %v4962 = vld [vmem:[%s4937 + $0x60] sm:$0xf]
          %v4963 = vld [vmem:[%s4937 + $0x64] sm:$0xf]
          %v4964 = vld [vmem:[%s4937 + $0x68] sm:$0xf]
          %v4965 = vld [vmem:[%s4937 + $0x6c] sm:$0xf]
          %v4966 = vld [vmem:[%s4937 + $0x70] sm:$0xf]
          %v4967 = vld [vmem:[%s4937 + $0x74] sm:$0xf]
          %v4968 = vld [vmem:[%s4937 + $0x78] sm:$0xf]
          %v4969 = vld [vmem:[%s4937 + $0x7c] sm:$0xf]
          %v5002 = vunpack.c.l.b16 %v4938
          %v5003 = vunpack.c.l.b16 %v4939
          %v5004 = vunpack.c.l.b16 %v4940
          %v5005 = vunpack.c.l.b16 %v4941
          %v5006 = vunpack.c.l.b16 %v4942
          %v5007 = vunpack.c.l.b16 %v4943
          %v5008 = vunpack.c.l.b16 %v4944
          %v5009 = vunpack.c.l.b16 %v4945
          %v5010 = vunpack.c.l.b16 %v4946
          %v5011 = vunpack.c.l.b16 %v4947
          %v5012 = vunpack.c.l.b16 %v4948
          %v5013 = vunpack.c.l.b16 %v4949
          %v5014 = vunpack.c.l.b16 %v4950
          %v5015 = vunpack.c.l.b16 %v4951
          %v5016 = vunpack.c.l.b16 %v4952
          %v5017 = vunpack.c.l.b16 %v4953
          %v5018 = vunpack.c.l.b16 %v4954
          %v5019 = vunpack.c.l.b16 %v4955
          %v5020 = vunpack.c.l.b16 %v4956
          %v5021 = vunpack.c.l.b16 %v4957
          %v5022 = vunpack.c.l.b16 %v4958
          %v5023 = vunpack.c.l.b16 %v4959
          %v5024 = vunpack.c.l.b16 %v4960
          %v5025 = vunpack.c.l.b16 %v4961
          %v5026 = vunpack.c.l.b16 %v4962
          %v5027 = vunpack.c.l.b16 %v4963
          %v5028 = vunpack.c.l.b16 %v4964
          %v5029 = vunpack.c.l.b16 %v4965
          %v5030 = vunpack.c.l.b16 %v4966
          %v5031 = vunpack.c.l.b16 %v4967
          %v5032 = vunpack.c.l.b16 %v4968
          %v5033 = vunpack.c.l.b16 %v4969
          %v5034 = vpack.c.b16 %v5003, %v5002
          %v5035 = vpack.c.b16 %v5005, %v5004
          %v5036 = vpack.c.b16 %v5007, %v5006
          %v5037 = vpack.c.b16 %v5009, %v5008
          %v5038 = vpack.c.b16 %v5011, %v5010
          %v5039 = vpack.c.b16 %v5013, %v5012
          %v5040 = vpack.c.b16 %v5015, %v5014
          %v5041 = vpack.c.b16 %v5017, %v5016
          %v5042 = vpack.c.b16 %v5019, %v5018
          %v5043 = vpack.c.b16 %v5021, %v5020
          %v5044 = vpack.c.b16 %v5023, %v5022
          %v5045 = vpack.c.b16 %v5025, %v5024
          %v5046 = vpack.c.b16 %v5027, %v5026
          %v5047 = vpack.c.b16 %v5029, %v5028
          %v5048 = vpack.c.b16 %v5031, %v5030
          %v5049 = vpack.c.b16 %v5033, %v5032
          %5066 = vmatprep.subr.bf16.mxu0 0
          %5067 = vmatpush1.bf16.msra.mxu0 %v5034
          %5068 = vmatprep.subr.bf16.mxu0 0
          %5069 = vmatpush1.bf16.msra.mxu0 %v5035
          %5070 = vmatprep.subr.bf16.mxu0 0
          %5071 = vmatpush1.bf16.msra.mxu0 %v5036
          %5072 = vmatprep.subr.bf16.mxu0 0
          %5073 = vmatpush1.bf16.msra.mxu0 %v5037
          %5074 = vmatprep.subr.bf16.mxu0 0
          %5075 = vmatpush1.bf16.msra.mxu0 %v5038
          %5076 = vmatprep.subr.bf16.mxu0 0
          %5077 = vmatpush1.bf16.msra.mxu0 %v5039
          %5078 = vmatprep.subr.bf16.mxu0 0
          %5079 = vmatpush1.bf16.msra.mxu0 %v5040
          %5080 = vmatprep.subr.bf16.mxu0 0
          %5081 = vmatpush1.bf16.msra.mxu0 %v5041
          %5082 = vmatprep.subr.bf16.mxu0 0
          %5083 = vmatpush1.bf16.msra.mxu0 %v5042
          %5084 = vmatprep.subr.bf16.mxu0 0
          %5085 = vmatpush1.bf16.msra.mxu0 %v5043
          %5086 = vmatprep.subr.bf16.mxu0 0
          %5087 = vmatpush1.bf16.msra.mxu0 %v5044
          %5088 = vmatprep.subr.bf16.mxu0 0
          %5089 = vmatpush1.bf16.msra.mxu0 %v5045
          %5090 = vmatprep.subr.bf16.mxu0 0
          %5091 = vmatpush1.bf16.msra.mxu0 %v5046
          %5092 = vmatprep.subr.bf16.mxu0 0
          %5093 = vmatpush1.bf16.msra.mxu0 %v5047
          %5094 = vmatprep.subr.bf16.mxu0 0
          %5095 = vmatpush1.bf16.msra.mxu0 %v5048
          %5096 = vmatprep.subr.bf16.mxu0 0
          %5097 = vmatpush1.bf16.msra.mxu0 %v5049
          %5098 = vmatprep.mubr.bf16.mxu0 %v4826
          %5099 = vmatmul.mubr.bf16.gmra.mrb[0].mxu0 %v4809
          %v5100 = vpop.f32.mrb[0].mxu0
          %v5101 = vadd.f32 0.0, %v5100
          %v5102 = vpop.f32.mrb[0].mxu0
          %v5103 = vpop.f32.mrb[0].mxu0
          %v5104 = vadd.f32 0.0, %v5103
          %v5105 = vpop.f32.mrb[0].mxu0
          %5106 = vmatprep.mubr.bf16.mxu0 %v4860
          %5107 = vmatmul.mubr.bf16.gmra.mrb[0].mxu0 %v4843
          %v5108 = vpop.f32.mrb[0].mxu0
          %v5109 = vadd.f32 0.0, %v5108
          %v5110 = vpop.f32.mrb[0].mxu0
          %v5111 = vpop.f32.mrb[0].mxu0
          %v5112 = vadd.f32 0.0, %v5111
          %v5113 = vpop.f32.mrb[0].mxu0
          %5114 = vmatprep.mubr.bf16.mxu0 %v4894
          %5115 = vmatmul.mubr.bf16.gmra.mrb[0].mxu0 %v4877
          %v5116 = vpop.f32.mrb[0].mxu0
          %v5117 = vadd.f32 0.0, %v5116
          %v5118 = vpop.f32.mrb[0].mxu0
          %v5119 = vpop.f32.mrb[0].mxu0
          %v5120 = vadd.f32 0.0, %v5119
          %v5121 = vpop.f32.mrb[0].mxu0
          %5122 = vmatprep.mubr.bf16.mxu0 %v4928
          %5123 = vmatmul.mubr.bf16.gmra.mrb[0].mxu0 %v4911
          %v5124 = vpop.f32.mrb[0].mxu0
          %v5125 = vadd.f32 0.0, %v5124
          %v5126 = vpop.f32.mrb[0].mxu0
          %v5127 = vpop.f32.mrb[0].mxu0
          %v5128 = vadd.f32 0.0, %v5127
          %v5129 = vpop.f32.mrb[0].mxu0
          %5130 = vdwg.mxu0
          %v5131 = vadd.f32 %v4741, %v5101
          %v5132 = vadd.f32 %v4742, %v5104
          %v5133 = vadd.f32 %v4743, %v5109
          %v5134 = vadd.f32 %v4744, %v5112
          %v5135 = vadd.f32 %v4745, %v5117
          %v5136 = vadd.f32 %v4746, %v5120
          %v5137 = vadd.f32 %v4747, %v5125
          %v5138 = vadd.f32 %v4748, %v5128
          %v5139 = vld [vmem:[%s4752 + $0x20] sm:$0xff]
          %v5140 = vld [vmem:[%s4752 + $0x28] sm:$0xff]
          %v5141 = vld [vmem:[%s4752 + $0x60] sm:$0xff]
          %v5142 = vld [vmem:[%s4752 + $0x68] sm:$0xff]
          %v5143 = vld [vmem:[%s4752 + $0xa0] sm:$0xff]
          %v5144 = vld [vmem:[%s4752 + $0xa8] sm:$0xff]
          %v5145 = vld [vmem:[%s4752 + $0xe0] sm:$0xff]
          %v5146 = vld [vmem:[%s4752 + $0xe8] sm:$0xff]
          %v5147 = vpack.c.bf16 %v5139, %v4755
          %v5148 = vpack.c.bf16 %v5140, %v4756
          %v5149 = vpack.c.bf16 %v5141, %v4761
          %v5150 = vpack.c.bf16 %v5142, %v4762
          %v5151 = vpack.c.bf16 %v5143, %v4767
          %v5152 = vpack.c.bf16 %v5144, %v4768
          %v5153 = vpack.c.bf16 %v5145, %v4773
          %v5154 = vpack.c.bf16 %v5146, %v4774
          %s5155 = scalar_lea.vmem [#allocation13], 512
          %v5156 = vld [vmem:[%s5155] sm:$0xf]
          %v5157 = vld [vmem:[%s5155 + $0x4] sm:$0xf]
          %v5158 = vld [vmem:[%s5155 + $0x8] sm:$0xf]
          %v5159 = vld [vmem:[%s5155 + $0xc] sm:$0xf]
          %v5160 = vld [vmem:[%s5155 + $0x10] sm:$0xf]
          %v5161 = vld [vmem:[%s5155 + $0x14] sm:$0xf]
          %v5162 = vld [vmem:[%s5155 + $0x18] sm:$0xf]
          %v5163 = vld [vmem:[%s5155 + $0x1c] sm:$0xf]
          %v5164 = vld [vmem:[%s5155 + $0x20] sm:$0xf]
          %v5165 = vld [vmem:[%s5155 + $0x24] sm:$0xf]
          %v5166 = vld [vmem:[%s5155 + $0x28] sm:$0xf]
          %v5167 = vld [vmem:[%s5155 + $0x2c] sm:$0xf]
          %v5168 = vld [vmem:[%s5155 + $0x30] sm:$0xf]
          %v5169 = vld [vmem:[%s5155 + $0x34] sm:$0xf]
          %v5170 = vld [vmem:[%s5155 + $0x38] sm:$0xf]
          %v5171 = vld [vmem:[%s5155 + $0x3c] sm:$0xf]
          %v5172 = vld [vmem:[%s5155 + $0x40] sm:$0xf]
          %v5173 = vld [vmem:[%s5155 + $0x44] sm:$0xf]
          %v5174 = vld [vmem:[%s5155 + $0x48] sm:$0xf]
          %v5175 = vld [vmem:[%s5155 + $0x4c] sm:$0xf]
          %v5176 = vld [vmem:[%s5155 + $0x50] sm:$0xf]
          %v5177 = vld [vmem:[%s5155 + $0x54] sm:$0xf]
          %v5178 = vld [vmem:[%s5155 + $0x58] sm:$0xf]
          %v5179 = vld [vmem:[%s5155 + $0x5c] sm:$0xf]
          %v5180 = vld [vmem:[%s5155 + $0x60] sm:$0xf]
          %v5181 = vld [vmem:[%s5155 + $0x64] sm:$0xf]
          %v5182 = vld [vmem:[%s5155 + $0x68] sm:$0xf]
          %v5183 = vld [vmem:[%s5155 + $0x6c] sm:$0xf]
          %v5184 = vld [vmem:[%s5155 + $0x70] sm:$0xf]
          %v5185 = vld [vmem:[%s5155 + $0x74] sm:$0xf]
          %v5186 = vld [vmem:[%s5155 + $0x78] sm:$0xf]
          %v5187 = vld [vmem:[%s5155 + $0x7c] sm:$0xf]
          %v5220 = vunpack.c.l.b16 %v5156
          %v5221 = vunpack.c.l.b16 %v5157
          %v5222 = vunpack.c.l.b16 %v5158
          %v5223 = vunpack.c.l.b16 %v5159
          %v5224 = vunpack.c.l.b16 %v5160
          %v5225 = vunpack.c.l.b16 %v5161
          %v5226 = vunpack.c.l.b16 %v5162
          %v5227 = vunpack.c.l.b16 %v5163
          %v5228 = vunpack.c.l.b16 %v5164
          %v5229 = vunpack.c.l.b16 %v5165
          %v5230 = vunpack.c.l.b16 %v5166
          %v5231 = vunpack.c.l.b16 %v5167
          %v5232 = vunpack.c.l.b16 %v5168
          %v5233 = vunpack.c.l.b16 %v5169
          %v5234 = vunpack.c.l.b16 %v5170
          %v5235 = vunpack.c.l.b16 %v5171
          %v5236 = vunpack.c.l.b16 %v5172
          %v5237 = vunpack.c.l.b16 %v5173
          %v5238 = vunpack.c.l.b16 %v5174
          %v5239 = vunpack.c.l.b16 %v5175
          %v5240 = vunpack.c.l.b16 %v5176
          %v5241 = vunpack.c.l.b16 %v5177
          %v5242 = vunpack.c.l.b16 %v5178
          %v5243 = vunpack.c.l.b16 %v5179
          %v5244 = vunpack.c.l.b16 %v5180
          %v5245 = vunpack.c.l.b16 %v5181
          %v5246 = vunpack.c.l.b16 %v5182
          %v5247 = vunpack.c.l.b16 %v5183
          %v5248 = vunpack.c.l.b16 %v5184
          %v5249 = vunpack.c.l.b16 %v5185
          %v5250 = vunpack.c.l.b16 %v5186
          %v5251 = vunpack.c.l.b16 %v5187
          %v5252 = vpack.c.b16 %v5221, %v5220
          %v5253 = vpack.c.b16 %v5223, %v5222
          %v5254 = vpack.c.b16 %v5225, %v5224
          %v5255 = vpack.c.b16 %v5227, %v5226
          %v5256 = vpack.c.b16 %v5229, %v5228
          %v5257 = vpack.c.b16 %v5231, %v5230
          %v5258 = vpack.c.b16 %v5233, %v5232
          %v5259 = vpack.c.b16 %v5235, %v5234
          %v5260 = vpack.c.b16 %v5237, %v5236
          %v5261 = vpack.c.b16 %v5239, %v5238
          %v5262 = vpack.c.b16 %v5241, %v5240
          %v5263 = vpack.c.b16 %v5243, %v5242
          %v5264 = vpack.c.b16 %v5245, %v5244
          %v5265 = vpack.c.b16 %v5247, %v5246
          %v5266 = vpack.c.b16 %v5249, %v5248
          %v5267 = vpack.c.b16 %v5251, %v5250
          %5284 = vmatprep.subr.bf16.mxu0 0
          %5285 = vmatpush1.bf16.msra.mxu0 %v5252
          %5286 = vmatprep.subr.bf16.mxu0 0
          %5287 = vmatpush1.bf16.msra.mxu0 %v5253
          %5288 = vmatprep.subr.bf16.mxu0 0
          %5289 = vmatpush1.bf16.msra.mxu0 %v5254
          %5290 = vmatprep.subr.bf16.mxu0 0
          %5291 = vmatpush1.bf16.msra.mxu0 %v5255
          %5292 = vmatprep.subr.bf16.mxu0 0
          %5293 = vmatpush1.bf16.msra.mxu0 %v5256
          %5294 = vmatprep.subr.bf16.mxu0 0
          %5295 = vmatpush1.bf16.msra.mxu0 %v5257
          %5296 = vmatprep.subr.bf16.mxu0 0
          %5297 = vmatpush1.bf16.msra.mxu0 %v5258
          %5298 = vmatprep.subr.bf16.mxu0 0
          %5299 = vmatpush1.bf16.msra.mxu0 %v5259
          %5300 = vmatprep.subr.bf16.mxu0 0
          %5301 = vmatpush1.bf16.msra.mxu0 %v5260
          %5302 = vmatprep.subr.bf16.mxu0 0
          %5303 = vmatpush1.bf16.msra.mxu0 %v5261
          %5304 = vmatprep.subr.bf16.mxu0 0
          %5305 = vmatpush1.bf16.msra.mxu0 %v5262
          %5306 = vmatprep.subr.bf16.mxu0 0
          %5307 = vmatpush1.bf16.msra.mxu0 %v5263
          %5308 = vmatprep.subr.bf16.mxu0 0
          %5309 = vmatpush1.bf16.msra.mxu0 %v5264
          %5310 = vmatprep.subr.bf16.mxu0 0
          %5311 = vmatpush1.bf16.msra.mxu0 %v5265
          %5312 = vmatprep.subr.bf16.mxu0 0
          %5313 = vmatpush1.bf16.msra.mxu0 %v5266
          %5314 = vmatprep.subr.bf16.mxu0 0
          %5315 = vmatpush1.bf16.msra.mxu0 %v5267
          %5316 = vmatprep.mubr.bf16.mxu0 %v5148
          %5317 = vmatmul.mubr.bf16.gmra.mrb[0].mxu0 %v5147
          %v5318 = vpop.f32.mrb[0].mxu0
          %v5319 = vadd.f32 0.0, %v5318
          %v5320 = vpop.f32.mrb[0].mxu0
          %v5321 = vpop.f32.mrb[0].mxu0
          %v5322 = vadd.f32 0.0, %v5321
          %v5323 = vpop.f32.mrb[0].mxu0
          %5324 = vmatprep.mubr.bf16.mxu0 %v5150
          %5325 = vmatmul.mubr.bf16.gmra.mrb[0].mxu0 %v5149
          %v5326 = vpop.f32.mrb[0].mxu0
          %v5327 = vadd.f32 0.0, %v5326
          %v5328 = vpop.f32.mrb[0].mxu0
          %v5329 = vpop.f32.mrb[0].mxu0
          %v5330 = vadd.f32 0.0, %v5329
          %v5331 = vpop.f32.mrb[0].mxu0
          %5332 = vmatprep.mubr.bf16.mxu0 %v5152
          %5333 = vmatmul.mubr.bf16.gmra.mrb[0].mxu0 %v5151
          %v5334 = vpop.f32.mrb[0].mxu0
          %v5335 = vadd.f32 0.0, %v5334
          %v5336 = vpop.f32.mrb[0].mxu0
          %v5337 = vpop.f32.mrb[0].mxu0
          %v5338 = vadd.f32 0.0, %v5337
          %v5339 = vpop.f32.mrb[0].mxu0
          %5340 = vmatprep.mubr.bf16.mxu0 %v5154
          %5341 = vmatmul.mubr.bf16.gmra.mrb[0].mxu0 %v5153
          %v5342 = vpop.f32.mrb[0].mxu0
          %v5343 = vadd.f32 0.0, %v5342
          %v5344 = vpop.f32.mrb[0].mxu0
          %v5345 = vpop.f32.mrb[0].mxu0
          %v5346 = vadd.f32 0.0, %v5345
          %v5347 = vpop.f32.mrb[0].mxu0
          %5348 = vdwg.mxu0
          %v5349 = vadd.f32 %v5131, %v5319
          %v5350 = vadd.f32 %v5132, %v5322
          %v5351 = vadd.f32 %v5133, %v5327
          %v5352 = vadd.f32 %v5134, %v5330
          %v5353 = vadd.f32 %v5135, %v5335
          %v5354 = vadd.f32 %v5136, %v5338
          %v5355 = vadd.f32 %v5137, %v5343
          %v5356 = vadd.f32 %v5138, %v5346
          %v5357 = vld [vmem:[%s4752 + $0x10] sm:$0xfe]
          %v5358 = vld [vmem:[%s4752 + $0x18] sm:$0xfe]
          %v5359 = vld [vmem:[%s4752 + $0x20] sm:$0xff]
          %v5360 = vld [vmem:[%s4752 + $0x28] sm:$0xff]
          %v5361 = vld [vmem:[%s4752 + $0x30] sm:$0x1]
          %v5362 = vld [vmem:[%s4752 + $0x38] sm:$0x1]
          %v5363 = vld [vmem:[%s4752 + $0x50] sm:$0xfe]
          %v5364 = vld [vmem:[%s4752 + $0x58] sm:$0xfe]
          %v5365 = vld [vmem:[%s4752 + $0x60] sm:$0xff]
          %v5366 = vld [vmem:[%s4752 + $0x68] sm:$0xff]
          %v5367 = vld [vmem:[%s4752 + $0x70] sm:$0x1]
          %v5368 = vld [vmem:[%s4752 + $0x78] sm:$0x1]
          %v5369 = vld [vmem:[%s4752 + $0x90] sm:$0xfe]
          %v5370 = vld [vmem:[%s4752 + $0x98] sm:$0xfe]
          %v5371 = vld [vmem:[%s4752 + $0xa0] sm:$0xff]
          %v5372 = vld [vmem:[%s4752 + $0xa8] sm:$0xff]
          %v5373 = vld [vmem:[%s4752 + $0xb0] sm:$0x1]
          %v5374 = vld [vmem:[%s4752 + $0xb8] sm:$0x1]
          %v5375 = vld [vmem:[%s4752 + $0xd0] sm:$0xfe]
          %v5376 = vld [vmem:[%s4752 + $0xd8] sm:$0xfe]
          %v5377 = vld [vmem:[%s4752 + $0xe0] sm:$0xff]
          %v5378 = vld [vmem:[%s4752 + $0xe8] sm:$0xff]
          %v5379 = vld [vmem:[%s4752 + $0xf0] sm:$0x1]
          %v5380 = vld [vmem:[%s4752 + $0xf8] sm:$0x1]
          %v5381 = vpack.c.bf16 %v5359, %v5357
          %v5382 = vpack.c.bf16 %v5360, %v5358
          %v5383 = vpack.c.bf16 %v5361, %v5361
          %v5384 = vpack.c.bf16 %v5362, %v5362
          %v5385 = vpack.c.bf16 %v5365, %v5363
          %v5386 = vpack.c.bf16 %v5366, %v5364
          %v5387 = vpack.c.bf16 %v5367, %v5367
          %v5388 = vpack.c.bf16 %v5368, %v5368
          %v5389 = vpack.c.bf16 %v5371, %v5369
          %v5390 = vpack.c.bf16 %v5372, %v5370
          %v5391 = vpack.c.bf16 %v5373, %v5373
          %v5392 = vpack.c.bf16 %v5374, %v5374
          %v5393 = vpack.c.bf16 %v5377, %v5375
          %v5394 = vpack.c.bf16 %v5378, %v5376
          %v5395 = vpack.c.bf16 %v5379, %v5379
          %v5396 = vpack.c.bf16 %v5380, %v5380
          %v5398 = vshrl.u32 %v5381, 16
          %v5400 = vshll.u32 %v5381, 16
          %v5402 = vrot.slane %v5400, 1
          %v5403 = vor.u32 %v5398, %v5402
          %v5405 = vshll.u32 %v5383, 16
          %v5407 = vrot.slane %v5405, 1
          %v5408 = vsel %vm4442, %v5403, %v5407
          %v5410 = vshrl.u32 %v5382, 16
          %v5412 = vshll.u32 %v5382, 16
          %v5414 = vrot.slane %v5412, 1
          %v5415 = vor.u32 %v5410, %v5414
          %v5417 = vshll.u32 %v5384, 16
          %v5419 = vrot.slane %v5417, 1
          %v5420 = vsel %vm4442, %v5415, %v5419
          %v5422 = vshrl.u32 %v5385, 16
          %v5424 = vshll.u32 %v5385, 16
          %v5426 = vrot.slane %v5424, 1
          %v5427 = vor.u32 %v5422, %v5426
          %v5429 = vshll.u32 %v5387, 16
          %v5431 = vrot.slane %v5429, 1
          %v5432 = vsel %vm4442, %v5427, %v5431
          %v5434 = vshrl.u32 %v5386, 16
          %v5436 = vshll.u32 %v5386, 16
          %v5438 = vrot.slane %v5436, 1
          %v5439 = vor.u32 %v5434, %v5438
          %v5441 = vshll.u32 %v5388, 16
          %v5443 = vrot.slane %v5441, 1
          %v5444 = vsel %vm4442, %v5439, %v5443
          %v5446 = vshrl.u32 %v5389, 16
          %v5448 = vshll.u32 %v5389, 16
          %v5450 = vrot.slane %v5448, 1
          %v5451 = vor.u32 %v5446, %v5450
          %v5453 = vshll.u32 %v5391, 16
          %v5455 = vrot.slane %v5453, 1
          %v5456 = vsel %vm4442, %v5451, %v5455
          %v5458 = vshrl.u32 %v5390, 16
          %v5460 = vshll.u32 %v5390, 16
          %v5462 = vrot.slane %v5460, 1
          %v5463 = vor.u32 %v5458, %v5462
          %v5465 = vshll.u32 %v5392, 16
          %v5467 = vrot.slane %v5465, 1
          %v5468 = vsel %vm4442, %v5463, %v5467
          %v5470 = vshrl.u32 %v5393, 16
          %v5472 = vshll.u32 %v5393, 16
          %v5474 = vrot.slane %v5472, 1
          %v5475 = vor.u32 %v5470, %v5474
          %v5477 = vshll.u32 %v5395, 16
          %v5479 = vrot.slane %v5477, 1
          %v5480 = vsel %vm4442, %v5475, %v5479
          %v5482 = vshrl.u32 %v5394, 16
          %v5484 = vshll.u32 %v5394, 16
          %v5486 = vrot.slane %v5484, 1
          %v5487 = vor.u32 %v5482, %v5486
          %v5489 = vshll.u32 %v5396, 16
          %v5491 = vrot.slane %v5489, 1
          %v5492 = vsel %vm4442, %v5487, %v5491
          %s5501 = scalar_lea.vmem [#allocation13], 640
          %v5502 = vld [vmem:[%s5501] sm:$0xf]
          %v5503 = vld [vmem:[%s5501 + $0x4] sm:$0xf]
          %v5504 = vld [vmem:[%s5501 + $0x8] sm:$0xf]
          %v5505 = vld [vmem:[%s5501 + $0xc] sm:$0xf]
          %v5506 = vld [vmem:[%s5501 + $0x10] sm:$0xf]
          %v5507 = vld [vmem:[%s5501 + $0x14] sm:$0xf]
          %v5508 = vld [vmem:[%s5501 + $0x18] sm:$0xf]
          %v5509 = vld [vmem:[%s5501 + $0x1c] sm:$0xf]
          %v5510 = vld [vmem:[%s5501 + $0x20] sm:$0xf]
          %v5511 = vld [vmem:[%s5501 + $0x24] sm:$0xf]
          %v5512 = vld [vmem:[%s5501 + $0x28] sm:$0xf]
          %v5513 = vld [vmem:[%s5501 + $0x2c] sm:$0xf]
          %v5514 = vld [vmem:[%s5501 + $0x30] sm:$0xf]
          %v5515 = vld [vmem:[%s5501 + $0x34] sm:$0xf]
          %v5516 = vld [vmem:[%s5501 + $0x38] sm:$0xf]
          %v5517 = vld [vmem:[%s5501 + $0x3c] sm:$0xf]
          %v5518 = vld [vmem:[%s5501 + $0x40] sm:$0xf]
          %v5519 = vld [vmem:[%s5501 + $0x44] sm:$0xf]
          %v5520 = vld [vmem:[%s5501 + $0x48] sm:$0xf]
          %v5521 = vld [vmem:[%s5501 + $0x4c] sm:$0xf]
          %v5522 = vld [vmem:[%s5501 + $0x50] sm:$0xf]
          %v5523 = vld [vmem:[%s5501 + $0x54] sm:$0xf]
          %v5524 = vld [vmem:[%s5501 + $0x58] sm:$0xf]
          %v5525 = vld [vmem:[%s5501 + $0x5c] sm:$0xf]
          %v5526 = vld [vmem:[%s5501 + $0x60] sm:$0xf]
          %v5527 = vld [vmem:[%s5501 + $0x64] sm:$0xf]
          %v5528 = vld [vmem:[%s5501 + $0x68] sm:$0xf]
          %v5529 = vld [vmem:[%s5501 + $0x6c] sm:$0xf]
          %v5530 = vld [vmem:[%s5501 + $0x70] sm:$0xf]
          %v5531 = vld [vmem:[%s5501 + $0x74] sm:$0xf]
          %v5532 = vld [vmem:[%s5501 + $0x78] sm:$0xf]
          %v5533 = vld [vmem:[%s5501 + $0x7c] sm:$0xf]
          %v5566 = vunpack.c.l.b16 %v5502
          %v5567 = vunpack.c.l.b16 %v5503
          %v5568 = vunpack.c.l.b16 %v5504
          %v5569 = vunpack.c.l.b16 %v5505
          %v5570 = vunpack.c.l.b16 %v5506
          %v5571 = vunpack.c.l.b16 %v5507
          %v5572 = vunpack.c.l.b16 %v5508
          %v5573 = vunpack.c.l.b16 %v5509
          %v5574 = vunpack.c.l.b16 %v5510
          %v5575 = vunpack.c.l.b16 %v5511
          %v5576 = vunpack.c.l.b16 %v5512
          %v5577 = vunpack.c.l.b16 %v5513
          %v5578 = vunpack.c.l.b16 %v5514
          %v5579 = vunpack.c.l.b16 %v5515
          %v5580 = vunpack.c.l.b16 %v5516
          %v5581 = vunpack.c.l.b16 %v5517
          %v5582 = vunpack.c.l.b16 %v5518
          %v5583 = vunpack.c.l.b16 %v5519
          %v5584 = vunpack.c.l.b16 %v5520
          %v5585 = vunpack.c.l.b16 %v5521
          %v5586 = vunpack.c.l.b16 %v5522
          %v5587 = vunpack.c.l.b16 %v5523
          %v5588 = vunpack.c.l.b16 %v5524
          %v5589 = vunpack.c.l.b16 %v5525
          %v5590 = vunpack.c.l.b16 %v5526
          %v5591 = vunpack.c.l.b16 %v5527
          %v5592 = vunpack.c.l.b16 %v5528
          %v5593 = vunpack.c.l.b16 %v5529
          %v5594 = vunpack.c.l.b16 %v5530
          %v5595 = vunpack.c.l.b16 %v5531
          %v5596 = vunpack.c.l.b16 %v5532
          %v5597 = vunpack.c.l.b16 %v5533
          %v5598 = vpack.c.b16 %v5567, %v5566
          %v5599 = vpack.c.b16 %v5569, %v5568
          %v5600 = vpack.c.b16 %v5571, %v5570
          %v5601 = vpack.c.b16 %v5573, %v5572
          %v5602 = vpack.c.b16 %v5575, %v5574
          %v5603 = vpack.c.b16 %v5577, %v5576
          %v5604 = vpack.c.b16 %v5579, %v5578
          %v5605 = vpack.c.b16 %v5581, %v5580
          %v5606 = vpack.c.b16 %v5583, %v5582
          %v5607 = vpack.c.b16 %v5585, %v5584
          %v5608 = vpack.c.b16 %v5587, %v5586
          %v5609 = vpack.c.b16 %v5589, %v5588
          %v5610 = vpack.c.b16 %v5591, %v5590
          %v5611 = vpack.c.b16 %v5593, %v5592
          %v5612 = vpack.c.b16 %v5595, %v5594
          %v5613 = vpack.c.b16 %v5597, %v5596
          %5630 = vmatprep.subr.bf16.mxu0 0
          %5631 = vmatpush1.bf16.msra.mxu0 %v5598
          %5632 = vmatprep.subr.bf16.mxu0 0
          %5633 = vmatpush1.bf16.msra.mxu0 %v5599
          %5634 = vmatprep.subr.bf16.mxu0 0
          %5635 = vmatpush1.bf16.msra.mxu0 %v5600
          %5636 = vmatprep.subr.bf16.mxu0 0
          %5637 = vmatpush1.bf16.msra.mxu0 %v5601
          %5638 = vmatprep.subr.bf16.mxu0 0
          %5639 = vmatpush1.bf16.msra.mxu0 %v5602
          %5640 = vmatprep.subr.bf16.mxu0 0
          %5641 = vmatpush1.bf16.msra.mxu0 %v5603
          %5642 = vmatprep.subr.bf16.mxu0 0
          %5643 = vmatpush1.bf16.msra.mxu0 %v5604
          %5644 = vmatprep.subr.bf16.mxu0 0
          %5645 = vmatpush1.bf16.msra.mxu0 %v5605
          %5646 = vmatprep.subr.bf16.mxu0 0
          %5647 = vmatpush1.bf16.msra.mxu0 %v5606
          %5648 = vmatprep.subr.bf16.mxu0 0
          %5649 = vmatpush1.bf16.msra.mxu0 %v5607
          %5650 = vmatprep.subr.bf16.mxu0 0
          %5651 = vmatpush1.bf16.msra.mxu0 %v5608
          %5652 = vmatprep.subr.bf16.mxu0 0
          %5653 = vmatpush1.bf16.msra.mxu0 %v5609
          %5654 = vmatprep.subr.bf16.mxu0 0
          %5655 = vmatpush1.bf16.msra.mxu0 %v5610
          %5656 = vmatprep.subr.bf16.mxu0 0
          %5657 = vmatpush1.bf16.msra.mxu0 %v5611
          %5658 = vmatprep.subr.bf16.mxu0 0
          %5659 = vmatpush1.bf16.msra.mxu0 %v5612
          %5660 = vmatprep.subr.bf16.mxu0 0
          %5661 = vmatpush1.bf16.msra.mxu0 %v5613
          %5662 = vmatprep.mubr.bf16.mxu0 %v5420
          %5663 = vmatmul.mubr.bf16.gmra.mrb[0].mxu0 %v5408
          %v5664 = vpop.f32.mrb[0].mxu0
          %v5665 = vadd.f32 0.0, %v5664
          %v5666 = vpop.f32.mrb[0].mxu0
          %v5667 = vpop.f32.mrb[0].mxu0
          %v5668 = vadd.f32 0.0, %v5667
          %v5669 = vpop.f32.mrb[0].mxu0
          %5670 = vmatprep.mubr.bf16.mxu0 %v5444
          %5671 = vmatmul.mubr.bf16.gmra.mrb[0].mxu0 %v5432
          %v5672 = vpop.f32.mrb[0].mxu0
          %v5673 = vadd.f32 0.0, %v5672
          %v5674 = vpop.f32.mrb[0].mxu0
          %v5675 = vpop.f32.mrb[0].mxu0
          %v5676 = vadd.f32 0.0, %v5675
          %v5677 = vpop.f32.mrb[0].mxu0
          %5678 = vmatprep.mubr.bf16.mxu0 %v5468
          %5679 = vmatmul.mubr.bf16.gmra.mrb[0].mxu0 %v5456
          %v5680 = vpop.f32.mrb[0].mxu0
          %v5681 = vadd.f32 0.0, %v5680
          %v5682 = vpop.f32.mrb[0].mxu0
          %v5683 = vpop.f32.mrb[0].mxu0
          %v5684 = vadd.f32 0.0, %v5683
          %v5685 = vpop.f32.mrb[0].mxu0
          %5686 = vmatprep.mubr.bf16.mxu0 %v5492
          %5687 = vmatmul.mubr.bf16.gmra.mrb[0].mxu0 %v5480
          %v5688 = vpop.f32.mrb[0].mxu0
          %v5689 = vadd.f32 0.0, %v5688
          %v5690 = vpop.f32.mrb[0].mxu0
          %v5691 = vpop.f32.mrb[0].mxu0
          %v5692 = vadd.f32 0.0, %v5691
          %v5693 = vpop.f32.mrb[0].mxu0
          %5694 = vdwg.mxu0
          %v5695 = vadd.f32 %v5349, %v5665
          %v5696 = vadd.f32 %v5350, %v5668
          %v5697 = vadd.f32 %v5351, %v5673
          %v5698 = vadd.f32 %v5352, %v5676
          %v5699 = vadd.f32 %v5353, %v5681
          %v5700 = vadd.f32 %v5354, %v5684
          %v5701 = vadd.f32 %v5355, %v5689
          %v5702 = vadd.f32 %v5356, %v5692
          %s5703 = sadd.s32 %s3810, 2
          %s5704 = smul.u32 %s5703, 8
          %s5705 = smul.addr %s5704, 8
          %s5706 = scalar_lea.vmem [#allocation4], %s5705
          %v5707 = vld [vmem:[%s5706] sm:$0x80]
          %v5708 = vld [vmem:[%s5706 + $0x8] sm:$0x80]
          %v5709 = vld [vmem:[%s5706 + $0x10] sm:$0xff]
          %v5710 = vld [vmem:[%s5706 + $0x18] sm:$0xff]
          %v5711 = vld [vmem:[%s5706 + $0x20] sm:$0x7f]
          %v5712 = vld [vmem:[%s5706 + $0x28] sm:$0x7f]
          %v5713 = vld [vmem:[%s5706 + $0x40] sm:$0x80]
          %v5714 = vld [vmem:[%s5706 + $0x48] sm:$0x80]
          %v5715 = vld [vmem:[%s5706 + $0x50] sm:$0xff]
          %v5716 = vld [vmem:[%s5706 + $0x58] sm:$0xff]
          %v5717 = vld [vmem:[%s5706 + $0x60] sm:$0x7f]
          %v5718 = vld [vmem:[%s5706 + $0x68] sm:$0x7f]
          %v5719 = vld [vmem:[%s5706 + $0x80] sm:$0x80]
          %v5720 = vld [vmem:[%s5706 + $0x88] sm:$0x80]
          %v5721 = vld [vmem:[%s5706 + $0x90] sm:$0xff]
          %v5722 = vld [vmem:[%s5706 + $0x98] sm:$0xff]
          %v5723 = vld [vmem:[%s5706 + $0xa0] sm:$0x7f]
          %v5724 = vld [vmem:[%s5706 + $0xa8] sm:$0x7f]
          %v5725 = vld [vmem:[%s5706 + $0xc0] sm:$0x80]
          %v5726 = vld [vmem:[%s5706 + $0xc8] sm:$0x80]
          %v5727 = vld [vmem:[%s5706 + $0xd0] sm:$0xff]
          %v5728 = vld [vmem:[%s5706 + $0xd8] sm:$0xff]
          %v5729 = vld [vmem:[%s5706 + $0xe0] sm:$0x7f]
          %v5730 = vld [vmem:[%s5706 + $0xe8] sm:$0x7f]
          %v5731 = vpack.c.bf16 %v5709, %v5707
          %v5732 = vpack.c.bf16 %v5710, %v5708
          %v5733 = vpack.c.bf16 %v5711, %v5711
          %v5734 = vpack.c.bf16 %v5712, %v5712
          %v5735 = vpack.c.bf16 %v5715, %v5713
          %v5736 = vpack.c.bf16 %v5716, %v5714
          %v5737 = vpack.c.bf16 %v5717, %v5717
          %v5738 = vpack.c.bf16 %v5718, %v5718
          %v5739 = vpack.c.bf16 %v5721, %v5719
          %v5740 = vpack.c.bf16 %v5722, %v5720
          %v5741 = vpack.c.bf16 %v5723, %v5723
          %v5742 = vpack.c.bf16 %v5724, %v5724
          %v5743 = vpack.c.bf16 %v5727, %v5725
          %v5744 = vpack.c.bf16 %v5728, %v5726
          %v5745 = vpack.c.bf16 %v5729, %v5729
          %v5746 = vpack.c.bf16 %v5730, %v5730
          %v5748 = vshrl.u32 %v5731, 16
          %v5750 = vrot.slane %v5748, 3
          %v5751 = vshll.u32 %v5731, 16
          %v5753 = vrot.slane %v5751, 4
          %v5754 = vor.u32 %v5750, %v5753
          %v5756 = vshrl.u32 %v5733, 16
          %v5758 = vrot.slane %v5756, 3
          %v5759 = vshll.u32 %v5733, 16
          %v5761 = vrot.slane %v5759, 4
          %v5762 = vor.u32 %v5758, %v5761
          %v5763 = vsel %vm3854, %v5754, %v5762
          %v5765 = vshrl.u32 %v5732, 16
          %v5767 = vrot.slane %v5765, 3
          %v5768 = vshll.u32 %v5732, 16
          %v5770 = vrot.slane %v5768, 4
          %v5771 = vor.u32 %v5767, %v5770
          %v5773 = vshrl.u32 %v5734, 16
          %v5775 = vrot.slane %v5773, 3
          %v5776 = vshll.u32 %v5734, 16
          %v5778 = vrot.slane %v5776, 4
          %v5779 = vor.u32 %v5775, %v5778
          %v5780 = vsel %vm3854, %v5771, %v5779
          %v5782 = vshrl.u32 %v5735, 16
          %v5784 = vrot.slane %v5782, 3
          %v5785 = vshll.u32 %v5735, 16
          %v5787 = vrot.slane %v5785, 4
          %v5788 = vor.u32 %v5784, %v5787
          %v5790 = vshrl.u32 %v5737, 16
          %v5792 = vrot.slane %v5790, 3
          %v5793 = vshll.u32 %v5737, 16
          %v5795 = vrot.slane %v5793, 4
          %v5796 = vor.u32 %v5792, %v5795
          %v5797 = vsel %vm3854, %v5788, %v5796
          %v5799 = vshrl.u32 %v5736, 16
          %v5801 = vrot.slane %v5799, 3
          %v5802 = vshll.u32 %v5736, 16
          %v5804 = vrot.slane %v5802, 4
          %v5805 = vor.u32 %v5801, %v5804
          %v5807 = vshrl.u32 %v5738, 16
          %v5809 = vrot.slane %v5807, 3
          %v5810 = vshll.u32 %v5738, 16
          %v5812 = vrot.slane %v5810, 4
          %v5813 = vor.u32 %v5809, %v5812
          %v5814 = vsel %vm3854, %v5805, %v5813
          %v5816 = vshrl.u32 %v5739, 16
          %v5818 = vrot.slane %v5816, 3
          %v5819 = vshll.u32 %v5739, 16
          %v5821 = vrot.slane %v5819, 4
          %v5822 = vor.u32 %v5818, %v5821
          %v5824 = vshrl.u32 %v5741, 16
          %v5826 = vrot.slane %v5824, 3
          %v5827 = vshll.u32 %v5741, 16
          %v5829 = vrot.slane %v5827, 4
          %v5830 = vor.u32 %v5826, %v5829
          %v5831 = vsel %vm3854, %v5822, %v5830
          %v5833 = vshrl.u32 %v5740, 16
          %v5835 = vrot.slane %v5833, 3
          %v5836 = vshll.u32 %v5740, 16
          %v5838 = vrot.slane %v5836, 4
          %v5839 = vor.u32 %v5835, %v5838
          %v5841 = vshrl.u32 %v5742, 16
          %v5843 = vrot.slane %v5841, 3
          %v5844 = vshll.u32 %v5742, 16
          %v5846 = vrot.slane %v5844, 4
          %v5847 = vor.u32 %v5843, %v5846
          %v5848 = vsel %vm3854, %v5839, %v5847
          %v5850 = vshrl.u32 %v5743, 16
          %v5852 = vrot.slane %v5850, 3
          %v5853 = vshll.u32 %v5743, 16
          %v5855 = vrot.slane %v5853, 4
          %v5856 = vor.u32 %v5852, %v5855
          %v5858 = vshrl.u32 %v5745, 16
          %v5860 = vrot.slane %v5858, 3
          %v5861 = vshll.u32 %v5745, 16
          %v5863 = vrot.slane %v5861, 4
          %v5864 = vor.u32 %v5860, %v5863
          %v5865 = vsel %vm3854, %v5856, %v5864
          %v5867 = vshrl.u32 %v5744, 16
          %v5869 = vrot.slane %v5867, 3
          %v5870 = vshll.u32 %v5744, 16
          %v5872 = vrot.slane %v5870, 4
          %v5873 = vor.u32 %v5869, %v5872
          %v5875 = vshrl.u32 %v5746, 16
          %v5877 = vrot.slane %v5875, 3
          %v5878 = vshll.u32 %v5746, 16
          %v5880 = vrot.slane %v5878, 4
          %v5881 = vor.u32 %v5877, %v5880
          %v5882 = vsel %vm3854, %v5873, %v5881
          %s5891 = scalar_lea.vmem [#allocation13], 768
          %v5892 = vld [vmem:[%s5891] sm:$0xf]
          %v5893 = vld [vmem:[%s5891 + $0x4] sm:$0xf]
          %v5894 = vld [vmem:[%s5891 + $0x8] sm:$0xf]
          %v5895 = vld [vmem:[%s5891 + $0xc] sm:$0xf]
          %v5896 = vld [vmem:[%s5891 + $0x10] sm:$0xf]
          %v5897 = vld [vmem:[%s5891 + $0x14] sm:$0xf]
          %v5898 = vld [vmem:[%s5891 + $0x18] sm:$0xf]
          %v5899 = vld [vmem:[%s5891 + $0x1c] sm:$0xf]
          %v5900 = vld [vmem:[%s5891 + $0x20] sm:$0xf]
          %v5901 = vld [vmem:[%s5891 + $0x24] sm:$0xf]
          %v5902 = vld [vmem:[%s5891 + $0x28] sm:$0xf]
          %v5903 = vld [vmem:[%s5891 + $0x2c] sm:$0xf]
          %v5904 = vld [vmem:[%s5891 + $0x30] sm:$0xf]
          %v5905 = vld [vmem:[%s5891 + $0x34] sm:$0xf]
          %v5906 = vld [vmem:[%s5891 + $0x38] sm:$0xf]
          %v5907 = vld [vmem:[%s5891 + $0x3c] sm:$0xf]
          %v5908 = vld [vmem:[%s5891 + $0x40] sm:$0xf]
          %v5909 = vld [vmem:[%s5891 + $0x44] sm:$0xf]
          %v5910 = vld [vmem:[%s5891 + $0x48] sm:$0xf]
          %v5911 = vld [vmem:[%s5891 + $0x4c] sm:$0xf]
          %v5912 = vld [vmem:[%s5891 + $0x50] sm:$0xf]
          %v5913 = vld [vmem:[%s5891 + $0x54] sm:$0xf]
          %v5914 = vld [vmem:[%s5891 + $0x58] sm:$0xf]
          %v5915 = vld [vmem:[%s5891 + $0x5c] sm:$0xf]
          %v5916 = vld [vmem:[%s5891 + $0x60] sm:$0xf]
          %v5917 = vld [vmem:[%s5891 + $0x64] sm:$0xf]
          %v5918 = vld [vmem:[%s5891 + $0x68] sm:$0xf]
          %v5919 = vld [vmem:[%s5891 + $0x6c] sm:$0xf]
          %v5920 = vld [vmem:[%s5891 + $0x70] sm:$0xf]
          %v5921 = vld [vmem:[%s5891 + $0x74] sm:$0xf]
          %v5922 = vld [vmem:[%s5891 + $0x78] sm:$0xf]
          %v5923 = vld [vmem:[%s5891 + $0x7c] sm:$0xf]
          %v5956 = vunpack.c.l.b16 %v5892
          %v5957 = vunpack.c.l.b16 %v5893
          %v5958 = vunpack.c.l.b16 %v5894
          %v5959 = vunpack.c.l.b16 %v5895
          %v5960 = vunpack.c.l.b16 %v5896
          %v5961 = vunpack.c.l.b16 %v5897
          %v5962 = vunpack.c.l.b16 %v5898
          %v5963 = vunpack.c.l.b16 %v5899
          %v5964 = vunpack.c.l.b16 %v5900
          %v5965 = vunpack.c.l.b16 %v5901
          %v5966 = vunpack.c.l.b16 %v5902
          %v5967 = vunpack.c.l.b16 %v5903
          %v5968 = vunpack.c.l.b16 %v5904
          %v5969 = vunpack.c.l.b16 %v5905
          %v5970 = vunpack.c.l.b16 %v5906
          %v5971 = vunpack.c.l.b16 %v5907
          %v5972 = vunpack.c.l.b16 %v5908
          %v5973 = vunpack.c.l.b16 %v5909
          %v5974 = vunpack.c.l.b16 %v5910
          %v5975 = vunpack.c.l.b16 %v5911
          %v5976 = vunpack.c.l.b16 %v5912
          %v5977 = vunpack.c.l.b16 %v5913
          %v5978 = vunpack.c.l.b16 %v5914
          %v5979 = vunpack.c.l.b16 %v5915
          %v5980 = vunpack.c.l.b16 %v5916
          %v5981 = vunpack.c.l.b16 %v5917
          %v5982 = vunpack.c.l.b16 %v5918
          %v5983 = vunpack.c.l.b16 %v5919
          %v5984 = vunpack.c.l.b16 %v5920
          %v5985 = vunpack.c.l.b16 %v5921
          %v5986 = vunpack.c.l.b16 %v5922
          %v5987 = vunpack.c.l.b16 %v5923
          %v5988 = vpack.c.b16 %v5957, %v5956
          %v5989 = vpack.c.b16 %v5959, %v5958
          %v5990 = vpack.c.b16 %v5961, %v5960
          %v5991 = vpack.c.b16 %v5963, %v5962
          %v5992 = vpack.c.b16 %v5965, %v5964
          %v5993 = vpack.c.b16 %v5967, %v5966
          %v5994 = vpack.c.b16 %v5969, %v5968
          %v5995 = vpack.c.b16 %v5971, %v5970
          %v5996 = vpack.c.b16 %v5973, %v5972
          %v5997 = vpack.c.b16 %v5975, %v5974
          %v5998 = vpack.c.b16 %v5977, %v5976
          %v5999 = vpack.c.b16 %v5979, %v5978
          %v6000 = vpack.c.b16 %v5981, %v5980
          %v6001 = vpack.c.b16 %v5983, %v5982
          %v6002 = vpack.c.b16 %v5985, %v5984
          %v6003 = vpack.c.b16 %v5987, %v5986
          %6020 = vmatprep.subr.bf16.mxu0 0
          %6021 = vmatpush1.bf16.msra.mxu0 %v5988
          %6022 = vmatprep.subr.bf16.mxu0 0
          %6023 = vmatpush1.bf16.msra.mxu0 %v5989
          %6024 = vmatprep.subr.bf16.mxu0 0
          %6025 = vmatpush1.bf16.msra.mxu0 %v5990
          %6026 = vmatprep.subr.bf16.mxu0 0
          %6027 = vmatpush1.bf16.msra.mxu0 %v5991
          %6028 = vmatprep.subr.bf16.mxu0 0
          %6029 = vmatpush1.bf16.msra.mxu0 %v5992
          %6030 = vmatprep.subr.bf16.mxu0 0
          %6031 = vmatpush1.bf16.msra.mxu0 %v5993
          %6032 = vmatprep.subr.bf16.mxu0 0
          %6033 = vmatpush1.bf16.msra.mxu0 %v5994
          %6034 = vmatprep.subr.bf16.mxu0 0
          %6035 = vmatpush1.bf16.msra.mxu0 %v5995
          %6036 = vmatprep.subr.bf16.mxu0 0
          %6037 = vmatpush1.bf16.msra.mxu0 %v5996
          %6038 = vmatprep.subr.bf16.mxu0 0
          %6039 = vmatpush1.bf16.msra.mxu0 %v5997
          %6040 = vmatprep.subr.bf16.mxu0 0
          %6041 = vmatpush1.bf16.msra.mxu0 %v5998
          %6042 = vmatprep.subr.bf16.mxu0 0
          %6043 = vmatpush1.bf16.msra.mxu0 %v5999
          %6044 = vmatprep.subr.bf16.mxu0 0
          %6045 = vmatpush1.bf16.msra.mxu0 %v6000
          %6046 = vmatprep.subr.bf16.mxu0 0
          %6047 = vmatpush1.bf16.msra.mxu0 %v6001
          %6048 = vmatprep.subr.bf16.mxu0 0
          %6049 = vmatpush1.bf16.msra.mxu0 %v6002
          %6050 = vmatprep.subr.bf16.mxu0 0
          %6051 = vmatpush1.bf16.msra.mxu0 %v6003
          %6052 = vmatprep.mubr.bf16.mxu0 %v5780
          %6053 = vmatmul.mubr.bf16.gmra.mrb[0].mxu0 %v5763
          %v6054 = vpop.f32.mrb[0].mxu0
          %v6055 = vadd.f32 0.0, %v6054
          %v6056 = vpop.f32.mrb[0].mxu0
          %v6057 = vpop.f32.mrb[0].mxu0
          %v6058 = vadd.f32 0.0, %v6057
          %v6059 = vpop.f32.mrb[0].mxu0
          %6060 = vmatprep.mubr.bf16.mxu0 %v5814
          %6061 = vmatmul.mubr.bf16.gmra.mrb[0].mxu0 %v5797
          %v6062 = vpop.f32.mrb[0].mxu0
          %v6063 = vadd.f32 0.0, %v6062
          %v6064 = vpop.f32.mrb[0].mxu0
          %v6065 = vpop.f32.mrb[0].mxu0
          %v6066 = vadd.f32 0.0, %v6065
          %v6067 = vpop.f32.mrb[0].mxu0
          %6068 = vmatprep.mubr.bf16.mxu0 %v5848
          %6069 = vmatmul.mubr.bf16.gmra.mrb[0].mxu0 %v5831
          %v6070 = vpop.f32.mrb[0].mxu0
          %v6071 = vadd.f32 0.0, %v6070
          %v6072 = vpop.f32.mrb[0].mxu0
          %v6073 = vpop.f32.mrb[0].mxu0
          %v6074 = vadd.f32 0.0, %v6073
          %v6075 = vpop.f32.mrb[0].mxu0
          %6076 = vmatprep.mubr.bf16.mxu0 %v5882
          %6077 = vmatmul.mubr.bf16.gmra.mrb[0].mxu0 %v5865
          %v6078 = vpop.f32.mrb[0].mxu0
          %v6079 = vadd.f32 0.0, %v6078
          %v6080 = vpop.f32.mrb[0].mxu0
          %v6081 = vpop.f32.mrb[0].mxu0
          %v6082 = vadd.f32 0.0, %v6081
          %v6083 = vpop.f32.mrb[0].mxu0
          %6084 = vdwg.mxu0
          %v6085 = vadd.f32 %v5695, %v6055
          %v6086 = vadd.f32 %v5696, %v6058
          %v6087 = vadd.f32 %v5697, %v6063
          %v6088 = vadd.f32 %v5698, %v6066
          %v6089 = vadd.f32 %v5699, %v6071
          %v6090 = vadd.f32 %v5700, %v6074
          %v6091 = vadd.f32 %v5701, %v6079
          %v6092 = vadd.f32 %v5702, %v6082
          %v6093 = vld [vmem:[%s5706 + $0x20] sm:$0xff]
          %v6094 = vld [vmem:[%s5706 + $0x28] sm:$0xff]
          %v6095 = vld [vmem:[%s5706 + $0x60] sm:$0xff]
          %v6096 = vld [vmem:[%s5706 + $0x68] sm:$0xff]
          %v6097 = vld [vmem:[%s5706 + $0xa0] sm:$0xff]
          %v6098 = vld [vmem:[%s5706 + $0xa8] sm:$0xff]
          %v6099 = vld [vmem:[%s5706 + $0xe0] sm:$0xff]
          %v6100 = vld [vmem:[%s5706 + $0xe8] sm:$0xff]
          %v6101 = vpack.c.bf16 %v6093, %v5709
          %v6102 = vpack.c.bf16 %v6094, %v5710
          %v6103 = vpack.c.bf16 %v6095, %v5715
          %v6104 = vpack.c.bf16 %v6096, %v5716
          %v6105 = vpack.c.bf16 %v6097, %v5721
          %v6106 = vpack.c.bf16 %v6098, %v5722
          %v6107 = vpack.c.bf16 %v6099, %v5727
          %v6108 = vpack.c.bf16 %v6100, %v5728
          %s6109 = scalar_lea.vmem [#allocation13], 896
          %v6110 = vld [vmem:[%s6109] sm:$0xf]
          %v6111 = vld [vmem:[%s6109 + $0x4] sm:$0xf]
          %v6112 = vld [vmem:[%s6109 + $0x8] sm:$0xf]
          %v6113 = vld [vmem:[%s6109 + $0xc] sm:$0xf]
          %v6114 = vld [vmem:[%s6109 + $0x10] sm:$0xf]
          %v6115 = vld [vmem:[%s6109 + $0x14] sm:$0xf]
          %v6116 = vld [vmem:[%s6109 + $0x18] sm:$0xf]
          %v6117 = vld [vmem:[%s6109 + $0x1c] sm:$0xf]
          %v6118 = vld [vmem:[%s6109 + $0x20] sm:$0xf]
          %v6119 = vld [vmem:[%s6109 + $0x24] sm:$0xf]
          %v6120 = vld [vmem:[%s6109 + $0x28] sm:$0xf]
          %v6121 = vld [vmem:[%s6109 + $0x2c] sm:$0xf]
          %v6122 = vld [vmem:[%s6109 + $0x30] sm:$0xf]
          %v6123 = vld [vmem:[%s6109 + $0x34] sm:$0xf]
          %v6124 = vld [vmem:[%s6109 + $0x38] sm:$0xf]
          %v6125 = vld [vmem:[%s6109 + $0x3c] sm:$0xf]
          %v6126 = vld [vmem:[%s6109 + $0x40] sm:$0xf]
          %v6127 = vld [vmem:[%s6109 + $0x44] sm:$0xf]
          %v6128 = vld [vmem:[%s6109 + $0x48] sm:$0xf]
          %v6129 = vld [vmem:[%s6109 + $0x4c] sm:$0xf]
          %v6130 = vld [vmem:[%s6109 + $0x50] sm:$0xf]
          %v6131 = vld [vmem:[%s6109 + $0x54] sm:$0xf]
          %v6132 = vld [vmem:[%s6109 + $0x58] sm:$0xf]
          %v6133 = vld [vmem:[%s6109 + $0x5c] sm:$0xf]
          %v6134 = vld [vmem:[%s6109 + $0x60] sm:$0xf]
          %v6135 = vld [vmem:[%s6109 + $0x64] sm:$0xf]
          %v6136 = vld [vmem:[%s6109 + $0x68] sm:$0xf]
          %v6137 = vld [vmem:[%s6109 + $0x6c] sm:$0xf]
          %v6138 = vld [vmem:[%s6109 + $0x70] sm:$0xf]
          %v6139 = vld [vmem:[%s6109 + $0x74] sm:$0xf]
          %v6140 = vld [vmem:[%s6109 + $0x78] sm:$0xf]
          %v6141 = vld [vmem:[%s6109 + $0x7c] sm:$0xf]
          %v6174 = vunpack.c.l.b16 %v6110
          %v6175 = vunpack.c.l.b16 %v6111
          %v6176 = vunpack.c.l.b16 %v6112
          %v6177 = vunpack.c.l.b16 %v6113
          %v6178 = vunpack.c.l.b16 %v6114
          %v6179 = vunpack.c.l.b16 %v6115
          %v6180 = vunpack.c.l.b16 %v6116
          %v6181 = vunpack.c.l.b16 %v6117
          %v6182 = vunpack.c.l.b16 %v6118
          %v6183 = vunpack.c.l.b16 %v6119
          %v6184 = vunpack.c.l.b16 %v6120
          %v6185 = vunpack.c.l.b16 %v6121
          %v6186 = vunpack.c.l.b16 %v6122
          %v6187 = vunpack.c.l.b16 %v6123
          %v6188 = vunpack.c.l.b16 %v6124
          %v6189 = vunpack.c.l.b16 %v6125
          %v6190 = vunpack.c.l.b16 %v6126
          %v6191 = vunpack.c.l.b16 %v6127
          %v6192 = vunpack.c.l.b16 %v6128
          %v6193 = vunpack.c.l.b16 %v6129
          %v6194 = vunpack.c.l.b16 %v6130
          %v6195 = vunpack.c.l.b16 %v6131
          %v6196 = vunpack.c.l.b16 %v6132
          %v6197 = vunpack.c.l.b16 %v6133
          %v6198 = vunpack.c.l.b16 %v6134
          %v6199 = vunpack.c.l.b16 %v6135
          %v6200 = vunpack.c.l.b16 %v6136
          %v6201 = vunpack.c.l.b16 %v6137
          %v6202 = vunpack.c.l.b16 %v6138
          %v6203 = vunpack.c.l.b16 %v6139
          %v6204 = vunpack.c.l.b16 %v6140
          %v6205 = vunpack.c.l.b16 %v6141
          %v6206 = vpack.c.b16 %v6175, %v6174
          %v6207 = vpack.c.b16 %v6177, %v6176
          %v6208 = vpack.c.b16 %v6179, %v6178
          %v6209 = vpack.c.b16 %v6181, %v6180
          %v6210 = vpack.c.b16 %v6183, %v6182
          %v6211 = vpack.c.b16 %v6185, %v6184
          %v6212 = vpack.c.b16 %v6187, %v6186
          %v6213 = vpack.c.b16 %v6189, %v6188
          %v6214 = vpack.c.b16 %v6191, %v6190
          %v6215 = vpack.c.b16 %v6193, %v6192
          %v6216 = vpack.c.b16 %v6195, %v6194
          %v6217 = vpack.c.b16 %v6197, %v6196
          %v6218 = vpack.c.b16 %v6199, %v6198
          %v6219 = vpack.c.b16 %v6201, %v6200
          %v6220 = vpack.c.b16 %v6203, %v6202
          %v6221 = vpack.c.b16 %v6205, %v6204
          %6238 = vmatprep.subr.bf16.mxu0 0
          %6239 = vmatpush1.bf16.msra.mxu0 %v6206
          %6240 = vmatprep.subr.bf16.mxu0 0
          %6241 = vmatpush1.bf16.msra.mxu0 %v6207
          %6242 = vmatprep.subr.bf16.mxu0 0
          %6243 = vmatpush1.bf16.msra.mxu0 %v6208
          %6244 = vmatprep.subr.bf16.mxu0 0
          %6245 = vmatpush1.bf16.msra.mxu0 %v6209
          %6246 = vmatprep.subr.bf16.mxu0 0
          %6247 = vmatpush1.bf16.msra.mxu0 %v6210
          %6248 = vmatprep.subr.bf16.mxu0 0
          %6249 = vmatpush1.bf16.msra.mxu0 %v6211
          %6250 = vmatprep.subr.bf16.mxu0 0
          %6251 = vmatpush1.bf16.msra.mxu0 %v6212
          %6252 = vmatprep.subr.bf16.mxu0 0
          %6253 = vmatpush1.bf16.msra.mxu0 %v6213
          %6254 = vmatprep.subr.bf16.mxu0 0
          %6255 = vmatpush1.bf16.msra.mxu0 %v6214
          %6256 = vmatprep.subr.bf16.mxu0 0
          %6257 = vmatpush1.bf16.msra.mxu0 %v6215
          %6258 = vmatprep.subr.bf16.mxu0 0
          %6259 = vmatpush1.bf16.msra.mxu0 %v6216
          %6260 = vmatprep.subr.bf16.mxu0 0
          %6261 = vmatpush1.bf16.msra.mxu0 %v6217
          %6262 = vmatprep.subr.bf16.mxu0 0
          %6263 = vmatpush1.bf16.msra.mxu0 %v6218
          %6264 = vmatprep.subr.bf16.mxu0 0
          %6265 = vmatpush1.bf16.msra.mxu0 %v6219
          %6266 = vmatprep.subr.bf16.mxu0 0
          %6267 = vmatpush1.bf16.msra.mxu0 %v6220
          %6268 = vmatprep.subr.bf16.mxu0 0
          %6269 = vmatpush1.bf16.msra.mxu0 %v6221
          %6270 = vmatprep.mubr.bf16.mxu0 %v6102
          %6271 = vmatmul.mubr.bf16.gmra.mrb[0].mxu0 %v6101
          %v6272 = vpop.f32.mrb[0].mxu0
          %v6273 = vadd.f32 0.0, %v6272
          %v6274 = vpop.f32.mrb[0].mxu0
          %v6275 = vpop.f32.mrb[0].mxu0
          %v6276 = vadd.f32 0.0, %v6275
          %v6277 = vpop.f32.mrb[0].mxu0
          %6278 = vmatprep.mubr.bf16.mxu0 %v6104
          %6279 = vmatmul.mubr.bf16.gmra.mrb[0].mxu0 %v6103
          %v6280 = vpop.f32.mrb[0].mxu0
          %v6281 = vadd.f32 0.0, %v6280
          %v6282 = vpop.f32.mrb[0].mxu0
          %v6283 = vpop.f32.mrb[0].mxu0
          %v6284 = vadd.f32 0.0, %v6283
          %v6285 = vpop.f32.mrb[0].mxu0
          %6286 = vmatprep.mubr.bf16.mxu0 %v6106
          %6287 = vmatmul.mubr.bf16.gmra.mrb[0].mxu0 %v6105
          %v6288 = vpop.f32.mrb[0].mxu0
          %v6289 = vadd.f32 0.0, %v6288
          %v6290 = vpop.f32.mrb[0].mxu0
          %v6291 = vpop.f32.mrb[0].mxu0
          %v6292 = vadd.f32 0.0, %v6291
          %v6293 = vpop.f32.mrb[0].mxu0
          %6294 = vmatprep.mubr.bf16.mxu0 %v6108
          %6295 = vmatmul.mubr.bf16.gmra.mrb[0].mxu0 %v6107
          %v6296 = vpop.f32.mrb[0].mxu0
          %v6297 = vadd.f32 0.0, %v6296
          %v6298 = vpop.f32.mrb[0].mxu0
          %v6299 = vpop.f32.mrb[0].mxu0
          %v6300 = vadd.f32 0.0, %v6299
          %v6301 = vpop.f32.mrb[0].mxu0
          %6302 = vdwg.mxu0
          %v6303 = vadd.f32 %v6085, %v6273
          %v6304 = vadd.f32 %v6086, %v6276
          %v6305 = vadd.f32 %v6087, %v6281
          %v6306 = vadd.f32 %v6088, %v6284
          %v6307 = vadd.f32 %v6089, %v6289
          %v6308 = vadd.f32 %v6090, %v6292
          %v6309 = vadd.f32 %v6091, %v6297
          %v6310 = vadd.f32 %v6092, %v6300
          %v6311 = vld [vmem:[%s5706 + $0x10] sm:$0xfe]
          %v6312 = vld [vmem:[%s5706 + $0x18] sm:$0xfe]
          %v6313 = vld [vmem:[%s5706 + $0x20] sm:$0xff]
          %v6314 = vld [vmem:[%s5706 + $0x28] sm:$0xff]
          %v6315 = vld [vmem:[%s5706 + $0x30] sm:$0x1]
          %v6316 = vld [vmem:[%s5706 + $0x38] sm:$0x1]
          %v6317 = vld [vmem:[%s5706 + $0x50] sm:$0xfe]
          %v6318 = vld [vmem:[%s5706 + $0x58] sm:$0xfe]
          %v6319 = vld [vmem:[%s5706 + $0x60] sm:$0xff]
          %v6320 = vld [vmem:[%s5706 + $0x68] sm:$0xff]
          %v6321 = vld [vmem:[%s5706 + $0x70] sm:$0x1]
          %v6322 = vld [vmem:[%s5706 + $0x78] sm:$0x1]
          %v6323 = vld [vmem:[%s5706 + $0x90] sm:$0xfe]
          %v6324 = vld [vmem:[%s5706 + $0x98] sm:$0xfe]
          %v6325 = vld [vmem:[%s5706 + $0xa0] sm:$0xff]
          %v6326 = vld [vmem:[%s5706 + $0xa8] sm:$0xff]
          %v6327 = vld [vmem:[%s5706 + $0xb0] sm:$0x1]
          %v6328 = vld [vmem:[%s5706 + $0xb8] sm:$0x1]
          %v6329 = vld [vmem:[%s5706 + $0xd0] sm:$0xfe]
          %v6330 = vld [vmem:[%s5706 + $0xd8] sm:$0xfe]
          %v6331 = vld [vmem:[%s5706 + $0xe0] sm:$0xff]
          %v6332 = vld [vmem:[%s5706 + $0xe8] sm:$0xff]
          %v6333 = vld [vmem:[%s5706 + $0xf0] sm:$0x1]
          %v6334 = vld [vmem:[%s5706 + $0xf8] sm:$0x1]
          %v6335 = vpack.c.bf16 %v6313, %v6311
          %v6336 = vpack.c.bf16 %v6314, %v6312
          %v6337 = vpack.c.bf16 %v6315, %v6315
          %v6338 = vpack.c.bf16 %v6316, %v6316
          %v6339 = vpack.c.bf16 %v6319, %v6317
          %v6340 = vpack.c.bf16 %v6320, %v6318
          %v6341 = vpack.c.bf16 %v6321, %v6321
          %v6342 = vpack.c.bf16 %v6322, %v6322
          %v6343 = vpack.c.bf16 %v6325, %v6323
          %v6344 = vpack.c.bf16 %v6326, %v6324
          %v6345 = vpack.c.bf16 %v6327, %v6327
          %v6346 = vpack.c.bf16 %v6328, %v6328
          %v6347 = vpack.c.bf16 %v6331, %v6329
          %v6348 = vpack.c.bf16 %v6332, %v6330
          %v6349 = vpack.c.bf16 %v6333, %v6333
          %v6350 = vpack.c.bf16 %v6334, %v6334
          %v6352 = vshrl.u32 %v6335, 16
          %v6354 = vshll.u32 %v6335, 16
          %v6356 = vrot.slane %v6354, 1
          %v6357 = vor.u32 %v6352, %v6356
          %v6359 = vshll.u32 %v6337, 16
          %v6361 = vrot.slane %v6359, 1
          %v6362 = vsel %vm4442, %v6357, %v6361
          %v6364 = vshrl.u32 %v6336, 16
          %v6366 = vshll.u32 %v6336, 16
          %v6368 = vrot.slane %v6366, 1
          %v6369 = vor.u32 %v6364, %v6368
          %v6371 = vshll.u32 %v6338, 16
          %v6373 = vrot.slane %v6371, 1
          %v6374 = vsel %vm4442, %v6369, %v6373
          %v6376 = vshrl.u32 %v6339, 16
          %v6378 = vshll.u32 %v6339, 16
          %v6380 = vrot.slane %v6378, 1
          %v6381 = vor.u32 %v6376, %v6380
          %v6383 = vshll.u32 %v6341, 16
          %v6385 = vrot.slane %v6383, 1
          %v6386 = vsel %vm4442, %v6381, %v6385
          %v6388 = vshrl.u32 %v6340, 16
          %v6390 = vshll.u32 %v6340, 16
          %v6392 = vrot.slane %v6390, 1
          %v6393 = vor.u32 %v6388, %v6392
          %v6395 = vshll.u32 %v6342, 16
          %v6397 = vrot.slane %v6395, 1
          %v6398 = vsel %vm4442, %v6393, %v6397
          %v6400 = vshrl.u32 %v6343, 16
          %v6402 = vshll.u32 %v6343, 16
          %v6404 = vrot.slane %v6402, 1
          %v6405 = vor.u32 %v6400, %v6404
          %v6407 = vshll.u32 %v6345, 16
          %v6409 = vrot.slane %v6407, 1
          %v6410 = vsel %vm4442, %v6405, %v6409
          %v6412 = vshrl.u32 %v6344, 16
          %v6414 = vshll.u32 %v6344, 16
          %v6416 = vrot.slane %v6414, 1
          %v6417 = vor.u32 %v6412, %v6416
          %v6419 = vshll.u32 %v6346, 16
          %v6421 = vrot.slane %v6419, 1
          %v6422 = vsel %vm4442, %v6417, %v6421
          %v6424 = vshrl.u32 %v6347, 16
          %v6426 = vshll.u32 %v6347, 16
          %v6428 = vrot.slane %v6426, 1
          %v6429 = vor.u32 %v6424, %v6428
          %v6431 = vshll.u32 %v6349, 16
          %v6433 = vrot.slane %v6431, 1
          %v6434 = vsel %vm4442, %v6429, %v6433
          %v6436 = vshrl.u32 %v6348, 16
          %v6438 = vshll.u32 %v6348, 16
          %v6440 = vrot.slane %v6438, 1
          %v6441 = vor.u32 %v6436, %v6440
          %v6443 = vshll.u32 %v6350, 16
          %v6445 = vrot.slane %v6443, 1
          %v6446 = vsel %vm4442, %v6441, %v6445
          %s6455 = scalar_lea.vmem [#allocation13], 1024
          %v6456 = vld [vmem:[%s6455] sm:$0xf]
          %v6457 = vld [vmem:[%s6455 + $0x4] sm:$0xf]
          %v6458 = vld [vmem:[%s6455 + $0x8] sm:$0xf]
          %v6459 = vld [vmem:[%s6455 + $0xc] sm:$0xf]
          %v6460 = vld [vmem:[%s6455 + $0x10] sm:$0xf]
          %v6461 = vld [vmem:[%s6455 + $0x14] sm:$0xf]
          %v6462 = vld [vmem:[%s6455 + $0x18] sm:$0xf]
          %v6463 = vld [vmem:[%s6455 + $0x1c] sm:$0xf]
          %v6464 = vld [vmem:[%s6455 + $0x20] sm:$0xf]
          %v6465 = vld [vmem:[%s6455 + $0x24] sm:$0xf]
          %v6466 = vld [vmem:[%s6455 + $0x28] sm:$0xf]
          %v6467 = vld [vmem:[%s6455 + $0x2c] sm:$0xf]
          %v6468 = vld [vmem:[%s6455 + $0x30] sm:$0xf]
          %v6469 = vld [vmem:[%s6455 + $0x34] sm:$0xf]
          %v6470 = vld [vmem:[%s6455 + $0x38] sm:$0xf]
          %v6471 = vld [vmem:[%s6455 + $0x3c] sm:$0xf]
          %v6472 = vld [vmem:[%s6455 + $0x40] sm:$0xf]
          %v6473 = vld [vmem:[%s6455 + $0x44] sm:$0xf]
          %v6474 = vld [vmem:[%s6455 + $0x48] sm:$0xf]
          %v6475 = vld [vmem:[%s6455 + $0x4c] sm:$0xf]
          %v6476 = vld [vmem:[%s6455 + $0x50] sm:$0xf]
          %v6477 = vld [vmem:[%s6455 + $0x54] sm:$0xf]
          %v6478 = vld [vmem:[%s6455 + $0x58] sm:$0xf]
          %v6479 = vld [vmem:[%s6455 + $0x5c] sm:$0xf]
          %v6480 = vld [vmem:[%s6455 + $0x60] sm:$0xf]
          %v6481 = vld [vmem:[%s6455 + $0x64] sm:$0xf]
          %v6482 = vld [vmem:[%s6455 + $0x68] sm:$0xf]
          %v6483 = vld [vmem:[%s6455 + $0x6c] sm:$0xf]
          %v6484 = vld [vmem:[%s6455 + $0x70] sm:$0xf]
          %v6485 = vld [vmem:[%s6455 + $0x74] sm:$0xf]
          %v6486 = vld [vmem:[%s6455 + $0x78] sm:$0xf]
          %v6487 = vld [vmem:[%s6455 + $0x7c] sm:$0xf]
          %v6520 = vunpack.c.l.b16 %v6456
          %v6521 = vunpack.c.l.b16 %v6457
          %v6522 = vunpack.c.l.b16 %v6458
          %v6523 = vunpack.c.l.b16 %v6459
          %v6524 = vunpack.c.l.b16 %v6460
          %v6525 = vunpack.c.l.b16 %v6461
          %v6526 = vunpack.c.l.b16 %v6462
          %v6527 = vunpack.c.l.b16 %v6463
          %v6528 = vunpack.c.l.b16 %v6464
          %v6529 = vunpack.c.l.b16 %v6465
          %v6530 = vunpack.c.l.b16 %v6466
          %v6531 = vunpack.c.l.b16 %v6467
          %v6532 = vunpack.c.l.b16 %v6468
          %v6533 = vunpack.c.l.b16 %v6469
          %v6534 = vunpack.c.l.b16 %v6470
          %v6535 = vunpack.c.l.b16 %v6471
          %v6536 = vunpack.c.l.b16 %v6472
          %v6537 = vunpack.c.l.b16 %v6473
          %v6538 = vunpack.c.l.b16 %v6474
          %v6539 = vunpack.c.l.b16 %v6475
          %v6540 = vunpack.c.l.b16 %v6476
          %v6541 = vunpack.c.l.b16 %v6477
          %v6542 = vunpack.c.l.b16 %v6478
          %v6543 = vunpack.c.l.b16 %v6479
          %v6544 = vunpack.c.l.b16 %v6480
          %v6545 = vunpack.c.l.b16 %v6481
          %v6546 = vunpack.c.l.b16 %v6482
          %v6547 = vunpack.c.l.b16 %v6483
          %v6548 = vunpack.c.l.b16 %v6484
          %v6549 = vunpack.c.l.b16 %v6485
          %v6550 = vunpack.c.l.b16 %v6486
          %v6551 = vunpack.c.l.b16 %v6487
          %v6552 = vpack.c.b16 %v6521, %v6520
          %v6553 = vpack.c.b16 %v6523, %v6522
          %v6554 = vpack.c.b16 %v6525, %v6524
          %v6555 = vpack.c.b16 %v6527, %v6526
          %v6556 = vpack.c.b16 %v6529, %v6528
          %v6557 = vpack.c.b16 %v6531, %v6530
          %v6558 = vpack.c.b16 %v6533, %v6532
          %v6559 = vpack.c.b16 %v6535, %v6534
          %v6560 = vpack.c.b16 %v6537, %v6536
          %v6561 = vpack.c.b16 %v6539, %v6538
          %v6562 = vpack.c.b16 %v6541, %v6540
          %v6563 = vpack.c.b16 %v6543, %v6542
          %v6564 = vpack.c.b16 %v6545, %v6544
          %v6565 = vpack.c.b16 %v6547, %v6546
          %v6566 = vpack.c.b16 %v6549, %v6548
          %v6567 = vpack.c.b16 %v6551, %v6550
          %6584 = vmatprep.subr.bf16.mxu0 0
          %6585 = vmatpush1.bf16.msra.mxu0 %v6552
          %6586 = vmatprep.subr.bf16.mxu0 0
          %6587 = vmatpush1.bf16.msra.mxu0 %v6553
          %6588 = vmatprep.subr.bf16.mxu0 0
          %6589 = vmatpush1.bf16.msra.mxu0 %v6554
          %6590 = vmatprep.subr.bf16.mxu0 0
          %6591 = vmatpush1.bf16.msra.mxu0 %v6555
          %6592 = vmatprep.subr.bf16.mxu0 0
          %6593 = vmatpush1.bf16.msra.mxu0 %v6556
          %6594 = vmatprep.subr.bf16.mxu0 0
          %6595 = vmatpush1.bf16.msra.mxu0 %v6557
          %6596 = vmatprep.subr.bf16.mxu0 0
          %6597 = vmatpush1.bf16.msra.mxu0 %v6558
          %6598 = vmatprep.subr.bf16.mxu0 0
          %6599 = vmatpush1.bf16.msra.mxu0 %v6559
          %6600 = vmatprep.subr.bf16.mxu0 0
          %6601 = vmatpush1.bf16.msra.mxu0 %v6560
          %6602 = vmatprep.subr.bf16.mxu0 0
          %6603 = vmatpush1.bf16.msra.mxu0 %v6561
          %6604 = vmatprep.subr.bf16.mxu0 0
          %6605 = vmatpush1.bf16.msra.mxu0 %v6562
          %6606 = vmatprep.subr.bf16.mxu0 0
          %6607 = vmatpush1.bf16.msra.mxu0 %v6563
          %6608 = vmatprep.subr.bf16.mxu0 0
          %6609 = vmatpush1.bf16.msra.mxu0 %v6564
          %6610 = vmatprep.subr.bf16.mxu0 0
          %6611 = vmatpush1.bf16.msra.mxu0 %v6565
          %6612 = vmatprep.subr.bf16.mxu0 0
          %6613 = vmatpush1.bf16.msra.mxu0 %v6566
          %6614 = vmatprep.subr.bf16.mxu0 0
          %6615 = vmatpush1.bf16.msra.mxu0 %v6567
          %6616 = vmatprep.mubr.bf16.mxu0 %v6374
          %6617 = vmatmul.mubr.bf16.gmra.mrb[0].mxu0 %v6362
          %v6618 = vpop.f32.mrb[0].mxu0
          %v6619 = vadd.f32 0.0, %v6618
          %v6620 = vpop.f32.mrb[0].mxu0
          %v6621 = vpop.f32.mrb[0].mxu0
          %v6622 = vadd.f32 0.0, %v6621
          %v6623 = vpop.f32.mrb[0].mxu0
          %6624 = vmatprep.mubr.bf16.mxu0 %v6398
          %6625 = vmatmul.mubr.bf16.gmra.mrb[0].mxu0 %v6386
          %v6626 = vpop.f32.mrb[0].mxu0
          %v6627 = vadd.f32 0.0, %v6626
          %v6628 = vpop.f32.mrb[0].mxu0
          %v6629 = vpop.f32.mrb[0].mxu0
          %v6630 = vadd.f32 0.0, %v6629
          %v6631 = vpop.f32.mrb[0].mxu0
          %6632 = vmatprep.mubr.bf16.mxu0 %v6422
          %6633 = vmatmul.mubr.bf16.gmra.mrb[0].mxu0 %v6410
          %v6634 = vpop.f32.mrb[0].mxu0
          %v6635 = vadd.f32 0.0, %v6634
          %v6636 = vpop.f32.mrb[0].mxu0
          %v6637 = vpop.f32.mrb[0].mxu0
          %v6638 = vadd.f32 0.0, %v6637
          %v6639 = vpop.f32.mrb[0].mxu0
          %6640 = vmatprep.mubr.bf16.mxu0 %v6446
          %6641 = vmatmul.mubr.bf16.gmra.mrb[0].mxu0 %v6434
          %v6642 = vpop.f32.mrb[0].mxu0
          %v6643 = vadd.f32 0.0, %v6642
          %v6644 = vpop.f32.mrb[0].mxu0
          %v6645 = vpop.f32.mrb[0].mxu0
          %v6646 = vadd.f32 0.0, %v6645
          %v6647 = vpop.f32.mrb[0].mxu0
          %6648 = vdwg.mxu0
          %v6649 = vadd.f32 %v6303, %v6619
          %v6650 = vadd.f32 %v6304, %v6622
          %v6651 = vadd.f32 %v6305, %v6627
          %v6652 = vadd.f32 %v6306, %v6630
          %v6653 = vadd.f32 %v6307, %v6635
          %v6654 = vadd.f32 %v6308, %v6638
          %v6655 = vadd.f32 %v6309, %v6643
          %v6656 = vadd.f32 %v6310, %v6646
          %v6657 = vld [vmem:[%s6] sm:$0x1]
          %v6659 = vlaneseq
          %v6660 = vshrl.u32 %v6659, 7
          %v6661 = vsub.s32 0, %v6660
          %v6662 = vrot.slane %v6657, %v6661
          %v6664 = vadd.f32 %v6649, %v6662
          %v6665 = vadd.f32 %v6650, %v6662
          %v6666 = vadd.f32 %v6651, %v6662
          %v6667 = vadd.f32 %v6652, %v6662
          %v6668 = vadd.f32 %v6653, %v6662
          %v6669 = vadd.f32 %v6654, %v6662
          %v6670 = vadd.f32 %v6655, %v6662
          %v6671 = vadd.f32 %v6656, %v6662
          %s6672 = smul.u32 %s3810, 16
          %s6673 = scalar_lea.vmem %s298, %s6672 [#allocation7]
          %v6674 = vld [vmem:[%s6673] sm:$0xff]
          %v6675 = vld [vmem:[%s6673 + $0x8] sm:$0xff]
          %v6676 = vld [vmem:[%s6673 + $0x10] sm:$0xff]
          %v6677 = vld [vmem:[%s6673 + $0x18] sm:$0xff]
          %v6678 = vld [vmem:[%s6673 + $0x20] sm:$0xff]
          %v6679 = vld [vmem:[%s6673 + $0x28] sm:$0xff]
          %v6680 = vld [vmem:[%s6673 + $0x30] sm:$0xff]
          %v6681 = vld [vmem:[%s6673 + $0x38] sm:$0xff]
          %v6682 = vadd.f32 %v6664, %v6674
          %v6683 = vadd.f32 %v6665, %v6675
          %v6684 = vadd.f32 %v6666, %v6676
          %v6685 = vadd.f32 %v6667, %v6677
          %v6686 = vadd.f32 %v6668, %v6678
          %v6687 = vadd.f32 %v6669, %v6679
          %v6688 = vadd.f32 %v6670, %v6680
          %v6689 = vadd.f32 %v6671, %v6681
          %v6690 = vmax.f32 %v6682, 0.0
          %v6691 = vmax.f32 %v6683, 0.0
          %v6692 = vmax.f32 %v6684, 0.0
          %v6693 = vmax.f32 %v6685, 0.0
          %v6694 = vmax.f32 %v6686, 0.0
          %v6695 = vmax.f32 %v6687, 0.0
          %v6696 = vmax.f32 %v6688, 0.0
          %v6697 = vmax.f32 %v6689, 0.0
          %s6698 = scalar_lea.vmem [#allocation5], %s6672
          %6699 = vst [vmem:[%s6698] sm:$0xff] %v6690
          %6700 = vst [vmem:[%s6698 + $0x8] sm:$0xff] %v6691
          %6701 = vst [vmem:[%s6698 + $0x10] sm:$0xff] %v6692
          %6702 = vst [vmem:[%s6698 + $0x18] sm:$0xff] %v6693
          %6703 = vst [vmem:[%s6698 + $0x20] sm:$0xff] %v6694
          %6704 = vst [vmem:[%s6698 + $0x28] sm:$0xff] %v6695
          %6705 = vst [vmem:[%s6698 + $0x30] sm:$0xff] %v6696
          %6706 = vst [vmem:[%s6698 + $0x38] sm:$0xff] %v6697
        $region90: #{tpu_custom_call.1} parent=47 // loop_footer
          %s3809 = sadd.s32 1, %s3805
        $region91: #{tpu_custom_call.1} parent=47 // loop_footer_branch
          %3804 = sbr.rel target = $region87
        $region92: #{tpu_custom_call.1} parent=47 // loop_exit
          _
        loop: start=0, step=1, limit=8
        $region93: #{tpu_custom_call.1} parent=47 // loop_pre_header
          _
        $region94: #{tpu_custom_call.1} parent=47 // loop_header
          %s6708 = sphi 0, %s6712
          %p6709 = scmp.ge.s32.totalorder %s6708, 8
        $region95: #{tpu_custom_call.1} parent=47 // loop_header_branch
          %6711 = sbr.rel (%p6709) target = $region99
        $region96: #{tpu_custom_call.1} parent=47 // loop_body
          %s6713 = smul.u32 %s6708, 2
          %s6714 = ssub.s32 %s6713, 1
          %p6715 = scmp.gt.s32.totalorder %s6714, 0
          %s6716 = scalar_select %p6715, %s6714, 0
          %s6717 = smul.u32 %s6716, 16
          %s6718 = scalar_lea.vmem [#allocation5], %s6717
          %v6719 = vld [vmem:[%s6718] sm:$0xff]
          %v6720 = vld [vmem:[%s6718 + $0x8] sm:$0xff]
          %s6721 = smul.u32 %s6713, 16
          %s6722 = scalar_lea.vmem [#allocation5], %s6721
          %v6723 = vld [vmem:[%s6722] sm:$0xff]
          %v6724 = vld [vmem:[%s6722 + $0x8] sm:$0xff]
          %s6725 = sadd.s32 %s6713, 1
          %s6726 = smul.u32 %s6725, 16
          %s6727 = scalar_lea.vmem [#allocation5], %s6726
          %v6728 = vld [vmem:[%s6727] sm:$0xff]
          %v6729 = vld [vmem:[%s6727 + $0x8] sm:$0xff]
          %v6730 = vmax.f32 %v6719, %v6723
          %v6731 = vmax.f32 %v6720, %v6724
          %v6732 = vmax.f32 %v6730, %v6728
          %v6733 = vmax.f32 %v6731, %v6729
          %s6734 = smul.u32 %s6708, 24
          %s6735 = scalar_lea.vmem [#allocation6], %s6734
          %6736 = vst [vmem:[%s6735 + $0x8] sm:$0xff] %v6732
          %6737 = vst [vmem:[%s6735 + $0x10] sm:$0xff] %v6733
        $region97: #{tpu_custom_call.1} parent=47 // loop_footer
          %s6712 = sadd.s32 1, %s6708
        $region98: #{tpu_custom_call.1} parent=47 // loop_footer_branch
          %6707 = sbr.rel target = $region94
        $region99: #{tpu_custom_call.1} parent=47 // loop_exit
          _
        %s6738 = scalar_lea.vmem [#allocation6], 7
        %v6739 = vld [vmem:[%s6738] ss:$2 sm:$0xff]
        %s6740 = scalar_lea.vmem [#allocation6], 31
        %v6741 = vld [vmem:[%s6740] ss:$2 sm:$0xff]
        %s6742 = scalar_lea.vmem [#allocation6], 55
        %v6743 = vld [vmem:[%s6742] ss:$2 sm:$0xff]
        %s6744 = scalar_lea.vmem [#allocation6], 79
        %v6745 = vld [vmem:[%s6744] ss:$2 sm:$0xff]
        %s6746 = scalar_lea.vmem [#allocation6], 103
        %v6747 = vld [vmem:[%s6746] ss:$2 sm:$0xff]
        %s6748 = scalar_lea.vmem [#allocation6], 127
        %v6749 = vld [vmem:[%s6748] ss:$2 sm:$0xff]
        %s6750 = scalar_lea.vmem [#allocation6], 151
        %v6751 = vld [vmem:[%s6750] ss:$2 sm:$0xff]
        %s6752 = scalar_lea.vmem [#allocation6], 175
        %v6753 = vld [vmem:[%s6752] ss:$2 sm:$0xff]
        %s6754 = scalar_lea.vmem [#allocation6], 8
        %v6755 = vld [vmem:[%s6754] ss:$2 sm:$0xff]
        %s6756 = scalar_lea.vmem [#allocation6], 32
        %v6757 = vld [vmem:[%s6756] ss:$2 sm:$0xff]
        %s6758 = scalar_lea.vmem [#allocation6], 56
        %v6759 = vld [vmem:[%s6758] ss:$2 sm:$0xff]
        %s6760 = scalar_lea.vmem [#allocation6], 80
        %v6761 = vld [vmem:[%s6760] ss:$2 sm:$0xff]
        %s6762 = scalar_lea.vmem [#allocation6], 104
        %v6763 = vld [vmem:[%s6762] ss:$2 sm:$0xff]
        %s6764 = scalar_lea.vmem [#allocation6], 128
        %v6765 = vld [vmem:[%s6764] ss:$2 sm:$0xff]
        %s6766 = scalar_lea.vmem [#allocation6], 152
        %v6767 = vld [vmem:[%s6766] ss:$2 sm:$0xff]
        %s6768 = scalar_lea.vmem [#allocation6], 176
        %v6769 = vld [vmem:[%s6768] ss:$2 sm:$0xff]
        %s6770 = scalar_lea.vmem [#allocation6], 9
        %v6771 = vld [vmem:[%s6770] ss:$2 sm:$0xff]
        %s6772 = scalar_lea.vmem [#allocation6], 33
        %v6773 = vld [vmem:[%s6772] ss:$2 sm:$0xff]
        %s6774 = scalar_lea.vmem [#allocation6], 57
        %v6775 = vld [vmem:[%s6774] ss:$2 sm:$0xff]
        %s6776 = scalar_lea.vmem [#allocation6], 81
        %v6777 = vld [vmem:[%s6776] ss:$2 sm:$0xff]
        %s6778 = scalar_lea.vmem [#allocation6], 105
        %v6779 = vld [vmem:[%s6778] ss:$2 sm:$0xff]
        %s6780 = scalar_lea.vmem [#allocation6], 129
        %v6781 = vld [vmem:[%s6780] ss:$2 sm:$0xff]
        %s6782 = scalar_lea.vmem [#allocation6], 153
        %v6783 = vld [vmem:[%s6782] ss:$2 sm:$0xff]
        %s6784 = scalar_lea.vmem [#allocation6], 177
        %v6785 = vld [vmem:[%s6784] ss:$2 sm:$0xff]
        %v6786 = vmax.f32 %v6739, %v6755
        %v6787 = vmax.f32 %v6741, %v6757
        %v6788 = vmax.f32 %v6743, %v6759
        %v6789 = vmax.f32 %v6745, %v6761
        %v6790 = vmax.f32 %v6747, %v6763
        %v6791 = vmax.f32 %v6749, %v6765
        %v6792 = vmax.f32 %v6751, %v6767
        %v6793 = vmax.f32 %v6753, %v6769
        %v6794 = vmax.f32 %v6786, %v6771
        %v6795 = vmax.f32 %v6787, %v6773
        %v6796 = vmax.f32 %v6788, %v6775
        %v6797 = vmax.f32 %v6789, %v6777
        %v6798 = vmax.f32 %v6790, %v6779
        %v6799 = vmax.f32 %v6791, %v6781
        %v6800 = vmax.f32 %v6792, %v6783
        %v6801 = vmax.f32 %v6793, %v6785
        %6802 = vst [vmem:[%s340] sm:$0xff] %v6794
        %6803 = vst [vmem:[%s340 + $0x8] sm:$0xff] %v6795
        %6804 = vst [vmem:[%s340 + $0x10] sm:$0xff] %v6796
        %6805 = vst [vmem:[%s340 + $0x18] sm:$0xff] %v6797
        %6806 = vst [vmem:[%s340 + $0x20] sm:$0xff] %v6798
        %6807 = vst [vmem:[%s340 + $0x28] sm:$0xff] %v6799
        %6808 = vst [vmem:[%s340 + $0x30] sm:$0xff] %v6800
        %6809 = vst [vmem:[%s340 + $0x38] sm:$0xff] %v6801
        %s6810 = sand.u32 %s186, 1
        %s6811 = scalar_lea.sflag [#allocation9], %s6810
        %s6812 = sand.u32 %s186, 1
        %s6813 = smul.addr %s6812, 64
        %s6814 = scalar_lea.vmem [#allocation15], %s6813
        // Predicated region
        $region100: #{tpu_custom_call.1} parent=47 // pred_check
          %p6815 = pneg %p196
        $region101: #{tpu_custom_call.1} parent=47 // pred_check_branch
          %6817 = sbr.rel (%p6815) target = $region103
        $region102: #{tpu_custom_call.1} parent=47 // pred_region
          %s6819 = ssub.s32 1024, 1024
          %6820 = vsyncadd %s6811, %s6819
          %s6821 = smul.addr %s26, 8
          %s6822 = smul.addr %s6821, 128
          %s6823 = scalar_lea.hbm %s7, %s6822
          %s6824 = sshll.u32 %s6814, 4
          %s6825 = int_to_ptr.vmem [resolvable:$true] %s6824
          %6830 = dma.vmem_to_hbm [thread:$0]  %s6825, 1024, %s6823, %s6811, 128, 128, 8
        $region103: #{tpu_custom_call.1} parent=47 // pred_fallthru
          _
      $region48: #{tpu_custom_call.1} parent=5 // pred_fallthru
        _
      %p6831 = scmp.le.s32.totalorder 2, %s21
      // Predicated region
      $region104: #{tpu_custom_call.1} parent=5 // pred_check
        %p6832 = pneg %p6831
      $region105: #{tpu_custom_call.1} parent=5 // pred_check_branch
        %6834 = sbr.rel (%p6832) target = $region107
      $region106: #{tpu_custom_call.1} parent=5 // pred_region
        %s6835 = ssub.s32 %s21, 2
        // Predicated region
        $region108: #{tpu_custom_call.1} parent=106 // pred_check
          %p6836 = pneg %p202
        $region109: #{tpu_custom_call.1} parent=106 // pred_check_branch
          %6838 = sbr.rel (%p6836) target = $region111
        $region110: #{tpu_custom_call.1} parent=106 // pred_region
          %s6839 = sand.u32 %s187, 1
          %s6840 = scalar_lea.sflag [#allocation9], %s6839
          %s6841 = sand.u32 %s187, 1
          %s6842 = smul.addr %s6841, 64
          %s6843 = scalar_lea.vmem [#allocation15], %s6842
          %6844 = dma.done %s6840, 1024
        $region111: #{tpu_custom_call.1} parent=106 // pred_fallthru
          _
      $region107: #{tpu_custom_call.1} parent=5 // pred_fallthru
        _
    $region6: #{tpu_custom_call.1} parent=1 // loop_footer
      %s25 = sadd.s32 1, %s21
    $region7: #{tpu_custom_call.1} parent=1 // loop_footer_branch
      %20 = sbr.rel target = $region3
    $region8: #{tpu_custom_call.1} parent=1 // loop_exit
      _
    %6845 = vsyncpa [#allocation8], 1
    %s6846 = scalar_lea.sflag [#allocation8], 1
    %6847 = vsyncpa %s6846, 1
    %6848 = vsyncpa [#allocation11], 1
    %6849 = vsyncpa [#allocation14], 1
    %6850 = vsyncpa [#allocation9], 1
    %s6851 = scalar_lea.sflag [#allocation9], 1
    %6852 = vsyncpa %s6851, 1

</llo_original>
